<compile_context>
chip_gen: v5e
topology: v5e:2x2
jax: 0.10.0
libtpu: 0.0.40
codegen_flags: <defaults>
</compile_context>

<pallas_src>
import functools

import jax
import jax.numpy as jnp
import numpy as np
from jax import lax
from jax.experimental import pallas as pl
from jax.experimental.pallas import tpu as pltpu


# Parameters consumed by the kernel (already fused / padded host-side).
KERNEL_PARAMS = [
    'Wrow_t',   # (F, WROW_PAD) fused per-position weight:
                #   [wih2 | W1_parent | wih1 | Wq_ctx | W1_ctx | Wp | Ws | 0pad]
    'brow',     # (1, WROW_PAD) matching fused bias row
    'whh1_t',   # (H, 3H)   GRUCell1 hidden weights
    'bhh1',     # (1, 3H)
    'Wns_t',    # (H, P+3H) fused [Wq_state | whh2]
    'bns',      # (1, P+3H) [0 | bhh2]
    'Wwt_kp',   # (K, P)    weight_transform conv taps
    'Wcw_kp',   # (K, P)    cum_weight_transform conv taps
    'bcov',     # (1, P)    bwt + bcw (folded cover-conv biases)
    'Wl',       # (1, P)    logit_transform weight
    'bl',       # (1, 1)
    'W1s_t',    # (H, H)    re_cls layer-1 state partial
    'W2_t',     # (H, V_pad)
    'b2',       # (1, V_pad)
]


def _round_up(x, m):
    return (x + m - 1) // m * m


# ----------------------------------------------------------------------------
# Pallas kernel: one invocation per batch block, decode loop inside the body
# ----------------------------------------------------------------------------
def decoder_kernel(*refs, dims, T):
    B, N, F, H, P, K = dims
    n_params = len(KERNEL_PARAMS)
    feats_ref, mask_ref = refs[0], refs[1]
    param_refs = refs[2:2 + n_params]
    cls_ref, att_ref = refs[2 + n_params], refs[3 + n_params]
    rc_ref, zp_ref = refs[4 + n_params], refs[5 + n_params]

    p = {name: r[...] for name, r in zip(KERNEL_PARAMS, param_refs)}
    feats = feats_ref[...]                                    # (B, N, F)
    mask = mask_ref[...]                                      # (B, N)
    pad = K // 2
    wrc = 3 * H + P + H                                       # row-context width

    # ---------------- t-independent precompute (done once) -----------------
    # one fused GEMM over all (batch, position) rows
    rall = (jnp.dot(feats.reshape(B * N, F), p['Wrow_t'],
                    preferred_element_type=jnp.float32)
            + p['brow']).reshape(B, N, -1)
    zp_ref[...] = rall[:, :, :4 * H]                          # parent gather table
    rc_ref[...] = rall[:, :, 4 * H:4 * H + wrc]               # per-step row context
    pfeat = rall[:, :, 4 * H + wrc:4 * H + wrc + P] * mask[:, :, None]
    si = rall[:, :, 4 * H + wrc + P:4 * H + wrc + P + H]

    # fusion seed in lane-dense (B, P, N) layout (sequence axis on lanes)
    fusion_seed = jnp.transpose(pfeat, (0, 2, 1)) + p['bcov'].reshape(1, P, 1)

    # initial GRU state: masked mean of the state-init projection
    state0 = (jnp.sum(si * mask[:, :, None], axis=1)
              / jnp.sum(mask, axis=1, keepdims=True))          # (B, H)

    # ---------------- loop-invariant hoists ---------------------------------
    iota_n = lax.broadcasted_iota(jnp.int32, (B, N), 1)
    mask_on = mask > 0.0
    neg_big = jnp.full((B, N), -1e30, jnp.float32)
    wl_col = p['Wl'].reshape(1, P, 1)
    bl0 = p['bl'][0, 0]
    wwt_cols = [p['Wwt_kp'][k].reshape(1, P, 1) for k in range(K)]
    wcw_cols = [p['Wcw_kp'][k].reshape(1, P, 1) for k in range(K)]
    whh1_t, bhh1 = p['whh1_t'], p['bhh1']
    wns_t, bns = p['Wns_t'], p['bns']
    w1s_t, w2_t, b2 = p['W1s_t'], p['W2_t'], p['b2']

    def shift_rows(x, d):
        # y[:, i] = x[:, i + d].  Edge zeros come from the guaranteed-zero
        # padded tail (N_pad >= N_true + K//2 and att weights are exactly 0 at
        # invalid positions); wrap-around only lands in padded columns that
        # are masked / sliced away everywhere downstream.
        if d == 0:
            return x
        return pltpu.roll(x, shift=(-d) % N, axis=1)

    def body(t, carry):
        state, satt, cum = carry

        row = rc_ref[:, pl.ds(t + 1, 1), :][:, 0, :]           # (B, 3H+P+H)
        gi1 = row[:, :3 * H]
        qctx = row[:, 3 * H:3 * H + P]
        h1ctx = row[:, 3 * H + P:]

        # GRU cell 1 (input gates precomputed; only the hidden matmul remains)
        gh1 = jnp.dot(state, whh1_t, preferred_element_type=jnp.float32) + bhh1
        r1 = jax.nn.sigmoid(gi1[:, :H] + gh1[:, :H])
        z1 = jax.nn.sigmoid(gi1[:, H:2 * H] + gh1[:, H:2 * H])
        c1 = jnp.tanh(gi1[:, 2 * H:] + r1 * gh1[:, 2 * H:])
        new_state = (1.0 - z1) * c1 + z1 * state               # (B, H)

        # fused state projection: [query state partial | GRU2 hidden gates]
        nsp = jnp.dot(new_state, wns_t, preferred_element_type=jnp.float32) + bns
        query = qctx + nsp[:, :P]                              # (B, P)
        gh2 = nsp[:, P:]                                       # (B, 3H)

        # attention fusion, lane-dense over the sequence axis
        fusion = fusion_seed + query[:, :, None]
        for k in range(K):                                     # static unroll
            d = k - pad
            fusion = fusion + shift_rows(satt, d)[:, None, :] * wwt_cols[k]
            fusion = fusion + shift_rows(cum, d)[:, None, :] * wcw_cols[k]
        att_logit = jnp.sum(jnp.tanh(fusion) * wl_col, axis=1) + bl0   # (B, N)

        # masked softmax over valid positions 0..t
        valid_t = jnp.logical_and(mask_on, iota_n <= t)
        att_m = jnp.where(valid_t, att_logit, neg_big)
        m = jnp.max(att_m, axis=1, keepdims=True)
        e = jnp.where(valid_t, jnp.exp(att_logit - m), 0.0)
        att_w = e / jnp.sum(e, axis=1, keepdims=True)
        new_cum = cum + att_w

        # parent = argmax of the RAW logits over positions 0..t
        # (matches torch.argmax in Decoder.step: no feature mask applied there)
        sel = jnp.where(iota_n <= t, att_logit, neg_big)
        mx = jnp.max(sel, axis=1, keepdims=True)
        line_idx = jnp.min(jnp.where(sel >= mx, iota_n, N), axis=1)    # (B,)
        onehot = (iota_n == line_idx[:, None]).astype(jnp.float32)
        parent = jnp.sum(onehot[:, :, None] * zp_ref[...], axis=1)     # (B, 4H)
        gi2 = parent[:, :3 * H]           # includes bih2 (folded in precompute)
        h1_par = parent[:, 3 * H:]

        # GRU cell 2
        r2 = jax.nn.sigmoid(gi2[:, :H] + gh2[:, :H])
        z2 = jax.nn.sigmoid(gi2[:, H:2 * H] + gh2[:, H:2 * H])
        c2 = jnp.tanh(gi2[:, 2 * H:] + r2 * gh2[:, 2 * H:])
        new_state2 = (1.0 - z2) * c2 + z2 * new_state

        # relation classifier (concat-free partial sums; b1 folded into h1ctx)
        h1 = jnp.tanh(h1ctx + h1_par
                      + jnp.dot(new_state2, w1s_t,
                                preferred_element_type=jnp.float32))
        logits = jnp.dot(h1, w2_t, preferred_element_type=jnp.float32) + b2

        cls_ref[pl.ds(t, 1), :, :] = logits[None]
        att_ref[pl.ds(t, 1), :, :] = att_logit[None]
        return new_state2, att_w, new_cum

    zeros_bn = jnp.zeros((B, N), jnp.float32)
    lax.fori_loop(0, T, body, (state0, zeros_bn, zeros_bn))


# ----------------------------------------------------------------------------
# host-side parameter fusion + wrapper
# ----------------------------------------------------------------------------
def make_params(key, F, H, P, K, V):
    shapes = [
        ('Wp_t', (F, P)), ('bp', (1, P)),
        ('Ws_t', (F, H)), ('bs', (1, H)),
        ('wih1_t', (F, 3 * H)), ('whh1_t', (H, 3 * H)),
        ('bih1', (1, 3 * H)), ('bhh1', (1, 3 * H)),
        ('Wq_t', (F + H, P)), ('bq', (1, P)),
        ('Wwt_kp', (K, P)), ('bwt', (1, P)),
        ('Wcw_kp', (K, P)), ('bcw', (1, P)),
        ('Wl', (1, P)), ('bl', (1, 1)),
        ('wih2_t', (F, 3 * H)), ('whh2_t', (H, 3 * H)),
        ('bih2', (1, 3 * H)), ('bhh2', (1, 3 * H)),
        ('W1_t', (2 * F + H, H)), ('b1', (1, H)),
        ('W2_t', (H, V)), ('b2', (1, V)),
    ]
    keys = jax.random.split(key, len(shapes))
    return {n: 0.2 * jax.random.normal(k, s, jnp.float32)
            for (n, s), k in zip(shapes, keys)}


def _build_kernel_params(p, F, H, P, K, V_pad):
    f32 = jnp.float32
    Wrow = jnp.concatenate(
        [p['wih2_t'], p['W1_t'][F:2 * F],              # parent gather table (4H)
         p['wih1_t'], p['Wq_t'][:F], p['W1_t'][:F],    # per-step row context
         p['Wp_t'], p['Ws_t']], axis=1)                # feat proj + state init
    brow = jnp.concatenate(
        [p['bih2'], jnp.zeros((1, H), f32),
         p['bih1'], p['bq'], p['b1'],
         p['bp'], p['bs']], axis=1)
    w_tot = Wrow.shape[1]
    w_pad = _round_up(w_tot, 128)
    if w_pad != w_tot:
        Wrow = jnp.concatenate([Wrow, jnp.zeros((F, w_pad - w_tot), f32)], axis=1)
        brow = jnp.concatenate([brow, jnp.zeros((1, w_pad - w_tot), f32)], axis=1)
    V = p['W2_t'].shape[1]
    W2, b2 = p['W2_t'], p['b2']
    if V_pad != V:
        W2 = jnp.concatenate([W2, jnp.zeros((H, V_pad - V), f32)], axis=1)
        b2 = jnp.concatenate([b2, jnp.zeros((1, V_pad - V), f32)], axis=1)
    return {
        'Wrow_t': Wrow, 'brow': brow,
        'whh1_t': p['whh1_t'], 'bhh1': p['bhh1'],
        'Wns_t': jnp.concatenate([p['Wq_t'][F:], p['whh2_t']], axis=1),
        'bns': jnp.concatenate([jnp.zeros((1, P), f32), p['bhh2']], axis=1),
        'Wwt_kp': p['Wwt_kp'], 'Wcw_kp': p['Wcw_kp'],
        'bcov': p['bwt'] + p['bcw'],
        'Wl': p['Wl'], 'bl': p['bl'],
        'W1s_t': p['W1_t'][2 * F:],
        'W2_t': W2, 'b2': b2,
    }


def decoder_inference_pallas(feats_bcn, feats_mask, params, K, V):
    B, F, n = feats_bcn.shape
    N_true = n + 1
    T = n
    H = params['whh1_t'].shape[0]
    P = params['Wp_t'].shape[1]
    pad = K // 2

    # batch block: >= 8 (sublane), try for >= 2 blocks (v7x megacore), cap 64
    B8 = _round_up(B, 8)
    if B8 <= 8:
        B_BLK = 8
    else:
        B_BLK = min(64, _round_up((B8 + 1) // 2, 8))
    B_pad = _round_up(B8, B_BLK)
    n_b = B_pad // B_BLK

    # sequence lane padding: at least K//2 slack so cover-conv rolls wrap only
    # into all-zero padded columns
    N_pad = _round_up(N_true + pad, 128)
    V_pad = _round_up(V, 128)
    WRC = 3 * H + P + H

    # batch pad (zeros), then prepend the BOS position (zero feature, mask 1)
    feats_p = jnp.zeros((B_pad, F, n), jnp.float32).at[:B].set(
        feats_bcn.astype(jnp.float32))
    mask_p = jnp.zeros((B_pad, n), jnp.float32).at[:B].set(
        feats_mask.astype(jnp.float32))
    feats_p = jnp.concatenate([jnp.zeros((B_pad, F, 1), jnp.float32), feats_p],
                              axis=-1)
    mask_p = jnp.concatenate([jnp.ones((B_pad, 1), jnp.float32), mask_p], axis=-1)
    feats_bnf = jnp.transpose(feats_p, (0, 2, 1))               # (B_pad, N_true, F)
    feats_bnf = jnp.zeros((B_pad, N_pad, F), jnp.float32).at[:, :N_true].set(feats_bnf)
    mask_bn = jnp.zeros((B_pad, N_pad), jnp.float32).at[:, :N_true].set(mask_p)

    kparams = _build_kernel_params(params, F, H, P, K, V_pad)
    param_list = [kparams[name] for name in KERNEL_PARAMS]
    WROW_PAD = kparams['Wrow_t'].shape[1]

    def _const_spec(a):
        nd = a.ndim
        return pl.BlockSpec(a.shape, lambda b, _nd=nd: (0,) * _nd)

    in_specs = ([pl.BlockSpec((B_BLK, N_pad, F), lambda b: (b, 0, 0)),
                 pl.BlockSpec((B_BLK, N_pad), lambda b: (b, 0))]
                + [_const_spec(a) for a in param_list])
    out_shape = (jax.ShapeDtypeStruct((T, B_pad, V_pad), jnp.float32),
                 jax.ShapeDtypeStruct((T, B_pad, N_pad), jnp.float32))
    out_specs = (pl.BlockSpec((T, B_BLK, V_pad), lambda b: (0, b, 0)),
                 pl.BlockSpec((T, B_BLK, N_pad), lambda b: (0, b, 0)))
    scratch_shapes = [
        pltpu.VMEM((B_BLK, N_pad, WRC), jnp.float32),    # per-step row context
        pltpu.VMEM((B_BLK, N_pad, 4 * H), jnp.float32),  # parent gather table
    ]

    # VMEM budget: derived from the actual footprint (no hard-coded 48 MiB).
    fsz = 4
    param_bytes = sum(int(np.prod(a.shape)) for a in param_list) * fsz
    vmem_est = (2 * B_BLK * N_pad * (F + 1) * fsz          # feats + mask (dbl buf)
                + 2 * param_bytes
                + 2 * T * B_BLK * (V_pad + N_pad) * fsz    # outputs (dbl buf)
                + B_BLK * N_pad * (WRC + 4 * H) * fsz      # scratch tables
                + B_BLK * N_pad * WROW_PAD * fsz           # fused GEMM intermediate
                + 6 * B_BLK * P * N_pad * fsz)             # fusion temps slack
    # TODO(synk): for very long sequences on v7x (64 MiB VMEM), stream the
    # (T, B, N_pad) attention logits back to HBM per step (pl.ANY + async copy)
    # instead of keeping the whole output block VMEM-resident.
    vmem_limit = int(min(max(32 * 2 ** 20, 2 * vmem_est), 60 * 2 ** 20))

    kernel = functools.partial(decoder_kernel,
                               dims=(B_BLK, N_pad, F, H, P, K), T=T)
    cls_logits, att_logits = pl.pallas_call(
        kernel,
        out_shape=out_shape,
        grid_spec=pltpu.PrefetchScalarGridSpec(
            num_scalar_prefetch=0,
            grid=(n_b,),
            in_specs=in_specs,
            out_specs=out_specs,
            scratch_shapes=scratch_shapes),
        compiler_params=pltpu.CompilerParams(
            dimension_semantics=("parallel",),
            vmem_limit_bytes=vmem_limit),
    )(feats_bnf, mask_bn, *param_list)

    re_cls_preds = jnp.argmax(cls_logits[:, :B, :V], axis=-1).astype(jnp.int32)
    ma_att_preds = att_logits[:, :B, None, :N_true - 1]          # (T, B, 1, n)
    return re_cls_preds, ma_att_preds


# ----------------------------------------------------------------------------
# independent pure-JAX reference (direct PyTorch translation, no fusion tricks)
# ----------------------------------------------------------------------------
def decoder_inference_ref(feats_bcn, feats_mask, params, K, V):
    B, F, n = feats_bcn.shape
    N = n + 1
    T = n
    H = params['whh1_t'].shape[0]
    P = params['Wp_t'].shape[1]
    pad = K // 2
    p = params

    feats = jnp.concatenate([jnp.zeros((B, F, 1), jnp.float32),
                             feats_bcn.astype(jnp.float32)], axis=-1)  # (B,F,N)
    mask = jnp.concatenate([jnp.ones((B, 1), jnp.float32),
                            feats_mask.astype(jnp.float32)], axis=-1)  # (B,N)
    feats_nf = jnp.transpose(feats, (0, 2, 1))                         # (B,N,F)

    def conv1x1(x_bnf, w_t, b):
        return jnp.einsum('bnf,fo->bno', x_bnf, w_t) + b

    def gru_cell(x, h, wih_t, whh_t, bih, bhh):
        gi = x @ wih_t + bih
        gh = h @ whh_t + bhh
        r = jax.nn.sigmoid(gi[:, :H] + gh[:, :H])
        z = jax.nn.sigmoid(gi[:, H:2 * H] + gh[:, H:2 * H])
        c = jnp.tanh(gi[:, 2 * H:] + r * gh[:, 2 * H:])
        return (1.0 - z) * c + z * h

    def cover_conv(x_bn, w_kp, b_p):      # Conv1d(1 -> P, K, padding=K//2)
        xp = jnp.pad(x_bn, ((0, 0), (pad, pad)))
        out = jnp.zeros((B, P, N), jnp.float32) + b_p.reshape(1, P, 1)
        for k in range(K):
            out = out + xp[:, k:k + N][:, None, :] * w_kp[k].reshape(1, P, 1)
        return out

    project_feats = (jnp.transpose(conv1x1(feats_nf, p['Wp_t'], p['bp']),
                                   (0, 2, 1)) * mask[:, None, :])      # (B,P,N)
    si = conv1x1(feats_nf, p['Ws_t'], p['bs'])
    state = (jnp.sum(si * mask[:, :, None], axis=1)
             / jnp.sum(mask, axis=1, keepdims=True))
    satt = jnp.zeros((B, N), jnp.float32)
    cum = jnp.zeros((B, N), jnp.float32)
    iota = jnp.arange(N)

    cls_list, att_list = [], []
    for t in range(T):
        context = feats_nf[:, t + 1]                                   # (B, F)
        step_mask = mask * (iota <= t).astype(jnp.float32)[None, :]
        new_state = gru_cell(context, state, p['wih1_t'], p['whh1_t'],
                             p['bih1'], p['bhh1'])
        query = jnp.concatenate([context, new_state], axis=1) @ p['Wq_t'] + p['bq']
        fusion = (project_feats + query[:, :, None]
                  + cover_conv(satt, p['Wwt_kp'], p['bwt'])
                  + cover_conv(cum, p['Wcw_kp'], p['bcw']))
        att_logit = (jnp.einsum('bpn,p->bn', jnp.tanh(fusion), p['Wl'][0])
                     + p['bl'][0, 0])
        att_w = jax.nn.softmax(att_logit - (1.0 - step_mask) * 1e8, axis=1)
        cum = cum + att_w
        satt = att_w
        line_idx = jnp.argmax(att_logit[:, :t + 1], axis=1)
        parent = feats_nf[jnp.arange(B), line_idx]                     # (B, F)
        new_state2 = gru_cell(parent, new_state, p['wih2_t'], p['whh2_t'],
                              p['bih2'], p['bhh2'])
        cls_feat = jnp.concatenate([context, parent, new_state2], axis=1)
        h1 = jnp.tanh(cls_feat @ p['W1_t'] + p['b1'])
        logits = h1 @ p['W2_t'] + p['b2']
        cls_list.append(logits)
        att_list.append(att_logit)
        state = new_state2

    cls_logits = jnp.stack(cls_list)                                   # (T,B,V)
    att_logits = jnp.stack(att_list)                                   # (T,B,N)
    preds = jnp.argmax(cls_logits, axis=-1).astype(jnp.int32)
    return preds, att_logits[:, :, None, :N - 1]


if __name__ == "__main__":
    B, F, H, P, K, V, n = 2, 32, 32, 32, 3, 4, 8   # feat/state/proj dim = 32
    key = jax.random.PRNGKey(0)
    kf, kp = jax.random.split(key, 2)

    feats = jax.random.normal(kf, (B, F, n), jnp.float32)       # (B, C, N) like PyTorch
    feats_mask = jnp.concatenate(
        [jnp.ones((1, n), jnp.float32),
         jnp.concatenate([jnp.ones((1, n - 2)), jnp.zeros((1, 2))], axis=1)],
        axis=0)                                                 # (B, N)
    params = make_params(kp, F, H, P, K, V)

    preds, ma_att = decoder_inference_pallas(feats, feats_mask, params, K, V)
    preds = jax.block_until_ready(preds)
    ma_att = jax.block_until_ready(ma_att)

    ref_preds, ref_att = decoder_inference_ref(feats, feats_mask, params, K, V)
    np.testing.assert_allclose(np.asarray(ma_att), np.asarray(ref_att),
                               rtol=1e-2, atol=1e-2)
    assert np.array_equal(np.asarray(preds), np.asarray(ref_preds))

    print("KERNEL_OK")
</pallas_src>

<mosaic_0001>
module attributes {stable_mosaic.version = 11 : i64} {
  func.func @decoder_kernel(%arg0: i32, %arg1: memref<8x128x32xf32, #tpu.memory_space<vmem>>, %arg2: memref<8x128xf32, #tpu.memory_space<vmem>>, %arg3: memref<32x384xf32, #tpu.memory_space<vmem>>, %arg4: memref<1x384xf32, #tpu.memory_space<vmem>>, %arg5: memref<32x96xf32, #tpu.memory_space<vmem>>, %arg6: memref<1x96xf32, #tpu.memory_space<vmem>>, %arg7: memref<32x128xf32, #tpu.memory_space<vmem>>, %arg8: memref<1x128xf32, #tpu.memory_space<vmem>>, %arg9: memref<3x32xf32, #tpu.memory_space<vmem>>, %arg10: memref<3x32xf32, #tpu.memory_space<vmem>>, %arg11: memref<1x32xf32, #tpu.memory_space<vmem>>, %arg12: memref<1x32xf32, #tpu.memory_space<vmem>>, %arg13: memref<1x1xf32, #tpu.memory_space<vmem>>, %arg14: memref<32x32xf32, #tpu.memory_space<vmem>>, %arg15: memref<32x128xf32, #tpu.memory_space<vmem>>, %arg16: memref<1x128xf32, #tpu.memory_space<vmem>>, %arg17: memref<8x8x128xf32, #tpu.memory_space<vmem>>, %arg18: memref<8x8x128xf32, #tpu.memory_space<vmem>>, %arg19: memref<8x128x160xf32, #tpu.memory_space<vmem>>, %arg20: memref<8x128x128xf32, #tpu.memory_space<vmem>>) attributes {dimension_semantics = [#tpu.dimension_semantics<parallel>], iteration_bounds = array<i64: 1>, scalar_prefetch = 0 : i64, scratch_operands = 2 : i64, tpu.core_type = #tpu.core_type<tc>, window_params = [{transform_indices = @transform_0, window_bounds = array<i64: 8, 128, 32>}, {transform_indices = @transform_1, window_bounds = array<i64: 8, 128>}, {pipeline_mode = #tpu.pipeline_mode<synchronous>, transform_indices = @transform_2, window_bounds = array<i64: 32, 384>}, {pipeline_mode = #tpu.pipeline_mode<synchronous>, transform_indices = @transform_3, window_bounds = array<i64: 1, 384>}, {pipeline_mode = #tpu.pipeline_mode<synchronous>, transform_indices = @transform_4, window_bounds = array<i64: 32, 96>}, {pipeline_mode = #tpu.pipeline_mode<synchronous>, transform_indices = @transform_5, window_bounds = array<i64: 1, 96>}, {pipeline_mode = #tpu.pipeline_mode<synchronous>, transform_indices = @transform_6, window_bounds = array<i64: 32, 128>}, {pipeline_mode = #tpu.pipeline_mode<synchronous>, transform_indices = @transform_7, window_bounds = array<i64: 1, 128>}, {pipeline_mode = #tpu.pipeline_mode<synchronous>, transform_indices = @transform_8, window_bounds = array<i64: 3, 32>}, {pipeline_mode = #tpu.pipeline_mode<synchronous>, transform_indices = @transform_9, window_bounds = array<i64: 3, 32>}, {pipeline_mode = #tpu.pipeline_mode<synchronous>, transform_indices = @transform_10, window_bounds = array<i64: 1, 32>}, {pipeline_mode = #tpu.pipeline_mode<synchronous>, transform_indices = @transform_11, window_bounds = array<i64: 1, 32>}, {pipeline_mode = #tpu.pipeline_mode<synchronous>, transform_indices = @transform_12, window_bounds = array<i64: 1, 1>}, {pipeline_mode = #tpu.pipeline_mode<synchronous>, transform_indices = @transform_13, window_bounds = array<i64: 32, 32>}, {pipeline_mode = #tpu.pipeline_mode<synchronous>, transform_indices = @transform_14, window_bounds = array<i64: 32, 128>}, {pipeline_mode = #tpu.pipeline_mode<synchronous>, transform_indices = @transform_15, window_bounds = array<i64: 1, 128>}, {transform_indices = @transform_16, window_bounds = array<i64: 8, 8, 128>}, {transform_indices = @transform_17, window_bounds = array<i64: 8, 8, 128>}]} {
    %c0 = arith.constant 0 : index
    %c0_0 = arith.constant 0 : index
    %0 = vector.load %arg3[%c0, %c0_0] : memref<32x384xf32, #tpu.memory_space<vmem>>, vector<32x384xf32>
    %c0_1 = arith.constant 0 : index
    %c0_2 = arith.constant 0 : index
    %1 = vector.load %arg4[%c0_1, %c0_2] : memref<1x384xf32, #tpu.memory_space<vmem>>, vector<1x384xf32>
    %c0_3 = arith.constant 0 : index
    %c0_4 = arith.constant 0 : index
    %2 = vector.load %arg5[%c0_3, %c0_4] : memref<32x96xf32, #tpu.memory_space<vmem>>, vector<32x96xf32>
    %c0_5 = arith.constant 0 : index
    %c0_6 = arith.constant 0 : index
    %3 = vector.load %arg6[%c0_5, %c0_6] : memref<1x96xf32, #tpu.memory_space<vmem>>, vector<1x96xf32>
    %c0_7 = arith.constant 0 : index
    %c0_8 = arith.constant 0 : index
    %4 = vector.load %arg7[%c0_7, %c0_8] : memref<32x128xf32, #tpu.memory_space<vmem>>, vector<32x128xf32>
    %c0_9 = arith.constant 0 : index
    %c0_10 = arith.constant 0 : index
    %5 = vector.load %arg8[%c0_9, %c0_10] : memref<1x128xf32, #tpu.memory_space<vmem>>, vector<1x128xf32>
    %c0_11 = arith.constant 0 : index
    %c0_12 = arith.constant 0 : index
    %6 = vector.load %arg9[%c0_11, %c0_12] : memref<3x32xf32, #tpu.memory_space<vmem>>, vector<3x32xf32>
    %c0_13 = arith.constant 0 : index
    %c0_14 = arith.constant 0 : index
    %7 = vector.load %arg10[%c0_13, %c0_14] : memref<3x32xf32, #tpu.memory_space<vmem>>, vector<3x32xf32>
    %c0_15 = arith.constant 0 : index
    %c0_16 = arith.constant 0 : index
    %8 = vector.load %arg11[%c0_15, %c0_16] : memref<1x32xf32, #tpu.memory_space<vmem>>, vector<1x32xf32>
    %c0_17 = arith.constant 0 : index
    %c0_18 = arith.constant 0 : index
    %9 = vector.load %arg12[%c0_17, %c0_18] : memref<1x32xf32, #tpu.memory_space<vmem>>, vector<1x32xf32>
    %c0_19 = arith.constant 0 : index
    %c0_20 = arith.constant 0 : index
    %10 = vector.load %arg13[%c0_19, %c0_20] : memref<1x1xf32, #tpu.memory_space<vmem>>, vector<1x1xf32>
    %c0_21 = arith.constant 0 : index
    %c0_22 = arith.constant 0 : index
    %11 = vector.load %arg14[%c0_21, %c0_22] : memref<32x32xf32, #tpu.memory_space<vmem>>, vector<32x32xf32>
    %c0_23 = arith.constant 0 : index
    %c0_24 = arith.constant 0 : index
    %12 = vector.load %arg15[%c0_23, %c0_24] : memref<32x128xf32, #tpu.memory_space<vmem>>, vector<32x128xf32>
    %c0_25 = arith.constant 0 : index
    %c0_26 = arith.constant 0 : index
    %13 = vector.load %arg16[%c0_25, %c0_26] : memref<1x128xf32, #tpu.memory_space<vmem>>, vector<1x128xf32>
    %c0_27 = arith.constant 0 : index
    %c0_28 = arith.constant 0 : index
    %c0_29 = arith.constant 0 : index
    %14 = vector.load %arg1[%c0_27, %c0_28, %c0_29] : memref<8x128x32xf32, #tpu.memory_space<vmem>>, vector<8x128x32xf32>
    %c0_30 = arith.constant 0 : index
    %c0_31 = arith.constant 0 : index
    %15 = vector.load %arg2[%c0_30, %c0_31] : memref<8x128xf32, #tpu.memory_space<vmem>>, vector<8x128xf32>
    %16 = vector.shape_cast %14 : vector<8x128x32xf32> to vector<1024x32xf32>
    %cst = arith.constant dense<0.000000e+00> : vector<1024x384xf32>
    %17 = tpu.matmul %16, %0, %cst {dimension_numbers = #tpu.dot_dimension_numbers<[1], [0], [0], [1], [0, 0, 1, 1], [], []>} : vector<1024x32xf32>, vector<32x384xf32>, vector<1024x384xf32> -> vector<1024x384xf32>
    %18 = vector.broadcast %1 : vector<1x384xf32> to vector<1024x384xf32>
    %19 = arith.addf %17, %18 : vector<1024x384xf32>
    %20 = vector.shape_cast %19 : vector<1024x384xf32> to vector<8x128x384xf32>
    %21 = vector.extract_strided_slice %20 {offsets = [0, 0, 0], sizes = [8, 128, 128], strides = [1, 1, 1]} : vector<8x128x384xf32> to vector<8x128x128xf32>
    %c0_32 = arith.constant 0 : index
    %c0_33 = arith.constant 0 : index
    %c0_34 = arith.constant 0 : index
    %22 = vector.load %arg20[%c0_32, %c0_33, %c0_34] : memref<8x128x128xf32, #tpu.memory_space<vmem>>, vector<8x128x128xf32>
    tpu.vector_store %arg20[%c0_32, %c0_33, %c0_34], %21 {strides = array<i32>} : memref<8x128x128xf32, #tpu.memory_space<vmem>>, vector<8x128x128xf32>,
    %23 = vector.extract_strided_slice %20 {offsets = [0, 0, 128], sizes = [8, 128, 160], strides = [1, 1, 1]} : vector<8x128x384xf32> to vector<8x128x160xf32>
    %c0_35 = arith.constant 0 : index
    %c0_36 = arith.constant 0 : index
    %c0_37 = arith.constant 0 : index
    %24 = vector.load %arg19[%c0_35, %c0_36, %c0_37] : memref<8x128x160xf32, #tpu.memory_space<vmem>>, vector<8x128x160xf32>
    tpu.vector_store %arg19[%c0_35, %c0_36, %c0_37], %23 {strides = array<i32>} : memref<8x128x160xf32, #tpu.memory_space<vmem>>, vector<8x128x160xf32>,
    %25 = vector.extract_strided_slice %20 {offsets = [0, 0, 288], sizes = [8, 128, 32], strides = [1, 1, 1]} : vector<8x128x384xf32> to vector<8x128x32xf32>
    %26 = vector.shape_cast %15 : vector<8x128xf32> to vector<8x128x1xf32>
    %27 = vector.broadcast %26 : vector<8x128x1xf32> to vector<8x128x32xf32>
    %28 = arith.mulf %25, %27 : vector<8x128x32xf32>
    %29 = vector.extract_strided_slice %20 {offsets = [0, 0, 320], sizes = [8, 128, 32], strides = [1, 1, 1]} : vector<8x128x384xf32> to vector<8x128x32xf32>
    %30 = tpu.transpose %28, [0, 2, 1] : vector<8x128x32xf32> -> vector<8x32x128xf32>
    %31 = vector.shape_cast %8 : vector<1x32xf32> to vector<1x32x1xf32>
    %32 = vector.broadcast %31 : vector<1x32x1xf32> to vector<8x32x128xf32>
    %33 = arith.addf %30, %32 : vector<8x32x128xf32>
    %34 = vector.shape_cast %15 : vector<8x128xf32> to vector<8x128x1xf32>
    %35 = vector.broadcast %34 : vector<8x128x1xf32> to vector<8x128x32xf32>
    %36 = arith.mulf %29, %35 : vector<8x128x32xf32>
    %cst_38 = arith.constant dense<0.000000e+00> : vector<8x32xf32>
    %37 = vector.multi_reduction <add>, %36, %cst_38 [1] : vector<8x128x32xf32> to vector<8x32xf32>
    %cst_39 = arith.constant dense<0.000000e+00> : vector<8xf32>
    %38 = vector.multi_reduction <add>, %15, %cst_39 [1] : vector<8x128xf32> to vector<8xf32>
    %39 = vector.shape_cast %38 : vector<8xf32> to vector<8x1xf32>
    %40 = vector.broadcast %39 : vector<8x1xf32> to vector<8x32xf32>
    %41 = arith.divf %37, %40 : vector<8x32xf32>
    %42 = tpu.iota {dimensions = array<i32: 1>} : vector<8x128xi32>
    %cst_40 = arith.constant 0.000000e+00 : f32
    %43 = vector.broadcast %cst_40 : f32 to vector<8x128xf32>
    %44 = arith.cmpf ogt, %15, %43 : vector<8x128xf32>
    %cst_41 = arith.constant -1.000000e+30 : f32
    %45 = vector.broadcast %cst_41 : f32 to vector<8x128xf32>
    %46 = vector.shape_cast %9 : vector<1x32xf32> to vector<1x32x1xf32>
    %47 = vector.extract %10[0, 0] : f32 from vector<1x1xf32>
    %48 = vector.extract_strided_slice %6 {offsets = [0, 0], sizes = [1, 32], strides = [1, 1]} : vector<3x32xf32> to vector<1x32xf32>
    %49 = vector.shape_cast %48 : vector<1x32xf32> to vector<32xf32>
    %50 = vector.shape_cast %49 : vector<32xf32> to vector<1x32x1xf32>
    %51 = vector.extract_strided_slice %6 {offsets = [1, 0], sizes = [1, 32], strides = [1, 1]} : vector<3x32xf32> to vector<1x32xf32>
    %52 = vector.shape_cast %51 : vector<1x32xf32> to vector<32xf32>
    %53 = vector.shape_cast %52 : vector<32xf32> to vector<1x32x1xf32>
    %54 = vector.extract_strided_slice %6 {offsets = [2, 0], sizes = [1, 32], strides = [1, 1]} : vector<3x32xf32> to vector<1x32xf32>
    %55 = vector.shape_cast %54 : vector<1x32xf32> to vector<32xf32>
    %56 = vector.shape_cast %55 : vector<32xf32> to vector<1x32x1xf32>
    %57 = vector.extract_strided_slice %7 {offsets = [0, 0], sizes = [1, 32], strides = [1, 1]} : vector<3x32xf32> to vector<1x32xf32>
    %58 = vector.shape_cast %57 : vector<1x32xf32> to vector<32xf32>
    %59 = vector.shape_cast %58 : vector<32xf32> to vector<1x32x1xf32>
    %60 = vector.extract_strided_slice %7 {offsets = [1, 0], sizes = [1, 32], strides = [1, 1]} : vector<3x32xf32> to vector<1x32xf32>
    %61 = vector.shape_cast %60 : vector<1x32xf32> to vector<32xf32>
    %62 = vector.shape_cast %61 : vector<32xf32> to vector<1x32x1xf32>
    %63 = vector.extract_strided_slice %7 {offsets = [2, 0], sizes = [1, 32], strides = [1, 1]} : vector<3x32xf32> to vector<1x32xf32>
    %64 = vector.shape_cast %63 : vector<1x32xf32> to vector<32xf32>
    %65 = vector.shape_cast %64 : vector<32xf32> to vector<1x32x1xf32>
    %cst_42 = arith.constant 0.000000e+00 : f32
    %66 = vector.broadcast %cst_42 : f32 to vector<8x128xf32>
    %c0_i32 = arith.constant 0 : i32
    %c8_i32 = arith.constant 8 : i32
    %67 = arith.addi %c0_i32, %c8_i32 : i32
    %c1_i32 = arith.constant 1 : i32
    %68:3 = scf.for %arg21 = %c0_i32 to %67 step %c1_i32 iter_args(%arg22 = %41, %arg23 = %66, %arg24 = %66) -> (vector<8x32xf32>, vector<8x128xf32>, vector<8x128xf32>)  : i32 {
      %c1_i32_44 = arith.constant 1 : i32
      %69 = arith.addi %arg21, %c1_i32_44 : i32
      %c0_45 = arith.constant 0 : index
      %70 = arith.index_cast %69 : i32 to index
      %c0_46 = arith.constant 0 : index
      %71 = vector.load %arg19[%c0_45, %70, %c0_46] : memref<8x128x160xf32, #tpu.memory_space<vmem>>, vector<8x1x160xf32>
      %72 = vector.shape_cast %71 : vector<8x1x160xf32> to vector<8x160xf32>
      %73 = vector.extract_strided_slice %72 {offsets = [0, 0], sizes = [8, 96], strides = [1, 1]} : vector<8x160xf32> to vector<8x96xf32>
      %74 = vector.extract_strided_slice %72 {offsets = [0, 96], sizes = [8, 32], strides = [1, 1]} : vector<8x160xf32> to vector<8x32xf32>
      %75 = vector.extract_strided_slice %72 {offsets = [0, 128], sizes = [8, 32], strides = [1, 1]} : vector<8x160xf32> to vector<8x32xf32>
      %cst_47 = arith.constant dense<0.000000e+00> : vector<8x96xf32>
      %76 = tpu.matmul %arg22, %2, %cst_47 {dimension_numbers = #tpu.dot_dimension_numbers<[1], [0], [0], [1], [0, 0, 1, 1], [], []>} : vector<8x32xf32>, vector<32x96xf32>, vector<8x96xf32> -> vector<8x96xf32>
      %77 = vector.broadcast %3 : vector<1x96xf32> to vector<8x96xf32>
      %78 = arith.addf %76, %77 : vector<8x96xf32>
      %79 = vector.extract_strided_slice %73 {offsets = [0, 0], sizes = [8, 32], strides = [1, 1]} : vector<8x96xf32> to vector<8x32xf32>
      %80 = vector.extract_strided_slice %78 {offsets = [0, 0], sizes = [8, 32], strides = [1, 1]} : vector<8x96xf32> to vector<8x32xf32>
      %81 = arith.addf %79, %80 : vector<8x32xf32>
      %82 = arith.negf %81 : vector<8x32xf32>
      %83 = math.exp %82 : vector<8x32xf32>
      %cst_48 = arith.constant 1.000000e+00 : f32
      %84 = vector.broadcast %cst_48 : f32 to vector<8x32xf32>
      %85 = arith.addf %84, %83 : vector<8x32xf32>
      %86 = arith.divf %84, %85 : vector<8x32xf32>
      %87 = vector.extract_strided_slice %73 {offsets = [0, 32], sizes = [8, 32], strides = [1, 1]} : vector<8x96xf32> to vector<8x32xf32>
      %88 = vector.extract_strided_slice %78 {offsets = [0, 32], sizes = [8, 32], strides = [1, 1]} : vector<8x96xf32> to vector<8x32xf32>
      %89 = arith.addf %87, %88 : vector<8x32xf32>
      %90 = arith.negf %89 : vector<8x32xf32>
      %91 = math.exp %90 : vector<8x32xf32>
      %cst_49 = arith.constant 1.000000e+00 : f32
      %92 = vector.broadcast %cst_49 : f32 to vector<8x32xf32>
      %93 = arith.addf %92, %91 : vector<8x32xf32>
      %94 = arith.divf %92, %93 : vector<8x32xf32>
      %95 = vector.extract_strided_slice %73 {offsets = [0, 64], sizes = [8, 32], strides = [1, 1]} : vector<8x96xf32> to vector<8x32xf32>
      %96 = vector.extract_strided_slice %78 {offsets = [0, 64], sizes = [8, 32], strides = [1, 1]} : vector<8x96xf32> to vector<8x32xf32>
      %97 = arith.mulf %86, %96 : vector<8x32xf32>
      %98 = arith.addf %95, %97 : vector<8x32xf32>
      %99 = math.tanh %98 : vector<8x32xf32>
      %cst_50 = arith.constant 1.000000e+00 : f32
      %100 = vector.broadcast %cst_50 : f32 to vector<8x32xf32>
      %101 = arith.subf %100, %94 : vector<8x32xf32>
      %102 = arith.mulf %101, %99 : vector<8x32xf32>
      %103 = arith.mulf %94, %arg22 : vector<8x32xf32>
      %104 = arith.addf %102, %103 : vector<8x32xf32>
      %cst_51 = arith.constant dense<0.000000e+00> : vector<8x128xf32>
      %105 = tpu.matmul %104, %4, %cst_51 {dimension_numbers = #tpu.dot_dimension_numbers<[1], [0], [0], [1], [0, 0, 1, 1], [], []>} : vector<8x32xf32>, vector<32x128xf32>, vector<8x128xf32> -> vector<8x128xf32>
      %106 = vector.broadcast %5 : vector<1x128xf32> to vector<8x128xf32>
      %107 = arith.addf %105, %106 : vector<8x128xf32>
      %108 = vector.extract_strided_slice %107 {offsets = [0, 0], sizes = [8, 32], strides = [1, 1]} : vector<8x128xf32> to vector<8x32xf32>
      %109 = arith.addf %74, %108 : vector<8x32xf32>
      %110 = vector.extract_strided_slice %107 {offsets = [0, 32], sizes = [8, 96], strides = [1, 1]} : vector<8x128xf32> to vector<8x96xf32>
      %111 = vector.shape_cast %109 : vector<8x32xf32> to vector<8x32x1xf32>
      %112 = vector.broadcast %111 : vector<8x32x1xf32> to vector<8x32x128xf32>
      %113 = arith.addf %33, %112 : vector<8x32x128xf32>
      %c1_i32_52 = arith.constant 1 : i32
      %114 = tpu.dynamic_rotate %arg23 by %c1_i32_52 dim 1 : vector<8x128xf32>, i32 -> vector<8x128xf32>
      %115 = vector.shape_cast %114 : vector<8x128xf32> to vector<8x1x128xf32>
      %116 = vector.broadcast %115 : vector<8x1x128xf32> to vector<8x32x128xf32>
      %117 = vector.broadcast %50 : vector<1x32x1xf32> to vector<8x32x128xf32>
      %118 = arith.mulf %116, %117 : vector<8x32x128xf32>
      %119 = arith.addf %113, %118 : vector<8x32x128xf32>
      %c1_i32_53 = arith.constant 1 : i32
      %120 = tpu.dynamic_rotate %arg24 by %c1_i32_53 dim 1 : vector<8x128xf32>, i32 -> vector<8x128xf32>
      %121 = vector.shape_cast %120 : vector<8x128xf32> to vector<8x1x128xf32>
      %122 = vector.broadcast %121 : vector<8x1x128xf32> to vector<8x32x128xf32>
      %123 = vector.broadcast %59 : vector<1x32x1xf32> to vector<8x32x128xf32>
      %124 = arith.mulf %122, %123 : vector<8x32x128xf32>
      %125 = arith.addf %119, %124 : vector<8x32x128xf32>
      %126 = vector.shape_cast %arg23 : vector<8x128xf32> to vector<8x1x128xf32>
      %127 = vector.broadcast %126 : vector<8x1x128xf32> to vector<8x32x128xf32>
      %128 = vector.broadcast %53 : vector<1x32x1xf32> to vector<8x32x128xf32>
      %129 = arith.mulf %127, %128 : vector<8x32x128xf32>
      %130 = arith.addf %125, %129 : vector<8x32x128xf32>
      %131 = vector.shape_cast %arg24 : vector<8x128xf32> to vector<8x1x128xf32>
      %132 = vector.broadcast %131 : vector<8x1x128xf32> to vector<8x32x128xf32>
      %133 = vector.broadcast %62 : vector<1x32x1xf32> to vector<8x32x128xf32>
      %134 = arith.mulf %132, %133 : vector<8x32x128xf32>
      %135 = arith.addf %130, %134 : vector<8x32x128xf32>
      %c127_i32 = arith.constant 127 : i32
      %136 = tpu.dynamic_rotate %arg23 by %c127_i32 dim 1 : vector<8x128xf32>, i32 -> vector<8x128xf32>
      %137 = vector.shape_cast %136 : vector<8x128xf32> to vector<8x1x128xf32>
      %138 = vector.broadcast %137 : vector<8x1x128xf32> to vector<8x32x128xf32>
      %139 = vector.broadcast %56 : vector<1x32x1xf32> to vector<8x32x128xf32>
      %140 = arith.mulf %138, %139 : vector<8x32x128xf32>
      %141 = arith.addf %135, %140 : vector<8x32x128xf32>
      %c127_i32_54 = arith.constant 127 : i32
      %142 = tpu.dynamic_rotate %arg24 by %c127_i32_54 dim 1 : vector<8x128xf32>, i32 -> vector<8x128xf32>
      %143 = vector.shape_cast %142 : vector<8x128xf32> to vector<8x1x128xf32>
      %144 = vector.broadcast %143 : vector<8x1x128xf32> to vector<8x32x128xf32>
      %145 = vector.broadcast %65 : vector<1x32x1xf32> to vector<8x32x128xf32>
      %146 = arith.mulf %144, %145 : vector<8x32x128xf32>
      %147 = arith.addf %141, %146 : vector<8x32x128xf32>
      %148 = math.tanh %147 : vector<8x32x128xf32>
      %149 = vector.broadcast %46 : vector<1x32x1xf32> to vector<8x32x128xf32>
      %150 = arith.mulf %148, %149 : vector<8x32x128xf32>
      %cst_55 = arith.constant dense<0.000000e+00> : vector<8x128xf32>
      %151 = vector.multi_reduction <add>, %150, %cst_55 [1] : vector<8x32x128xf32> to vector<8x128xf32>
      %152 = vector.broadcast %47 : f32 to vector<8x128xf32>
      %153 = arith.addf %151, %152 : vector<8x128xf32>
      %154 = vector.broadcast %arg21 : i32 to vector<8x128xi32>
      %155 = arith.cmpi sle, %42, %154 : vector<8x128xi32>
      %156 = arith.andi %44, %155 : vector<8x128xi1>
      %157 = arith.select %156, %153, %45 : vector<8x128xi1>, vector<8x128xf32>
      %cst_56 = arith.constant dense<0xFF800000> : vector<8xf32>
      %158 = vector.multi_reduction <maximumf>, %157, %cst_56 [1] : vector<8x128xf32> to vector<8xf32>
      %159 = vector.shape_cast %158 : vector<8xf32> to vector<8x1xf32>
      %160 = vector.broadcast %159 : vector<8x1xf32> to vector<8x128xf32>
      %161 = arith.subf %153, %160 : vector<8x128xf32>
      %162 = math.exp %161 : vector<8x128xf32>
      %cst_57 = arith.constant 0.000000e+00 : f32
      %163 = vector.broadcast %cst_57 : f32 to vector<8x128xf32>
      %164 = arith.select %156, %162, %163 : vector<8x128xi1>, vector<8x128xf32>
      %cst_58 = arith.constant dense<0.000000e+00> : vector<8xf32>
      %165 = vector.multi_reduction <add>, %164, %cst_58 [1] : vector<8x128xf32> to vector<8xf32>
      %166 = vector.shape_cast %165 : vector<8xf32> to vector<8x1xf32>
      %167 = vector.broadcast %166 : vector<8x1xf32> to vector<8x128xf32>
      %168 = arith.divf %164, %167 : vector<8x128xf32>
      %169 = arith.addf %arg24, %168 : vector<8x128xf32>
      %170 = vector.broadcast %arg21 : i32 to vector<8x128xi32>
      %171 = arith.cmpi sle, %42, %170 : vector<8x128xi32>
      %172 = arith.select %171, %153, %45 : vector<8x128xi1>, vector<8x128xf32>
      %cst_59 = arith.constant dense<0xFF800000> : vector<8xf32>
      %173 = vector.multi_reduction <maximumf>, %172, %cst_59 [1] : vector<8x128xf32> to vector<8xf32>
      %174 = vector.shape_cast %173 : vector<8xf32> to vector<8x1xf32>
      %175 = vector.broadcast %174 : vector<8x1xf32> to vector<8x128xf32>
      %176 = arith.cmpf oge, %172, %175 : vector<8x128xf32>
      %c128_i32 = arith.constant 128 : i32
      %177 = vector.broadcast %c128_i32 : i32 to vector<8x128xi32>
      %178 = arith.select %176, %42, %177 : vector<8x128xi1>, vector<8x128xi32>
      %cst_60 = arith.constant dense<2147483647> : vector<8xi32>
      %179 = vector.multi_reduction <minsi>, %178, %cst_60 [1] : vector<8x128xi32> to vector<8xi32>
      %180 = vector.shape_cast %179 : vector<8xi32> to vector<8x1xi32>
      %181 = vector.broadcast %180 : vector<8x1xi32> to vector<8x128xi32>
      %182 = arith.cmpi eq, %42, %181 : vector<8x128xi32>
      %183 = arith.extui %182 : vector<8x128xi1> to vector<8x128xi32>
      %184 = arith.sitofp %183 : vector<8x128xi32> to vector<8x128xf32>
      %185 = vector.shape_cast %184 : vector<8x128xf32> to vector<8x128x1xf32>
      %c0_61 = arith.constant 0 : index
      %c0_62 = arith.constant 0 : index
      %c0_63 = arith.constant 0 : index
      %186 = vector.load %arg20[%c0_61, %c0_62, %c0_63] : memref<8x128x128xf32, #tpu.memory_space<vmem>>, vector<8x128x128xf32>
      %187 = vector.broadcast %185 : vector<8x128x1xf32> to vector<8x128x128xf32>
      %188 = arith.mulf %187, %186 : vector<8x128x128xf32>
      %cst_64 = arith.constant dense<0.000000e+00> : vector<8x128xf32>
      %189 = vector.multi_reduction <add>, %188, %cst_64 [1] : vector<8x128x128xf32> to vector<8x128xf32>
      %190 = vector.extract_strided_slice %189 {offsets = [0, 0], sizes = [8, 96], strides = [1, 1]} : vector<8x128xf32> to vector<8x96xf32>
      %191 = vector.extract_strided_slice %189 {offsets = [0, 96], sizes = [8, 32], strides = [1, 1]} : vector<8x128xf32> to vector<8x32xf32>
      %192 = vector.extract_strided_slice %190 {offsets = [0, 0], sizes = [8, 32], strides = [1, 1]} : vector<8x96xf32> to vector<8x32xf32>
      %193 = vector.extract_strided_slice %110 {offsets = [0, 0], sizes = [8, 32], strides = [1, 1]} : vector<8x96xf32> to vector<8x32xf32>
      %194 = arith.addf %192, %193 : vector<8x32xf32>
      %195 = arith.negf %194 : vector<8x32xf32>
      %196 = math.exp %195 : vector<8x32xf32>
      %cst_65 = arith.constant 1.000000e+00 : f32
      %197 = vector.broadcast %cst_65 : f32 to vector<8x32xf32>
      %198 = arith.addf %197, %196 : vector<8x32xf32>
      %199 = arith.divf %197, %198 : vector<8x32xf32>
      %200 = vector.extract_strided_slice %190 {offsets = [0, 32], sizes = [8, 32], strides = [1, 1]} : vector<8x96xf32> to vector<8x32xf32>
      %201 = vector.extract_strided_slice %110 {offsets = [0, 32], sizes = [8, 32], strides = [1, 1]} : vector<8x96xf32> to vector<8x32xf32>
      %202 = arith.addf %200, %201 : vector<8x32xf32>
      %203 = arith.negf %202 : vector<8x32xf32>
      %204 = math.exp %203 : vector<8x32xf32>
      %cst_66 = arith.constant 1.000000e+00 : f32
      %205 = vector.broadcast %cst_66 : f32 to vector<8x32xf32>
      %206 = arith.addf %205, %204 : vector<8x32xf32>
      %207 = arith.divf %205, %206 : vector<8x32xf32>
      %208 = vector.extract_strided_slice %190 {offsets = [0, 64], sizes = [8, 32], strides = [1, 1]} : vector<8x96xf32> to vector<8x32xf32>
      %209 = vector.extract_strided_slice %110 {offsets = [0, 64], sizes = [8, 32], strides = [1, 1]} : vector<8x96xf32> to vector<8x32xf32>
      %210 = arith.mulf %199, %209 : vector<8x32xf32>
      %211 = arith.addf %208, %210 : vector<8x32xf32>
      %212 = math.tanh %211 : vector<8x32xf32>
      %cst_67 = arith.constant 1.000000e+00 : f32
      %213 = vector.broadcast %cst_67 : f32 to vector<8x32xf32>
      %214 = arith.subf %213, %207 : vector<8x32xf32>
      %215 = arith.mulf %214, %212 : vector<8x32xf32>
      %216 = arith.mulf %207, %104 : vector<8x32xf32>
      %217 = arith.addf %215, %216 : vector<8x32xf32>
      %218 = arith.addf %75, %191 : vector<8x32xf32>
      %cst_68 = arith.constant dense<0.000000e+00> : vector<8x32xf32>
      %219 = tpu.matmul %217, %11, %cst_68 {dimension_numbers = #tpu.dot_dimension_numbers<[1], [0], [0], [1], [0, 0, 1, 1], [], []>} : vector<8x32xf32>, vector<32x32xf32>, vector<8x32xf32> -> vector<8x32xf32>
      %220 = arith.addf %218, %219 : vector<8x32xf32>
      %221 = math.tanh %220 : vector<8x32xf32>
      %cst_69 = arith.constant dense<0.000000e+00> : vector<8x128xf32>
      %222 = tpu.matmul %221, %12, %cst_69 {dimension_numbers = #tpu.dot_dimension_numbers<[1], [0], [0], [1], [0, 0, 1, 1], [], []>} : vector<8x32xf32>, vector<32x128xf32>, vector<8x128xf32> -> vector<8x128xf32>
      %223 = vector.broadcast %13 : vector<1x128xf32> to vector<8x128xf32>
      %224 = arith.addf %222, %223 : vector<8x128xf32>
      %225 = vector.shape_cast %224 : vector<8x128xf32> to vector<1x8x128xf32>
      %226 = arith.index_cast %arg21 : i32 to index
      %c0_70 = arith.constant 0 : index
      %c0_71 = arith.constant 0 : index
      %227 = vector.load %arg17[%226, %c0_70, %c0_71] : memref<8x8x128xf32, #tpu.memory_space<vmem>>, vector<1x8x128xf32>
      tpu.vector_store %arg17[%226, %c0_70, %c0_71], %225 {strides = array<i32>} : memref<8x8x128xf32, #tpu.memory_space<vmem>>, vector<1x8x128xf32>,
      %228 = vector.shape_cast %153 : vector<8x128xf32> to vector<1x8x128xf32>
      %229 = arith.index_cast %arg21 : i32 to index
      %c0_72 = arith.constant 0 : index
      %c0_73 = arith.constant 0 : index
      %230 = vector.load %arg18[%229, %c0_72, %c0_73] : memref<8x8x128xf32, #tpu.memory_space<vmem>>, vector<1x8x128xf32>
      tpu.vector_store %arg18[%229, %c0_72, %c0_73], %228 {strides = array<i32>} : memref<8x8x128xf32, #tpu.memory_space<vmem>>, vector<1x8x128xf32>,
      scf.yield %217, %168, %169 : vector<8x32xf32>, vector<8x128xf32>, vector<8x128xf32>
    }
    %c8_i32_43 = arith.constant 8 : i32
    return
  }
  func.func @transform_0(%arg0: i32) -> (i32, i32, i32) {
    %c0_i32 = arith.constant 0 : i32
    %c0_i32_0 = arith.constant 0 : i32
    %c0_i32_1 = arith.constant 0 : i32
    return %arg0, %c0_i32, %c0_i32_0 : i32, i32, i32
  }
  func.func @transform_1(%arg0: i32) -> (i32, i32) {
    %c0_i32 = arith.constant 0 : i32
    %c0_i32_0 = arith.constant 0 : i32
    return %arg0, %c0_i32 : i32, i32
  }
  func.func @transform_2(%arg0: i32) -> (i32, i32) {
    %c0_i32 = arith.constant 0 : i32
    %c0_i32_0 = arith.constant 0 : i32
    %c0_i32_1 = arith.constant 0 : i32
    return %c0_i32, %c0_i32_0 : i32, i32
  }
  func.func @transform_3(%arg0: i32) -> (i32, i32) {
    %c0_i32 = arith.constant 0 : i32
    %c0_i32_0 = arith.constant 0 : i32
    %c0_i32_1 = arith.constant 0 : i32
    return %c0_i32, %c0_i32_0 : i32, i32
  }
  func.func @transform_4(%arg0: i32) -> (i32, i32) {
    %c0_i32 = arith.constant 0 : i32
    %c0_i32_0 = arith.constant 0 : i32
    %c0_i32_1 = arith.constant 0 : i32
    return %c0_i32, %c0_i32_0 : i32, i32
  }
  func.func @transform_5(%arg0: i32) -> (i32, i32) {
    %c0_i32 = arith.constant 0 : i32
    %c0_i32_0 = arith.constant 0 : i32
    %c0_i32_1 = arith.constant 0 : i32
    return %c0_i32, %c0_i32_0 : i32, i32
  }
  func.func @transform_6(%arg0: i32) -> (i32, i32) {
    %c0_i32 = arith.constant 0 : i32
    %c0_i32_0 = arith.constant 0 : i32
    %c0_i32_1 = arith.constant 0 : i32
    return %c0_i32, %c0_i32_0 : i32, i32
  }
  func.func @transform_7(%arg0: i32) -> (i32, i32) {
    %c0_i32 = arith.constant 0 : i32
    %c0_i32_0 = arith.constant 0 : i32
    %c0_i32_1 = arith.constant 0 : i32
    return %c0_i32, %c0_i32_0 : i32, i32
  }
  func.func @transform_8(%arg0: i32) -> (i32, i32) {
    %c0_i32 = arith.constant 0 : i32
    %c0_i32_0 = arith.constant 0 : i32
    %c0_i32_1 = arith.constant 0 : i32
    return %c0_i32, %c0_i32_0 : i32, i32
  }
  func.func @transform_9(%arg0: i32) -> (i32, i32) {
    %c0_i32 = arith.constant 0 : i32
    %c0_i32_0 = arith.constant 0 : i32
    %c0_i32_1 = arith.constant 0 : i32
    return %c0_i32, %c0_i32_0 : i32, i32
  }
  func.func @transform_10(%arg0: i32) -> (i32, i32) {
    %c0_i32 = arith.constant 0 : i32
    %c0_i32_0 = arith.constant 0 : i32
    %c0_i32_1 = arith.constant 0 : i32
    return %c0_i32, %c0_i32_0 : i32, i32
  }
  func.func @transform_11(%arg0: i32) -> (i32, i32) {
    %c0_i32 = arith.constant 0 : i32
    %c0_i32_0 = arith.constant 0 : i32
    %c0_i32_1 = arith.constant 0 : i32
    return %c0_i32, %c0_i32_0 : i32, i32
  }
  func.func @transform_12(%arg0: i32) -> (i32, i32) {
    %c0_i32 = arith.constant 0 : i32
    %c0_i32_0 = arith.constant 0 : i32
    %c0_i32_1 = arith.constant 0 : i32
    return %c0_i32, %c0_i32_0 : i32, i32
  }
  func.func @transform_13(%arg0: i32) -> (i32, i32) {
    %c0_i32 = arith.constant 0 : i32
    %c0_i32_0 = arith.constant 0 : i32
    %c0_i32_1 = arith.constant 0 : i32
    return %c0_i32, %c0_i32_0 : i32, i32
  }
  func.func @transform_14(%arg0: i32) -> (i32, i32) {
    %c0_i32 = arith.constant 0 : i32
    %c0_i32_0 = arith.constant 0 : i32
    %c0_i32_1 = arith.constant 0 : i32
    return %c0_i32, %c0_i32_0 : i32, i32
  }
  func.func @transform_15(%arg0: i32) -> (i32, i32) {
    %c0_i32 = arith.constant 0 : i32
    %c0_i32_0 = arith.constant 0 : i32
    %c0_i32_1 = arith.constant 0 : i32
    return %c0_i32, %c0_i32_0 : i32, i32
  }
  func.func @transform_16(%arg0: i32) -> (i32, i32, i32) {
    %c0_i32 = arith.constant 0 : i32
    %c0_i32_0 = arith.constant 0 : i32
    %c0_i32_1 = arith.constant 0 : i32
    return %c0_i32, %arg0, %c0_i32_0 : i32, i32, i32
  }
  func.func @transform_17(%arg0: i32) -> (i32, i32, i32) {
    %c0_i32 = arith.constant 0 : i32
    %c0_i32_0 = arith.constant 0 : i32
    %c0_i32_1 = arith.constant 0 : i32
    return %c0_i32, %arg0, %c0_i32_0 : i32, i32, i32
  }
}

</mosaic_0001>

<llo_original>
// kernel: tpu_custom_call.1
$region0: #{tpu_custom_call.1}
  #allocation0 [shape = 'u32[]', space=smem, size = 0x4, offset = 0x4, fixed_abs, tag = 'smem constant byte address 0x4 - core index']
  #allocation1 [shape = 'u32[72,128]{1,0:T(1,128)}', space=vmem, size = 0x9000, scoped, tag = 'internal scratch']
  #allocation2 [shape = 'f32[8,128,160]{2,1,0:T(8,128)}', space=vmem, size = 0x100000, scoped, tag = 'scratch operand']
  #allocation3 [shape = 'f32[8,128,128]{2,1,0:T(8,128)}', space=vmem, size = 0x80000, scoped, tag = 'scratch operand']
  #allocation4 [shape = 'f32[1,1]{1,0:T(1,128)S(1)}', space=vmem, size = 0x200, scoped, tag = 'scoped memory for tpu_custom_call.1']
  %s0 = inlined_call_operand.vmem [shape: f32[8,128,32], index: 0, kind: input, shape index: {}]
  %s1 = inlined_call_operand.vmem [shape: f32[8,128], index: 1, kind: input, shape index: {}]
  %s2 = inlined_call_operand.vmem [shape: f32[32,384], index: 2, kind: input, shape index: {}]
  %s3 = inlined_call_operand.vmem [shape: f32[1,384], index: 3, kind: input, shape index: {}]
  %s4 = inlined_call_operand.vmem [shape: f32[32,96], index: 4, kind: input, shape index: {}]
  %s5 = inlined_call_operand.vmem [shape: f32[1,96], index: 5, kind: input, shape index: {}]
  %s6 = inlined_call_operand.vmem [shape: f32[32,128], index: 6, kind: input, shape index: {}]
  %s7 = inlined_call_operand.vmem [shape: f32[1,128], index: 7, kind: input, shape index: {}]
  %s8 = inlined_call_operand.vmem [shape: f32[3,32], index: 8, kind: input, shape index: {}]
  %s9 = inlined_call_operand.vmem [shape: f32[3,32], index: 9, kind: input, shape index: {}]
  %s10 = inlined_call_operand.vmem [shape: f32[1,32], index: 10, kind: input, shape index: {}]
  %s11 = inlined_call_operand.vmem [shape: f32[1,32], index: 11, kind: input, shape index: {}]
  %s12 = inlined_call_operand.<no memory space> [shape: f32[1,1], index: 12, kind: input, shape index: {}]
  %s13 = inlined_call_operand.vmem [shape: f32[32,32], index: 13, kind: input, shape index: {}]
  %s14 = inlined_call_operand.vmem [shape: f32[32,128], index: 14, kind: input, shape index: {}]
  %s15 = inlined_call_operand.vmem [shape: f32[1,128], index: 15, kind: input, shape index: {}]
  %s16 = inlined_call_operand.hbm [shape: f32[8,8,128], index: 16, kind: output, shape index: {0}]
  %s17 = inlined_call_operand.hbm [shape: f32[8,8,128], index: 17, kind: output, shape index: {1}]
  %18 = xla_tuple %s16, %s17
  %s19 = sld [smem:[#allocation0]]
  $region89: #{tpu_custom_call.1} parent=0
    _
  %s21 = ssub.s32 1, %s19
  %s22 = scalar_select 0, %s21, %s19
  %v23 = vstv %s12
  %24 = vst [vmem:[#allocation4] sm:$0x1] %v23
  $region1: #{tpu_custom_call.1} parent=0
    #allocation5 [shape = 'u8[32768]{0}', space=vmem, size = 0x8000, scoped, tag = 'output window, operand 0, single buffered']
    #allocation6 [shape = 's32[1]{0}', space=sflag, size = 0x4, scoped, tag = 'scoped memory for tpu_custom_call.1']
    #allocation7 [shape = 'u8[32768]{0}', space=vmem, size = 0x8000, scoped, tag = 'output window, operand 1, single buffered']
    #allocation8 [shape = 's32[1]{0}', space=sflag, size = 0x4, scoped, tag = 'scoped memory for tpu_custom_call.1']
    %25 = vsyncpa [#allocation6], 0
    %26 = vsyncpa [#allocation8], 0
    // Predicated region
    $region2: #{tpu_custom_call.1} parent=1 // pred_check
      _
    $region3: #{tpu_custom_call.1} parent=1 // pred_check_branch
      %28 = sbr.rel (0) target = $region5
    $region4: #{tpu_custom_call.1} parent=1 // pred_region
      _
    $region5: #{tpu_custom_call.1} parent=1 // pred_fallthru
      _
    // Predicated region
    $region6: #{tpu_custom_call.1} parent=1 // pred_check
      _
    $region7: #{tpu_custom_call.1} parent=1 // pred_check_branch
      %30 = sbr.rel (0) target = $region9
    $region8: #{tpu_custom_call.1} parent=1 // pred_region
      _
    $region9: #{tpu_custom_call.1} parent=1 // pred_fallthru
      _
    // Predicated region
    $region10: #{tpu_custom_call.1} parent=1 // pred_check
      _
    $region11: #{tpu_custom_call.1} parent=1 // pred_check_branch
      %32 = sbr.rel (0) target = $region13
    $region12: #{tpu_custom_call.1} parent=1 // pred_region
      _
    $region13: #{tpu_custom_call.1} parent=1 // pred_fallthru
      _
    // Predicated region
    $region14: #{tpu_custom_call.1} parent=1 // pred_check
      _
    $region15: #{tpu_custom_call.1} parent=1 // pred_check_branch
      %34 = sbr.rel (0) target = $region17
    $region16: #{tpu_custom_call.1} parent=1 // pred_region
      _
    $region17: #{tpu_custom_call.1} parent=1 // pred_fallthru
      _
    // Predicated region
    $region18: #{tpu_custom_call.1} parent=1 // pred_check
      _
    $region19: #{tpu_custom_call.1} parent=1 // pred_check_branch
      %36 = sbr.rel (0) target = $region21
    $region20: #{tpu_custom_call.1} parent=1 // pred_region
      _
    $region21: #{tpu_custom_call.1} parent=1 // pred_fallthru
      _
    // Predicated region
    $region22: #{tpu_custom_call.1} parent=1 // pred_check
      _
    $region23: #{tpu_custom_call.1} parent=1 // pred_check_branch
      %38 = sbr.rel (0) target = $region25
    $region24: #{tpu_custom_call.1} parent=1 // pred_region
      _
    $region25: #{tpu_custom_call.1} parent=1 // pred_fallthru
      _
    // Predicated region
    $region26: #{tpu_custom_call.1} parent=1 // pred_check
      _
    $region27: #{tpu_custom_call.1} parent=1 // pred_check_branch
      %40 = sbr.rel (0) target = $region29
    $region28: #{tpu_custom_call.1} parent=1 // pred_region
      _
    $region29: #{tpu_custom_call.1} parent=1 // pred_fallthru
      _
    // Predicated region
    $region30: #{tpu_custom_call.1} parent=1 // pred_check
      _
    $region31: #{tpu_custom_call.1} parent=1 // pred_check_branch
      %42 = sbr.rel (0) target = $region33
    $region32: #{tpu_custom_call.1} parent=1 // pred_region
      _
    $region33: #{tpu_custom_call.1} parent=1 // pred_fallthru
      _
    // Predicated region
    $region34: #{tpu_custom_call.1} parent=1 // pred_check
      _
    $region35: #{tpu_custom_call.1} parent=1 // pred_check_branch
      %44 = sbr.rel (0) target = $region37
    $region36: #{tpu_custom_call.1} parent=1 // pred_region
      _
    $region37: #{tpu_custom_call.1} parent=1 // pred_fallthru
      _
    // Predicated region
    $region38: #{tpu_custom_call.1} parent=1 // pred_check
      _
    $region39: #{tpu_custom_call.1} parent=1 // pred_check_branch
      %46 = sbr.rel (0) target = $region41
    $region40: #{tpu_custom_call.1} parent=1 // pred_region
      _
    $region41: #{tpu_custom_call.1} parent=1 // pred_fallthru
      _
    // Predicated region
    $region42: #{tpu_custom_call.1} parent=1 // pred_check
      _
    $region43: #{tpu_custom_call.1} parent=1 // pred_check_branch
      %48 = sbr.rel (0) target = $region45
    $region44: #{tpu_custom_call.1} parent=1 // pred_region
      _
    $region45: #{tpu_custom_call.1} parent=1 // pred_fallthru
      _
    // Predicated region
    $region46: #{tpu_custom_call.1} parent=1 // pred_check
      _
    $region47: #{tpu_custom_call.1} parent=1 // pred_check_branch
      %50 = sbr.rel (0) target = $region49
    $region48: #{tpu_custom_call.1} parent=1 // pred_region
      _
    $region49: #{tpu_custom_call.1} parent=1 // pred_fallthru
      _
    // Predicated region
    $region50: #{tpu_custom_call.1} parent=1 // pred_check
      _
    $region51: #{tpu_custom_call.1} parent=1 // pred_check_branch
      %52 = sbr.rel (0) target = $region53
    $region52: #{tpu_custom_call.1} parent=1 // pred_region
      _
    $region53: #{tpu_custom_call.1} parent=1 // pred_fallthru
      _
    // Predicated region
    $region54: #{tpu_custom_call.1} parent=1 // pred_check
      _
    $region55: #{tpu_custom_call.1} parent=1 // pred_check_branch
      %54 = sbr.rel (0) target = $region57
    $region56: #{tpu_custom_call.1} parent=1 // pred_region
      _
    $region57: #{tpu_custom_call.1} parent=1 // pred_fallthru
      _
    // Predicated region
    $region58: #{tpu_custom_call.1} parent=1 // pred_check
      _
    $region59: #{tpu_custom_call.1} parent=1 // pred_check_branch
      %56 = sbr.rel (0) target = $region61
    $region60: #{tpu_custom_call.1} parent=1 // pred_region
      _
    $region61: #{tpu_custom_call.1} parent=1 // pred_fallthru
      _
    // Predicated region
    $region62: #{tpu_custom_call.1} parent=1 // pred_check
      _
    $region63: #{tpu_custom_call.1} parent=1 // pred_check_branch
      %58 = sbr.rel (0) target = $region65
    $region64: #{tpu_custom_call.1} parent=1 // pred_region
      _
    $region65: #{tpu_custom_call.1} parent=1 // pred_fallthru
      _
    %v59 = vld [vmem:[%s2] sm:$0xff]
    %v60 = vld [vmem:[%s2 + $0x8] sm:$0xff]
    %v61 = vld [vmem:[%s2 + $0x10] sm:$0xff]
    %v62 = vld [vmem:[%s2 + $0x18] sm:$0xff]
    %v63 = vld [vmem:[%s2 + $0x20] sm:$0xff]
    %v64 = vld [vmem:[%s2 + $0x28] sm:$0xff]
    %v65 = vld [vmem:[%s2 + $0x30] sm:$0xff]
    %v66 = vld [vmem:[%s2 + $0x38] sm:$0xff]
    %v67 = vld [vmem:[%s2 + $0x40] sm:$0xff]
    %v68 = vld [vmem:[%s2 + $0x48] sm:$0xff]
    %v69 = vld [vmem:[%s2 + $0x50] sm:$0xff]
    %v70 = vld [vmem:[%s2 + $0x58] sm:$0xff]
    %v71 = vld [vmem:[%s3] sm:$0x7]
    %v72 = vld [vmem:[%s4] sm:$0xff]
    %v73 = vld [vmem:[%s4 + $0x8] sm:$0xff]
    %v74 = vld [vmem:[%s4 + $0x10] sm:$0xff]
    %v75 = vld [vmem:[%s4 + $0x18] sm:$0xff]
    %v76 = vld [vmem:[%s5] sm:$0x1]
    %v77 = vld [vmem:[%s6] sm:$0xff]
    %v78 = vld [vmem:[%s6 + $0x8] sm:$0xff]
    %v79 = vld [vmem:[%s6 + $0x10] sm:$0xff]
    %v80 = vld [vmem:[%s6 + $0x18] sm:$0xff]
    %v81 = vld [vmem:[%s7] sm:$0x1]
    %v82 = vld [vmem:[%s8] sm:$0x7]
    %v83 = vld [vmem:[%s9] sm:$0x7]
    %v84 = vld [vmem:[%s10] sm:$0x1]
    %v85 = vld [vmem:[%s11] sm:$0x1]
    %v86 = vld [vmem:[#allocation4] sm:$0x1]
    %v87 = vld [vmem:[%s13] sm:$0xff]
    %v88 = vld [vmem:[%s13 + $0x8] sm:$0xff]
    %v89 = vld [vmem:[%s13 + $0x10] sm:$0xff]
    %v90 = vld [vmem:[%s13 + $0x18] sm:$0xff]
    %v91 = vld [vmem:[%s14] sm:$0xff]
    %v92 = vld [vmem:[%s14 + $0x8] sm:$0xff]
    %v93 = vld [vmem:[%s14 + $0x10] sm:$0xff]
    %v94 = vld [vmem:[%s14 + $0x18] sm:$0xff]
    %v95 = vld [vmem:[%s15] sm:$0x1]
    %v96 = vld [vmem:[%s0] sm:$0xff]
    %v97 = vld [vmem:[%s0 + $0x8] sm:$0xff]
    %v98 = vld [vmem:[%s0 + $0x10] sm:$0xff]
    %v99 = vld [vmem:[%s0 + $0x18] sm:$0xff]
    %v100 = vld [vmem:[%s0 + $0x20] sm:$0xff]
    %v101 = vld [vmem:[%s0 + $0x28] sm:$0xff]
    %v102 = vld [vmem:[%s0 + $0x30] sm:$0xff]
    %v103 = vld [vmem:[%s0 + $0x38] sm:$0xff]
    %v104 = vld [vmem:[%s0 + $0x40] sm:$0xff]
    %v105 = vld [vmem:[%s0 + $0x48] sm:$0xff]
    %v106 = vld [vmem:[%s0 + $0x50] sm:$0xff]
    %v107 = vld [vmem:[%s0 + $0x58] sm:$0xff]
    %v108 = vld [vmem:[%s0 + $0x60] sm:$0xff]
    %v109 = vld [vmem:[%s0 + $0x68] sm:$0xff]
    %v110 = vld [vmem:[%s0 + $0x70] sm:$0xff]
    %v111 = vld [vmem:[%s0 + $0x78] sm:$0xff]
    %v112 = vld [vmem:[%s0 + $0x80] sm:$0xff]
    %v113 = vld [vmem:[%s0 + $0x88] sm:$0xff]
    %v114 = vld [vmem:[%s0 + $0x90] sm:$0xff]
    %v115 = vld [vmem:[%s0 + $0x98] sm:$0xff]
    %v116 = vld [vmem:[%s0 + $0xa0] sm:$0xff]
    %v117 = vld [vmem:[%s0 + $0xa8] sm:$0xff]
    %v118 = vld [vmem:[%s0 + $0xb0] sm:$0xff]
    %v119 = vld [vmem:[%s0 + $0xb8] sm:$0xff]
    %v120 = vld [vmem:[%s0 + $0xc0] sm:$0xff]
    %v121 = vld [vmem:[%s0 + $0xc8] sm:$0xff]
    %v122 = vld [vmem:[%s0 + $0xd0] sm:$0xff]
    %v123 = vld [vmem:[%s0 + $0xd8] sm:$0xff]
    %v124 = vld [vmem:[%s0 + $0xe0] sm:$0xff]
    %v125 = vld [vmem:[%s0 + $0xe8] sm:$0xff]
    %v126 = vld [vmem:[%s0 + $0xf0] sm:$0xff]
    %v127 = vld [vmem:[%s0 + $0xf8] sm:$0xff]
    %v128 = vld [vmem:[%s0 + $0x100] sm:$0xff]
    %v129 = vld [vmem:[%s0 + $0x108] sm:$0xff]
    %v130 = vld [vmem:[%s0 + $0x110] sm:$0xff]
    %v131 = vld [vmem:[%s0 + $0x118] sm:$0xff]
    %v132 = vld [vmem:[%s0 + $0x120] sm:$0xff]
    %v133 = vld [vmem:[%s0 + $0x128] sm:$0xff]
    %v134 = vld [vmem:[%s0 + $0x130] sm:$0xff]
    %v135 = vld [vmem:[%s0 + $0x138] sm:$0xff]
    %v136 = vld [vmem:[%s0 + $0x140] sm:$0xff]
    %v137 = vld [vmem:[%s0 + $0x148] sm:$0xff]
    %v138 = vld [vmem:[%s0 + $0x150] sm:$0xff]
    %v139 = vld [vmem:[%s0 + $0x158] sm:$0xff]
    %v140 = vld [vmem:[%s0 + $0x160] sm:$0xff]
    %v141 = vld [vmem:[%s0 + $0x168] sm:$0xff]
    %v142 = vld [vmem:[%s0 + $0x170] sm:$0xff]
    %v143 = vld [vmem:[%s0 + $0x178] sm:$0xff]
    %v144 = vld [vmem:[%s0 + $0x180] sm:$0xff]
    %v145 = vld [vmem:[%s0 + $0x188] sm:$0xff]
    %v146 = vld [vmem:[%s0 + $0x190] sm:$0xff]
    %v147 = vld [vmem:[%s0 + $0x198] sm:$0xff]
    %v148 = vld [vmem:[%s0 + $0x1a0] sm:$0xff]
    %v149 = vld [vmem:[%s0 + $0x1a8] sm:$0xff]
    %v150 = vld [vmem:[%s0 + $0x1b0] sm:$0xff]
    %v151 = vld [vmem:[%s0 + $0x1b8] sm:$0xff]
    %v152 = vld [vmem:[%s0 + $0x1c0] sm:$0xff]
    %v153 = vld [vmem:[%s0 + $0x1c8] sm:$0xff]
    %v154 = vld [vmem:[%s0 + $0x1d0] sm:$0xff]
    %v155 = vld [vmem:[%s0 + $0x1d8] sm:$0xff]
    %v156 = vld [vmem:[%s0 + $0x1e0] sm:$0xff]
    %v157 = vld [vmem:[%s0 + $0x1e8] sm:$0xff]
    %v158 = vld [vmem:[%s0 + $0x1f0] sm:$0xff]
    %v159 = vld [vmem:[%s0 + $0x1f8] sm:$0xff]
    %v160 = vld [vmem:[%s0 + $0x200] sm:$0xff]
    %v161 = vld [vmem:[%s0 + $0x208] sm:$0xff]
    %v162 = vld [vmem:[%s0 + $0x210] sm:$0xff]
    %v163 = vld [vmem:[%s0 + $0x218] sm:$0xff]
    %v164 = vld [vmem:[%s0 + $0x220] sm:$0xff]
    %v165 = vld [vmem:[%s0 + $0x228] sm:$0xff]
    %v166 = vld [vmem:[%s0 + $0x230] sm:$0xff]
    %v167 = vld [vmem:[%s0 + $0x238] sm:$0xff]
    %v168 = vld [vmem:[%s0 + $0x240] sm:$0xff]
    %v169 = vld [vmem:[%s0 + $0x248] sm:$0xff]
    %v170 = vld [vmem:[%s0 + $0x250] sm:$0xff]
    %v171 = vld [vmem:[%s0 + $0x258] sm:$0xff]
    %v172 = vld [vmem:[%s0 + $0x260] sm:$0xff]
    %v173 = vld [vmem:[%s0 + $0x268] sm:$0xff]
    %v174 = vld [vmem:[%s0 + $0x270] sm:$0xff]
    %v175 = vld [vmem:[%s0 + $0x278] sm:$0xff]
    %v176 = vld [vmem:[%s0 + $0x280] sm:$0xff]
    %v177 = vld [vmem:[%s0 + $0x288] sm:$0xff]
    %v178 = vld [vmem:[%s0 + $0x290] sm:$0xff]
    %v179 = vld [vmem:[%s0 + $0x298] sm:$0xff]
    %v180 = vld [vmem:[%s0 + $0x2a0] sm:$0xff]
    %v181 = vld [vmem:[%s0 + $0x2a8] sm:$0xff]
    %v182 = vld [vmem:[%s0 + $0x2b0] sm:$0xff]
    %v183 = vld [vmem:[%s0 + $0x2b8] sm:$0xff]
    %v184 = vld [vmem:[%s0 + $0x2c0] sm:$0xff]
    %v185 = vld [vmem:[%s0 + $0x2c8] sm:$0xff]
    %v186 = vld [vmem:[%s0 + $0x2d0] sm:$0xff]
    %v187 = vld [vmem:[%s0 + $0x2d8] sm:$0xff]
    %v188 = vld [vmem:[%s0 + $0x2e0] sm:$0xff]
    %v189 = vld [vmem:[%s0 + $0x2e8] sm:$0xff]
    %v190 = vld [vmem:[%s0 + $0x2f0] sm:$0xff]
    %v191 = vld [vmem:[%s0 + $0x2f8] sm:$0xff]
    %v192 = vld [vmem:[%s0 + $0x300] sm:$0xff]
    %v193 = vld [vmem:[%s0 + $0x308] sm:$0xff]
    %v194 = vld [vmem:[%s0 + $0x310] sm:$0xff]
    %v195 = vld [vmem:[%s0 + $0x318] sm:$0xff]
    %v196 = vld [vmem:[%s0 + $0x320] sm:$0xff]
    %v197 = vld [vmem:[%s0 + $0x328] sm:$0xff]
    %v198 = vld [vmem:[%s0 + $0x330] sm:$0xff]
    %v199 = vld [vmem:[%s0 + $0x338] sm:$0xff]
    %v200 = vld [vmem:[%s0 + $0x340] sm:$0xff]
    %v201 = vld [vmem:[%s0 + $0x348] sm:$0xff]
    %v202 = vld [vmem:[%s0 + $0x350] sm:$0xff]
    %v203 = vld [vmem:[%s0 + $0x358] sm:$0xff]
    %v204 = vld [vmem:[%s0 + $0x360] sm:$0xff]
    %v205 = vld [vmem:[%s0 + $0x368] sm:$0xff]
    %v206 = vld [vmem:[%s0 + $0x370] sm:$0xff]
    %v207 = vld [vmem:[%s0 + $0x378] sm:$0xff]
    %v208 = vld [vmem:[%s0 + $0x380] sm:$0xff]
    %v209 = vld [vmem:[%s0 + $0x388] sm:$0xff]
    %v210 = vld [vmem:[%s0 + $0x390] sm:$0xff]
    %v211 = vld [vmem:[%s0 + $0x398] sm:$0xff]
    %v212 = vld [vmem:[%s0 + $0x3a0] sm:$0xff]
    %v213 = vld [vmem:[%s0 + $0x3a8] sm:$0xff]
    %v214 = vld [vmem:[%s0 + $0x3b0] sm:$0xff]
    %v215 = vld [vmem:[%s0 + $0x3b8] sm:$0xff]
    %v216 = vld [vmem:[%s0 + $0x3c0] sm:$0xff]
    %v217 = vld [vmem:[%s0 + $0x3c8] sm:$0xff]
    %v218 = vld [vmem:[%s0 + $0x3d0] sm:$0xff]
    %v219 = vld [vmem:[%s0 + $0x3d8] sm:$0xff]
    %v220 = vld [vmem:[%s0 + $0x3e0] sm:$0xff]
    %v221 = vld [vmem:[%s0 + $0x3e8] sm:$0xff]
    %v222 = vld [vmem:[%s0 + $0x3f0] sm:$0xff]
    %v223 = vld [vmem:[%s0 + $0x3f8] sm:$0xff]
    %v224 = vld [vmem:[%s1] sm:$0xff]
    %v226 = vperm.slane %v71, 0
    %v227 = vperm.slane %v71, 1
    %v228 = vperm.slane %v71, 2
    %vm232 = vcmask 261120
    %v234 = vsel %vm232, %v96, 0
    %v237 = vsel %vm232, %v97, 0
    %v240 = vsel %vm232, %v98, 0
    %v243 = vsel %vm232, %v99, 0
    %v246 = vsel %vm232, %v100, 0
    %v249 = vsel %vm232, %v101, 0
    %v252 = vsel %vm232, %v102, 0
    %v255 = vsel %vm232, %v103, 0
    %v258 = vsel %vm232, %v104, 0
    %v261 = vsel %vm232, %v105, 0
    %v264 = vsel %vm232, %v106, 0
    %v267 = vsel %vm232, %v107, 0
    %v270 = vsel %vm232, %v108, 0
    %v273 = vsel %vm232, %v109, 0
    %v276 = vsel %vm232, %v110, 0
    %v279 = vsel %vm232, %v111, 0
    %v282 = vsel %vm232, %v112, 0
    %v285 = vsel %vm232, %v113, 0
    %v288 = vsel %vm232, %v114, 0
    %v291 = vsel %vm232, %v115, 0
    %v294 = vsel %vm232, %v116, 0
    %v297 = vsel %vm232, %v117, 0
    %v300 = vsel %vm232, %v118, 0
    %v303 = vsel %vm232, %v119, 0
    %v306 = vsel %vm232, %v120, 0
    %v309 = vsel %vm232, %v121, 0
    %v312 = vsel %vm232, %v122, 0
    %v315 = vsel %vm232, %v123, 0
    %v318 = vsel %vm232, %v124, 0
    %v321 = vsel %vm232, %v125, 0
    %v324 = vsel %vm232, %v126, 0
    %v327 = vsel %vm232, %v127, 0
    %v330 = vsel %vm232, %v128, 0
    %v333 = vsel %vm232, %v129, 0
    %v336 = vsel %vm232, %v130, 0
    %v339 = vsel %vm232, %v131, 0
    %v342 = vsel %vm232, %v132, 0
    %v345 = vsel %vm232, %v133, 0
    %v348 = vsel %vm232, %v134, 0
    %v351 = vsel %vm232, %v135, 0
    %v354 = vsel %vm232, %v136, 0
    %v357 = vsel %vm232, %v137, 0
    %v360 = vsel %vm232, %v138, 0
    %v363 = vsel %vm232, %v139, 0
    %v366 = vsel %vm232, %v140, 0
    %v369 = vsel %vm232, %v141, 0
    %v372 = vsel %vm232, %v142, 0
    %v375 = vsel %vm232, %v143, 0
    %v378 = vsel %vm232, %v144, 0
    %v381 = vsel %vm232, %v145, 0
    %v384 = vsel %vm232, %v146, 0
    %v387 = vsel %vm232, %v147, 0
    %v390 = vsel %vm232, %v148, 0
    %v393 = vsel %vm232, %v149, 0
    %v396 = vsel %vm232, %v150, 0
    %v399 = vsel %vm232, %v151, 0
    %v402 = vsel %vm232, %v152, 0
    %v405 = vsel %vm232, %v153, 0
    %v408 = vsel %vm232, %v154, 0
    %v411 = vsel %vm232, %v155, 0
    %v414 = vsel %vm232, %v156, 0
    %v417 = vsel %vm232, %v157, 0
    %v420 = vsel %vm232, %v158, 0
    %v423 = vsel %vm232, %v159, 0
    %v426 = vsel %vm232, %v160, 0
    %v429 = vsel %vm232, %v161, 0
    %v432 = vsel %vm232, %v162, 0
    %v435 = vsel %vm232, %v163, 0
    %v438 = vsel %vm232, %v164, 0
    %v441 = vsel %vm232, %v165, 0
    %v444 = vsel %vm232, %v166, 0
    %v447 = vsel %vm232, %v167, 0
    %v450 = vsel %vm232, %v168, 0
    %v453 = vsel %vm232, %v169, 0
    %v456 = vsel %vm232, %v170, 0
    %v459 = vsel %vm232, %v171, 0
    %v462 = vsel %vm232, %v172, 0
    %v465 = vsel %vm232, %v173, 0
    %v468 = vsel %vm232, %v174, 0
    %v471 = vsel %vm232, %v175, 0
    %v474 = vsel %vm232, %v176, 0
    %v477 = vsel %vm232, %v177, 0
    %v480 = vsel %vm232, %v178, 0
    %v483 = vsel %vm232, %v179, 0
    %v486 = vsel %vm232, %v180, 0
    %v489 = vsel %vm232, %v181, 0
    %v492 = vsel %vm232, %v182, 0
    %v495 = vsel %vm232, %v183, 0
    %v498 = vsel %vm232, %v184, 0
    %v501 = vsel %vm232, %v185, 0
    %v504 = vsel %vm232, %v186, 0
    %v507 = vsel %vm232, %v187, 0
    %v510 = vsel %vm232, %v188, 0
    %v513 = vsel %vm232, %v189, 0
    %v516 = vsel %vm232, %v190, 0
    %v519 = vsel %vm232, %v191, 0
    %v522 = vsel %vm232, %v192, 0
    %v525 = vsel %vm232, %v193, 0
    %v528 = vsel %vm232, %v194, 0
    %v531 = vsel %vm232, %v195, 0
    %v534 = vsel %vm232, %v196, 0
    %v537 = vsel %vm232, %v197, 0
    %v540 = vsel %vm232, %v198, 0
    %v543 = vsel %vm232, %v199, 0
    %v546 = vsel %vm232, %v200, 0
    %v549 = vsel %vm232, %v201, 0
    %v552 = vsel %vm232, %v202, 0
    %v555 = vsel %vm232, %v203, 0
    %v558 = vsel %vm232, %v204, 0
    %v561 = vsel %vm232, %v205, 0
    %v564 = vsel %vm232, %v206, 0
    %v567 = vsel %vm232, %v207, 0
    %v570 = vsel %vm232, %v208, 0
    %v573 = vsel %vm232, %v209, 0
    %v576 = vsel %vm232, %v210, 0
    %v579 = vsel %vm232, %v211, 0
    %v582 = vsel %vm232, %v212, 0
    %v585 = vsel %vm232, %v213, 0
    %v588 = vsel %vm232, %v214, 0
    %v591 = vsel %vm232, %v215, 0
    %v594 = vsel %vm232, %v216, 0
    %v597 = vsel %vm232, %v217, 0
    %v600 = vsel %vm232, %v218, 0
    %v603 = vsel %vm232, %v219, 0
    %v606 = vsel %vm232, %v220, 0
    %v609 = vsel %vm232, %v221, 0
    %v612 = vsel %vm232, %v222, 0
    %v615 = vsel %vm232, %v223, 0
    %617 = vmatpush.msra.mxu0 0.0
    %618 = vmatpush.msra.mxu0 0.0
    %619 = vmatpush.msra.mxu0 0.0
    %620 = vmatpush.msra.mxu0 0.0
    %621 = vmatpush.msra.mxu0 0.0
    %622 = vmatpush.msra.mxu0 0.0
    %623 = vmatpush.msra.mxu0 0.0
    %624 = vmatpush.msra.mxu0 0.0
    %625 = vmatpush.msra.mxu0 0.0
    %626 = vmatpush.msra.mxu0 0.0
    %627 = vmatpush.msra.mxu0 0.0
    %628 = vmatpush.msra.mxu0 0.0
    %629 = vmatpush.msra.mxu0 %v68
    %630 = vmatpush.msra.mxu0 %v65
    %631 = vmatpush.msra.mxu0 %v62
    %632 = vmatpush.msra.mxu0 %v59
    %633 = vmatmul.f32.gmra.mxu0 %v234
    %v634 = vpop.f32.mrf.mxu0
    %v635 = vadd.f32 %v226, %v634
    %636 = vmatmul.f32.gmra.mxu0 %v237
    %v637 = vpop.f32.mrf.mxu0
    %v638 = vadd.f32 %v226, %v637
    %639 = vmatmul.f32.gmra.mxu0 %v240
    %v640 = vpop.f32.mrf.mxu0
    %v641 = vadd.f32 %v226, %v640
    %642 = vmatmul.f32.gmra.mxu0 %v243
    %v643 = vpop.f32.mrf.mxu0
    %v644 = vadd.f32 %v226, %v643
    %645 = vmatmul.f32.gmra.mxu0 %v246
    %v646 = vpop.f32.mrf.mxu0
    %v647 = vadd.f32 %v226, %v646
    %648 = vmatmul.f32.gmra.mxu0 %v249
    %v649 = vpop.f32.mrf.mxu0
    %v650 = vadd.f32 %v226, %v649
    %651 = vmatmul.f32.gmra.mxu0 %v252
    %v652 = vpop.f32.mrf.mxu0
    %v653 = vadd.f32 %v226, %v652
    %654 = vmatmul.f32.gmra.mxu0 %v255
    %v655 = vpop.f32.mrf.mxu0
    %v656 = vadd.f32 %v226, %v655
    %657 = vmatmul.f32.gmra.mxu0 %v258
    %v658 = vpop.f32.mrf.mxu0
    %v659 = vadd.f32 %v226, %v658
    %660 = vmatmul.f32.gmra.mxu0 %v261
    %v661 = vpop.f32.mrf.mxu0
    %v662 = vadd.f32 %v226, %v661
    %663 = vmatmul.f32.gmra.mxu0 %v264
    %v664 = vpop.f32.mrf.mxu0
    %v665 = vadd.f32 %v226, %v664
    %666 = vmatmul.f32.gmra.mxu0 %v267
    %v667 = vpop.f32.mrf.mxu0
    %v668 = vadd.f32 %v226, %v667
    %669 = vmatmul.f32.gmra.mxu0 %v270
    %v670 = vpop.f32.mrf.mxu0
    %v671 = vadd.f32 %v226, %v670
    %672 = vmatmul.f32.gmra.mxu0 %v273
    %v673 = vpop.f32.mrf.mxu0
    %v674 = vadd.f32 %v226, %v673
    %675 = vmatmul.f32.gmra.mxu0 %v276
    %v676 = vpop.f32.mrf.mxu0
    %v677 = vadd.f32 %v226, %v676
    %678 = vmatmul.f32.gmra.mxu0 %v279
    %v679 = vpop.f32.mrf.mxu0
    %v680 = vadd.f32 %v226, %v679
    %681 = vmatmul.f32.gmra.mxu0 %v282
    %v682 = vpop.f32.mrf.mxu0
    %v683 = vadd.f32 %v226, %v682
    %684 = vmatmul.f32.gmra.mxu0 %v285
    %v685 = vpop.f32.mrf.mxu0
    %v686 = vadd.f32 %v226, %v685
    %687 = vmatmul.f32.gmra.mxu0 %v288
    %v688 = vpop.f32.mrf.mxu0
    %v689 = vadd.f32 %v226, %v688
    %690 = vmatmul.f32.gmra.mxu0 %v291
    %v691 = vpop.f32.mrf.mxu0
    %v692 = vadd.f32 %v226, %v691
    %693 = vmatmul.f32.gmra.mxu0 %v294
    %v694 = vpop.f32.mrf.mxu0
    %v695 = vadd.f32 %v226, %v694
    %696 = vmatmul.f32.gmra.mxu0 %v297
    %v697 = vpop.f32.mrf.mxu0
    %v698 = vadd.f32 %v226, %v697
    %699 = vmatmul.f32.gmra.mxu0 %v300
    %v700 = vpop.f32.mrf.mxu0
    %v701 = vadd.f32 %v226, %v700
    %702 = vmatmul.f32.gmra.mxu0 %v303
    %v703 = vpop.f32.mrf.mxu0
    %v704 = vadd.f32 %v226, %v703
    %705 = vmatmul.f32.gmra.mxu0 %v306
    %v706 = vpop.f32.mrf.mxu0
    %v707 = vadd.f32 %v226, %v706
    %708 = vmatmul.f32.gmra.mxu0 %v309
    %v709 = vpop.f32.mrf.mxu0
    %v710 = vadd.f32 %v226, %v709
    %711 = vmatmul.f32.gmra.mxu0 %v312
    %v712 = vpop.f32.mrf.mxu0
    %v713 = vadd.f32 %v226, %v712
    %714 = vmatmul.f32.gmra.mxu0 %v315
    %v715 = vpop.f32.mrf.mxu0
    %v716 = vadd.f32 %v226, %v715
    %717 = vmatmul.f32.gmra.mxu0 %v318
    %v718 = vpop.f32.mrf.mxu0
    %v719 = vadd.f32 %v226, %v718
    %720 = vmatmul.f32.gmra.mxu0 %v321
    %v721 = vpop.f32.mrf.mxu0
    %v722 = vadd.f32 %v226, %v721
    %723 = vmatmul.f32.gmra.mxu0 %v324
    %v724 = vpop.f32.mrf.mxu0
    %v725 = vadd.f32 %v226, %v724
    %726 = vmatmul.f32.gmra.mxu0 %v327
    %v727 = vpop.f32.mrf.mxu0
    %v728 = vadd.f32 %v226, %v727
    %729 = vmatmul.f32.gmra.mxu0 %v330
    %v730 = vpop.f32.mrf.mxu0
    %v731 = vadd.f32 %v226, %v730
    %732 = vmatmul.f32.gmra.mxu0 %v333
    %v733 = vpop.f32.mrf.mxu0
    %v734 = vadd.f32 %v226, %v733
    %735 = vmatmul.f32.gmra.mxu0 %v336
    %v736 = vpop.f32.mrf.mxu0
    %v737 = vadd.f32 %v226, %v736
    %738 = vmatmul.f32.gmra.mxu0 %v339
    %v739 = vpop.f32.mrf.mxu0
    %v740 = vadd.f32 %v226, %v739
    %741 = vmatmul.f32.gmra.mxu0 %v342
    %v742 = vpop.f32.mrf.mxu0
    %v743 = vadd.f32 %v226, %v742
    %744 = vmatmul.f32.gmra.mxu0 %v345
    %v745 = vpop.f32.mrf.mxu0
    %v746 = vadd.f32 %v226, %v745
    %747 = vmatmul.f32.gmra.mxu0 %v348
    %v748 = vpop.f32.mrf.mxu0
    %v749 = vadd.f32 %v226, %v748
    %750 = vmatmul.f32.gmra.mxu0 %v351
    %v751 = vpop.f32.mrf.mxu0
    %v752 = vadd.f32 %v226, %v751
    %753 = vmatmul.f32.gmra.mxu0 %v354
    %v754 = vpop.f32.mrf.mxu0
    %v755 = vadd.f32 %v226, %v754
    %756 = vmatmul.f32.gmra.mxu0 %v357
    %v757 = vpop.f32.mrf.mxu0
    %v758 = vadd.f32 %v226, %v757
    %759 = vmatmul.f32.gmra.mxu0 %v360
    %v760 = vpop.f32.mrf.mxu0
    %v761 = vadd.f32 %v226, %v760
    %762 = vmatmul.f32.gmra.mxu0 %v363
    %v763 = vpop.f32.mrf.mxu0
    %v764 = vadd.f32 %v226, %v763
    %765 = vmatmul.f32.gmra.mxu0 %v366
    %v766 = vpop.f32.mrf.mxu0
    %v767 = vadd.f32 %v226, %v766
    %768 = vmatmul.f32.gmra.mxu0 %v369
    %v769 = vpop.f32.mrf.mxu0
    %v770 = vadd.f32 %v226, %v769
    %771 = vmatmul.f32.gmra.mxu0 %v372
    %v772 = vpop.f32.mrf.mxu0
    %v773 = vadd.f32 %v226, %v772
    %774 = vmatmul.f32.gmra.mxu0 %v375
    %v775 = vpop.f32.mrf.mxu0
    %v776 = vadd.f32 %v226, %v775
    %777 = vmatmul.f32.gmra.mxu0 %v378
    %v778 = vpop.f32.mrf.mxu0
    %v779 = vadd.f32 %v226, %v778
    %780 = vmatmul.f32.gmra.mxu0 %v381
    %v781 = vpop.f32.mrf.mxu0
    %v782 = vadd.f32 %v226, %v781
    %783 = vmatmul.f32.gmra.mxu0 %v384
    %v784 = vpop.f32.mrf.mxu0
    %v785 = vadd.f32 %v226, %v784
    %786 = vmatmul.f32.gmra.mxu0 %v387
    %v787 = vpop.f32.mrf.mxu0
    %v788 = vadd.f32 %v226, %v787
    %789 = vmatmul.f32.gmra.mxu0 %v390
    %v790 = vpop.f32.mrf.mxu0
    %v791 = vadd.f32 %v226, %v790
    %792 = vmatmul.f32.gmra.mxu0 %v393
    %v793 = vpop.f32.mrf.mxu0
    %v794 = vadd.f32 %v226, %v793
    %795 = vmatmul.f32.gmra.mxu0 %v396
    %v796 = vpop.f32.mrf.mxu0
    %v797 = vadd.f32 %v226, %v796
    %798 = vmatmul.f32.gmra.mxu0 %v399
    %v799 = vpop.f32.mrf.mxu0
    %v800 = vadd.f32 %v226, %v799
    %801 = vmatmul.f32.gmra.mxu0 %v402
    %v802 = vpop.f32.mrf.mxu0
    %v803 = vadd.f32 %v226, %v802
    %804 = vmatmul.f32.gmra.mxu0 %v405
    %v805 = vpop.f32.mrf.mxu0
    %v806 = vadd.f32 %v226, %v805
    %807 = vmatmul.f32.gmra.mxu0 %v408
    %v808 = vpop.f32.mrf.mxu0
    %v809 = vadd.f32 %v226, %v808
    %810 = vmatmul.f32.gmra.mxu0 %v411
    %v811 = vpop.f32.mrf.mxu0
    %v812 = vadd.f32 %v226, %v811
    %813 = vmatmul.f32.gmra.mxu0 %v414
    %v814 = vpop.f32.mrf.mxu0
    %v815 = vadd.f32 %v226, %v814
    %816 = vmatmul.f32.gmra.mxu0 %v417
    %v817 = vpop.f32.mrf.mxu0
    %v818 = vadd.f32 %v226, %v817
    %819 = vmatmul.f32.gmra.mxu0 %v420
    %v820 = vpop.f32.mrf.mxu0
    %v821 = vadd.f32 %v226, %v820
    %822 = vmatmul.f32.gmra.mxu0 %v423
    %v823 = vpop.f32.mrf.mxu0
    %v824 = vadd.f32 %v226, %v823
    %825 = vmatmul.f32.gmra.mxu0 %v426
    %v826 = vpop.f32.mrf.mxu0
    %v827 = vadd.f32 %v226, %v826
    %828 = vmatmul.f32.gmra.mxu0 %v429
    %v829 = vpop.f32.mrf.mxu0
    %v830 = vadd.f32 %v226, %v829
    %831 = vmatmul.f32.gmra.mxu0 %v432
    %v832 = vpop.f32.mrf.mxu0
    %v833 = vadd.f32 %v226, %v832
    %834 = vmatmul.f32.gmra.mxu0 %v435
    %v835 = vpop.f32.mrf.mxu0
    %v836 = vadd.f32 %v226, %v835
    %837 = vmatmul.f32.gmra.mxu0 %v438
    %v838 = vpop.f32.mrf.mxu0
    %v839 = vadd.f32 %v226, %v838
    %840 = vmatmul.f32.gmra.mxu0 %v441
    %v841 = vpop.f32.mrf.mxu0
    %v842 = vadd.f32 %v226, %v841
    %843 = vmatmul.f32.gmra.mxu0 %v444
    %v844 = vpop.f32.mrf.mxu0
    %v845 = vadd.f32 %v226, %v844
    %846 = vmatmul.f32.gmra.mxu0 %v447
    %v847 = vpop.f32.mrf.mxu0
    %v848 = vadd.f32 %v226, %v847
    %849 = vmatmul.f32.gmra.mxu0 %v450
    %v850 = vpop.f32.mrf.mxu0
    %v851 = vadd.f32 %v226, %v850
    %852 = vmatmul.f32.gmra.mxu0 %v453
    %v853 = vpop.f32.mrf.mxu0
    %v854 = vadd.f32 %v226, %v853
    %855 = vmatmul.f32.gmra.mxu0 %v456
    %v856 = vpop.f32.mrf.mxu0
    %v857 = vadd.f32 %v226, %v856
    %858 = vmatmul.f32.gmra.mxu0 %v459
    %v859 = vpop.f32.mrf.mxu0
    %v860 = vadd.f32 %v226, %v859
    %861 = vmatmul.f32.gmra.mxu0 %v462
    %v862 = vpop.f32.mrf.mxu0
    %v863 = vadd.f32 %v226, %v862
    %864 = vmatmul.f32.gmra.mxu0 %v465
    %v865 = vpop.f32.mrf.mxu0
    %v866 = vadd.f32 %v226, %v865
    %867 = vmatmul.f32.gmra.mxu0 %v468
    %v868 = vpop.f32.mrf.mxu0
    %v869 = vadd.f32 %v226, %v868
    %870 = vmatmul.f32.gmra.mxu0 %v471
    %v871 = vpop.f32.mrf.mxu0
    %v872 = vadd.f32 %v226, %v871
    %873 = vmatmul.f32.gmra.mxu0 %v474
    %v874 = vpop.f32.mrf.mxu0
    %v875 = vadd.f32 %v226, %v874
    %876 = vmatmul.f32.gmra.mxu0 %v477
    %v877 = vpop.f32.mrf.mxu0
    %v878 = vadd.f32 %v226, %v877
    %879 = vmatmul.f32.gmra.mxu0 %v480
    %v880 = vpop.f32.mrf.mxu0
    %v881 = vadd.f32 %v226, %v880
    %882 = vmatmul.f32.gmra.mxu0 %v483
    %v883 = vpop.f32.mrf.mxu0
    %v884 = vadd.f32 %v226, %v883
    %885 = vmatmul.f32.gmra.mxu0 %v486
    %v886 = vpop.f32.mrf.mxu0
    %v887 = vadd.f32 %v226, %v886
    %888 = vmatmul.f32.gmra.mxu0 %v489
    %v889 = vpop.f32.mrf.mxu0
    %v890 = vadd.f32 %v226, %v889
    %891 = vmatmul.f32.gmra.mxu0 %v492
    %v892 = vpop.f32.mrf.mxu0
    %v893 = vadd.f32 %v226, %v892
    %894 = vmatmul.f32.gmra.mxu0 %v495
    %v895 = vpop.f32.mrf.mxu0
    %v896 = vadd.f32 %v226, %v895
    %897 = vmatmul.f32.gmra.mxu0 %v498
    %v898 = vpop.f32.mrf.mxu0
    %v899 = vadd.f32 %v226, %v898
    %900 = vmatmul.f32.gmra.mxu0 %v501
    %v901 = vpop.f32.mrf.mxu0
    %v902 = vadd.f32 %v226, %v901
    %903 = vmatmul.f32.gmra.mxu0 %v504
    %v904 = vpop.f32.mrf.mxu0
    %v905 = vadd.f32 %v226, %v904
    %906 = vmatmul.f32.gmra.mxu0 %v507
    %v907 = vpop.f32.mrf.mxu0
    %v908 = vadd.f32 %v226, %v907
    %909 = vmatmul.f32.gmra.mxu0 %v510
    %v910 = vpop.f32.mrf.mxu0
    %v911 = vadd.f32 %v226, %v910
    %912 = vmatmul.f32.gmra.mxu0 %v513
    %v913 = vpop.f32.mrf.mxu0
    %v914 = vadd.f32 %v226, %v913
    %915 = vmatmul.f32.gmra.mxu0 %v516
    %v916 = vpop.f32.mrf.mxu0
    %v917 = vadd.f32 %v226, %v916
    %918 = vmatmul.f32.gmra.mxu0 %v519
    %v919 = vpop.f32.mrf.mxu0
    %v920 = vadd.f32 %v226, %v919
    %921 = vmatmul.f32.gmra.mxu0 %v522
    %v922 = vpop.f32.mrf.mxu0
    %v923 = vadd.f32 %v226, %v922
    %924 = vmatmul.f32.gmra.mxu0 %v525
    %v925 = vpop.f32.mrf.mxu0
    %v926 = vadd.f32 %v226, %v925
    %927 = vmatmul.f32.gmra.mxu0 %v528
    %v928 = vpop.f32.mrf.mxu0
    %v929 = vadd.f32 %v226, %v928
    %930 = vmatmul.f32.gmra.mxu0 %v531
    %v931 = vpop.f32.mrf.mxu0
    %v932 = vadd.f32 %v226, %v931
    %933 = vmatmul.f32.gmra.mxu0 %v534
    %v934 = vpop.f32.mrf.mxu0
    %v935 = vadd.f32 %v226, %v934
    %936 = vmatmul.f32.gmra.mxu0 %v537
    %v937 = vpop.f32.mrf.mxu0
    %v938 = vadd.f32 %v226, %v937
    %939 = vmatmul.f32.gmra.mxu0 %v540
    %v940 = vpop.f32.mrf.mxu0
    %v941 = vadd.f32 %v226, %v940
    %942 = vmatmul.f32.gmra.mxu0 %v543
    %v943 = vpop.f32.mrf.mxu0
    %v944 = vadd.f32 %v226, %v943
    %945 = vmatmul.f32.gmra.mxu0 %v546
    %v946 = vpop.f32.mrf.mxu0
    %v947 = vadd.f32 %v226, %v946
    %948 = vmatmul.f32.gmra.mxu0 %v549
    %v949 = vpop.f32.mrf.mxu0
    %v950 = vadd.f32 %v226, %v949
    %951 = vmatmul.f32.gmra.mxu0 %v552
    %v952 = vpop.f32.mrf.mxu0
    %v953 = vadd.f32 %v226, %v952
    %954 = vmatmul.f32.gmra.mxu0 %v555
    %v955 = vpop.f32.mrf.mxu0
    %v956 = vadd.f32 %v226, %v955
    %957 = vmatmul.f32.gmra.mxu0 %v558
    %v958 = vpop.f32.mrf.mxu0
    %v959 = vadd.f32 %v226, %v958
    %960 = vmatmul.f32.gmra.mxu0 %v561
    %v961 = vpop.f32.mrf.mxu0
    %v962 = vadd.f32 %v226, %v961
    %963 = vmatmul.f32.gmra.mxu0 %v564
    %v964 = vpop.f32.mrf.mxu0
    %v965 = vadd.f32 %v226, %v964
    %966 = vmatmul.f32.gmra.mxu0 %v567
    %v967 = vpop.f32.mrf.mxu0
    %v968 = vadd.f32 %v226, %v967
    %969 = vmatmul.f32.gmra.mxu0 %v570
    %v970 = vpop.f32.mrf.mxu0
    %v971 = vadd.f32 %v226, %v970
    %972 = vmatmul.f32.gmra.mxu0 %v573
    %v973 = vpop.f32.mrf.mxu0
    %v974 = vadd.f32 %v226, %v973
    %975 = vmatmul.f32.gmra.mxu0 %v576
    %v976 = vpop.f32.mrf.mxu0
    %v977 = vadd.f32 %v226, %v976
    %978 = vmatmul.f32.gmra.mxu0 %v579
    %v979 = vpop.f32.mrf.mxu0
    %v980 = vadd.f32 %v226, %v979
    %981 = vmatmul.f32.gmra.mxu0 %v582
    %v982 = vpop.f32.mrf.mxu0
    %v983 = vadd.f32 %v226, %v982
    %984 = vmatmul.f32.gmra.mxu0 %v585
    %v985 = vpop.f32.mrf.mxu0
    %v986 = vadd.f32 %v226, %v985
    %987 = vmatmul.f32.gmra.mxu0 %v588
    %v988 = vpop.f32.mrf.mxu0
    %v989 = vadd.f32 %v226, %v988
    %990 = vmatmul.f32.gmra.mxu0 %v591
    %v991 = vpop.f32.mrf.mxu0
    %v992 = vadd.f32 %v226, %v991
    %993 = vmatmul.f32.gmra.mxu0 %v594
    %v994 = vpop.f32.mrf.mxu0
    %v995 = vadd.f32 %v226, %v994
    %996 = vmatmul.f32.gmra.mxu0 %v597
    %v997 = vpop.f32.mrf.mxu0
    %v998 = vadd.f32 %v226, %v997
    %999 = vmatmul.f32.gmra.mxu0 %v600
    %v1000 = vpop.f32.mrf.mxu0
    %v1001 = vadd.f32 %v226, %v1000
    %1002 = vmatmul.f32.gmra.mxu0 %v603
    %v1003 = vpop.f32.mrf.mxu0
    %v1004 = vadd.f32 %v226, %v1003
    %1005 = vmatmul.f32.gmra.mxu0 %v606
    %v1006 = vpop.f32.mrf.mxu0
    %v1007 = vadd.f32 %v226, %v1006
    %1008 = vmatmul.f32.gmra.mxu0 %v609
    %v1009 = vpop.f32.mrf.mxu0
    %v1010 = vadd.f32 %v226, %v1009
    %1011 = vmatmul.f32.gmra.mxu0 %v612
    %v1012 = vpop.f32.mrf.mxu0
    %v1013 = vadd.f32 %v226, %v1012
    %1014 = vmatmul.f32.gmra.mxu0 %v615
    %v1015 = vpop.f32.mrf.mxu0
    %v1016 = vadd.f32 %v226, %v1015
    %1017 = vdwg.mxu0
    %1018 = vmatpush.msra.mxu0 0.0
    %1019 = vmatpush.msra.mxu0 0.0
    %1020 = vmatpush.msra.mxu0 0.0
    %1021 = vmatpush.msra.mxu0 0.0
    %1022 = vmatpush.msra.mxu0 0.0
    %1023 = vmatpush.msra.mxu0 0.0
    %1024 = vmatpush.msra.mxu0 0.0
    %1025 = vmatpush.msra.mxu0 0.0
    %1026 = vmatpush.msra.mxu0 0.0
    %1027 = vmatpush.msra.mxu0 0.0
    %1028 = vmatpush.msra.mxu0 0.0
    %1029 = vmatpush.msra.mxu0 0.0
    %1030 = vmatpush.msra.mxu0 %v69
    %1031 = vmatpush.msra.mxu0 %v66
    %1032 = vmatpush.msra.mxu0 %v63
    %1033 = vmatpush.msra.mxu0 %v60
    %1034 = vmatmul.f32.gmra.mxu0 %v234
    %v1035 = vpop.f32.mrf.mxu0
    %v1036 = vadd.f32 %v227, %v1035
    %1037 = vmatmul.f32.gmra.mxu0 %v237
    %v1038 = vpop.f32.mrf.mxu0
    %v1039 = vadd.f32 %v227, %v1038
    %1040 = vmatmul.f32.gmra.mxu0 %v240
    %v1041 = vpop.f32.mrf.mxu0
    %v1042 = vadd.f32 %v227, %v1041
    %1043 = vmatmul.f32.gmra.mxu0 %v243
    %v1044 = vpop.f32.mrf.mxu0
    %v1045 = vadd.f32 %v227, %v1044
    %1046 = vmatmul.f32.gmra.mxu0 %v246
    %v1047 = vpop.f32.mrf.mxu0
    %v1048 = vadd.f32 %v227, %v1047
    %1049 = vmatmul.f32.gmra.mxu0 %v249
    %v1050 = vpop.f32.mrf.mxu0
    %v1051 = vadd.f32 %v227, %v1050
    %1052 = vmatmul.f32.gmra.mxu0 %v252
    %v1053 = vpop.f32.mrf.mxu0
    %v1054 = vadd.f32 %v227, %v1053
    %1055 = vmatmul.f32.gmra.mxu0 %v255
    %v1056 = vpop.f32.mrf.mxu0
    %v1057 = vadd.f32 %v227, %v1056
    %1058 = vmatmul.f32.gmra.mxu0 %v258
    %v1059 = vpop.f32.mrf.mxu0
    %v1060 = vadd.f32 %v227, %v1059
    %1061 = vmatmul.f32.gmra.mxu0 %v261
    %v1062 = vpop.f32.mrf.mxu0
    %v1063 = vadd.f32 %v227, %v1062
    %1064 = vmatmul.f32.gmra.mxu0 %v264
    %v1065 = vpop.f32.mrf.mxu0
    %v1066 = vadd.f32 %v227, %v1065
    %1067 = vmatmul.f32.gmra.mxu0 %v267
    %v1068 = vpop.f32.mrf.mxu0
    %v1069 = vadd.f32 %v227, %v1068
    %1070 = vmatmul.f32.gmra.mxu0 %v270
    %v1071 = vpop.f32.mrf.mxu0
    %v1072 = vadd.f32 %v227, %v1071
    %1073 = vmatmul.f32.gmra.mxu0 %v273
    %v1074 = vpop.f32.mrf.mxu0
    %v1075 = vadd.f32 %v227, %v1074
    %1076 = vmatmul.f32.gmra.mxu0 %v276
    %v1077 = vpop.f32.mrf.mxu0
    %v1078 = vadd.f32 %v227, %v1077
    %1079 = vmatmul.f32.gmra.mxu0 %v279
    %v1080 = vpop.f32.mrf.mxu0
    %v1081 = vadd.f32 %v227, %v1080
    %1082 = vmatmul.f32.gmra.mxu0 %v282
    %v1083 = vpop.f32.mrf.mxu0
    %v1084 = vadd.f32 %v227, %v1083
    %1085 = vmatmul.f32.gmra.mxu0 %v285
    %v1086 = vpop.f32.mrf.mxu0
    %v1087 = vadd.f32 %v227, %v1086
    %1088 = vmatmul.f32.gmra.mxu0 %v288
    %v1089 = vpop.f32.mrf.mxu0
    %v1090 = vadd.f32 %v227, %v1089
    %1091 = vmatmul.f32.gmra.mxu0 %v291
    %v1092 = vpop.f32.mrf.mxu0
    %v1093 = vadd.f32 %v227, %v1092
    %1094 = vmatmul.f32.gmra.mxu0 %v294
    %v1095 = vpop.f32.mrf.mxu0
    %v1096 = vadd.f32 %v227, %v1095
    %1097 = vmatmul.f32.gmra.mxu0 %v297
    %v1098 = vpop.f32.mrf.mxu0
    %v1099 = vadd.f32 %v227, %v1098
    %1100 = vmatmul.f32.gmra.mxu0 %v300
    %v1101 = vpop.f32.mrf.mxu0
    %v1102 = vadd.f32 %v227, %v1101
    %1103 = vmatmul.f32.gmra.mxu0 %v303
    %v1104 = vpop.f32.mrf.mxu0
    %v1105 = vadd.f32 %v227, %v1104
    %1106 = vmatmul.f32.gmra.mxu0 %v306
    %v1107 = vpop.f32.mrf.mxu0
    %v1108 = vadd.f32 %v227, %v1107
    %1109 = vmatmul.f32.gmra.mxu0 %v309
    %v1110 = vpop.f32.mrf.mxu0
    %v1111 = vadd.f32 %v227, %v1110
    %1112 = vmatmul.f32.gmra.mxu0 %v312
    %v1113 = vpop.f32.mrf.mxu0
    %v1114 = vadd.f32 %v227, %v1113
    %1115 = vmatmul.f32.gmra.mxu0 %v315
    %v1116 = vpop.f32.mrf.mxu0
    %v1117 = vadd.f32 %v227, %v1116
    %1118 = vmatmul.f32.gmra.mxu0 %v318
    %v1119 = vpop.f32.mrf.mxu0
    %v1120 = vadd.f32 %v227, %v1119
    %1121 = vmatmul.f32.gmra.mxu0 %v321
    %v1122 = vpop.f32.mrf.mxu0
    %v1123 = vadd.f32 %v227, %v1122
    %1124 = vmatmul.f32.gmra.mxu0 %v324
    %v1125 = vpop.f32.mrf.mxu0
    %v1126 = vadd.f32 %v227, %v1125
    %1127 = vmatmul.f32.gmra.mxu0 %v327
    %v1128 = vpop.f32.mrf.mxu0
    %v1129 = vadd.f32 %v227, %v1128
    %1130 = vmatmul.f32.gmra.mxu0 %v330
    %v1131 = vpop.f32.mrf.mxu0
    %v1132 = vadd.f32 %v227, %v1131
    %1133 = vmatmul.f32.gmra.mxu0 %v333
    %v1134 = vpop.f32.mrf.mxu0
    %v1135 = vadd.f32 %v227, %v1134
    %1136 = vmatmul.f32.gmra.mxu0 %v336
    %v1137 = vpop.f32.mrf.mxu0
    %v1138 = vadd.f32 %v227, %v1137
    %1139 = vmatmul.f32.gmra.mxu0 %v339
    %v1140 = vpop.f32.mrf.mxu0
    %v1141 = vadd.f32 %v227, %v1140
    %1142 = vmatmul.f32.gmra.mxu0 %v342
    %v1143 = vpop.f32.mrf.mxu0
    %v1144 = vadd.f32 %v227, %v1143
    %1145 = vmatmul.f32.gmra.mxu0 %v345
    %v1146 = vpop.f32.mrf.mxu0
    %v1147 = vadd.f32 %v227, %v1146
    %1148 = vmatmul.f32.gmra.mxu0 %v348
    %v1149 = vpop.f32.mrf.mxu0
    %v1150 = vadd.f32 %v227, %v1149
    %1151 = vmatmul.f32.gmra.mxu0 %v351
    %v1152 = vpop.f32.mrf.mxu0
    %v1153 = vadd.f32 %v227, %v1152
    %1154 = vmatmul.f32.gmra.mxu0 %v354
    %v1155 = vpop.f32.mrf.mxu0
    %v1156 = vadd.f32 %v227, %v1155
    %1157 = vmatmul.f32.gmra.mxu0 %v357
    %v1158 = vpop.f32.mrf.mxu0
    %v1159 = vadd.f32 %v227, %v1158
    %1160 = vmatmul.f32.gmra.mxu0 %v360
    %v1161 = vpop.f32.mrf.mxu0
    %v1162 = vadd.f32 %v227, %v1161
    %1163 = vmatmul.f32.gmra.mxu0 %v363
    %v1164 = vpop.f32.mrf.mxu0
    %v1165 = vadd.f32 %v227, %v1164
    %1166 = vmatmul.f32.gmra.mxu0 %v366
    %v1167 = vpop.f32.mrf.mxu0
    %v1168 = vadd.f32 %v227, %v1167
    %1169 = vmatmul.f32.gmra.mxu0 %v369
    %v1170 = vpop.f32.mrf.mxu0
    %v1171 = vadd.f32 %v227, %v1170
    %1172 = vmatmul.f32.gmra.mxu0 %v372
    %v1173 = vpop.f32.mrf.mxu0
    %v1174 = vadd.f32 %v227, %v1173
    %1175 = vmatmul.f32.gmra.mxu0 %v375
    %v1176 = vpop.f32.mrf.mxu0
    %v1177 = vadd.f32 %v227, %v1176
    %1178 = vmatmul.f32.gmra.mxu0 %v378
    %v1179 = vpop.f32.mrf.mxu0
    %v1180 = vadd.f32 %v227, %v1179
    %1181 = vmatmul.f32.gmra.mxu0 %v381
    %v1182 = vpop.f32.mrf.mxu0
    %v1183 = vadd.f32 %v227, %v1182
    %1184 = vmatmul.f32.gmra.mxu0 %v384
    %v1185 = vpop.f32.mrf.mxu0
    %v1186 = vadd.f32 %v227, %v1185
    %1187 = vmatmul.f32.gmra.mxu0 %v387
    %v1188 = vpop.f32.mrf.mxu0
    %v1189 = vadd.f32 %v227, %v1188
    %1190 = vmatmul.f32.gmra.mxu0 %v390
    %v1191 = vpop.f32.mrf.mxu0
    %v1192 = vadd.f32 %v227, %v1191
    %1193 = vmatmul.f32.gmra.mxu0 %v393
    %v1194 = vpop.f32.mrf.mxu0
    %v1195 = vadd.f32 %v227, %v1194
    %1196 = vmatmul.f32.gmra.mxu0 %v396
    %v1197 = vpop.f32.mrf.mxu0
    %v1198 = vadd.f32 %v227, %v1197
    %1199 = vmatmul.f32.gmra.mxu0 %v399
    %v1200 = vpop.f32.mrf.mxu0
    %v1201 = vadd.f32 %v227, %v1200
    %1202 = vmatmul.f32.gmra.mxu0 %v402
    %v1203 = vpop.f32.mrf.mxu0
    %v1204 = vadd.f32 %v227, %v1203
    %1205 = vmatmul.f32.gmra.mxu0 %v405
    %v1206 = vpop.f32.mrf.mxu0
    %v1207 = vadd.f32 %v227, %v1206
    %1208 = vmatmul.f32.gmra.mxu0 %v408
    %v1209 = vpop.f32.mrf.mxu0
    %v1210 = vadd.f32 %v227, %v1209
    %1211 = vmatmul.f32.gmra.mxu0 %v411
    %v1212 = vpop.f32.mrf.mxu0
    %v1213 = vadd.f32 %v227, %v1212
    %1214 = vmatmul.f32.gmra.mxu0 %v414
    %v1215 = vpop.f32.mrf.mxu0
    %v1216 = vadd.f32 %v227, %v1215
    %1217 = vmatmul.f32.gmra.mxu0 %v417
    %v1218 = vpop.f32.mrf.mxu0
    %v1219 = vadd.f32 %v227, %v1218
    %1220 = vmatmul.f32.gmra.mxu0 %v420
    %v1221 = vpop.f32.mrf.mxu0
    %v1222 = vadd.f32 %v227, %v1221
    %1223 = vmatmul.f32.gmra.mxu0 %v423
    %v1224 = vpop.f32.mrf.mxu0
    %v1225 = vadd.f32 %v227, %v1224
    %1226 = vmatmul.f32.gmra.mxu0 %v426
    %v1227 = vpop.f32.mrf.mxu0
    %v1228 = vadd.f32 %v227, %v1227
    %1229 = vmatmul.f32.gmra.mxu0 %v429
    %v1230 = vpop.f32.mrf.mxu0
    %v1231 = vadd.f32 %v227, %v1230
    %1232 = vmatmul.f32.gmra.mxu0 %v432
    %v1233 = vpop.f32.mrf.mxu0
    %v1234 = vadd.f32 %v227, %v1233
    %1235 = vmatmul.f32.gmra.mxu0 %v435
    %v1236 = vpop.f32.mrf.mxu0
    %v1237 = vadd.f32 %v227, %v1236
    %1238 = vmatmul.f32.gmra.mxu0 %v438
    %v1239 = vpop.f32.mrf.mxu0
    %v1240 = vadd.f32 %v227, %v1239
    %1241 = vmatmul.f32.gmra.mxu0 %v441
    %v1242 = vpop.f32.mrf.mxu0
    %v1243 = vadd.f32 %v227, %v1242
    %1244 = vmatmul.f32.gmra.mxu0 %v444
    %v1245 = vpop.f32.mrf.mxu0
    %v1246 = vadd.f32 %v227, %v1245
    %1247 = vmatmul.f32.gmra.mxu0 %v447
    %v1248 = vpop.f32.mrf.mxu0
    %v1249 = vadd.f32 %v227, %v1248
    %1250 = vmatmul.f32.gmra.mxu0 %v450
    %v1251 = vpop.f32.mrf.mxu0
    %v1252 = vadd.f32 %v227, %v1251
    %1253 = vmatmul.f32.gmra.mxu0 %v453
    %v1254 = vpop.f32.mrf.mxu0
    %v1255 = vadd.f32 %v227, %v1254
    %1256 = vmatmul.f32.gmra.mxu0 %v456
    %v1257 = vpop.f32.mrf.mxu0
    %v1258 = vadd.f32 %v227, %v1257
    %1259 = vmatmul.f32.gmra.mxu0 %v459
    %v1260 = vpop.f32.mrf.mxu0
    %v1261 = vadd.f32 %v227, %v1260
    %1262 = vmatmul.f32.gmra.mxu0 %v462
    %v1263 = vpop.f32.mrf.mxu0
    %v1264 = vadd.f32 %v227, %v1263
    %1265 = vmatmul.f32.gmra.mxu0 %v465
    %v1266 = vpop.f32.mrf.mxu0
    %v1267 = vadd.f32 %v227, %v1266
    %1268 = vmatmul.f32.gmra.mxu0 %v468
    %v1269 = vpop.f32.mrf.mxu0
    %v1270 = vadd.f32 %v227, %v1269
    %1271 = vmatmul.f32.gmra.mxu0 %v471
    %v1272 = vpop.f32.mrf.mxu0
    %v1273 = vadd.f32 %v227, %v1272
    %1274 = vmatmul.f32.gmra.mxu0 %v474
    %v1275 = vpop.f32.mrf.mxu0
    %v1276 = vadd.f32 %v227, %v1275
    %1277 = vmatmul.f32.gmra.mxu0 %v477
    %v1278 = vpop.f32.mrf.mxu0
    %v1279 = vadd.f32 %v227, %v1278
    %1280 = vmatmul.f32.gmra.mxu0 %v480
    %v1281 = vpop.f32.mrf.mxu0
    %v1282 = vadd.f32 %v227, %v1281
    %1283 = vmatmul.f32.gmra.mxu0 %v483
    %v1284 = vpop.f32.mrf.mxu0
    %v1285 = vadd.f32 %v227, %v1284
    %1286 = vmatmul.f32.gmra.mxu0 %v486
    %v1287 = vpop.f32.mrf.mxu0
    %v1288 = vadd.f32 %v227, %v1287
    %1289 = vmatmul.f32.gmra.mxu0 %v489
    %v1290 = vpop.f32.mrf.mxu0
    %v1291 = vadd.f32 %v227, %v1290
    %1292 = vmatmul.f32.gmra.mxu0 %v492
    %v1293 = vpop.f32.mrf.mxu0
    %v1294 = vadd.f32 %v227, %v1293
    %1295 = vmatmul.f32.gmra.mxu0 %v495
    %v1296 = vpop.f32.mrf.mxu0
    %v1297 = vadd.f32 %v227, %v1296
    %1298 = vmatmul.f32.gmra.mxu0 %v498
    %v1299 = vpop.f32.mrf.mxu0
    %v1300 = vadd.f32 %v227, %v1299
    %1301 = vmatmul.f32.gmra.mxu0 %v501
    %v1302 = vpop.f32.mrf.mxu0
    %v1303 = vadd.f32 %v227, %v1302
    %1304 = vmatmul.f32.gmra.mxu0 %v504
    %v1305 = vpop.f32.mrf.mxu0
    %v1306 = vadd.f32 %v227, %v1305
    %1307 = vmatmul.f32.gmra.mxu0 %v507
    %v1308 = vpop.f32.mrf.mxu0
    %v1309 = vadd.f32 %v227, %v1308
    %1310 = vmatmul.f32.gmra.mxu0 %v510
    %v1311 = vpop.f32.mrf.mxu0
    %v1312 = vadd.f32 %v227, %v1311
    %1313 = vmatmul.f32.gmra.mxu0 %v513
    %v1314 = vpop.f32.mrf.mxu0
    %v1315 = vadd.f32 %v227, %v1314
    %1316 = vmatmul.f32.gmra.mxu0 %v516
    %v1317 = vpop.f32.mrf.mxu0
    %v1318 = vadd.f32 %v227, %v1317
    %1319 = vmatmul.f32.gmra.mxu0 %v519
    %v1320 = vpop.f32.mrf.mxu0
    %v1321 = vadd.f32 %v227, %v1320
    %1322 = vmatmul.f32.gmra.mxu0 %v522
    %v1323 = vpop.f32.mrf.mxu0
    %v1324 = vadd.f32 %v227, %v1323
    %1325 = vmatmul.f32.gmra.mxu0 %v525
    %v1326 = vpop.f32.mrf.mxu0
    %v1327 = vadd.f32 %v227, %v1326
    %1328 = vmatmul.f32.gmra.mxu0 %v528
    %v1329 = vpop.f32.mrf.mxu0
    %v1330 = vadd.f32 %v227, %v1329
    %1331 = vmatmul.f32.gmra.mxu0 %v531
    %v1332 = vpop.f32.mrf.mxu0
    %v1333 = vadd.f32 %v227, %v1332
    %1334 = vmatmul.f32.gmra.mxu0 %v534
    %v1335 = vpop.f32.mrf.mxu0
    %v1336 = vadd.f32 %v227, %v1335
    %1337 = vmatmul.f32.gmra.mxu0 %v537
    %v1338 = vpop.f32.mrf.mxu0
    %v1339 = vadd.f32 %v227, %v1338
    %1340 = vmatmul.f32.gmra.mxu0 %v540
    %v1341 = vpop.f32.mrf.mxu0
    %v1342 = vadd.f32 %v227, %v1341
    %1343 = vmatmul.f32.gmra.mxu0 %v543
    %v1344 = vpop.f32.mrf.mxu0
    %v1345 = vadd.f32 %v227, %v1344
    %1346 = vmatmul.f32.gmra.mxu0 %v546
    %v1347 = vpop.f32.mrf.mxu0
    %v1348 = vadd.f32 %v227, %v1347
    %1349 = vmatmul.f32.gmra.mxu0 %v549
    %v1350 = vpop.f32.mrf.mxu0
    %v1351 = vadd.f32 %v227, %v1350
    %1352 = vmatmul.f32.gmra.mxu0 %v552
    %v1353 = vpop.f32.mrf.mxu0
    %v1354 = vadd.f32 %v227, %v1353
    %1355 = vmatmul.f32.gmra.mxu0 %v555
    %v1356 = vpop.f32.mrf.mxu0
    %v1357 = vadd.f32 %v227, %v1356
    %1358 = vmatmul.f32.gmra.mxu0 %v558
    %v1359 = vpop.f32.mrf.mxu0
    %v1360 = vadd.f32 %v227, %v1359
    %1361 = vmatmul.f32.gmra.mxu0 %v561
    %v1362 = vpop.f32.mrf.mxu0
    %v1363 = vadd.f32 %v227, %v1362
    %1364 = vmatmul.f32.gmra.mxu0 %v564
    %v1365 = vpop.f32.mrf.mxu0
    %v1366 = vadd.f32 %v227, %v1365
    %1367 = vmatmul.f32.gmra.mxu0 %v567
    %v1368 = vpop.f32.mrf.mxu0
    %v1369 = vadd.f32 %v227, %v1368
    %1370 = vmatmul.f32.gmra.mxu0 %v570
    %v1371 = vpop.f32.mrf.mxu0
    %v1372 = vadd.f32 %v227, %v1371
    %1373 = vmatmul.f32.gmra.mxu0 %v573
    %v1374 = vpop.f32.mrf.mxu0
    %v1375 = vadd.f32 %v227, %v1374
    %1376 = vmatmul.f32.gmra.mxu0 %v576
    %v1377 = vpop.f32.mrf.mxu0
    %v1378 = vadd.f32 %v227, %v1377
    %1379 = vmatmul.f32.gmra.mxu0 %v579
    %v1380 = vpop.f32.mrf.mxu0
    %v1381 = vadd.f32 %v227, %v1380
    %1382 = vmatmul.f32.gmra.mxu0 %v582
    %v1383 = vpop.f32.mrf.mxu0
    %v1384 = vadd.f32 %v227, %v1383
    %1385 = vmatmul.f32.gmra.mxu0 %v585
    %v1386 = vpop.f32.mrf.mxu0
    %v1387 = vadd.f32 %v227, %v1386
    %1388 = vmatmul.f32.gmra.mxu0 %v588
    %v1389 = vpop.f32.mrf.mxu0
    %v1390 = vadd.f32 %v227, %v1389
    %1391 = vmatmul.f32.gmra.mxu0 %v591
    %v1392 = vpop.f32.mrf.mxu0
    %v1393 = vadd.f32 %v227, %v1392
    %1394 = vmatmul.f32.gmra.mxu0 %v594
    %v1395 = vpop.f32.mrf.mxu0
    %v1396 = vadd.f32 %v227, %v1395
    %1397 = vmatmul.f32.gmra.mxu0 %v597
    %v1398 = vpop.f32.mrf.mxu0
    %v1399 = vadd.f32 %v227, %v1398
    %1400 = vmatmul.f32.gmra.mxu0 %v600
    %v1401 = vpop.f32.mrf.mxu0
    %v1402 = vadd.f32 %v227, %v1401
    %1403 = vmatmul.f32.gmra.mxu0 %v603
    %v1404 = vpop.f32.mrf.mxu0
    %v1405 = vadd.f32 %v227, %v1404
    %1406 = vmatmul.f32.gmra.mxu0 %v606
    %v1407 = vpop.f32.mrf.mxu0
    %v1408 = vadd.f32 %v227, %v1407
    %1409 = vmatmul.f32.gmra.mxu0 %v609
    %v1410 = vpop.f32.mrf.mxu0
    %v1411 = vadd.f32 %v227, %v1410
    %1412 = vmatmul.f32.gmra.mxu0 %v612
    %v1413 = vpop.f32.mrf.mxu0
    %v1414 = vadd.f32 %v227, %v1413
    %1415 = vmatmul.f32.gmra.mxu0 %v615
    %v1416 = vpop.f32.mrf.mxu0
    %v1417 = vadd.f32 %v227, %v1416
    %1418 = vdwg.mxu0
    %1419 = vmatpush.msra.mxu0 0.0
    %1420 = vmatpush.msra.mxu0 0.0
    %1421 = vmatpush.msra.mxu0 0.0
    %1422 = vmatpush.msra.mxu0 0.0
    %1423 = vmatpush.msra.mxu0 0.0
    %1424 = vmatpush.msra.mxu0 0.0
    %1425 = vmatpush.msra.mxu0 0.0
    %1426 = vmatpush.msra.mxu0 0.0
    %1427 = vmatpush.msra.mxu0 0.0
    %1428 = vmatpush.msra.mxu0 0.0
    %1429 = vmatpush.msra.mxu0 0.0
    %1430 = vmatpush.msra.mxu0 0.0
    %1431 = vmatpush.msra.mxu0 %v70
    %1432 = vmatpush.msra.mxu0 %v67
    %1433 = vmatpush.msra.mxu0 %v64
    %1434 = vmatpush.msra.mxu0 %v61
    %1435 = vmatmul.f32.gmra.mxu0 %v234
    %v1436 = vpop.f32.mrf.mxu0
    %v1437 = vadd.f32 %v228, %v1436
    %1438 = vmatmul.f32.gmra.mxu0 %v237
    %v1439 = vpop.f32.mrf.mxu0
    %v1440 = vadd.f32 %v228, %v1439
    %1441 = vmatmul.f32.gmra.mxu0 %v240
    %v1442 = vpop.f32.mrf.mxu0
    %v1443 = vadd.f32 %v228, %v1442
    %1444 = vmatmul.f32.gmra.mxu0 %v243
    %v1445 = vpop.f32.mrf.mxu0
    %v1446 = vadd.f32 %v228, %v1445
    %1447 = vmatmul.f32.gmra.mxu0 %v246
    %v1448 = vpop.f32.mrf.mxu0
    %v1449 = vadd.f32 %v228, %v1448
    %1450 = vmatmul.f32.gmra.mxu0 %v249
    %v1451 = vpop.f32.mrf.mxu0
    %v1452 = vadd.f32 %v228, %v1451
    %1453 = vmatmul.f32.gmra.mxu0 %v252
    %v1454 = vpop.f32.mrf.mxu0
    %v1455 = vadd.f32 %v228, %v1454
    %1456 = vmatmul.f32.gmra.mxu0 %v255
    %v1457 = vpop.f32.mrf.mxu0
    %v1458 = vadd.f32 %v228, %v1457
    %1459 = vmatmul.f32.gmra.mxu0 %v258
    %v1460 = vpop.f32.mrf.mxu0
    %v1461 = vadd.f32 %v228, %v1460
    %1462 = vmatmul.f32.gmra.mxu0 %v261
    %v1463 = vpop.f32.mrf.mxu0
    %v1464 = vadd.f32 %v228, %v1463
    %1465 = vmatmul.f32.gmra.mxu0 %v264
    %v1466 = vpop.f32.mrf.mxu0
    %v1467 = vadd.f32 %v228, %v1466
    %1468 = vmatmul.f32.gmra.mxu0 %v267
    %v1469 = vpop.f32.mrf.mxu0
    %v1470 = vadd.f32 %v228, %v1469
    %1471 = vmatmul.f32.gmra.mxu0 %v270
    %v1472 = vpop.f32.mrf.mxu0
    %v1473 = vadd.f32 %v228, %v1472
    %1474 = vmatmul.f32.gmra.mxu0 %v273
    %v1475 = vpop.f32.mrf.mxu0
    %v1476 = vadd.f32 %v228, %v1475
    %1477 = vmatmul.f32.gmra.mxu0 %v276
    %v1478 = vpop.f32.mrf.mxu0
    %v1479 = vadd.f32 %v228, %v1478
    %1480 = vmatmul.f32.gmra.mxu0 %v279
    %v1481 = vpop.f32.mrf.mxu0
    %v1482 = vadd.f32 %v228, %v1481
    %1483 = vmatmul.f32.gmra.mxu0 %v282
    %v1484 = vpop.f32.mrf.mxu0
    %v1485 = vadd.f32 %v228, %v1484
    %1486 = vmatmul.f32.gmra.mxu0 %v285
    %v1487 = vpop.f32.mrf.mxu0
    %v1488 = vadd.f32 %v228, %v1487
    %1489 = vmatmul.f32.gmra.mxu0 %v288
    %v1490 = vpop.f32.mrf.mxu0
    %v1491 = vadd.f32 %v228, %v1490
    %1492 = vmatmul.f32.gmra.mxu0 %v291
    %v1493 = vpop.f32.mrf.mxu0
    %v1494 = vadd.f32 %v228, %v1493
    %1495 = vmatmul.f32.gmra.mxu0 %v294
    %v1496 = vpop.f32.mrf.mxu0
    %v1497 = vadd.f32 %v228, %v1496
    %1498 = vmatmul.f32.gmra.mxu0 %v297
    %v1499 = vpop.f32.mrf.mxu0
    %v1500 = vadd.f32 %v228, %v1499
    %1501 = vmatmul.f32.gmra.mxu0 %v300
    %v1502 = vpop.f32.mrf.mxu0
    %v1503 = vadd.f32 %v228, %v1502
    %1504 = vmatmul.f32.gmra.mxu0 %v303
    %v1505 = vpop.f32.mrf.mxu0
    %v1506 = vadd.f32 %v228, %v1505
    %1507 = vmatmul.f32.gmra.mxu0 %v306
    %v1508 = vpop.f32.mrf.mxu0
    %v1509 = vadd.f32 %v228, %v1508
    %1510 = vmatmul.f32.gmra.mxu0 %v309
    %v1511 = vpop.f32.mrf.mxu0
    %v1512 = vadd.f32 %v228, %v1511
    %1513 = vmatmul.f32.gmra.mxu0 %v312
    %v1514 = vpop.f32.mrf.mxu0
    %v1515 = vadd.f32 %v228, %v1514
    %1516 = vmatmul.f32.gmra.mxu0 %v315
    %v1517 = vpop.f32.mrf.mxu0
    %v1518 = vadd.f32 %v228, %v1517
    %1519 = vmatmul.f32.gmra.mxu0 %v318
    %v1520 = vpop.f32.mrf.mxu0
    %v1521 = vadd.f32 %v228, %v1520
    %1522 = vmatmul.f32.gmra.mxu0 %v321
    %v1523 = vpop.f32.mrf.mxu0
    %v1524 = vadd.f32 %v228, %v1523
    %1525 = vmatmul.f32.gmra.mxu0 %v324
    %v1526 = vpop.f32.mrf.mxu0
    %v1527 = vadd.f32 %v228, %v1526
    %1528 = vmatmul.f32.gmra.mxu0 %v327
    %v1529 = vpop.f32.mrf.mxu0
    %v1530 = vadd.f32 %v228, %v1529
    %1531 = vmatmul.f32.gmra.mxu0 %v330
    %v1532 = vpop.f32.mrf.mxu0
    %v1533 = vadd.f32 %v228, %v1532
    %1534 = vmatmul.f32.gmra.mxu0 %v333
    %v1535 = vpop.f32.mrf.mxu0
    %v1536 = vadd.f32 %v228, %v1535
    %1537 = vmatmul.f32.gmra.mxu0 %v336
    %v1538 = vpop.f32.mrf.mxu0
    %v1539 = vadd.f32 %v228, %v1538
    %1540 = vmatmul.f32.gmra.mxu0 %v339
    %v1541 = vpop.f32.mrf.mxu0
    %v1542 = vadd.f32 %v228, %v1541
    %1543 = vmatmul.f32.gmra.mxu0 %v342
    %v1544 = vpop.f32.mrf.mxu0
    %v1545 = vadd.f32 %v228, %v1544
    %1546 = vmatmul.f32.gmra.mxu0 %v345
    %v1547 = vpop.f32.mrf.mxu0
    %v1548 = vadd.f32 %v228, %v1547
    %1549 = vmatmul.f32.gmra.mxu0 %v348
    %v1550 = vpop.f32.mrf.mxu0
    %v1551 = vadd.f32 %v228, %v1550
    %1552 = vmatmul.f32.gmra.mxu0 %v351
    %v1553 = vpop.f32.mrf.mxu0
    %v1554 = vadd.f32 %v228, %v1553
    %1555 = vmatmul.f32.gmra.mxu0 %v354
    %v1556 = vpop.f32.mrf.mxu0
    %v1557 = vadd.f32 %v228, %v1556
    %1558 = vmatmul.f32.gmra.mxu0 %v357
    %v1559 = vpop.f32.mrf.mxu0
    %v1560 = vadd.f32 %v228, %v1559
    %1561 = vmatmul.f32.gmra.mxu0 %v360
    %v1562 = vpop.f32.mrf.mxu0
    %v1563 = vadd.f32 %v228, %v1562
    %1564 = vmatmul.f32.gmra.mxu0 %v363
    %v1565 = vpop.f32.mrf.mxu0
    %v1566 = vadd.f32 %v228, %v1565
    %1567 = vmatmul.f32.gmra.mxu0 %v366
    %v1568 = vpop.f32.mrf.mxu0
    %v1569 = vadd.f32 %v228, %v1568
    %1570 = vmatmul.f32.gmra.mxu0 %v369
    %v1571 = vpop.f32.mrf.mxu0
    %v1572 = vadd.f32 %v228, %v1571
    %1573 = vmatmul.f32.gmra.mxu0 %v372
    %v1574 = vpop.f32.mrf.mxu0
    %v1575 = vadd.f32 %v228, %v1574
    %1576 = vmatmul.f32.gmra.mxu0 %v375
    %v1577 = vpop.f32.mrf.mxu0
    %v1578 = vadd.f32 %v228, %v1577
    %1579 = vmatmul.f32.gmra.mxu0 %v378
    %v1580 = vpop.f32.mrf.mxu0
    %v1581 = vadd.f32 %v228, %v1580
    %1582 = vmatmul.f32.gmra.mxu0 %v381
    %v1583 = vpop.f32.mrf.mxu0
    %v1584 = vadd.f32 %v228, %v1583
    %1585 = vmatmul.f32.gmra.mxu0 %v384
    %v1586 = vpop.f32.mrf.mxu0
    %v1587 = vadd.f32 %v228, %v1586
    %1588 = vmatmul.f32.gmra.mxu0 %v387
    %v1589 = vpop.f32.mrf.mxu0
    %v1590 = vadd.f32 %v228, %v1589
    %1591 = vmatmul.f32.gmra.mxu0 %v390
    %v1592 = vpop.f32.mrf.mxu0
    %v1593 = vadd.f32 %v228, %v1592
    %1594 = vmatmul.f32.gmra.mxu0 %v393
    %v1595 = vpop.f32.mrf.mxu0
    %v1596 = vadd.f32 %v228, %v1595
    %1597 = vmatmul.f32.gmra.mxu0 %v396
    %v1598 = vpop.f32.mrf.mxu0
    %v1599 = vadd.f32 %v228, %v1598
    %1600 = vmatmul.f32.gmra.mxu0 %v399
    %v1601 = vpop.f32.mrf.mxu0
    %v1602 = vadd.f32 %v228, %v1601
    %1603 = vmatmul.f32.gmra.mxu0 %v402
    %v1604 = vpop.f32.mrf.mxu0
    %v1605 = vadd.f32 %v228, %v1604
    %1606 = vmatmul.f32.gmra.mxu0 %v405
    %v1607 = vpop.f32.mrf.mxu0
    %v1608 = vadd.f32 %v228, %v1607
    %1609 = vmatmul.f32.gmra.mxu0 %v408
    %v1610 = vpop.f32.mrf.mxu0
    %v1611 = vadd.f32 %v228, %v1610
    %1612 = vmatmul.f32.gmra.mxu0 %v411
    %v1613 = vpop.f32.mrf.mxu0
    %v1614 = vadd.f32 %v228, %v1613
    %1615 = vmatmul.f32.gmra.mxu0 %v414
    %v1616 = vpop.f32.mrf.mxu0
    %v1617 = vadd.f32 %v228, %v1616
    %1618 = vmatmul.f32.gmra.mxu0 %v417
    %v1619 = vpop.f32.mrf.mxu0
    %v1620 = vadd.f32 %v228, %v1619
    %1621 = vmatmul.f32.gmra.mxu0 %v420
    %v1622 = vpop.f32.mrf.mxu0
    %v1623 = vadd.f32 %v228, %v1622
    %1624 = vmatmul.f32.gmra.mxu0 %v423
    %v1625 = vpop.f32.mrf.mxu0
    %v1626 = vadd.f32 %v228, %v1625
    %1627 = vmatmul.f32.gmra.mxu0 %v426
    %v1628 = vpop.f32.mrf.mxu0
    %v1629 = vadd.f32 %v228, %v1628
    %1630 = vmatmul.f32.gmra.mxu0 %v429
    %v1631 = vpop.f32.mrf.mxu0
    %v1632 = vadd.f32 %v228, %v1631
    %1633 = vmatmul.f32.gmra.mxu0 %v432
    %v1634 = vpop.f32.mrf.mxu0
    %v1635 = vadd.f32 %v228, %v1634
    %1636 = vmatmul.f32.gmra.mxu0 %v435
    %v1637 = vpop.f32.mrf.mxu0
    %v1638 = vadd.f32 %v228, %v1637
    %1639 = vmatmul.f32.gmra.mxu0 %v438
    %v1640 = vpop.f32.mrf.mxu0
    %v1641 = vadd.f32 %v228, %v1640
    %1642 = vmatmul.f32.gmra.mxu0 %v441
    %v1643 = vpop.f32.mrf.mxu0
    %v1644 = vadd.f32 %v228, %v1643
    %1645 = vmatmul.f32.gmra.mxu0 %v444
    %v1646 = vpop.f32.mrf.mxu0
    %v1647 = vadd.f32 %v228, %v1646
    %1648 = vmatmul.f32.gmra.mxu0 %v447
    %v1649 = vpop.f32.mrf.mxu0
    %v1650 = vadd.f32 %v228, %v1649
    %1651 = vmatmul.f32.gmra.mxu0 %v450
    %v1652 = vpop.f32.mrf.mxu0
    %v1653 = vadd.f32 %v228, %v1652
    %1654 = vmatmul.f32.gmra.mxu0 %v453
    %v1655 = vpop.f32.mrf.mxu0
    %v1656 = vadd.f32 %v228, %v1655
    %1657 = vmatmul.f32.gmra.mxu0 %v456
    %v1658 = vpop.f32.mrf.mxu0
    %v1659 = vadd.f32 %v228, %v1658
    %1660 = vmatmul.f32.gmra.mxu0 %v459
    %v1661 = vpop.f32.mrf.mxu0
    %v1662 = vadd.f32 %v228, %v1661
    %1663 = vmatmul.f32.gmra.mxu0 %v462
    %v1664 = vpop.f32.mrf.mxu0
    %v1665 = vadd.f32 %v228, %v1664
    %1666 = vmatmul.f32.gmra.mxu0 %v465
    %v1667 = vpop.f32.mrf.mxu0
    %v1668 = vadd.f32 %v228, %v1667
    %1669 = vmatmul.f32.gmra.mxu0 %v468
    %v1670 = vpop.f32.mrf.mxu0
    %v1671 = vadd.f32 %v228, %v1670
    %1672 = vmatmul.f32.gmra.mxu0 %v471
    %v1673 = vpop.f32.mrf.mxu0
    %v1674 = vadd.f32 %v228, %v1673
    %1675 = vmatmul.f32.gmra.mxu0 %v474
    %v1676 = vpop.f32.mrf.mxu0
    %v1677 = vadd.f32 %v228, %v1676
    %1678 = vmatmul.f32.gmra.mxu0 %v477
    %v1679 = vpop.f32.mrf.mxu0
    %v1680 = vadd.f32 %v228, %v1679
    %1681 = vmatmul.f32.gmra.mxu0 %v480
    %v1682 = vpop.f32.mrf.mxu0
    %v1683 = vadd.f32 %v228, %v1682
    %1684 = vmatmul.f32.gmra.mxu0 %v483
    %v1685 = vpop.f32.mrf.mxu0
    %v1686 = vadd.f32 %v228, %v1685
    %1687 = vmatmul.f32.gmra.mxu0 %v486
    %v1688 = vpop.f32.mrf.mxu0
    %v1689 = vadd.f32 %v228, %v1688
    %1690 = vmatmul.f32.gmra.mxu0 %v489
    %v1691 = vpop.f32.mrf.mxu0
    %v1692 = vadd.f32 %v228, %v1691
    %1693 = vmatmul.f32.gmra.mxu0 %v492
    %v1694 = vpop.f32.mrf.mxu0
    %v1695 = vadd.f32 %v228, %v1694
    %1696 = vmatmul.f32.gmra.mxu0 %v495
    %v1697 = vpop.f32.mrf.mxu0
    %v1698 = vadd.f32 %v228, %v1697
    %1699 = vmatmul.f32.gmra.mxu0 %v498
    %v1700 = vpop.f32.mrf.mxu0
    %v1701 = vadd.f32 %v228, %v1700
    %1702 = vmatmul.f32.gmra.mxu0 %v501
    %v1703 = vpop.f32.mrf.mxu0
    %v1704 = vadd.f32 %v228, %v1703
    %1705 = vmatmul.f32.gmra.mxu0 %v504
    %v1706 = vpop.f32.mrf.mxu0
    %v1707 = vadd.f32 %v228, %v1706
    %1708 = vmatmul.f32.gmra.mxu0 %v507
    %v1709 = vpop.f32.mrf.mxu0
    %v1710 = vadd.f32 %v228, %v1709
    %1711 = vmatmul.f32.gmra.mxu0 %v510
    %v1712 = vpop.f32.mrf.mxu0
    %v1713 = vadd.f32 %v228, %v1712
    %1714 = vmatmul.f32.gmra.mxu0 %v513
    %v1715 = vpop.f32.mrf.mxu0
    %v1716 = vadd.f32 %v228, %v1715
    %1717 = vmatmul.f32.gmra.mxu0 %v516
    %v1718 = vpop.f32.mrf.mxu0
    %v1719 = vadd.f32 %v228, %v1718
    %1720 = vmatmul.f32.gmra.mxu0 %v519
    %v1721 = vpop.f32.mrf.mxu0
    %v1722 = vadd.f32 %v228, %v1721
    %1723 = vmatmul.f32.gmra.mxu0 %v522
    %v1724 = vpop.f32.mrf.mxu0
    %v1725 = vadd.f32 %v228, %v1724
    %1726 = vmatmul.f32.gmra.mxu0 %v525
    %v1727 = vpop.f32.mrf.mxu0
    %v1728 = vadd.f32 %v228, %v1727
    %1729 = vmatmul.f32.gmra.mxu0 %v528
    %v1730 = vpop.f32.mrf.mxu0
    %v1731 = vadd.f32 %v228, %v1730
    %1732 = vmatmul.f32.gmra.mxu0 %v531
    %v1733 = vpop.f32.mrf.mxu0
    %v1734 = vadd.f32 %v228, %v1733
    %1735 = vmatmul.f32.gmra.mxu0 %v534
    %v1736 = vpop.f32.mrf.mxu0
    %v1737 = vadd.f32 %v228, %v1736
    %1738 = vmatmul.f32.gmra.mxu0 %v537
    %v1739 = vpop.f32.mrf.mxu0
    %v1740 = vadd.f32 %v228, %v1739
    %1741 = vmatmul.f32.gmra.mxu0 %v540
    %v1742 = vpop.f32.mrf.mxu0
    %v1743 = vadd.f32 %v228, %v1742
    %1744 = vmatmul.f32.gmra.mxu0 %v543
    %v1745 = vpop.f32.mrf.mxu0
    %v1746 = vadd.f32 %v228, %v1745
    %1747 = vmatmul.f32.gmra.mxu0 %v546
    %v1748 = vpop.f32.mrf.mxu0
    %v1749 = vadd.f32 %v228, %v1748
    %1750 = vmatmul.f32.gmra.mxu0 %v549
    %v1751 = vpop.f32.mrf.mxu0
    %v1752 = vadd.f32 %v228, %v1751
    %1753 = vmatmul.f32.gmra.mxu0 %v552
    %v1754 = vpop.f32.mrf.mxu0
    %v1755 = vadd.f32 %v228, %v1754
    %1756 = vmatmul.f32.gmra.mxu0 %v555
    %v1757 = vpop.f32.mrf.mxu0
    %v1758 = vadd.f32 %v228, %v1757
    %1759 = vmatmul.f32.gmra.mxu0 %v558
    %v1760 = vpop.f32.mrf.mxu0
    %v1761 = vadd.f32 %v228, %v1760
    %1762 = vmatmul.f32.gmra.mxu0 %v561
    %v1763 = vpop.f32.mrf.mxu0
    %v1764 = vadd.f32 %v228, %v1763
    %1765 = vmatmul.f32.gmra.mxu0 %v564
    %v1766 = vpop.f32.mrf.mxu0
    %v1767 = vadd.f32 %v228, %v1766
    %1768 = vmatmul.f32.gmra.mxu0 %v567
    %v1769 = vpop.f32.mrf.mxu0
    %v1770 = vadd.f32 %v228, %v1769
    %1771 = vmatmul.f32.gmra.mxu0 %v570
    %v1772 = vpop.f32.mrf.mxu0
    %v1773 = vadd.f32 %v228, %v1772
    %1774 = vmatmul.f32.gmra.mxu0 %v573
    %v1775 = vpop.f32.mrf.mxu0
    %v1776 = vadd.f32 %v228, %v1775
    %1777 = vmatmul.f32.gmra.mxu0 %v576
    %v1778 = vpop.f32.mrf.mxu0
    %v1779 = vadd.f32 %v228, %v1778
    %1780 = vmatmul.f32.gmra.mxu0 %v579
    %v1781 = vpop.f32.mrf.mxu0
    %v1782 = vadd.f32 %v228, %v1781
    %1783 = vmatmul.f32.gmra.mxu0 %v582
    %v1784 = vpop.f32.mrf.mxu0
    %v1785 = vadd.f32 %v228, %v1784
    %1786 = vmatmul.f32.gmra.mxu0 %v585
    %v1787 = vpop.f32.mrf.mxu0
    %v1788 = vadd.f32 %v228, %v1787
    %1789 = vmatmul.f32.gmra.mxu0 %v588
    %v1790 = vpop.f32.mrf.mxu0
    %v1791 = vadd.f32 %v228, %v1790
    %1792 = vmatmul.f32.gmra.mxu0 %v591
    %v1793 = vpop.f32.mrf.mxu0
    %v1794 = vadd.f32 %v228, %v1793
    %1795 = vmatmul.f32.gmra.mxu0 %v594
    %v1796 = vpop.f32.mrf.mxu0
    %v1797 = vadd.f32 %v228, %v1796
    %1798 = vmatmul.f32.gmra.mxu0 %v597
    %v1799 = vpop.f32.mrf.mxu0
    %v1800 = vadd.f32 %v228, %v1799
    %1801 = vmatmul.f32.gmra.mxu0 %v600
    %v1802 = vpop.f32.mrf.mxu0
    %v1803 = vadd.f32 %v228, %v1802
    %1804 = vmatmul.f32.gmra.mxu0 %v603
    %v1805 = vpop.f32.mrf.mxu0
    %v1806 = vadd.f32 %v228, %v1805
    %1807 = vmatmul.f32.gmra.mxu0 %v606
    %v1808 = vpop.f32.mrf.mxu0
    %v1809 = vadd.f32 %v228, %v1808
    %1810 = vmatmul.f32.gmra.mxu0 %v609
    %v1811 = vpop.f32.mrf.mxu0
    %v1812 = vadd.f32 %v228, %v1811
    %1813 = vmatmul.f32.gmra.mxu0 %v612
    %v1814 = vpop.f32.mrf.mxu0
    %v1815 = vadd.f32 %v228, %v1814
    %1816 = vmatmul.f32.gmra.mxu0 %v615
    %v1817 = vpop.f32.mrf.mxu0
    %v1818 = vadd.f32 %v228, %v1817
    %1819 = vdwg.mxu0
    %1820 = vst [vmem:[#allocation3] sm:$0xff] %v635
    %1821 = vst [vmem:[#allocation3 + $0x8] sm:$0xff] %v638
    %1822 = vst [vmem:[#allocation3 + $0x10] sm:$0xff] %v641
    %1823 = vst [vmem:[#allocation3 + $0x18] sm:$0xff] %v644
    %1824 = vst [vmem:[#allocation3 + $0x20] sm:$0xff] %v647
    %1825 = vst [vmem:[#allocation3 + $0x28] sm:$0xff] %v650
    %1826 = vst [vmem:[#allocation3 + $0x30] sm:$0xff] %v653
    %1827 = vst [vmem:[#allocation3 + $0x38] sm:$0xff] %v656
    %1828 = vst [vmem:[#allocation3 + $0x40] sm:$0xff] %v659
    %1829 = vst [vmem:[#allocation3 + $0x48] sm:$0xff] %v662
    %1830 = vst [vmem:[#allocation3 + $0x50] sm:$0xff] %v665
    %1831 = vst [vmem:[#allocation3 + $0x58] sm:$0xff] %v668
    %1832 = vst [vmem:[#allocation3 + $0x60] sm:$0xff] %v671
    %1833 = vst [vmem:[#allocation3 + $0x68] sm:$0xff] %v674
    %1834 = vst [vmem:[#allocation3 + $0x70] sm:$0xff] %v677
    %1835 = vst [vmem:[#allocation3 + $0x78] sm:$0xff] %v680
    %1836 = vst [vmem:[#allocation3 + $0x80] sm:$0xff] %v683
    %1837 = vst [vmem:[#allocation3 + $0x88] sm:$0xff] %v686
    %1838 = vst [vmem:[#allocation3 + $0x90] sm:$0xff] %v689
    %1839 = vst [vmem:[#allocation3 + $0x98] sm:$0xff] %v692
    %1840 = vst [vmem:[#allocation3 + $0xa0] sm:$0xff] %v695
    %1841 = vst [vmem:[#allocation3 + $0xa8] sm:$0xff] %v698
    %1842 = vst [vmem:[#allocation3 + $0xb0] sm:$0xff] %v701
    %1843 = vst [vmem:[#allocation3 + $0xb8] sm:$0xff] %v704
    %1844 = vst [vmem:[#allocation3 + $0xc0] sm:$0xff] %v707
    %1845 = vst [vmem:[#allocation3 + $0xc8] sm:$0xff] %v710
    %1846 = vst [vmem:[#allocation3 + $0xd0] sm:$0xff] %v713
    %1847 = vst [vmem:[#allocation3 + $0xd8] sm:$0xff] %v716
    %1848 = vst [vmem:[#allocation3 + $0xe0] sm:$0xff] %v719
    %1849 = vst [vmem:[#allocation3 + $0xe8] sm:$0xff] %v722
    %1850 = vst [vmem:[#allocation3 + $0xf0] sm:$0xff] %v725
    %1851 = vst [vmem:[#allocation3 + $0xf8] sm:$0xff] %v728
    %1852 = vst [vmem:[#allocation3 + $0x100] sm:$0xff] %v731
    %1853 = vst [vmem:[#allocation3 + $0x108] sm:$0xff] %v734
    %1854 = vst [vmem:[#allocation3 + $0x110] sm:$0xff] %v737
    %1855 = vst [vmem:[#allocation3 + $0x118] sm:$0xff] %v740
    %1856 = vst [vmem:[#allocation3 + $0x120] sm:$0xff] %v743
    %1857 = vst [vmem:[#allocation3 + $0x128] sm:$0xff] %v746
    %1858 = vst [vmem:[#allocation3 + $0x130] sm:$0xff] %v749
    %1859 = vst [vmem:[#allocation3 + $0x138] sm:$0xff] %v752
    %1860 = vst [vmem:[#allocation3 + $0x140] sm:$0xff] %v755
    %1861 = vst [vmem:[#allocation3 + $0x148] sm:$0xff] %v758
    %1862 = vst [vmem:[#allocation3 + $0x150] sm:$0xff] %v761
    %1863 = vst [vmem:[#allocation3 + $0x158] sm:$0xff] %v764
    %1864 = vst [vmem:[#allocation3 + $0x160] sm:$0xff] %v767
    %1865 = vst [vmem:[#allocation3 + $0x168] sm:$0xff] %v770
    %1866 = vst [vmem:[#allocation3 + $0x170] sm:$0xff] %v773
    %1867 = vst [vmem:[#allocation3 + $0x178] sm:$0xff] %v776
    %1868 = vst [vmem:[#allocation3 + $0x180] sm:$0xff] %v779
    %1869 = vst [vmem:[#allocation3 + $0x188] sm:$0xff] %v782
    %1870 = vst [vmem:[#allocation3 + $0x190] sm:$0xff] %v785
    %1871 = vst [vmem:[#allocation3 + $0x198] sm:$0xff] %v788
    %1872 = vst [vmem:[#allocation3 + $0x1a0] sm:$0xff] %v791
    %1873 = vst [vmem:[#allocation3 + $0x1a8] sm:$0xff] %v794
    %1874 = vst [vmem:[#allocation3 + $0x1b0] sm:$0xff] %v797
    %1875 = vst [vmem:[#allocation3 + $0x1b8] sm:$0xff] %v800
    %1876 = vst [vmem:[#allocation3 + $0x1c0] sm:$0xff] %v803
    %1877 = vst [vmem:[#allocation3 + $0x1c8] sm:$0xff] %v806
    %1878 = vst [vmem:[#allocation3 + $0x1d0] sm:$0xff] %v809
    %1879 = vst [vmem:[#allocation3 + $0x1d8] sm:$0xff] %v812
    %1880 = vst [vmem:[#allocation3 + $0x1e0] sm:$0xff] %v815
    %1881 = vst [vmem:[#allocation3 + $0x1e8] sm:$0xff] %v818
    %1882 = vst [vmem:[#allocation3 + $0x1f0] sm:$0xff] %v821
    %1883 = vst [vmem:[#allocation3 + $0x1f8] sm:$0xff] %v824
    %1884 = vst [vmem:[#allocation3 + $0x200] sm:$0xff] %v827
    %1885 = vst [vmem:[#allocation3 + $0x208] sm:$0xff] %v830
    %1886 = vst [vmem:[#allocation3 + $0x210] sm:$0xff] %v833
    %1887 = vst [vmem:[#allocation3 + $0x218] sm:$0xff] %v836
    %1888 = vst [vmem:[#allocation3 + $0x220] sm:$0xff] %v839
    %1889 = vst [vmem:[#allocation3 + $0x228] sm:$0xff] %v842
    %1890 = vst [vmem:[#allocation3 + $0x230] sm:$0xff] %v845
    %1891 = vst [vmem:[#allocation3 + $0x238] sm:$0xff] %v848
    %1892 = vst [vmem:[#allocation3 + $0x240] sm:$0xff] %v851
    %1893 = vst [vmem:[#allocation3 + $0x248] sm:$0xff] %v854
    %1894 = vst [vmem:[#allocation3 + $0x250] sm:$0xff] %v857
    %1895 = vst [vmem:[#allocation3 + $0x258] sm:$0xff] %v860
    %1896 = vst [vmem:[#allocation3 + $0x260] sm:$0xff] %v863
    %1897 = vst [vmem:[#allocation3 + $0x268] sm:$0xff] %v866
    %1898 = vst [vmem:[#allocation3 + $0x270] sm:$0xff] %v869
    %1899 = vst [vmem:[#allocation3 + $0x278] sm:$0xff] %v872
    %1900 = vst [vmem:[#allocation3 + $0x280] sm:$0xff] %v875
    %1901 = vst [vmem:[#allocation3 + $0x288] sm:$0xff] %v878
    %1902 = vst [vmem:[#allocation3 + $0x290] sm:$0xff] %v881
    %1903 = vst [vmem:[#allocation3 + $0x298] sm:$0xff] %v884
    %1904 = vst [vmem:[#allocation3 + $0x2a0] sm:$0xff] %v887
    %1905 = vst [vmem:[#allocation3 + $0x2a8] sm:$0xff] %v890
    %1906 = vst [vmem:[#allocation3 + $0x2b0] sm:$0xff] %v893
    %1907 = vst [vmem:[#allocation3 + $0x2b8] sm:$0xff] %v896
    %1908 = vst [vmem:[#allocation3 + $0x2c0] sm:$0xff] %v899
    %1909 = vst [vmem:[#allocation3 + $0x2c8] sm:$0xff] %v902
    %1910 = vst [vmem:[#allocation3 + $0x2d0] sm:$0xff] %v905
    %1911 = vst [vmem:[#allocation3 + $0x2d8] sm:$0xff] %v908
    %1912 = vst [vmem:[#allocation3 + $0x2e0] sm:$0xff] %v911
    %1913 = vst [vmem:[#allocation3 + $0x2e8] sm:$0xff] %v914
    %1914 = vst [vmem:[#allocation3 + $0x2f0] sm:$0xff] %v917
    %1915 = vst [vmem:[#allocation3 + $0x2f8] sm:$0xff] %v920
    %1916 = vst [vmem:[#allocation3 + $0x300] sm:$0xff] %v923
    %1917 = vst [vmem:[#allocation3 + $0x308] sm:$0xff] %v926
    %1918 = vst [vmem:[#allocation3 + $0x310] sm:$0xff] %v929
    %1919 = vst [vmem:[#allocation3 + $0x318] sm:$0xff] %v932
    %1920 = vst [vmem:[#allocation3 + $0x320] sm:$0xff] %v935
    %1921 = vst [vmem:[#allocation3 + $0x328] sm:$0xff] %v938
    %1922 = vst [vmem:[#allocation3 + $0x330] sm:$0xff] %v941
    %1923 = vst [vmem:[#allocation3 + $0x338] sm:$0xff] %v944
    %1924 = vst [vmem:[#allocation3 + $0x340] sm:$0xff] %v947
    %1925 = vst [vmem:[#allocation3 + $0x348] sm:$0xff] %v950
    %1926 = vst [vmem:[#allocation3 + $0x350] sm:$0xff] %v953
    %1927 = vst [vmem:[#allocation3 + $0x358] sm:$0xff] %v956
    %1928 = vst [vmem:[#allocation3 + $0x360] sm:$0xff] %v959
    %1929 = vst [vmem:[#allocation3 + $0x368] sm:$0xff] %v962
    %1930 = vst [vmem:[#allocation3 + $0x370] sm:$0xff] %v965
    %1931 = vst [vmem:[#allocation3 + $0x378] sm:$0xff] %v968
    %1932 = vst [vmem:[#allocation3 + $0x380] sm:$0xff] %v971
    %1933 = vst [vmem:[#allocation3 + $0x388] sm:$0xff] %v974
    %1934 = vst [vmem:[#allocation3 + $0x390] sm:$0xff] %v977
    %1935 = vst [vmem:[#allocation3 + $0x398] sm:$0xff] %v980
    %1936 = vst [vmem:[#allocation3 + $0x3a0] sm:$0xff] %v983
    %1937 = vst [vmem:[#allocation3 + $0x3a8] sm:$0xff] %v986
    %1938 = vst [vmem:[#allocation3 + $0x3b0] sm:$0xff] %v989
    %1939 = vst [vmem:[#allocation3 + $0x3b8] sm:$0xff] %v992
    %1940 = vst [vmem:[#allocation3 + $0x3c0] sm:$0xff] %v995
    %1941 = vst [vmem:[#allocation3 + $0x3c8] sm:$0xff] %v998
    %1942 = vst [vmem:[#allocation3 + $0x3d0] sm:$0xff] %v1001
    %1943 = vst [vmem:[#allocation3 + $0x3d8] sm:$0xff] %v1004
    %1944 = vst [vmem:[#allocation3 + $0x3e0] sm:$0xff] %v1007
    %1945 = vst [vmem:[#allocation3 + $0x3e8] sm:$0xff] %v1010
    %1946 = vst [vmem:[#allocation3 + $0x3f0] sm:$0xff] %v1013
    %1947 = vst [vmem:[#allocation3 + $0x3f8] sm:$0xff] %v1016
    %1948 = vst [vmem:[#allocation2] sm:$0xff] %v1036
    %1949 = vst.msk [vmem:[#allocation2 + $0x8] sm:$0xff] %vm232, %v1437
    %1950 = vst [vmem:[#allocation2 + $0x10] sm:$0xff] %v1039
    %1951 = vst.msk [vmem:[#allocation2 + $0x18] sm:$0xff] %vm232, %v1440
    %1952 = vst [vmem:[#allocation2 + $0x20] sm:$0xff] %v1042
    %1953 = vst.msk [vmem:[#allocation2 + $0x28] sm:$0xff] %vm232, %v1443
    %1954 = vst [vmem:[#allocation2 + $0x30] sm:$0xff] %v1045
    %1955 = vst.msk [vmem:[#allocation2 + $0x38] sm:$0xff] %vm232, %v1446
    %1956 = vst [vmem:[#allocation2 + $0x40] sm:$0xff] %v1048
    %1957 = vst.msk [vmem:[#allocation2 + $0x48] sm:$0xff] %vm232, %v1449
    %1958 = vst [vmem:[#allocation2 + $0x50] sm:$0xff] %v1051
    %1959 = vst.msk [vmem:[#allocation2 + $0x58] sm:$0xff] %vm232, %v1452
    %1960 = vst [vmem:[#allocation2 + $0x60] sm:$0xff] %v1054
    %1961 = vst.msk [vmem:[#allocation2 + $0x68] sm:$0xff] %vm232, %v1455
    %1962 = vst [vmem:[#allocation2 + $0x70] sm:$0xff] %v1057
    %1963 = vst.msk [vmem:[#allocation2 + $0x78] sm:$0xff] %vm232, %v1458
    %1964 = vst [vmem:[#allocation2 + $0x80] sm:$0xff] %v1060
    %1965 = vst.msk [vmem:[#allocation2 + $0x88] sm:$0xff] %vm232, %v1461
    %1966 = vst [vmem:[#allocation2 + $0x90] sm:$0xff] %v1063
    %1967 = vst.msk [vmem:[#allocation2 + $0x98] sm:$0xff] %vm232, %v1464
    %1968 = vst [vmem:[#allocation2 + $0xa0] sm:$0xff] %v1066
    %1969 = vst.msk [vmem:[#allocation2 + $0xa8] sm:$0xff] %vm232, %v1467
    %1970 = vst [vmem:[#allocation2 + $0xb0] sm:$0xff] %v1069
    %1971 = vst.msk [vmem:[#allocation2 + $0xb8] sm:$0xff] %vm232, %v1470
    %1972 = vst [vmem:[#allocation2 + $0xc0] sm:$0xff] %v1072
    %1973 = vst.msk [vmem:[#allocation2 + $0xc8] sm:$0xff] %vm232, %v1473
    %1974 = vst [vmem:[#allocation2 + $0xd0] sm:$0xff] %v1075
    %1975 = vst.msk [vmem:[#allocation2 + $0xd8] sm:$0xff] %vm232, %v1476
    %1976 = vst [vmem:[#allocation2 + $0xe0] sm:$0xff] %v1078
    %1977 = vst.msk [vmem:[#allocation2 + $0xe8] sm:$0xff] %vm232, %v1479
    %1978 = vst [vmem:[#allocation2 + $0xf0] sm:$0xff] %v1081
    %1979 = vst.msk [vmem:[#allocation2 + $0xf8] sm:$0xff] %vm232, %v1482
    %1980 = vst [vmem:[#allocation2 + $0x100] sm:$0xff] %v1084
    %1981 = vst.msk [vmem:[#allocation2 + $0x108] sm:$0xff] %vm232, %v1485
    %1982 = vst [vmem:[#allocation2 + $0x110] sm:$0xff] %v1087
    %1983 = vst.msk [vmem:[#allocation2 + $0x118] sm:$0xff] %vm232, %v1488
    %1984 = vst [vmem:[#allocation2 + $0x120] sm:$0xff] %v1090
    %1985 = vst.msk [vmem:[#allocation2 + $0x128] sm:$0xff] %vm232, %v1491
    %1986 = vst [vmem:[#allocation2 + $0x130] sm:$0xff] %v1093
    %1987 = vst.msk [vmem:[#allocation2 + $0x138] sm:$0xff] %vm232, %v1494
    %1988 = vst [vmem:[#allocation2 + $0x140] sm:$0xff] %v1096
    %1989 = vst.msk [vmem:[#allocation2 + $0x148] sm:$0xff] %vm232, %v1497
    %1990 = vst [vmem:[#allocation2 + $0x150] sm:$0xff] %v1099
    %1991 = vst.msk [vmem:[#allocation2 + $0x158] sm:$0xff] %vm232, %v1500
    %1992 = vst [vmem:[#allocation2 + $0x160] sm:$0xff] %v1102
    %1993 = vst.msk [vmem:[#allocation2 + $0x168] sm:$0xff] %vm232, %v1503
    %1994 = vst [vmem:[#allocation2 + $0x170] sm:$0xff] %v1105
    %1995 = vst.msk [vmem:[#allocation2 + $0x178] sm:$0xff] %vm232, %v1506
    %1996 = vst [vmem:[#allocation2 + $0x180] sm:$0xff] %v1108
    %1997 = vst.msk [vmem:[#allocation2 + $0x188] sm:$0xff] %vm232, %v1509
    %1998 = vst [vmem:[#allocation2 + $0x190] sm:$0xff] %v1111
    %1999 = vst.msk [vmem:[#allocation2 + $0x198] sm:$0xff] %vm232, %v1512
    %2000 = vst [vmem:[#allocation2 + $0x1a0] sm:$0xff] %v1114
    %2001 = vst.msk [vmem:[#allocation2 + $0x1a8] sm:$0xff] %vm232, %v1515
    %2002 = vst [vmem:[#allocation2 + $0x1b0] sm:$0xff] %v1117
    %2003 = vst.msk [vmem:[#allocation2 + $0x1b8] sm:$0xff] %vm232, %v1518
    %2004 = vst [vmem:[#allocation2 + $0x1c0] sm:$0xff] %v1120
    %2005 = vst.msk [vmem:[#allocation2 + $0x1c8] sm:$0xff] %vm232, %v1521
    %2006 = vst [vmem:[#allocation2 + $0x1d0] sm:$0xff] %v1123
    %2007 = vst.msk [vmem:[#allocation2 + $0x1d8] sm:$0xff] %vm232, %v1524
    %2008 = vst [vmem:[#allocation2 + $0x1e0] sm:$0xff] %v1126
    %2009 = vst.msk [vmem:[#allocation2 + $0x1e8] sm:$0xff] %vm232, %v1527
    %2010 = vst [vmem:[#allocation2 + $0x1f0] sm:$0xff] %v1129
    %2011 = vst.msk [vmem:[#allocation2 + $0x1f8] sm:$0xff] %vm232, %v1530
    %2012 = vst [vmem:[#allocation2 + $0x200] sm:$0xff] %v1132
    %2013 = vst.msk [vmem:[#allocation2 + $0x208] sm:$0xff] %vm232, %v1533
    %2014 = vst [vmem:[#allocation2 + $0x210] sm:$0xff] %v1135
    %2015 = vst.msk [vmem:[#allocation2 + $0x218] sm:$0xff] %vm232, %v1536
    %2016 = vst [vmem:[#allocation2 + $0x220] sm:$0xff] %v1138
    %2017 = vst.msk [vmem:[#allocation2 + $0x228] sm:$0xff] %vm232, %v1539
    %2018 = vst [vmem:[#allocation2 + $0x230] sm:$0xff] %v1141
    %2019 = vst.msk [vmem:[#allocation2 + $0x238] sm:$0xff] %vm232, %v1542
    %2020 = vst [vmem:[#allocation2 + $0x240] sm:$0xff] %v1144
    %2021 = vst.msk [vmem:[#allocation2 + $0x248] sm:$0xff] %vm232, %v1545
    %2022 = vst [vmem:[#allocation2 + $0x250] sm:$0xff] %v1147
    %2023 = vst.msk [vmem:[#allocation2 + $0x258] sm:$0xff] %vm232, %v1548
    %2024 = vst [vmem:[#allocation2 + $0x260] sm:$0xff] %v1150
    %2025 = vst.msk [vmem:[#allocation2 + $0x268] sm:$0xff] %vm232, %v1551
    %2026 = vst [vmem:[#allocation2 + $0x270] sm:$0xff] %v1153
    %2027 = vst.msk [vmem:[#allocation2 + $0x278] sm:$0xff] %vm232, %v1554
    %2028 = vst [vmem:[#allocation2 + $0x280] sm:$0xff] %v1156
    %2029 = vst.msk [vmem:[#allocation2 + $0x288] sm:$0xff] %vm232, %v1557
    %2030 = vst [vmem:[#allocation2 + $0x290] sm:$0xff] %v1159
    %2031 = vst.msk [vmem:[#allocation2 + $0x298] sm:$0xff] %vm232, %v1560
    %2032 = vst [vmem:[#allocation2 + $0x2a0] sm:$0xff] %v1162
    %2033 = vst.msk [vmem:[#allocation2 + $0x2a8] sm:$0xff] %vm232, %v1563
    %2034 = vst [vmem:[#allocation2 + $0x2b0] sm:$0xff] %v1165
    %2035 = vst.msk [vmem:[#allocation2 + $0x2b8] sm:$0xff] %vm232, %v1566
    %2036 = vst [vmem:[#allocation2 + $0x2c0] sm:$0xff] %v1168
    %2037 = vst.msk [vmem:[#allocation2 + $0x2c8] sm:$0xff] %vm232, %v1569
    %2038 = vst [vmem:[#allocation2 + $0x2d0] sm:$0xff] %v1171
    %2039 = vst.msk [vmem:[#allocation2 + $0x2d8] sm:$0xff] %vm232, %v1572
    %2040 = vst [vmem:[#allocation2 + $0x2e0] sm:$0xff] %v1174
    %2041 = vst.msk [vmem:[#allocation2 + $0x2e8] sm:$0xff] %vm232, %v1575
    %2042 = vst [vmem:[#allocation2 + $0x2f0] sm:$0xff] %v1177
    %2043 = vst.msk [vmem:[#allocation2 + $0x2f8] sm:$0xff] %vm232, %v1578
    %2044 = vst [vmem:[#allocation2 + $0x300] sm:$0xff] %v1180
    %2045 = vst.msk [vmem:[#allocation2 + $0x308] sm:$0xff] %vm232, %v1581
    %2046 = vst [vmem:[#allocation2 + $0x310] sm:$0xff] %v1183
    %2047 = vst.msk [vmem:[#allocation2 + $0x318] sm:$0xff] %vm232, %v1584
    %2048 = vst [vmem:[#allocation2 + $0x320] sm:$0xff] %v1186
    %2049 = vst.msk [vmem:[#allocation2 + $0x328] sm:$0xff] %vm232, %v1587
    %2050 = vst [vmem:[#allocation2 + $0x330] sm:$0xff] %v1189
    %2051 = vst.msk [vmem:[#allocation2 + $0x338] sm:$0xff] %vm232, %v1590
    %2052 = vst [vmem:[#allocation2 + $0x340] sm:$0xff] %v1192
    %2053 = vst.msk [vmem:[#allocation2 + $0x348] sm:$0xff] %vm232, %v1593
    %2054 = vst [vmem:[#allocation2 + $0x350] sm:$0xff] %v1195
    %2055 = vst.msk [vmem:[#allocation2 + $0x358] sm:$0xff] %vm232, %v1596
    %2056 = vst [vmem:[#allocation2 + $0x360] sm:$0xff] %v1198
    %2057 = vst.msk [vmem:[#allocation2 + $0x368] sm:$0xff] %vm232, %v1599
    %2058 = vst [vmem:[#allocation2 + $0x370] sm:$0xff] %v1201
    %2059 = vst.msk [vmem:[#allocation2 + $0x378] sm:$0xff] %vm232, %v1602
    %2060 = vst [vmem:[#allocation2 + $0x380] sm:$0xff] %v1204
    %2061 = vst.msk [vmem:[#allocation2 + $0x388] sm:$0xff] %vm232, %v1605
    %2062 = vst [vmem:[#allocation2 + $0x390] sm:$0xff] %v1207
    %2063 = vst.msk [vmem:[#allocation2 + $0x398] sm:$0xff] %vm232, %v1608
    %2064 = vst [vmem:[#allocation2 + $0x3a0] sm:$0xff] %v1210
    %2065 = vst.msk [vmem:[#allocation2 + $0x3a8] sm:$0xff] %vm232, %v1611
    %2066 = vst [vmem:[#allocation2 + $0x3b0] sm:$0xff] %v1213
    %2067 = vst.msk [vmem:[#allocation2 + $0x3b8] sm:$0xff] %vm232, %v1614
    %2068 = vst [vmem:[#allocation2 + $0x3c0] sm:$0xff] %v1216
    %2069 = vst.msk [vmem:[#allocation2 + $0x3c8] sm:$0xff] %vm232, %v1617
    %2070 = vst [vmem:[#allocation2 + $0x3d0] sm:$0xff] %v1219
    %2071 = vst.msk [vmem:[#allocation2 + $0x3d8] sm:$0xff] %vm232, %v1620
    %2072 = vst [vmem:[#allocation2 + $0x3e0] sm:$0xff] %v1222
    %2073 = vst.msk [vmem:[#allocation2 + $0x3e8] sm:$0xff] %vm232, %v1623
    %2074 = vst [vmem:[#allocation2 + $0x3f0] sm:$0xff] %v1225
    %2075 = vst.msk [vmem:[#allocation2 + $0x3f8] sm:$0xff] %vm232, %v1626
    %2076 = vst [vmem:[#allocation2 + $0x400] sm:$0xff] %v1228
    %2077 = vst.msk [vmem:[#allocation2 + $0x408] sm:$0xff] %vm232, %v1629
    %2078 = vst [vmem:[#allocation2 + $0x410] sm:$0xff] %v1231
    %2079 = vst.msk [vmem:[#allocation2 + $0x418] sm:$0xff] %vm232, %v1632
    %2080 = vst [vmem:[#allocation2 + $0x420] sm:$0xff] %v1234
    %2081 = vst.msk [vmem:[#allocation2 + $0x428] sm:$0xff] %vm232, %v1635
    %2082 = vst [vmem:[#allocation2 + $0x430] sm:$0xff] %v1237
    %2083 = vst.msk [vmem:[#allocation2 + $0x438] sm:$0xff] %vm232, %v1638
    %2084 = vst [vmem:[#allocation2 + $0x440] sm:$0xff] %v1240
    %2085 = vst.msk [vmem:[#allocation2 + $0x448] sm:$0xff] %vm232, %v1641
    %2086 = vst [vmem:[#allocation2 + $0x450] sm:$0xff] %v1243
    %2087 = vst.msk [vmem:[#allocation2 + $0x458] sm:$0xff] %vm232, %v1644
    %2088 = vst [vmem:[#allocation2 + $0x460] sm:$0xff] %v1246
    %2089 = vst.msk [vmem:[#allocation2 + $0x468] sm:$0xff] %vm232, %v1647
    %2090 = vst [vmem:[#allocation2 + $0x470] sm:$0xff] %v1249
    %2091 = vst.msk [vmem:[#allocation2 + $0x478] sm:$0xff] %vm232, %v1650
    %2092 = vst [vmem:[#allocation2 + $0x480] sm:$0xff] %v1252
    %2093 = vst.msk [vmem:[#allocation2 + $0x488] sm:$0xff] %vm232, %v1653
    %2094 = vst [vmem:[#allocation2 + $0x490] sm:$0xff] %v1255
    %2095 = vst.msk [vmem:[#allocation2 + $0x498] sm:$0xff] %vm232, %v1656
    %2096 = vst [vmem:[#allocation2 + $0x4a0] sm:$0xff] %v1258
    %2097 = vst.msk [vmem:[#allocation2 + $0x4a8] sm:$0xff] %vm232, %v1659
    %2098 = vst [vmem:[#allocation2 + $0x4b0] sm:$0xff] %v1261
    %2099 = vst.msk [vmem:[#allocation2 + $0x4b8] sm:$0xff] %vm232, %v1662
    %2100 = vst [vmem:[#allocation2 + $0x4c0] sm:$0xff] %v1264
    %2101 = vst.msk [vmem:[#allocation2 + $0x4c8] sm:$0xff] %vm232, %v1665
    %2102 = vst [vmem:[#allocation2 + $0x4d0] sm:$0xff] %v1267
    %2103 = vst.msk [vmem:[#allocation2 + $0x4d8] sm:$0xff] %vm232, %v1668
    %2104 = vst [vmem:[#allocation2 + $0x4e0] sm:$0xff] %v1270
    %2105 = vst.msk [vmem:[#allocation2 + $0x4e8] sm:$0xff] %vm232, %v1671
    %2106 = vst [vmem:[#allocation2 + $0x4f0] sm:$0xff] %v1273
    %2107 = vst.msk [vmem:[#allocation2 + $0x4f8] sm:$0xff] %vm232, %v1674
    %2108 = vst [vmem:[#allocation2 + $0x500] sm:$0xff] %v1276
    %2109 = vst.msk [vmem:[#allocation2 + $0x508] sm:$0xff] %vm232, %v1677
    %2110 = vst [vmem:[#allocation2 + $0x510] sm:$0xff] %v1279
    %2111 = vst.msk [vmem:[#allocation2 + $0x518] sm:$0xff] %vm232, %v1680
    %2112 = vst [vmem:[#allocation2 + $0x520] sm:$0xff] %v1282
    %2113 = vst.msk [vmem:[#allocation2 + $0x528] sm:$0xff] %vm232, %v1683
    %2114 = vst [vmem:[#allocation2 + $0x530] sm:$0xff] %v1285
    %2115 = vst.msk [vmem:[#allocation2 + $0x538] sm:$0xff] %vm232, %v1686
    %2116 = vst [vmem:[#allocation2 + $0x540] sm:$0xff] %v1288
    %2117 = vst.msk [vmem:[#allocation2 + $0x548] sm:$0xff] %vm232, %v1689
    %2118 = vst [vmem:[#allocation2 + $0x550] sm:$0xff] %v1291
    %2119 = vst.msk [vmem:[#allocation2 + $0x558] sm:$0xff] %vm232, %v1692
    %2120 = vst [vmem:[#allocation2 + $0x560] sm:$0xff] %v1294
    %2121 = vst.msk [vmem:[#allocation2 + $0x568] sm:$0xff] %vm232, %v1695
    %2122 = vst [vmem:[#allocation2 + $0x570] sm:$0xff] %v1297
    %2123 = vst.msk [vmem:[#allocation2 + $0x578] sm:$0xff] %vm232, %v1698
    %2124 = vst [vmem:[#allocation2 + $0x580] sm:$0xff] %v1300
    %2125 = vst.msk [vmem:[#allocation2 + $0x588] sm:$0xff] %vm232, %v1701
    %2126 = vst [vmem:[#allocation2 + $0x590] sm:$0xff] %v1303
    %2127 = vst.msk [vmem:[#allocation2 + $0x598] sm:$0xff] %vm232, %v1704
    %2128 = vst [vmem:[#allocation2 + $0x5a0] sm:$0xff] %v1306
    %2129 = vst.msk [vmem:[#allocation2 + $0x5a8] sm:$0xff] %vm232, %v1707
    %2130 = vst [vmem:[#allocation2 + $0x5b0] sm:$0xff] %v1309
    %2131 = vst.msk [vmem:[#allocation2 + $0x5b8] sm:$0xff] %vm232, %v1710
    %2132 = vst [vmem:[#allocation2 + $0x5c0] sm:$0xff] %v1312
    %2133 = vst.msk [vmem:[#allocation2 + $0x5c8] sm:$0xff] %vm232, %v1713
    %2134 = vst [vmem:[#allocation2 + $0x5d0] sm:$0xff] %v1315
    %2135 = vst.msk [vmem:[#allocation2 + $0x5d8] sm:$0xff] %vm232, %v1716
    %2136 = vst [vmem:[#allocation2 + $0x5e0] sm:$0xff] %v1318
    %2137 = vst.msk [vmem:[#allocation2 + $0x5e8] sm:$0xff] %vm232, %v1719
    %2138 = vst [vmem:[#allocation2 + $0x5f0] sm:$0xff] %v1321
    %2139 = vst.msk [vmem:[#allocation2 + $0x5f8] sm:$0xff] %vm232, %v1722
    %2140 = vst [vmem:[#allocation2 + $0x600] sm:$0xff] %v1324
    %2141 = vst.msk [vmem:[#allocation2 + $0x608] sm:$0xff] %vm232, %v1725
    %2142 = vst [vmem:[#allocation2 + $0x610] sm:$0xff] %v1327
    %2143 = vst.msk [vmem:[#allocation2 + $0x618] sm:$0xff] %vm232, %v1728
    %2144 = vst [vmem:[#allocation2 + $0x620] sm:$0xff] %v1330
    %2145 = vst.msk [vmem:[#allocation2 + $0x628] sm:$0xff] %vm232, %v1731
    %2146 = vst [vmem:[#allocation2 + $0x630] sm:$0xff] %v1333
    %2147 = vst.msk [vmem:[#allocation2 + $0x638] sm:$0xff] %vm232, %v1734
    %2148 = vst [vmem:[#allocation2 + $0x640] sm:$0xff] %v1336
    %2149 = vst.msk [vmem:[#allocation2 + $0x648] sm:$0xff] %vm232, %v1737
    %2150 = vst [vmem:[#allocation2 + $0x650] sm:$0xff] %v1339
    %2151 = vst.msk [vmem:[#allocation2 + $0x658] sm:$0xff] %vm232, %v1740
    %2152 = vst [vmem:[#allocation2 + $0x660] sm:$0xff] %v1342
    %2153 = vst.msk [vmem:[#allocation2 + $0x668] sm:$0xff] %vm232, %v1743
    %2154 = vst [vmem:[#allocation2 + $0x670] sm:$0xff] %v1345
    %2155 = vst.msk [vmem:[#allocation2 + $0x678] sm:$0xff] %vm232, %v1746
    %2156 = vst [vmem:[#allocation2 + $0x680] sm:$0xff] %v1348
    %2157 = vst.msk [vmem:[#allocation2 + $0x688] sm:$0xff] %vm232, %v1749
    %2158 = vst [vmem:[#allocation2 + $0x690] sm:$0xff] %v1351
    %2159 = vst.msk [vmem:[#allocation2 + $0x698] sm:$0xff] %vm232, %v1752
    %2160 = vst [vmem:[#allocation2 + $0x6a0] sm:$0xff] %v1354
    %2161 = vst.msk [vmem:[#allocation2 + $0x6a8] sm:$0xff] %vm232, %v1755
    %2162 = vst [vmem:[#allocation2 + $0x6b0] sm:$0xff] %v1357
    %2163 = vst.msk [vmem:[#allocation2 + $0x6b8] sm:$0xff] %vm232, %v1758
    %2164 = vst [vmem:[#allocation2 + $0x6c0] sm:$0xff] %v1360
    %2165 = vst.msk [vmem:[#allocation2 + $0x6c8] sm:$0xff] %vm232, %v1761
    %2166 = vst [vmem:[#allocation2 + $0x6d0] sm:$0xff] %v1363
    %2167 = vst.msk [vmem:[#allocation2 + $0x6d8] sm:$0xff] %vm232, %v1764
    %2168 = vst [vmem:[#allocation2 + $0x6e0] sm:$0xff] %v1366
    %2169 = vst.msk [vmem:[#allocation2 + $0x6e8] sm:$0xff] %vm232, %v1767
    %2170 = vst [vmem:[#allocation2 + $0x6f0] sm:$0xff] %v1369
    %2171 = vst.msk [vmem:[#allocation2 + $0x6f8] sm:$0xff] %vm232, %v1770
    %2172 = vst [vmem:[#allocation2 + $0x700] sm:$0xff] %v1372
    %2173 = vst.msk [vmem:[#allocation2 + $0x708] sm:$0xff] %vm232, %v1773
    %2174 = vst [vmem:[#allocation2 + $0x710] sm:$0xff] %v1375
    %2175 = vst.msk [vmem:[#allocation2 + $0x718] sm:$0xff] %vm232, %v1776
    %2176 = vst [vmem:[#allocation2 + $0x720] sm:$0xff] %v1378
    %2177 = vst.msk [vmem:[#allocation2 + $0x728] sm:$0xff] %vm232, %v1779
    %2178 = vst [vmem:[#allocation2 + $0x730] sm:$0xff] %v1381
    %2179 = vst.msk [vmem:[#allocation2 + $0x738] sm:$0xff] %vm232, %v1782
    %2180 = vst [vmem:[#allocation2 + $0x740] sm:$0xff] %v1384
    %2181 = vst.msk [vmem:[#allocation2 + $0x748] sm:$0xff] %vm232, %v1785
    %2182 = vst [vmem:[#allocation2 + $0x750] sm:$0xff] %v1387
    %2183 = vst.msk [vmem:[#allocation2 + $0x758] sm:$0xff] %vm232, %v1788
    %2184 = vst [vmem:[#allocation2 + $0x760] sm:$0xff] %v1390
    %2185 = vst.msk [vmem:[#allocation2 + $0x768] sm:$0xff] %vm232, %v1791
    %2186 = vst [vmem:[#allocation2 + $0x770] sm:$0xff] %v1393
    %2187 = vst.msk [vmem:[#allocation2 + $0x778] sm:$0xff] %vm232, %v1794
    %2188 = vst [vmem:[#allocation2 + $0x780] sm:$0xff] %v1396
    %2189 = vst.msk [vmem:[#allocation2 + $0x788] sm:$0xff] %vm232, %v1797
    %2190 = vst [vmem:[#allocation2 + $0x790] sm:$0xff] %v1399
    %2191 = vst.msk [vmem:[#allocation2 + $0x798] sm:$0xff] %vm232, %v1800
    %2192 = vst [vmem:[#allocation2 + $0x7a0] sm:$0xff] %v1402
    %2193 = vst.msk [vmem:[#allocation2 + $0x7a8] sm:$0xff] %vm232, %v1803
    %2194 = vst [vmem:[#allocation2 + $0x7b0] sm:$0xff] %v1405
    %2195 = vst.msk [vmem:[#allocation2 + $0x7b8] sm:$0xff] %vm232, %v1806
    %2196 = vst [vmem:[#allocation2 + $0x7c0] sm:$0xff] %v1408
    %2197 = vst.msk [vmem:[#allocation2 + $0x7c8] sm:$0xff] %vm232, %v1809
    %2198 = vst [vmem:[#allocation2 + $0x7d0] sm:$0xff] %v1411
    %2199 = vst.msk [vmem:[#allocation2 + $0x7d8] sm:$0xff] %vm232, %v1812
    %2200 = vst [vmem:[#allocation2 + $0x7e0] sm:$0xff] %v1414
    %2201 = vst.msk [vmem:[#allocation2 + $0x7e8] sm:$0xff] %vm232, %v1815
    %2202 = vst [vmem:[#allocation2 + $0x7f0] sm:$0xff] %v1417
    %2203 = vst.msk [vmem:[#allocation2 + $0x7f8] sm:$0xff] %vm232, %v1818
    %v2204 = vperm.slane %v224, 0
    %v2205 = vlaneseq
    %v2206 = vshrl.u32 %v2205, 7
    %2208 = vset.pattern.permute.xlu0 %v2206
    %2209 = vperm.xlu0 %2208, %v2204
    %v2210 = vpop.permute.xlu0 %2209
    %v2211 = vlaneseq
    %v2212 = vshrl.u32 %v2211, 7
    %v2213 = vadd.s32 %v2212, 8
    %2214 = vset.pattern.permute.xlu0 %v2213
    %2215 = vperm.xlu0 %2214, %v2204
    %v2216 = vpop.permute.xlu0 %2215
    %v2217 = vlaneseq
    %v2218 = vshrl.u32 %v2217, 7
    %v2219 = vadd.s32 %v2218, 16
    %2220 = vset.pattern.permute.xlu0 %v2219
    %2221 = vperm.xlu0 %2220, %v2204
    %v2222 = vpop.permute.xlu0 %2221
    %v2223 = vlaneseq
    %v2224 = vshrl.u32 %v2223, 7
    %v2225 = vadd.s32 %v2224, 24
    %2226 = vset.pattern.permute.xlu0 %v2225
    %2227 = vperm.xlu0 %2226, %v2204
    %v2228 = vpop.permute.xlu0 %2227
    %v2229 = vlaneseq
    %v2230 = vshrl.u32 %v2229, 7
    %v2231 = vadd.s32 %v2230, 32
    %2232 = vset.pattern.permute.xlu0 %v2231
    %2233 = vperm.xlu0 %2232, %v2204
    %v2234 = vpop.permute.xlu0 %2233
    %v2235 = vlaneseq
    %v2236 = vshrl.u32 %v2235, 7
    %v2237 = vadd.s32 %v2236, 40
    %2238 = vset.pattern.permute.xlu0 %v2237
    %2239 = vperm.xlu0 %2238, %v2204
    %v2240 = vpop.permute.xlu0 %2239
    %v2241 = vlaneseq
    %v2242 = vshrl.u32 %v2241, 7
    %v2243 = vadd.s32 %v2242, 48
    %2244 = vset.pattern.permute.xlu0 %v2243
    %2245 = vperm.xlu0 %2244, %v2204
    %v2246 = vpop.permute.xlu0 %2245
    %v2247 = vlaneseq
    %v2248 = vshrl.u32 %v2247, 7
    %v2249 = vadd.s32 %v2248, 56
    %2250 = vset.pattern.permute.xlu0 %v2249
    %2251 = vperm.xlu0 %2250, %v2204
    %v2252 = vpop.permute.xlu0 %2251
    %v2253 = vlaneseq
    %v2254 = vshrl.u32 %v2253, 7
    %v2255 = vadd.s32 %v2254, 64
    %2256 = vset.pattern.permute.xlu0 %v2255
    %2257 = vperm.xlu0 %2256, %v2204
    %v2258 = vpop.permute.xlu0 %2257
    %v2259 = vlaneseq
    %v2260 = vshrl.u32 %v2259, 7
    %v2261 = vadd.s32 %v2260, 72
    %2262 = vset.pattern.permute.xlu0 %v2261
    %2263 = vperm.xlu0 %2262, %v2204
    %v2264 = vpop.permute.xlu0 %2263
    %v2265 = vlaneseq
    %v2266 = vshrl.u32 %v2265, 7
    %v2267 = vadd.s32 %v2266, 80
    %2268 = vset.pattern.permute.xlu0 %v2267
    %2269 = vperm.xlu0 %2268, %v2204
    %v2270 = vpop.permute.xlu0 %2269
    %v2271 = vlaneseq
    %v2272 = vshrl.u32 %v2271, 7
    %v2273 = vadd.s32 %v2272, 88
    %2274 = vset.pattern.permute.xlu0 %v2273
    %2275 = vperm.xlu0 %2274, %v2204
    %v2276 = vpop.permute.xlu0 %2275
    %v2277 = vlaneseq
    %v2278 = vshrl.u32 %v2277, 7
    %v2279 = vadd.s32 %v2278, 96
    %2280 = vset.pattern.permute.xlu0 %v2279
    %2281 = vperm.xlu0 %2280, %v2204
    %v2282 = vpop.permute.xlu0 %2281
    %v2283 = vlaneseq
    %v2284 = vshrl.u32 %v2283, 7
    %v2285 = vadd.s32 %v2284, 104
    %2286 = vset.pattern.permute.xlu0 %v2285
    %2287 = vperm.xlu0 %2286, %v2204
    %v2288 = vpop.permute.xlu0 %2287
    %v2289 = vlaneseq
    %v2290 = vshrl.u32 %v2289, 7
    %v2291 = vadd.s32 %v2290, 112
    %2292 = vset.pattern.permute.xlu0 %v2291
    %2293 = vperm.xlu0 %2292, %v2204
    %v2294 = vpop.permute.xlu0 %2293
    %v2295 = vlaneseq
    %v2296 = vshrl.u32 %v2295, 7
    %v2297 = vadd.s32 %v2296, 120
    %2298 = vset.pattern.permute.xlu0 %v2297
    %2299 = vperm.xlu0 %2298, %v2204
    %v2300 = vpop.permute.xlu0 %2299
    %v2301 = vperm.slane %v224, 1
    %v2302 = vlaneseq
    %v2303 = vshrl.u32 %v2302, 7
    %2305 = vset.pattern.permute.xlu0 %v2303
    %2306 = vperm.xlu0 %2305, %v2301
    %v2307 = vpop.permute.xlu0 %2306
    %v2308 = vlaneseq
    %v2309 = vshrl.u32 %v2308, 7
    %v2310 = vadd.s32 %v2309, 8
    %2311 = vset.pattern.permute.xlu0 %v2310
    %2312 = vperm.xlu0 %2311, %v2301
    %v2313 = vpop.permute.xlu0 %2312
    %v2314 = vlaneseq
    %v2315 = vshrl.u32 %v2314, 7
    %v2316 = vadd.s32 %v2315, 16
    %2317 = vset.pattern.permute.xlu0 %v2316
    %2318 = vperm.xlu0 %2317, %v2301
    %v2319 = vpop.permute.xlu0 %2318
    %v2320 = vlaneseq
    %v2321 = vshrl.u32 %v2320, 7
    %v2322 = vadd.s32 %v2321, 24
    %2323 = vset.pattern.permute.xlu0 %v2322
    %2324 = vperm.xlu0 %2323, %v2301
    %v2325 = vpop.permute.xlu0 %2324
    %v2326 = vlaneseq
    %v2327 = vshrl.u32 %v2326, 7
    %v2328 = vadd.s32 %v2327, 32
    %2329 = vset.pattern.permute.xlu0 %v2328
    %2330 = vperm.xlu0 %2329, %v2301
    %v2331 = vpop.permute.xlu0 %2330
    %v2332 = vlaneseq
    %v2333 = vshrl.u32 %v2332, 7
    %v2334 = vadd.s32 %v2333, 40
    %2335 = vset.pattern.permute.xlu0 %v2334
    %2336 = vperm.xlu0 %2335, %v2301
    %v2337 = vpop.permute.xlu0 %2336
    %v2338 = vlaneseq
    %v2339 = vshrl.u32 %v2338, 7
    %v2340 = vadd.s32 %v2339, 48
    %2341 = vset.pattern.permute.xlu0 %v2340
    %2342 = vperm.xlu0 %2341, %v2301
    %v2343 = vpop.permute.xlu0 %2342
    %v2344 = vlaneseq
    %v2345 = vshrl.u32 %v2344, 7
    %v2346 = vadd.s32 %v2345, 56
    %2347 = vset.pattern.permute.xlu0 %v2346
    %2348 = vperm.xlu0 %2347, %v2301
    %v2349 = vpop.permute.xlu0 %2348
    %v2350 = vlaneseq
    %v2351 = vshrl.u32 %v2350, 7
    %v2352 = vadd.s32 %v2351, 64
    %2353 = vset.pattern.permute.xlu0 %v2352
    %2354 = vperm.xlu0 %2353, %v2301
    %v2355 = vpop.permute.xlu0 %2354
    %v2356 = vlaneseq
    %v2357 = vshrl.u32 %v2356, 7
    %v2358 = vadd.s32 %v2357, 72
    %2359 = vset.pattern.permute.xlu0 %v2358
    %2360 = vperm.xlu0 %2359, %v2301
    %v2361 = vpop.permute.xlu0 %2360
    %v2362 = vlaneseq
    %v2363 = vshrl.u32 %v2362, 7
    %v2364 = vadd.s32 %v2363, 80
    %2365 = vset.pattern.permute.xlu0 %v2364
    %2366 = vperm.xlu0 %2365, %v2301
    %v2367 = vpop.permute.xlu0 %2366
    %v2368 = vlaneseq
    %v2369 = vshrl.u32 %v2368, 7
    %v2370 = vadd.s32 %v2369, 88
    %2371 = vset.pattern.permute.xlu0 %v2370
    %2372 = vperm.xlu0 %2371, %v2301
    %v2373 = vpop.permute.xlu0 %2372
    %v2374 = vlaneseq
    %v2375 = vshrl.u32 %v2374, 7
    %v2376 = vadd.s32 %v2375, 96
    %2377 = vset.pattern.permute.xlu0 %v2376
    %2378 = vperm.xlu0 %2377, %v2301
    %v2379 = vpop.permute.xlu0 %2378
    %v2380 = vlaneseq
    %v2381 = vshrl.u32 %v2380, 7
    %v2382 = vadd.s32 %v2381, 104
    %2383 = vset.pattern.permute.xlu0 %v2382
    %2384 = vperm.xlu0 %2383, %v2301
    %v2385 = vpop.permute.xlu0 %2384
    %v2386 = vlaneseq
    %v2387 = vshrl.u32 %v2386, 7
    %v2388 = vadd.s32 %v2387, 112
    %2389 = vset.pattern.permute.xlu0 %v2388
    %2390 = vperm.xlu0 %2389, %v2301
    %v2391 = vpop.permute.xlu0 %2390
    %v2392 = vlaneseq
    %v2393 = vshrl.u32 %v2392, 7
    %v2394 = vadd.s32 %v2393, 120
    %2395 = vset.pattern.permute.xlu0 %v2394
    %2396 = vperm.xlu0 %2395, %v2301
    %v2397 = vpop.permute.xlu0 %2396
    %v2398 = vperm.slane %v224, 2
    %v2399 = vlaneseq
    %v2400 = vshrl.u32 %v2399, 7
    %2402 = vset.pattern.permute.xlu0 %v2400
    %2403 = vperm.xlu0 %2402, %v2398
    %v2404 = vpop.permute.xlu0 %2403
    %v2405 = vlaneseq
    %v2406 = vshrl.u32 %v2405, 7
    %v2407 = vadd.s32 %v2406, 8
    %2408 = vset.pattern.permute.xlu0 %v2407
    %2409 = vperm.xlu0 %2408, %v2398
    %v2410 = vpop.permute.xlu0 %2409
    %v2411 = vlaneseq
    %v2412 = vshrl.u32 %v2411, 7
    %v2413 = vadd.s32 %v2412, 16
    %2414 = vset.pattern.permute.xlu0 %v2413
    %2415 = vperm.xlu0 %2414, %v2398
    %v2416 = vpop.permute.xlu0 %2415
    %v2417 = vlaneseq
    %v2418 = vshrl.u32 %v2417, 7
    %v2419 = vadd.s32 %v2418, 24
    %2420 = vset.pattern.permute.xlu0 %v2419
    %2421 = vperm.xlu0 %2420, %v2398
    %v2422 = vpop.permute.xlu0 %2421
    %v2423 = vlaneseq
    %v2424 = vshrl.u32 %v2423, 7
    %v2425 = vadd.s32 %v2424, 32
    %2426 = vset.pattern.permute.xlu0 %v2425
    %2427 = vperm.xlu0 %2426, %v2398
    %v2428 = vpop.permute.xlu0 %2427
    %v2429 = vlaneseq
    %v2430 = vshrl.u32 %v2429, 7
    %v2431 = vadd.s32 %v2430, 40
    %2432 = vset.pattern.permute.xlu0 %v2431
    %2433 = vperm.xlu0 %2432, %v2398
    %v2434 = vpop.permute.xlu0 %2433
    %v2435 = vlaneseq
    %v2436 = vshrl.u32 %v2435, 7
    %v2437 = vadd.s32 %v2436, 48
    %2438 = vset.pattern.permute.xlu0 %v2437
    %2439 = vperm.xlu0 %2438, %v2398
    %v2440 = vpop.permute.xlu0 %2439
    %v2441 = vlaneseq
    %v2442 = vshrl.u32 %v2441, 7
    %v2443 = vadd.s32 %v2442, 56
    %2444 = vset.pattern.permute.xlu0 %v2443
    %2445 = vperm.xlu0 %2444, %v2398
    %v2446 = vpop.permute.xlu0 %2445
    %v2447 = vlaneseq
    %v2448 = vshrl.u32 %v2447, 7
    %v2449 = vadd.s32 %v2448, 64
    %2450 = vset.pattern.permute.xlu0 %v2449
    %2451 = vperm.xlu0 %2450, %v2398
    %v2452 = vpop.permute.xlu0 %2451
    %v2453 = vlaneseq
    %v2454 = vshrl.u32 %v2453, 7
    %v2455 = vadd.s32 %v2454, 72
    %2456 = vset.pattern.permute.xlu0 %v2455
    %2457 = vperm.xlu0 %2456, %v2398
    %v2458 = vpop.permute.xlu0 %2457
    %v2459 = vlaneseq
    %v2460 = vshrl.u32 %v2459, 7
    %v2461 = vadd.s32 %v2460, 80
    %2462 = vset.pattern.permute.xlu0 %v2461
    %2463 = vperm.xlu0 %2462, %v2398
    %v2464 = vpop.permute.xlu0 %2463
    %v2465 = vlaneseq
    %v2466 = vshrl.u32 %v2465, 7
    %v2467 = vadd.s32 %v2466, 88
    %2468 = vset.pattern.permute.xlu0 %v2467
    %2469 = vperm.xlu0 %2468, %v2398
    %v2470 = vpop.permute.xlu0 %2469
    %v2471 = vlaneseq
    %v2472 = vshrl.u32 %v2471, 7
    %v2473 = vadd.s32 %v2472, 96
    %2474 = vset.pattern.permute.xlu0 %v2473
    %2475 = vperm.xlu0 %2474, %v2398
    %v2476 = vpop.permute.xlu0 %2475
    %v2477 = vlaneseq
    %v2478 = vshrl.u32 %v2477, 7
    %v2479 = vadd.s32 %v2478, 104
    %2480 = vset.pattern.permute.xlu0 %v2479
    %2481 = vperm.xlu0 %2480, %v2398
    %v2482 = vpop.permute.xlu0 %2481
    %v2483 = vlaneseq
    %v2484 = vshrl.u32 %v2483, 7
    %v2485 = vadd.s32 %v2484, 112
    %2486 = vset.pattern.permute.xlu0 %v2485
    %2487 = vperm.xlu0 %2486, %v2398
    %v2488 = vpop.permute.xlu0 %2487
    %v2489 = vlaneseq
    %v2490 = vshrl.u32 %v2489, 7
    %v2491 = vadd.s32 %v2490, 120
    %2492 = vset.pattern.permute.xlu0 %v2491
    %2493 = vperm.xlu0 %2492, %v2398
    %v2494 = vpop.permute.xlu0 %2493
    %v2495 = vperm.slane %v224, 3
    %v2496 = vlaneseq
    %v2497 = vshrl.u32 %v2496, 7
    %2499 = vset.pattern.permute.xlu0 %v2497
    %2500 = vperm.xlu0 %2499, %v2495
    %v2501 = vpop.permute.xlu0 %2500
    %v2502 = vlaneseq
    %v2503 = vshrl.u32 %v2502, 7
    %v2504 = vadd.s32 %v2503, 8
    %2505 = vset.pattern.permute.xlu0 %v2504
    %2506 = vperm.xlu0 %2505, %v2495
    %v2507 = vpop.permute.xlu0 %2506
    %v2508 = vlaneseq
    %v2509 = vshrl.u32 %v2508, 7
    %v2510 = vadd.s32 %v2509, 16
    %2511 = vset.pattern.permute.xlu0 %v2510
    %2512 = vperm.xlu0 %2511, %v2495
    %v2513 = vpop.permute.xlu0 %2512
    %v2514 = vlaneseq
    %v2515 = vshrl.u32 %v2514, 7
    %v2516 = vadd.s32 %v2515, 24
    %2517 = vset.pattern.permute.xlu0 %v2516
    %2518 = vperm.xlu0 %2517, %v2495
    %v2519 = vpop.permute.xlu0 %2518
    %v2520 = vlaneseq
    %v2521 = vshrl.u32 %v2520, 7
    %v2522 = vadd.s32 %v2521, 32
    %2523 = vset.pattern.permute.xlu0 %v2522
    %2524 = vperm.xlu0 %2523, %v2495
    %v2525 = vpop.permute.xlu0 %2524
    %v2526 = vlaneseq
    %v2527 = vshrl.u32 %v2526, 7
    %v2528 = vadd.s32 %v2527, 40
    %2529 = vset.pattern.permute.xlu0 %v2528
    %2530 = vperm.xlu0 %2529, %v2495
    %v2531 = vpop.permute.xlu0 %2530
    %v2532 = vlaneseq
    %v2533 = vshrl.u32 %v2532, 7
    %v2534 = vadd.s32 %v2533, 48
    %2535 = vset.pattern.permute.xlu0 %v2534
    %2536 = vperm.xlu0 %2535, %v2495
    %v2537 = vpop.permute.xlu0 %2536
    %v2538 = vlaneseq
    %v2539 = vshrl.u32 %v2538, 7
    %v2540 = vadd.s32 %v2539, 56
    %2541 = vset.pattern.permute.xlu0 %v2540
    %2542 = vperm.xlu0 %2541, %v2495
    %v2543 = vpop.permute.xlu0 %2542
    %v2544 = vlaneseq
    %v2545 = vshrl.u32 %v2544, 7
    %v2546 = vadd.s32 %v2545, 64
    %2547 = vset.pattern.permute.xlu0 %v2546
    %2548 = vperm.xlu0 %2547, %v2495
    %v2549 = vpop.permute.xlu0 %2548
    %v2550 = vlaneseq
    %v2551 = vshrl.u32 %v2550, 7
    %v2552 = vadd.s32 %v2551, 72
    %2553 = vset.pattern.permute.xlu0 %v2552
    %2554 = vperm.xlu0 %2553, %v2495
    %v2555 = vpop.permute.xlu0 %2554
    %v2556 = vlaneseq
    %v2557 = vshrl.u32 %v2556, 7
    %v2558 = vadd.s32 %v2557, 80
    %2559 = vset.pattern.permute.xlu0 %v2558
    %2560 = vperm.xlu0 %2559, %v2495
    %v2561 = vpop.permute.xlu0 %2560
    %v2562 = vlaneseq
    %v2563 = vshrl.u32 %v2562, 7
    %v2564 = vadd.s32 %v2563, 88
    %2565 = vset.pattern.permute.xlu0 %v2564
    %2566 = vperm.xlu0 %2565, %v2495
    %v2567 = vpop.permute.xlu0 %2566
    %v2568 = vlaneseq
    %v2569 = vshrl.u32 %v2568, 7
    %v2570 = vadd.s32 %v2569, 96
    %2571 = vset.pattern.permute.xlu0 %v2570
    %2572 = vperm.xlu0 %2571, %v2495
    %v2573 = vpop.permute.xlu0 %2572
    %v2574 = vlaneseq
    %v2575 = vshrl.u32 %v2574, 7
    %v2576 = vadd.s32 %v2575, 104
    %2577 = vset.pattern.permute.xlu0 %v2576
    %2578 = vperm.xlu0 %2577, %v2495
    %v2579 = vpop.permute.xlu0 %2578
    %v2580 = vlaneseq
    %v2581 = vshrl.u32 %v2580, 7
    %v2582 = vadd.s32 %v2581, 112
    %2583 = vset.pattern.permute.xlu0 %v2582
    %2584 = vperm.xlu0 %2583, %v2495
    %v2585 = vpop.permute.xlu0 %2584
    %v2586 = vlaneseq
    %v2587 = vshrl.u32 %v2586, 7
    %v2588 = vadd.s32 %v2587, 120
    %2589 = vset.pattern.permute.xlu0 %v2588
    %2590 = vperm.xlu0 %2589, %v2495
    %v2591 = vpop.permute.xlu0 %2590
    %v2592 = vperm.slane %v224, 4
    %v2593 = vlaneseq
    %v2594 = vshrl.u32 %v2593, 7
    %2596 = vset.pattern.permute.xlu0 %v2594
    %2597 = vperm.xlu0 %2596, %v2592
    %v2598 = vpop.permute.xlu0 %2597
    %v2599 = vlaneseq
    %v2600 = vshrl.u32 %v2599, 7
    %v2601 = vadd.s32 %v2600, 8
    %2602 = vset.pattern.permute.xlu0 %v2601
    %2603 = vperm.xlu0 %2602, %v2592
    %v2604 = vpop.permute.xlu0 %2603
    %v2605 = vlaneseq
    %v2606 = vshrl.u32 %v2605, 7
    %v2607 = vadd.s32 %v2606, 16
    %2608 = vset.pattern.permute.xlu0 %v2607
    %2609 = vperm.xlu0 %2608, %v2592
    %v2610 = vpop.permute.xlu0 %2609
    %v2611 = vlaneseq
    %v2612 = vshrl.u32 %v2611, 7
    %v2613 = vadd.s32 %v2612, 24
    %2614 = vset.pattern.permute.xlu0 %v2613
    %2615 = vperm.xlu0 %2614, %v2592
    %v2616 = vpop.permute.xlu0 %2615
    %v2617 = vlaneseq
    %v2618 = vshrl.u32 %v2617, 7
    %v2619 = vadd.s32 %v2618, 32
    %2620 = vset.pattern.permute.xlu0 %v2619
    %2621 = vperm.xlu0 %2620, %v2592
    %v2622 = vpop.permute.xlu0 %2621
    %v2623 = vlaneseq
    %v2624 = vshrl.u32 %v2623, 7
    %v2625 = vadd.s32 %v2624, 40
    %2626 = vset.pattern.permute.xlu0 %v2625
    %2627 = vperm.xlu0 %2626, %v2592
    %v2628 = vpop.permute.xlu0 %2627
    %v2629 = vlaneseq
    %v2630 = vshrl.u32 %v2629, 7
    %v2631 = vadd.s32 %v2630, 48
    %2632 = vset.pattern.permute.xlu0 %v2631
    %2633 = vperm.xlu0 %2632, %v2592
    %v2634 = vpop.permute.xlu0 %2633
    %v2635 = vlaneseq
    %v2636 = vshrl.u32 %v2635, 7
    %v2637 = vadd.s32 %v2636, 56
    %2638 = vset.pattern.permute.xlu0 %v2637
    %2639 = vperm.xlu0 %2638, %v2592
    %v2640 = vpop.permute.xlu0 %2639
    %v2641 = vlaneseq
    %v2642 = vshrl.u32 %v2641, 7
    %v2643 = vadd.s32 %v2642, 64
    %2644 = vset.pattern.permute.xlu0 %v2643
    %2645 = vperm.xlu0 %2644, %v2592
    %v2646 = vpop.permute.xlu0 %2645
    %v2647 = vlaneseq
    %v2648 = vshrl.u32 %v2647, 7
    %v2649 = vadd.s32 %v2648, 72
    %2650 = vset.pattern.permute.xlu0 %v2649
    %2651 = vperm.xlu0 %2650, %v2592
    %v2652 = vpop.permute.xlu0 %2651
    %v2653 = vlaneseq
    %v2654 = vshrl.u32 %v2653, 7
    %v2655 = vadd.s32 %v2654, 80
    %2656 = vset.pattern.permute.xlu0 %v2655
    %2657 = vperm.xlu0 %2656, %v2592
    %v2658 = vpop.permute.xlu0 %2657
    %v2659 = vlaneseq
    %v2660 = vshrl.u32 %v2659, 7
    %v2661 = vadd.s32 %v2660, 88
    %2662 = vset.pattern.permute.xlu0 %v2661
    %2663 = vperm.xlu0 %2662, %v2592
    %v2664 = vpop.permute.xlu0 %2663
    %v2665 = vlaneseq
    %v2666 = vshrl.u32 %v2665, 7
    %v2667 = vadd.s32 %v2666, 96
    %2668 = vset.pattern.permute.xlu0 %v2667
    %2669 = vperm.xlu0 %2668, %v2592
    %v2670 = vpop.permute.xlu0 %2669
    %v2671 = vlaneseq
    %v2672 = vshrl.u32 %v2671, 7
    %v2673 = vadd.s32 %v2672, 104
    %2674 = vset.pattern.permute.xlu0 %v2673
    %2675 = vperm.xlu0 %2674, %v2592
    %v2676 = vpop.permute.xlu0 %2675
    %v2677 = vlaneseq
    %v2678 = vshrl.u32 %v2677, 7
    %v2679 = vadd.s32 %v2678, 112
    %2680 = vset.pattern.permute.xlu0 %v2679
    %2681 = vperm.xlu0 %2680, %v2592
    %v2682 = vpop.permute.xlu0 %2681
    %v2683 = vlaneseq
    %v2684 = vshrl.u32 %v2683, 7
    %v2685 = vadd.s32 %v2684, 120
    %2686 = vset.pattern.permute.xlu0 %v2685
    %2687 = vperm.xlu0 %2686, %v2592
    %v2688 = vpop.permute.xlu0 %2687
    %v2689 = vperm.slane %v224, 5
    %v2690 = vlaneseq
    %v2691 = vshrl.u32 %v2690, 7
    %2693 = vset.pattern.permute.xlu0 %v2691
    %2694 = vperm.xlu0 %2693, %v2689
    %v2695 = vpop.permute.xlu0 %2694
    %v2696 = vlaneseq
    %v2697 = vshrl.u32 %v2696, 7
    %v2698 = vadd.s32 %v2697, 8
    %2699 = vset.pattern.permute.xlu0 %v2698
    %2700 = vperm.xlu0 %2699, %v2689
    %v2701 = vpop.permute.xlu0 %2700
    %v2702 = vlaneseq
    %v2703 = vshrl.u32 %v2702, 7
    %v2704 = vadd.s32 %v2703, 16
    %2705 = vset.pattern.permute.xlu0 %v2704
    %2706 = vperm.xlu0 %2705, %v2689
    %v2707 = vpop.permute.xlu0 %2706
    %v2708 = vlaneseq
    %v2709 = vshrl.u32 %v2708, 7
    %v2710 = vadd.s32 %v2709, 24
    %2711 = vset.pattern.permute.xlu0 %v2710
    %2712 = vperm.xlu0 %2711, %v2689
    %v2713 = vpop.permute.xlu0 %2712
    %v2714 = vlaneseq
    %v2715 = vshrl.u32 %v2714, 7
    %v2716 = vadd.s32 %v2715, 32
    %2717 = vset.pattern.permute.xlu0 %v2716
    %2718 = vperm.xlu0 %2717, %v2689
    %v2719 = vpop.permute.xlu0 %2718
    %v2720 = vlaneseq
    %v2721 = vshrl.u32 %v2720, 7
    %v2722 = vadd.s32 %v2721, 40
    %2723 = vset.pattern.permute.xlu0 %v2722
    %2724 = vperm.xlu0 %2723, %v2689
    %v2725 = vpop.permute.xlu0 %2724
    %v2726 = vlaneseq
    %v2727 = vshrl.u32 %v2726, 7
    %v2728 = vadd.s32 %v2727, 48
    %2729 = vset.pattern.permute.xlu0 %v2728
    %2730 = vperm.xlu0 %2729, %v2689
    %v2731 = vpop.permute.xlu0 %2730
    %v2732 = vlaneseq
    %v2733 = vshrl.u32 %v2732, 7
    %v2734 = vadd.s32 %v2733, 56
    %2735 = vset.pattern.permute.xlu0 %v2734
    %2736 = vperm.xlu0 %2735, %v2689
    %v2737 = vpop.permute.xlu0 %2736
    %v2738 = vlaneseq
    %v2739 = vshrl.u32 %v2738, 7
    %v2740 = vadd.s32 %v2739, 64
    %2741 = vset.pattern.permute.xlu0 %v2740
    %2742 = vperm.xlu0 %2741, %v2689
    %v2743 = vpop.permute.xlu0 %2742
    %v2744 = vlaneseq
    %v2745 = vshrl.u32 %v2744, 7
    %v2746 = vadd.s32 %v2745, 72
    %2747 = vset.pattern.permute.xlu0 %v2746
    %2748 = vperm.xlu0 %2747, %v2689
    %v2749 = vpop.permute.xlu0 %2748
    %v2750 = vlaneseq
    %v2751 = vshrl.u32 %v2750, 7
    %v2752 = vadd.s32 %v2751, 80
    %2753 = vset.pattern.permute.xlu0 %v2752
    %2754 = vperm.xlu0 %2753, %v2689
    %v2755 = vpop.permute.xlu0 %2754
    %v2756 = vlaneseq
    %v2757 = vshrl.u32 %v2756, 7
    %v2758 = vadd.s32 %v2757, 88
    %2759 = vset.pattern.permute.xlu0 %v2758
    %2760 = vperm.xlu0 %2759, %v2689
    %v2761 = vpop.permute.xlu0 %2760
    %v2762 = vlaneseq
    %v2763 = vshrl.u32 %v2762, 7
    %v2764 = vadd.s32 %v2763, 96
    %2765 = vset.pattern.permute.xlu0 %v2764
    %2766 = vperm.xlu0 %2765, %v2689
    %v2767 = vpop.permute.xlu0 %2766
    %v2768 = vlaneseq
    %v2769 = vshrl.u32 %v2768, 7
    %v2770 = vadd.s32 %v2769, 104
    %2771 = vset.pattern.permute.xlu0 %v2770
    %2772 = vperm.xlu0 %2771, %v2689
    %v2773 = vpop.permute.xlu0 %2772
    %v2774 = vlaneseq
    %v2775 = vshrl.u32 %v2774, 7
    %v2776 = vadd.s32 %v2775, 112
    %2777 = vset.pattern.permute.xlu0 %v2776
    %2778 = vperm.xlu0 %2777, %v2689
    %v2779 = vpop.permute.xlu0 %2778
    %v2780 = vlaneseq
    %v2781 = vshrl.u32 %v2780, 7
    %v2782 = vadd.s32 %v2781, 120
    %2783 = vset.pattern.permute.xlu0 %v2782
    %2784 = vperm.xlu0 %2783, %v2689
    %v2785 = vpop.permute.xlu0 %2784
    %v2786 = vperm.slane %v224, 6
    %v2787 = vlaneseq
    %v2788 = vshrl.u32 %v2787, 7
    %2790 = vset.pattern.permute.xlu0 %v2788
    %2791 = vperm.xlu0 %2790, %v2786
    %v2792 = vpop.permute.xlu0 %2791
    %v2793 = vlaneseq
    %v2794 = vshrl.u32 %v2793, 7
    %v2795 = vadd.s32 %v2794, 8
    %2796 = vset.pattern.permute.xlu0 %v2795
    %2797 = vperm.xlu0 %2796, %v2786
    %v2798 = vpop.permute.xlu0 %2797
    %v2799 = vlaneseq
    %v2800 = vshrl.u32 %v2799, 7
    %v2801 = vadd.s32 %v2800, 16
    %2802 = vset.pattern.permute.xlu0 %v2801
    %2803 = vperm.xlu0 %2802, %v2786
    %v2804 = vpop.permute.xlu0 %2803
    %v2805 = vlaneseq
    %v2806 = vshrl.u32 %v2805, 7
    %v2807 = vadd.s32 %v2806, 24
    %2808 = vset.pattern.permute.xlu0 %v2807
    %2809 = vperm.xlu0 %2808, %v2786
    %v2810 = vpop.permute.xlu0 %2809
    %v2811 = vlaneseq
    %v2812 = vshrl.u32 %v2811, 7
    %v2813 = vadd.s32 %v2812, 32
    %2814 = vset.pattern.permute.xlu0 %v2813
    %2815 = vperm.xlu0 %2814, %v2786
    %v2816 = vpop.permute.xlu0 %2815
    %v2817 = vlaneseq
    %v2818 = vshrl.u32 %v2817, 7
    %v2819 = vadd.s32 %v2818, 40
    %2820 = vset.pattern.permute.xlu0 %v2819
    %2821 = vperm.xlu0 %2820, %v2786
    %v2822 = vpop.permute.xlu0 %2821
    %v2823 = vlaneseq
    %v2824 = vshrl.u32 %v2823, 7
    %v2825 = vadd.s32 %v2824, 48
    %2826 = vset.pattern.permute.xlu0 %v2825
    %2827 = vperm.xlu0 %2826, %v2786
    %v2828 = vpop.permute.xlu0 %2827
    %v2829 = vlaneseq
    %v2830 = vshrl.u32 %v2829, 7
    %v2831 = vadd.s32 %v2830, 56
    %2832 = vset.pattern.permute.xlu0 %v2831
    %2833 = vperm.xlu0 %2832, %v2786
    %v2834 = vpop.permute.xlu0 %2833
    %v2835 = vlaneseq
    %v2836 = vshrl.u32 %v2835, 7
    %v2837 = vadd.s32 %v2836, 64
    %2838 = vset.pattern.permute.xlu0 %v2837
    %2839 = vperm.xlu0 %2838, %v2786
    %v2840 = vpop.permute.xlu0 %2839
    %v2841 = vlaneseq
    %v2842 = vshrl.u32 %v2841, 7
    %v2843 = vadd.s32 %v2842, 72
    %2844 = vset.pattern.permute.xlu0 %v2843
    %2845 = vperm.xlu0 %2844, %v2786
    %v2846 = vpop.permute.xlu0 %2845
    %v2847 = vlaneseq
    %v2848 = vshrl.u32 %v2847, 7
    %v2849 = vadd.s32 %v2848, 80
    %2850 = vset.pattern.permute.xlu0 %v2849
    %2851 = vperm.xlu0 %2850, %v2786
    %v2852 = vpop.permute.xlu0 %2851
    %v2853 = vlaneseq
    %v2854 = vshrl.u32 %v2853, 7
    %v2855 = vadd.s32 %v2854, 88
    %2856 = vset.pattern.permute.xlu0 %v2855
    %2857 = vperm.xlu0 %2856, %v2786
    %v2858 = vpop.permute.xlu0 %2857
    %v2859 = vlaneseq
    %v2860 = vshrl.u32 %v2859, 7
    %v2861 = vadd.s32 %v2860, 96
    %2862 = vset.pattern.permute.xlu0 %v2861
    %2863 = vperm.xlu0 %2862, %v2786
    %v2864 = vpop.permute.xlu0 %2863
    %v2865 = vlaneseq
    %v2866 = vshrl.u32 %v2865, 7
    %v2867 = vadd.s32 %v2866, 104
    %2868 = vset.pattern.permute.xlu0 %v2867
    %2869 = vperm.xlu0 %2868, %v2786
    %v2870 = vpop.permute.xlu0 %2869
    %v2871 = vlaneseq
    %v2872 = vshrl.u32 %v2871, 7
    %v2873 = vadd.s32 %v2872, 112
    %2874 = vset.pattern.permute.xlu0 %v2873
    %2875 = vperm.xlu0 %2874, %v2786
    %v2876 = vpop.permute.xlu0 %2875
    %v2877 = vlaneseq
    %v2878 = vshrl.u32 %v2877, 7
    %v2879 = vadd.s32 %v2878, 120
    %2880 = vset.pattern.permute.xlu0 %v2879
    %2881 = vperm.xlu0 %2880, %v2786
    %v2882 = vpop.permute.xlu0 %2881
    %v2883 = vperm.slane %v224, 7
    %v2884 = vlaneseq
    %v2885 = vshrl.u32 %v2884, 7
    %2887 = vset.pattern.permute.xlu0 %v2885
    %2888 = vperm.xlu0 %2887, %v2883
    %v2889 = vpop.permute.xlu0 %2888
    %v2890 = vlaneseq
    %v2891 = vshrl.u32 %v2890, 7
    %v2892 = vadd.s32 %v2891, 8
    %2893 = vset.pattern.permute.xlu0 %v2892
    %2894 = vperm.xlu0 %2893, %v2883
    %v2895 = vpop.permute.xlu0 %2894
    %v2896 = vlaneseq
    %v2897 = vshrl.u32 %v2896, 7
    %v2898 = vadd.s32 %v2897, 16
    %2899 = vset.pattern.permute.xlu0 %v2898
    %2900 = vperm.xlu0 %2899, %v2883
    %v2901 = vpop.permute.xlu0 %2900
    %v2902 = vlaneseq
    %v2903 = vshrl.u32 %v2902, 7
    %v2904 = vadd.s32 %v2903, 24
    %2905 = vset.pattern.permute.xlu0 %v2904
    %2906 = vperm.xlu0 %2905, %v2883
    %v2907 = vpop.permute.xlu0 %2906
    %v2908 = vlaneseq
    %v2909 = vshrl.u32 %v2908, 7
    %v2910 = vadd.s32 %v2909, 32
    %2911 = vset.pattern.permute.xlu0 %v2910
    %2912 = vperm.xlu0 %2911, %v2883
    %v2913 = vpop.permute.xlu0 %2912
    %v2914 = vlaneseq
    %v2915 = vshrl.u32 %v2914, 7
    %v2916 = vadd.s32 %v2915, 40
    %2917 = vset.pattern.permute.xlu0 %v2916
    %2918 = vperm.xlu0 %2917, %v2883
    %v2919 = vpop.permute.xlu0 %2918
    %v2920 = vlaneseq
    %v2921 = vshrl.u32 %v2920, 7
    %v2922 = vadd.s32 %v2921, 48
    %2923 = vset.pattern.permute.xlu0 %v2922
    %2924 = vperm.xlu0 %2923, %v2883
    %v2925 = vpop.permute.xlu0 %2924
    %v2926 = vlaneseq
    %v2927 = vshrl.u32 %v2926, 7
    %v2928 = vadd.s32 %v2927, 56
    %2929 = vset.pattern.permute.xlu0 %v2928
    %2930 = vperm.xlu0 %2929, %v2883
    %v2931 = vpop.permute.xlu0 %2930
    %v2932 = vlaneseq
    %v2933 = vshrl.u32 %v2932, 7
    %v2934 = vadd.s32 %v2933, 64
    %2935 = vset.pattern.permute.xlu0 %v2934
    %2936 = vperm.xlu0 %2935, %v2883
    %v2937 = vpop.permute.xlu0 %2936
    %v2938 = vlaneseq
    %v2939 = vshrl.u32 %v2938, 7
    %v2940 = vadd.s32 %v2939, 72
    %2941 = vset.pattern.permute.xlu0 %v2940
    %2942 = vperm.xlu0 %2941, %v2883
    %v2943 = vpop.permute.xlu0 %2942
    %v2944 = vlaneseq
    %v2945 = vshrl.u32 %v2944, 7
    %v2946 = vadd.s32 %v2945, 80
    %2947 = vset.pattern.permute.xlu0 %v2946
    %2948 = vperm.xlu0 %2947, %v2883
    %v2949 = vpop.permute.xlu0 %2948
    %v2950 = vlaneseq
    %v2951 = vshrl.u32 %v2950, 7
    %v2952 = vadd.s32 %v2951, 88
    %2953 = vset.pattern.permute.xlu0 %v2952
    %2954 = vperm.xlu0 %2953, %v2883
    %v2955 = vpop.permute.xlu0 %2954
    %v2956 = vlaneseq
    %v2957 = vshrl.u32 %v2956, 7
    %v2958 = vadd.s32 %v2957, 96
    %2959 = vset.pattern.permute.xlu0 %v2958
    %2960 = vperm.xlu0 %2959, %v2883
    %v2961 = vpop.permute.xlu0 %2960
    %v2962 = vlaneseq
    %v2963 = vshrl.u32 %v2962, 7
    %v2964 = vadd.s32 %v2963, 104
    %2965 = vset.pattern.permute.xlu0 %v2964
    %2966 = vperm.xlu0 %2965, %v2883
    %v2967 = vpop.permute.xlu0 %2966
    %v2968 = vlaneseq
    %v2969 = vshrl.u32 %v2968, 7
    %v2970 = vadd.s32 %v2969, 112
    %2971 = vset.pattern.permute.xlu0 %v2970
    %2972 = vperm.xlu0 %2971, %v2883
    %v2973 = vpop.permute.xlu0 %2972
    %v2974 = vlaneseq
    %v2975 = vshrl.u32 %v2974, 7
    %v2976 = vadd.s32 %v2975, 120
    %2977 = vset.pattern.permute.xlu0 %v2976
    %2978 = vperm.xlu0 %2977, %v2883
    %v2979 = vpop.permute.xlu0 %2978
    %v2980 = vmul.f32 %v1437, %v2210
    %v2981 = vmul.f32 %v1440, %v2216
    %v2982 = vmul.f32 %v1443, %v2222
    %v2983 = vmul.f32 %v1446, %v2228
    %v2984 = vmul.f32 %v1449, %v2234
    %v2985 = vmul.f32 %v1452, %v2240
    %v2986 = vmul.f32 %v1455, %v2246
    %v2987 = vmul.f32 %v1458, %v2252
    %v2988 = vmul.f32 %v1461, %v2258
    %v2989 = vmul.f32 %v1464, %v2264
    %v2990 = vmul.f32 %v1467, %v2270
    %v2991 = vmul.f32 %v1470, %v2276
    %v2992 = vmul.f32 %v1473, %v2282
    %v2993 = vmul.f32 %v1476, %v2288
    %v2994 = vmul.f32 %v1479, %v2294
    %v2995 = vmul.f32 %v1482, %v2300
    %v2996 = vmul.f32 %v1485, %v2307
    %v2997 = vmul.f32 %v1488, %v2313
    %v2998 = vmul.f32 %v1491, %v2319
    %v2999 = vmul.f32 %v1494, %v2325
    %v3000 = vmul.f32 %v1497, %v2331
    %v3001 = vmul.f32 %v1500, %v2337
    %v3002 = vmul.f32 %v1503, %v2343
    %v3003 = vmul.f32 %v1506, %v2349
    %v3004 = vmul.f32 %v1509, %v2355
    %v3005 = vmul.f32 %v1512, %v2361
    %v3006 = vmul.f32 %v1515, %v2367
    %v3007 = vmul.f32 %v1518, %v2373
    %v3008 = vmul.f32 %v1521, %v2379
    %v3009 = vmul.f32 %v1524, %v2385
    %v3010 = vmul.f32 %v1527, %v2391
    %v3011 = vmul.f32 %v1530, %v2397
    %v3012 = vmul.f32 %v1533, %v2404
    %v3013 = vmul.f32 %v1536, %v2410
    %v3014 = vmul.f32 %v1539, %v2416
    %v3015 = vmul.f32 %v1542, %v2422
    %v3016 = vmul.f32 %v1545, %v2428
    %v3017 = vmul.f32 %v1548, %v2434
    %v3018 = vmul.f32 %v1551, %v2440
    %v3019 = vmul.f32 %v1554, %v2446
    %v3020 = vmul.f32 %v1557, %v2452
    %v3021 = vmul.f32 %v1560, %v2458
    %v3022 = vmul.f32 %v1563, %v2464
    %v3023 = vmul.f32 %v1566, %v2470
    %v3024 = vmul.f32 %v1569, %v2476
    %v3025 = vmul.f32 %v1572, %v2482
    %v3026 = vmul.f32 %v1575, %v2488
    %v3027 = vmul.f32 %v1578, %v2494
    %v3028 = vmul.f32 %v1581, %v2501
    %v3029 = vmul.f32 %v1584, %v2507
    %v3030 = vmul.f32 %v1587, %v2513
    %v3031 = vmul.f32 %v1590, %v2519
    %v3032 = vmul.f32 %v1593, %v2525
    %v3033 = vmul.f32 %v1596, %v2531
    %v3034 = vmul.f32 %v1599, %v2537
    %v3035 = vmul.f32 %v1602, %v2543
    %v3036 = vmul.f32 %v1605, %v2549
    %v3037 = vmul.f32 %v1608, %v2555
    %v3038 = vmul.f32 %v1611, %v2561
    %v3039 = vmul.f32 %v1614, %v2567
    %v3040 = vmul.f32 %v1617, %v2573
    %v3041 = vmul.f32 %v1620, %v2579
    %v3042 = vmul.f32 %v1623, %v2585
    %v3043 = vmul.f32 %v1626, %v2591
    %v3044 = vmul.f32 %v1629, %v2598
    %v3045 = vmul.f32 %v1632, %v2604
    %v3046 = vmul.f32 %v1635, %v2610
    %v3047 = vmul.f32 %v1638, %v2616
    %v3048 = vmul.f32 %v1641, %v2622
    %v3049 = vmul.f32 %v1644, %v2628
    %v3050 = vmul.f32 %v1647, %v2634
    %v3051 = vmul.f32 %v1650, %v2640
    %v3052 = vmul.f32 %v1653, %v2646
    %v3053 = vmul.f32 %v1656, %v2652
    %v3054 = vmul.f32 %v1659, %v2658
    %v3055 = vmul.f32 %v1662, %v2664
    %v3056 = vmul.f32 %v1665, %v2670
    %v3057 = vmul.f32 %v1668, %v2676
    %v3058 = vmul.f32 %v1671, %v2682
    %v3059 = vmul.f32 %v1674, %v2688
    %v3060 = vmul.f32 %v1677, %v2695
    %v3061 = vmul.f32 %v1680, %v2701
    %v3062 = vmul.f32 %v1683, %v2707
    %v3063 = vmul.f32 %v1686, %v2713
    %v3064 = vmul.f32 %v1689, %v2719
    %v3065 = vmul.f32 %v1692, %v2725
    %v3066 = vmul.f32 %v1695, %v2731
    %v3067 = vmul.f32 %v1698, %v2737
    %v3068 = vmul.f32 %v1701, %v2743
    %v3069 = vmul.f32 %v1704, %v2749
    %v3070 = vmul.f32 %v1707, %v2755
    %v3071 = vmul.f32 %v1710, %v2761
    %v3072 = vmul.f32 %v1713, %v2767
    %v3073 = vmul.f32 %v1716, %v2773
    %v3074 = vmul.f32 %v1719, %v2779
    %v3075 = vmul.f32 %v1722, %v2785
    %v3076 = vmul.f32 %v1725, %v2792
    %v3077 = vmul.f32 %v1728, %v2798
    %v3078 = vmul.f32 %v1731, %v2804
    %v3079 = vmul.f32 %v1734, %v2810
    %v3080 = vmul.f32 %v1737, %v2816
    %v3081 = vmul.f32 %v1740, %v2822
    %v3082 = vmul.f32 %v1743, %v2828
    %v3083 = vmul.f32 %v1746, %v2834
    %v3084 = vmul.f32 %v1749, %v2840
    %v3085 = vmul.f32 %v1752, %v2846
    %v3086 = vmul.f32 %v1755, %v2852
    %v3087 = vmul.f32 %v1758, %v2858
    %v3088 = vmul.f32 %v1761, %v2864
    %v3089 = vmul.f32 %v1764, %v2870
    %v3090 = vmul.f32 %v1767, %v2876
    %v3091 = vmul.f32 %v1770, %v2882
    %v3092 = vmul.f32 %v1773, %v2889
    %v3093 = vmul.f32 %v1776, %v2895
    %v3094 = vmul.f32 %v1779, %v2901
    %v3095 = vmul.f32 %v1782, %v2907
    %v3096 = vmul.f32 %v1785, %v2913
    %v3097 = vmul.f32 %v1788, %v2919
    %v3098 = vmul.f32 %v1791, %v2925
    %v3099 = vmul.f32 %v1794, %v2931
    %v3100 = vmul.f32 %v1797, %v2937
    %v3101 = vmul.f32 %v1800, %v2943
    %v3102 = vmul.f32 %v1803, %v2949
    %v3103 = vmul.f32 %v1806, %v2955
    %v3104 = vmul.f32 %v1809, %v2961
    %v3105 = vmul.f32 %v1812, %v2967
    %v3106 = vmul.f32 %v1815, %v2973
    %v3107 = vmul.f32 %v1818, %v2979
    %3236 = vrot.lane.b32.xlu0 %v2980, 96
    %v3237 = vpop.permute.xlu0 %3236
    %3238 = vrot.lane.b32.xlu0 %v2981, 96
    %v3239 = vpop.permute.xlu0 %3238
    %3240 = vrot.lane.b32.xlu0 %v2982, 96
    %v3241 = vpop.permute.xlu0 %3240
    %3242 = vrot.lane.b32.xlu0 %v2983, 96
    %v3243 = vpop.permute.xlu0 %3242
    %3244 = vrot.lane.b32.xlu0 %v2984, 96
    %v3245 = vpop.permute.xlu0 %3244
    %3246 = vrot.lane.b32.xlu0 %v2985, 96
    %v3247 = vpop.permute.xlu0 %3246
    %3248 = vrot.lane.b32.xlu0 %v2986, 96
    %v3249 = vpop.permute.xlu0 %3248
    %3250 = vrot.lane.b32.xlu0 %v2987, 96
    %v3251 = vpop.permute.xlu0 %3250
    %3252 = vrot.lane.b32.xlu0 %v2988, 96
    %v3253 = vpop.permute.xlu0 %3252
    %3254 = vrot.lane.b32.xlu0 %v2989, 96
    %v3255 = vpop.permute.xlu0 %3254
    %3256 = vrot.lane.b32.xlu0 %v2990, 96
    %v3257 = vpop.permute.xlu0 %3256
    %3258 = vrot.lane.b32.xlu0 %v2991, 96
    %v3259 = vpop.permute.xlu0 %3258
    %3260 = vrot.lane.b32.xlu0 %v2992, 96
    %v3261 = vpop.permute.xlu0 %3260
    %3262 = vrot.lane.b32.xlu0 %v2993, 96
    %v3263 = vpop.permute.xlu0 %3262
    %3264 = vrot.lane.b32.xlu0 %v2994, 96
    %v3265 = vpop.permute.xlu0 %3264
    %3266 = vrot.lane.b32.xlu0 %v2995, 96
    %v3267 = vpop.permute.xlu0 %3266
    %3268 = vrot.lane.b32.xlu0 %v2996, 96
    %v3269 = vpop.permute.xlu0 %3268
    %3270 = vrot.lane.b32.xlu0 %v2997, 96
    %v3271 = vpop.permute.xlu0 %3270
    %3272 = vrot.lane.b32.xlu0 %v2998, 96
    %v3273 = vpop.permute.xlu0 %3272
    %3274 = vrot.lane.b32.xlu0 %v2999, 96
    %v3275 = vpop.permute.xlu0 %3274
    %3276 = vrot.lane.b32.xlu0 %v3000, 96
    %v3277 = vpop.permute.xlu0 %3276
    %3278 = vrot.lane.b32.xlu0 %v3001, 96
    %v3279 = vpop.permute.xlu0 %3278
    %3280 = vrot.lane.b32.xlu0 %v3002, 96
    %v3281 = vpop.permute.xlu0 %3280
    %3282 = vrot.lane.b32.xlu0 %v3003, 96
    %v3283 = vpop.permute.xlu0 %3282
    %3284 = vrot.lane.b32.xlu0 %v3004, 96
    %v3285 = vpop.permute.xlu0 %3284
    %3286 = vrot.lane.b32.xlu0 %v3005, 96
    %v3287 = vpop.permute.xlu0 %3286
    %3288 = vrot.lane.b32.xlu0 %v3006, 96
    %v3289 = vpop.permute.xlu0 %3288
    %3290 = vrot.lane.b32.xlu0 %v3007, 96
    %v3291 = vpop.permute.xlu0 %3290
    %3292 = vrot.lane.b32.xlu0 %v3008, 96
    %v3293 = vpop.permute.xlu0 %3292
    %3294 = vrot.lane.b32.xlu0 %v3009, 96
    %v3295 = vpop.permute.xlu0 %3294
    %3296 = vrot.lane.b32.xlu0 %v3010, 96
    %v3297 = vpop.permute.xlu0 %3296
    %3298 = vrot.lane.b32.xlu0 %v3011, 96
    %v3299 = vpop.permute.xlu0 %3298
    %3300 = vrot.lane.b32.xlu0 %v3012, 96
    %v3301 = vpop.permute.xlu0 %3300
    %3302 = vrot.lane.b32.xlu0 %v3013, 96
    %v3303 = vpop.permute.xlu0 %3302
    %3304 = vrot.lane.b32.xlu0 %v3014, 96
    %v3305 = vpop.permute.xlu0 %3304
    %3306 = vrot.lane.b32.xlu0 %v3015, 96
    %v3307 = vpop.permute.xlu0 %3306
    %3308 = vrot.lane.b32.xlu0 %v3016, 96
    %v3309 = vpop.permute.xlu0 %3308
    %3310 = vrot.lane.b32.xlu0 %v3017, 96
    %v3311 = vpop.permute.xlu0 %3310
    %3312 = vrot.lane.b32.xlu0 %v3018, 96
    %v3313 = vpop.permute.xlu0 %3312
    %3314 = vrot.lane.b32.xlu0 %v3019, 96
    %v3315 = vpop.permute.xlu0 %3314
    %3316 = vrot.lane.b32.xlu0 %v3020, 96
    %v3317 = vpop.permute.xlu0 %3316
    %3318 = vrot.lane.b32.xlu0 %v3021, 96
    %v3319 = vpop.permute.xlu0 %3318
    %3320 = vrot.lane.b32.xlu0 %v3022, 96
    %v3321 = vpop.permute.xlu0 %3320
    %3322 = vrot.lane.b32.xlu0 %v3023, 96
    %v3323 = vpop.permute.xlu0 %3322
    %3324 = vrot.lane.b32.xlu0 %v3024, 96
    %v3325 = vpop.permute.xlu0 %3324
    %3326 = vrot.lane.b32.xlu0 %v3025, 96
    %v3327 = vpop.permute.xlu0 %3326
    %3328 = vrot.lane.b32.xlu0 %v3026, 96
    %v3329 = vpop.permute.xlu0 %3328
    %3330 = vrot.lane.b32.xlu0 %v3027, 96
    %v3331 = vpop.permute.xlu0 %3330
    %3332 = vrot.lane.b32.xlu0 %v3028, 96
    %v3333 = vpop.permute.xlu0 %3332
    %3334 = vrot.lane.b32.xlu0 %v3029, 96
    %v3335 = vpop.permute.xlu0 %3334
    %3336 = vrot.lane.b32.xlu0 %v3030, 96
    %v3337 = vpop.permute.xlu0 %3336
    %3338 = vrot.lane.b32.xlu0 %v3031, 96
    %v3339 = vpop.permute.xlu0 %3338
    %3340 = vrot.lane.b32.xlu0 %v3032, 96
    %v3341 = vpop.permute.xlu0 %3340
    %3342 = vrot.lane.b32.xlu0 %v3033, 96
    %v3343 = vpop.permute.xlu0 %3342
    %3344 = vrot.lane.b32.xlu0 %v3034, 96
    %v3345 = vpop.permute.xlu0 %3344
    %3346 = vrot.lane.b32.xlu0 %v3035, 96
    %v3347 = vpop.permute.xlu0 %3346
    %3348 = vrot.lane.b32.xlu0 %v3036, 96
    %v3349 = vpop.permute.xlu0 %3348
    %3350 = vrot.lane.b32.xlu0 %v3037, 96
    %v3351 = vpop.permute.xlu0 %3350
    %3352 = vrot.lane.b32.xlu0 %v3038, 96
    %v3353 = vpop.permute.xlu0 %3352
    %3354 = vrot.lane.b32.xlu0 %v3039, 96
    %v3355 = vpop.permute.xlu0 %3354
    %3356 = vrot.lane.b32.xlu0 %v3040, 96
    %v3357 = vpop.permute.xlu0 %3356
    %3358 = vrot.lane.b32.xlu0 %v3041, 96
    %v3359 = vpop.permute.xlu0 %3358
    %3360 = vrot.lane.b32.xlu0 %v3042, 96
    %v3361 = vpop.permute.xlu0 %3360
    %3362 = vrot.lane.b32.xlu0 %v3043, 96
    %v3363 = vpop.permute.xlu0 %3362
    %3364 = vrot.lane.b32.xlu0 %v3044, 96
    %v3365 = vpop.permute.xlu0 %3364
    %3366 = vrot.lane.b32.xlu0 %v3045, 96
    %v3367 = vpop.permute.xlu0 %3366
    %3368 = vrot.lane.b32.xlu0 %v3046, 96
    %v3369 = vpop.permute.xlu0 %3368
    %3370 = vrot.lane.b32.xlu0 %v3047, 96
    %v3371 = vpop.permute.xlu0 %3370
    %3372 = vrot.lane.b32.xlu0 %v3048, 96
    %v3373 = vpop.permute.xlu0 %3372
    %3374 = vrot.lane.b32.xlu0 %v3049, 96
    %v3375 = vpop.permute.xlu0 %3374
    %3376 = vrot.lane.b32.xlu0 %v3050, 96
    %v3377 = vpop.permute.xlu0 %3376
    %3378 = vrot.lane.b32.xlu0 %v3051, 96
    %v3379 = vpop.permute.xlu0 %3378
    %3380 = vrot.lane.b32.xlu0 %v3052, 96
    %v3381 = vpop.permute.xlu0 %3380
    %3382 = vrot.lane.b32.xlu0 %v3053, 96
    %v3383 = vpop.permute.xlu0 %3382
    %3384 = vrot.lane.b32.xlu0 %v3054, 96
    %v3385 = vpop.permute.xlu0 %3384
    %3386 = vrot.lane.b32.xlu0 %v3055, 96
    %v3387 = vpop.permute.xlu0 %3386
    %3388 = vrot.lane.b32.xlu0 %v3056, 96
    %v3389 = vpop.permute.xlu0 %3388
    %3390 = vrot.lane.b32.xlu0 %v3057, 96
    %v3391 = vpop.permute.xlu0 %3390
    %3392 = vrot.lane.b32.xlu0 %v3058, 96
    %v3393 = vpop.permute.xlu0 %3392
    %3394 = vrot.lane.b32.xlu0 %v3059, 96
    %v3395 = vpop.permute.xlu0 %3394
    %3396 = vrot.lane.b32.xlu0 %v3060, 96
    %v3397 = vpop.permute.xlu0 %3396
    %3398 = vrot.lane.b32.xlu0 %v3061, 96
    %v3399 = vpop.permute.xlu0 %3398
    %3400 = vrot.lane.b32.xlu0 %v3062, 96
    %v3401 = vpop.permute.xlu0 %3400
    %3402 = vrot.lane.b32.xlu0 %v3063, 96
    %v3403 = vpop.permute.xlu0 %3402
    %3404 = vrot.lane.b32.xlu0 %v3064, 96
    %v3405 = vpop.permute.xlu0 %3404
    %3406 = vrot.lane.b32.xlu0 %v3065, 96
    %v3407 = vpop.permute.xlu0 %3406
    %3408 = vrot.lane.b32.xlu0 %v3066, 96
    %v3409 = vpop.permute.xlu0 %3408
    %3410 = vrot.lane.b32.xlu0 %v3067, 96
    %v3411 = vpop.permute.xlu0 %3410
    %3412 = vrot.lane.b32.xlu0 %v3068, 96
    %v3413 = vpop.permute.xlu0 %3412
    %3414 = vrot.lane.b32.xlu0 %v3069, 96
    %v3415 = vpop.permute.xlu0 %3414
    %3416 = vrot.lane.b32.xlu0 %v3070, 96
    %v3417 = vpop.permute.xlu0 %3416
    %3418 = vrot.lane.b32.xlu0 %v3071, 96
    %v3419 = vpop.permute.xlu0 %3418
    %3420 = vrot.lane.b32.xlu0 %v3072, 96
    %v3421 = vpop.permute.xlu0 %3420
    %3422 = vrot.lane.b32.xlu0 %v3073, 96
    %v3423 = vpop.permute.xlu0 %3422
    %3424 = vrot.lane.b32.xlu0 %v3074, 96
    %v3425 = vpop.permute.xlu0 %3424
    %3426 = vrot.lane.b32.xlu0 %v3075, 96
    %v3427 = vpop.permute.xlu0 %3426
    %3428 = vrot.lane.b32.xlu0 %v3076, 96
    %v3429 = vpop.permute.xlu0 %3428
    %3430 = vrot.lane.b32.xlu0 %v3077, 96
    %v3431 = vpop.permute.xlu0 %3430
    %3432 = vrot.lane.b32.xlu0 %v3078, 96
    %v3433 = vpop.permute.xlu0 %3432
    %3434 = vrot.lane.b32.xlu0 %v3079, 96
    %v3435 = vpop.permute.xlu0 %3434
    %3436 = vrot.lane.b32.xlu0 %v3080, 96
    %v3437 = vpop.permute.xlu0 %3436
    %3438 = vrot.lane.b32.xlu0 %v3081, 96
    %v3439 = vpop.permute.xlu0 %3438
    %3440 = vrot.lane.b32.xlu0 %v3082, 96
    %v3441 = vpop.permute.xlu0 %3440
    %3442 = vrot.lane.b32.xlu0 %v3083, 96
    %v3443 = vpop.permute.xlu0 %3442
    %3444 = vrot.lane.b32.xlu0 %v3084, 96
    %v3445 = vpop.permute.xlu0 %3444
    %3446 = vrot.lane.b32.xlu0 %v3085, 96
    %v3447 = vpop.permute.xlu0 %3446
    %3448 = vrot.lane.b32.xlu0 %v3086, 96
    %v3449 = vpop.permute.xlu0 %3448
    %3450 = vrot.lane.b32.xlu0 %v3087, 96
    %v3451 = vpop.permute.xlu0 %3450
    %3452 = vrot.lane.b32.xlu0 %v3088, 96
    %v3453 = vpop.permute.xlu0 %3452
    %3454 = vrot.lane.b32.xlu0 %v3089, 96
    %v3455 = vpop.permute.xlu0 %3454
    %3456 = vrot.lane.b32.xlu0 %v3090, 96
    %v3457 = vpop.permute.xlu0 %3456
    %3458 = vrot.lane.b32.xlu0 %v3091, 96
    %v3459 = vpop.permute.xlu0 %3458
    %3460 = vrot.lane.b32.xlu0 %v3092, 96
    %v3461 = vpop.permute.xlu0 %3460
    %3462 = vrot.lane.b32.xlu0 %v3093, 96
    %v3463 = vpop.permute.xlu0 %3462
    %3464 = vrot.lane.b32.xlu0 %v3094, 96
    %v3465 = vpop.permute.xlu0 %3464
    %3466 = vrot.lane.b32.xlu0 %v3095, 96
    %v3467 = vpop.permute.xlu0 %3466
    %3468 = vrot.lane.b32.xlu0 %v3096, 96
    %v3469 = vpop.permute.xlu0 %3468
    %3470 = vrot.lane.b32.xlu0 %v3097, 96
    %v3471 = vpop.permute.xlu0 %3470
    %3472 = vrot.lane.b32.xlu0 %v3098, 96
    %v3473 = vpop.permute.xlu0 %3472
    %3474 = vrot.lane.b32.xlu0 %v3099, 96
    %v3475 = vpop.permute.xlu0 %3474
    %3476 = vrot.lane.b32.xlu0 %v3100, 96
    %v3477 = vpop.permute.xlu0 %3476
    %3478 = vrot.lane.b32.xlu0 %v3101, 96
    %v3479 = vpop.permute.xlu0 %3478
    %3480 = vrot.lane.b32.xlu0 %v3102, 96
    %v3481 = vpop.permute.xlu0 %3480
    %3482 = vrot.lane.b32.xlu0 %v3103, 96
    %v3483 = vpop.permute.xlu0 %3482
    %3484 = vrot.lane.b32.xlu0 %v3104, 96
    %v3485 = vpop.permute.xlu0 %3484
    %3486 = vrot.lane.b32.xlu0 %v3105, 96
    %v3487 = vpop.permute.xlu0 %3486
    %3488 = vrot.lane.b32.xlu0 %v3106, 96
    %v3489 = vpop.permute.xlu0 %3488
    %3490 = vrot.lane.b32.xlu0 %v3107, 96
    %v3491 = vpop.permute.xlu0 %3490
    %3620 = vxpose.xlu0.b32.start [1/16] %v3237, 128
    %3621 = vxpose.xlu0.b32.cont [2/16] %v3239, 128
    %3622 = vxpose.xlu0.b32.cont [3/16] %v3241, 128
    %3623 = vxpose.xlu0.b32.cont [4/16] %v3243, 128
    %3624 = vxpose.xlu0.b32.cont [5/16] %v3245, 128
    %3625 = vxpose.xlu0.b32.cont [6/16] %v3247, 128
    %3626 = vxpose.xlu0.b32.cont [7/16] %v3249, 128
    %3627 = vxpose.xlu0.b32.cont [8/16] %v3251, 128
    %3628 = vxpose.xlu0.b32.cont [9/16] %v3253, 128
    %3629 = vxpose.xlu0.b32.cont [10/16] %v3255, 128
    %3630 = vxpose.xlu0.b32.cont [11/16] %v3257, 128
    %3631 = vxpose.xlu0.b32.cont [12/16] %v3259, 128
    %3632 = vxpose.xlu0.b32.cont [13/16] %v3261, 128
    %3633 = vxpose.xlu0.b32.cont [14/16] %v3263, 128
    %3634 = vxpose.xlu0.b32.cont [15/16] %v3265, 128
    %3635 = vxpose.xlu0.b32.end [16/16] %v3267, 128
    %v3636 = vpop.trf.xlu0
    %v3637 = vpop.trf.xlu0
    %v3638 = vpop.trf.xlu0
    %v3639 = vpop.trf.xlu0
    %v3640 = vpop.trf.xlu0
    %v3641 = vpop.trf.xlu0
    %v3642 = vpop.trf.xlu0
    %v3643 = vpop.trf.xlu0
    %v3644 = vpop.trf.xlu0
    %v3645 = vpop.trf.xlu0
    %v3646 = vpop.trf.xlu0
    %v3647 = vpop.trf.xlu0
    %v3648 = vpop.trf.xlu0
    %v3649 = vpop.trf.xlu0
    %v3650 = vpop.trf.xlu0
    %v3651 = vpop.trf.xlu0
    %3652 = vxpose.xlu0.b32.start [1/16] %v3269, 128
    %3653 = vxpose.xlu0.b32.cont [2/16] %v3271, 128
    %3654 = vxpose.xlu0.b32.cont [3/16] %v3273, 128
    %3655 = vxpose.xlu0.b32.cont [4/16] %v3275, 128
    %3656 = vxpose.xlu0.b32.cont [5/16] %v3277, 128
    %3657 = vxpose.xlu0.b32.cont [6/16] %v3279, 128
    %3658 = vxpose.xlu0.b32.cont [7/16] %v3281, 128
    %3659 = vxpose.xlu0.b32.cont [8/16] %v3283, 128
    %3660 = vxpose.xlu0.b32.cont [9/16] %v3285, 128
    %3661 = vxpose.xlu0.b32.cont [10/16] %v3287, 128
    %3662 = vxpose.xlu0.b32.cont [11/16] %v3289, 128
    %3663 = vxpose.xlu0.b32.cont [12/16] %v3291, 128
    %3664 = vxpose.xlu0.b32.cont [13/16] %v3293, 128
    %3665 = vxpose.xlu0.b32.cont [14/16] %v3295, 128
    %3666 = vxpose.xlu0.b32.cont [15/16] %v3297, 128
    %3667 = vxpose.xlu0.b32.end [16/16] %v3299, 128
    %v3668 = vpop.trf.xlu0
    %v3669 = vpop.trf.xlu0
    %v3670 = vpop.trf.xlu0
    %v3671 = vpop.trf.xlu0
    %v3672 = vpop.trf.xlu0
    %v3673 = vpop.trf.xlu0
    %v3674 = vpop.trf.xlu0
    %v3675 = vpop.trf.xlu0
    %v3676 = vpop.trf.xlu0
    %v3677 = vpop.trf.xlu0
    %v3678 = vpop.trf.xlu0
    %v3679 = vpop.trf.xlu0
    %v3680 = vpop.trf.xlu0
    %v3681 = vpop.trf.xlu0
    %v3682 = vpop.trf.xlu0
    %v3683 = vpop.trf.xlu0
    %3684 = vxpose.xlu0.b32.start [1/16] %v3301, 128
    %3685 = vxpose.xlu0.b32.cont [2/16] %v3303, 128
    %3686 = vxpose.xlu0.b32.cont [3/16] %v3305, 128
    %3687 = vxpose.xlu0.b32.cont [4/16] %v3307, 128
    %3688 = vxpose.xlu0.b32.cont [5/16] %v3309, 128
    %3689 = vxpose.xlu0.b32.cont [6/16] %v3311, 128
    %3690 = vxpose.xlu0.b32.cont [7/16] %v3313, 128
    %3691 = vxpose.xlu0.b32.cont [8/16] %v3315, 128
    %3692 = vxpose.xlu0.b32.cont [9/16] %v3317, 128
    %3693 = vxpose.xlu0.b32.cont [10/16] %v3319, 128
    %3694 = vxpose.xlu0.b32.cont [11/16] %v3321, 128
    %3695 = vxpose.xlu0.b32.cont [12/16] %v3323, 128
    %3696 = vxpose.xlu0.b32.cont [13/16] %v3325, 128
    %3697 = vxpose.xlu0.b32.cont [14/16] %v3327, 128
    %3698 = vxpose.xlu0.b32.cont [15/16] %v3329, 128
    %3699 = vxpose.xlu0.b32.end [16/16] %v3331, 128
    %v3700 = vpop.trf.xlu0
    %v3701 = vpop.trf.xlu0
    %v3702 = vpop.trf.xlu0
    %v3703 = vpop.trf.xlu0
    %v3704 = vpop.trf.xlu0
    %v3705 = vpop.trf.xlu0
    %v3706 = vpop.trf.xlu0
    %v3707 = vpop.trf.xlu0
    %v3708 = vpop.trf.xlu0
    %v3709 = vpop.trf.xlu0
    %v3710 = vpop.trf.xlu0
    %v3711 = vpop.trf.xlu0
    %v3712 = vpop.trf.xlu0
    %v3713 = vpop.trf.xlu0
    %v3714 = vpop.trf.xlu0
    %v3715 = vpop.trf.xlu0
    %3716 = vxpose.xlu0.b32.start [1/16] %v3333, 128
    %3717 = vxpose.xlu0.b32.cont [2/16] %v3335, 128
    %3718 = vxpose.xlu0.b32.cont [3/16] %v3337, 128
    %3719 = vxpose.xlu0.b32.cont [4/16] %v3339, 128
    %3720 = vxpose.xlu0.b32.cont [5/16] %v3341, 128
    %3721 = vxpose.xlu0.b32.cont [6/16] %v3343, 128
    %3722 = vxpose.xlu0.b32.cont [7/16] %v3345, 128
    %3723 = vxpose.xlu0.b32.cont [8/16] %v3347, 128
    %3724 = vxpose.xlu0.b32.cont [9/16] %v3349, 128
    %3725 = vxpose.xlu0.b32.cont [10/16] %v3351, 128
    %3726 = vxpose.xlu0.b32.cont [11/16] %v3353, 128
    %3727 = vxpose.xlu0.b32.cont [12/16] %v3355, 128
    %3728 = vxpose.xlu0.b32.cont [13/16] %v3357, 128
    %3729 = vxpose.xlu0.b32.cont [14/16] %v3359, 128
    %3730 = vxpose.xlu0.b32.cont [15/16] %v3361, 128
    %3731 = vxpose.xlu0.b32.end [16/16] %v3363, 128
    %v3732 = vpop.trf.xlu0
    %v3733 = vpop.trf.xlu0
    %v3734 = vpop.trf.xlu0
    %v3735 = vpop.trf.xlu0
    %v3736 = vpop.trf.xlu0
    %v3737 = vpop.trf.xlu0
    %v3738 = vpop.trf.xlu0
    %v3739 = vpop.trf.xlu0
    %v3740 = vpop.trf.xlu0
    %v3741 = vpop.trf.xlu0
    %v3742 = vpop.trf.xlu0
    %v3743 = vpop.trf.xlu0
    %v3744 = vpop.trf.xlu0
    %v3745 = vpop.trf.xlu0
    %v3746 = vpop.trf.xlu0
    %v3747 = vpop.trf.xlu0
    %3748 = vxpose.xlu0.b32.start [1/16] %v3365, 128
    %3749 = vxpose.xlu0.b32.cont [2/16] %v3367, 128
    %3750 = vxpose.xlu0.b32.cont [3/16] %v3369, 128
    %3751 = vxpose.xlu0.b32.cont [4/16] %v3371, 128
    %3752 = vxpose.xlu0.b32.cont [5/16] %v3373, 128
    %3753 = vxpose.xlu0.b32.cont [6/16] %v3375, 128
    %3754 = vxpose.xlu0.b32.cont [7/16] %v3377, 128
    %3755 = vxpose.xlu0.b32.cont [8/16] %v3379, 128
    %3756 = vxpose.xlu0.b32.cont [9/16] %v3381, 128
    %3757 = vxpose.xlu0.b32.cont [10/16] %v3383, 128
    %3758 = vxpose.xlu0.b32.cont [11/16] %v3385, 128
    %3759 = vxpose.xlu0.b32.cont [12/16] %v3387, 128
    %3760 = vxpose.xlu0.b32.cont [13/16] %v3389, 128
    %3761 = vxpose.xlu0.b32.cont [14/16] %v3391, 128
    %3762 = vxpose.xlu0.b32.cont [15/16] %v3393, 128
    %3763 = vxpose.xlu0.b32.end [16/16] %v3395, 128
    %v3764 = vpop.trf.xlu0
    %v3765 = vpop.trf.xlu0
    %v3766 = vpop.trf.xlu0
    %v3767 = vpop.trf.xlu0
    %v3768 = vpop.trf.xlu0
    %v3769 = vpop.trf.xlu0
    %v3770 = vpop.trf.xlu0
    %v3771 = vpop.trf.xlu0
    %v3772 = vpop.trf.xlu0
    %v3773 = vpop.trf.xlu0
    %v3774 = vpop.trf.xlu0
    %v3775 = vpop.trf.xlu0
    %v3776 = vpop.trf.xlu0
    %v3777 = vpop.trf.xlu0
    %v3778 = vpop.trf.xlu0
    %v3779 = vpop.trf.xlu0
    %3780 = vxpose.xlu0.b32.start [1/16] %v3397, 128
    %3781 = vxpose.xlu0.b32.cont [2/16] %v3399, 128
    %3782 = vxpose.xlu0.b32.cont [3/16] %v3401, 128
    %3783 = vxpose.xlu0.b32.cont [4/16] %v3403, 128
    %3784 = vxpose.xlu0.b32.cont [5/16] %v3405, 128
    %3785 = vxpose.xlu0.b32.cont [6/16] %v3407, 128
    %3786 = vxpose.xlu0.b32.cont [7/16] %v3409, 128
    %3787 = vxpose.xlu0.b32.cont [8/16] %v3411, 128
    %3788 = vxpose.xlu0.b32.cont [9/16] %v3413, 128
    %3789 = vxpose.xlu0.b32.cont [10/16] %v3415, 128
    %3790 = vxpose.xlu0.b32.cont [11/16] %v3417, 128
    %3791 = vxpose.xlu0.b32.cont [12/16] %v3419, 128
    %3792 = vxpose.xlu0.b32.cont [13/16] %v3421, 128
    %3793 = vxpose.xlu0.b32.cont [14/16] %v3423, 128
    %3794 = vxpose.xlu0.b32.cont [15/16] %v3425, 128
    %3795 = vxpose.xlu0.b32.end [16/16] %v3427, 128
    %v3796 = vpop.trf.xlu0
    %v3797 = vpop.trf.xlu0
    %v3798 = vpop.trf.xlu0
    %v3799 = vpop.trf.xlu0
    %v3800 = vpop.trf.xlu0
    %v3801 = vpop.trf.xlu0
    %v3802 = vpop.trf.xlu0
    %v3803 = vpop.trf.xlu0
    %v3804 = vpop.trf.xlu0
    %v3805 = vpop.trf.xlu0
    %v3806 = vpop.trf.xlu0
    %v3807 = vpop.trf.xlu0
    %v3808 = vpop.trf.xlu0
    %v3809 = vpop.trf.xlu0
    %v3810 = vpop.trf.xlu0
    %v3811 = vpop.trf.xlu0
    %3812 = vxpose.xlu0.b32.start [1/16] %v3429, 128
    %3813 = vxpose.xlu0.b32.cont [2/16] %v3431, 128
    %3814 = vxpose.xlu0.b32.cont [3/16] %v3433, 128
    %3815 = vxpose.xlu0.b32.cont [4/16] %v3435, 128
    %3816 = vxpose.xlu0.b32.cont [5/16] %v3437, 128
    %3817 = vxpose.xlu0.b32.cont [6/16] %v3439, 128
    %3818 = vxpose.xlu0.b32.cont [7/16] %v3441, 128
    %3819 = vxpose.xlu0.b32.cont [8/16] %v3443, 128
    %3820 = vxpose.xlu0.b32.cont [9/16] %v3445, 128
    %3821 = vxpose.xlu0.b32.cont [10/16] %v3447, 128
    %3822 = vxpose.xlu0.b32.cont [11/16] %v3449, 128
    %3823 = vxpose.xlu0.b32.cont [12/16] %v3451, 128
    %3824 = vxpose.xlu0.b32.cont [13/16] %v3453, 128
    %3825 = vxpose.xlu0.b32.cont [14/16] %v3455, 128
    %3826 = vxpose.xlu0.b32.cont [15/16] %v3457, 128
    %3827 = vxpose.xlu0.b32.end [16/16] %v3459, 128
    %v3828 = vpop.trf.xlu0
    %v3829 = vpop.trf.xlu0
    %v3830 = vpop.trf.xlu0
    %v3831 = vpop.trf.xlu0
    %v3832 = vpop.trf.xlu0
    %v3833 = vpop.trf.xlu0
    %v3834 = vpop.trf.xlu0
    %v3835 = vpop.trf.xlu0
    %v3836 = vpop.trf.xlu0
    %v3837 = vpop.trf.xlu0
    %v3838 = vpop.trf.xlu0
    %v3839 = vpop.trf.xlu0
    %v3840 = vpop.trf.xlu0
    %v3841 = vpop.trf.xlu0
    %v3842 = vpop.trf.xlu0
    %v3843 = vpop.trf.xlu0
    %3844 = vxpose.xlu0.b32.start [1/16] %v3461, 128
    %3845 = vxpose.xlu0.b32.cont [2/16] %v3463, 128
    %3846 = vxpose.xlu0.b32.cont [3/16] %v3465, 128
    %3847 = vxpose.xlu0.b32.cont [4/16] %v3467, 128
    %3848 = vxpose.xlu0.b32.cont [5/16] %v3469, 128
    %3849 = vxpose.xlu0.b32.cont [6/16] %v3471, 128
    %3850 = vxpose.xlu0.b32.cont [7/16] %v3473, 128
    %3851 = vxpose.xlu0.b32.cont [8/16] %v3475, 128
    %3852 = vxpose.xlu0.b32.cont [9/16] %v3477, 128
    %3853 = vxpose.xlu0.b32.cont [10/16] %v3479, 128
    %3854 = vxpose.xlu0.b32.cont [11/16] %v3481, 128
    %3855 = vxpose.xlu0.b32.cont [12/16] %v3483, 128
    %3856 = vxpose.xlu0.b32.cont [13/16] %v3485, 128
    %3857 = vxpose.xlu0.b32.cont [14/16] %v3487, 128
    %3858 = vxpose.xlu0.b32.cont [15/16] %v3489, 128
    %3859 = vxpose.xlu0.b32.end [16/16] %v3491, 128
    %v3860 = vpop.trf.xlu0
    %v3861 = vpop.trf.xlu0
    %v3862 = vpop.trf.xlu0
    %v3863 = vpop.trf.xlu0
    %v3864 = vpop.trf.xlu0
    %v3865 = vpop.trf.xlu0
    %v3866 = vpop.trf.xlu0
    %v3867 = vpop.trf.xlu0
    %v3868 = vpop.trf.xlu0
    %v3869 = vpop.trf.xlu0
    %v3870 = vpop.trf.xlu0
    %v3871 = vpop.trf.xlu0
    %v3872 = vpop.trf.xlu0
    %v3873 = vpop.trf.xlu0
    %v3874 = vpop.trf.xlu0
    %v3875 = vpop.trf.xlu0
    %v3876 = vperm.slane %v84, 0
    %v3877 = vlaneseq
    %v3878 = vshrl.u32 %v3877, 7
    %3880 = vset.pattern.permute.xlu0 %v3878
    %3881 = vperm.xlu0 %3880, %v3876
    %v3882 = vpop.permute.xlu0 %3881
    %v3883 = vlaneseq
    %v3884 = vshrl.u32 %v3883, 7
    %v3885 = vadd.s32 %v3884, 8
    %3886 = vset.pattern.permute.xlu0 %v3885
    %3887 = vperm.xlu0 %3886, %v3876
    %v3888 = vpop.permute.xlu0 %3887
    %v3889 = vlaneseq
    %v3890 = vshrl.u32 %v3889, 7
    %v3891 = vadd.s32 %v3890, 16
    %3892 = vset.pattern.permute.xlu0 %v3891
    %3893 = vperm.xlu0 %3892, %v3876
    %v3894 = vpop.permute.xlu0 %3893
    %v3895 = vlaneseq
    %v3896 = vshrl.u32 %v3895, 7
    %v3897 = vadd.s32 %v3896, 24
    %3898 = vset.pattern.permute.xlu0 %v3897
    %3899 = vperm.xlu0 %3898, %v3876
    %v3900 = vpop.permute.xlu0 %3899
    %v3901 = vadd.f32 %v3636, %v3882
    %v3902 = vadd.f32 %v3637, %v3888
    %v3903 = vadd.f32 %v3638, %v3894
    %v3904 = vadd.f32 %v3639, %v3900
    %v3905 = vadd.f32 %v3668, %v3882
    %v3906 = vadd.f32 %v3669, %v3888
    %v3907 = vadd.f32 %v3670, %v3894
    %v3908 = vadd.f32 %v3671, %v3900
    %v3909 = vadd.f32 %v3700, %v3882
    %v3910 = vadd.f32 %v3701, %v3888
    %v3911 = vadd.f32 %v3702, %v3894
    %v3912 = vadd.f32 %v3703, %v3900
    %v3913 = vadd.f32 %v3732, %v3882
    %v3914 = vadd.f32 %v3733, %v3888
    %v3915 = vadd.f32 %v3734, %v3894
    %v3916 = vadd.f32 %v3735, %v3900
    %v3917 = vadd.f32 %v3764, %v3882
    %v3918 = vadd.f32 %v3765, %v3888
    %v3919 = vadd.f32 %v3766, %v3894
    %v3920 = vadd.f32 %v3767, %v3900
    %v3921 = vadd.f32 %v3796, %v3882
    %v3922 = vadd.f32 %v3797, %v3888
    %v3923 = vadd.f32 %v3798, %v3894
    %v3924 = vadd.f32 %v3799, %v3900
    %v3925 = vadd.f32 %v3828, %v3882
    %v3926 = vadd.f32 %v3829, %v3888
    %v3927 = vadd.f32 %v3830, %v3894
    %v3928 = vadd.f32 %v3831, %v3900
    %v3929 = vadd.f32 %v3860, %v3882
    %v3930 = vadd.f32 %v3861, %v3888
    %v3931 = vadd.f32 %v3862, %v3894
    %v3932 = vadd.f32 %v3863, %v3900
    %vm3933 = vcmask 785920
    %v3934 = vsel %vm3933, %v2980, 0.0
    %v3935 = vsel %vm3933, %v2981, 0.0
    %v3936 = vadd.f32 %v3934, %v3935
    %v3937 = vsel %vm3933, %v2982, 0.0
    %v3938 = vadd.f32 %v3936, %v3937
    %v3939 = vsel %vm3933, %v2983, 0.0
    %v3940 = vadd.f32 %v3938, %v3939
    %v3941 = vsel %vm3933, %v2984, 0.0
    %v3942 = vadd.f32 %v3940, %v3941
    %v3943 = vsel %vm3933, %v2985, 0.0
    %v3944 = vadd.f32 %v3942, %v3943
    %v3945 = vsel %vm3933, %v2986, 0.0
    %v3946 = vadd.f32 %v3944, %v3945
    %v3947 = vsel %vm3933, %v2987, 0.0
    %v3948 = vadd.f32 %v3946, %v3947
    %v3949 = vsel %vm3933, %v2988, 0.0
    %v3950 = vadd.f32 %v3948, %v3949
    %v3951 = vsel %vm3933, %v2989, 0.0
    %v3952 = vadd.f32 %v3950, %v3951
    %v3953 = vsel %vm3933, %v2990, 0.0
    %v3954 = vadd.f32 %v3952, %v3953
    %v3955 = vsel %vm3933, %v2991, 0.0
    %v3956 = vadd.f32 %v3954, %v3955
    %v3957 = vsel %vm3933, %v2992, 0.0
    %v3958 = vadd.f32 %v3956, %v3957
    %v3959 = vsel %vm3933, %v2993, 0.0
    %v3960 = vadd.f32 %v3958, %v3959
    %v3961 = vsel %vm3933, %v2994, 0.0
    %v3962 = vadd.f32 %v3960, %v3961
    %v3963 = vsel %vm3933, %v2995, 0.0
    %v3964 = vadd.f32 %v3962, %v3963
    %v3965 = vrot.slane %v3964, 4
    %v3966 = vadd.f32 %v3964, %v3965
    %v3967 = vrot.slane %v3966, 2
    %v3968 = vadd.f32 %v3966, %v3967
    %v3969 = vrot.slane %v3968, 1
    %v3970 = vadd.f32 %v3968, %v3969
    %v3971 = vsel %vm3933, %v2996, 0.0
    %v3972 = vsel %vm3933, %v2997, 0.0
    %v3973 = vadd.f32 %v3971, %v3972
    %v3974 = vsel %vm3933, %v2998, 0.0
    %v3975 = vadd.f32 %v3973, %v3974
    %v3976 = vsel %vm3933, %v2999, 0.0
    %v3977 = vadd.f32 %v3975, %v3976
    %v3978 = vsel %vm3933, %v3000, 0.0
    %v3979 = vadd.f32 %v3977, %v3978
    %v3980 = vsel %vm3933, %v3001, 0.0
    %v3981 = vadd.f32 %v3979, %v3980
    %v3982 = vsel %vm3933, %v3002, 0.0
    %v3983 = vadd.f32 %v3981, %v3982
    %v3984 = vsel %vm3933, %v3003, 0.0
    %v3985 = vadd.f32 %v3983, %v3984
    %v3986 = vsel %vm3933, %v3004, 0.0
    %v3987 = vadd.f32 %v3985, %v3986
    %v3988 = vsel %vm3933, %v3005, 0.0
    %v3989 = vadd.f32 %v3987, %v3988
    %v3990 = vsel %vm3933, %v3006, 0.0
    %v3991 = vadd.f32 %v3989, %v3990
    %v3992 = vsel %vm3933, %v3007, 0.0
    %v3993 = vadd.f32 %v3991, %v3992
    %v3994 = vsel %vm3933, %v3008, 0.0
    %v3995 = vadd.f32 %v3993, %v3994
    %v3996 = vsel %vm3933, %v3009, 0.0
    %v3997 = vadd.f32 %v3995, %v3996
    %v3998 = vsel %vm3933, %v3010, 0.0
    %v3999 = vadd.f32 %v3997, %v3998
    %v4000 = vsel %vm3933, %v3011, 0.0
    %v4001 = vadd.f32 %v3999, %v4000
    %v4002 = vrot.slane %v4001, 4
    %v4003 = vadd.f32 %v4001, %v4002
    %v4004 = vrot.slane %v4003, 2
    %v4005 = vadd.f32 %v4003, %v4004
    %v4006 = vrot.slane %v4005, 1
    %v4007 = vadd.f32 %v4005, %v4006
    %v4008 = vsel %vm3933, %v3012, 0.0
    %v4009 = vsel %vm3933, %v3013, 0.0
    %v4010 = vadd.f32 %v4008, %v4009
    %v4011 = vsel %vm3933, %v3014, 0.0
    %v4012 = vadd.f32 %v4010, %v4011
    %v4013 = vsel %vm3933, %v3015, 0.0
    %v4014 = vadd.f32 %v4012, %v4013
    %v4015 = vsel %vm3933, %v3016, 0.0
    %v4016 = vadd.f32 %v4014, %v4015
    %v4017 = vsel %vm3933, %v3017, 0.0
    %v4018 = vadd.f32 %v4016, %v4017
    %v4019 = vsel %vm3933, %v3018, 0.0
    %v4020 = vadd.f32 %v4018, %v4019
    %v4021 = vsel %vm3933, %v3019, 0.0
    %v4022 = vadd.f32 %v4020, %v4021
    %v4023 = vsel %vm3933, %v3020, 0.0
    %v4024 = vadd.f32 %v4022, %v4023
    %v4025 = vsel %vm3933, %v3021, 0.0
    %v4026 = vadd.f32 %v4024, %v4025
    %v4027 = vsel %vm3933, %v3022, 0.0
    %v4028 = vadd.f32 %v4026, %v4027
    %v4029 = vsel %vm3933, %v3023, 0.0
    %v4030 = vadd.f32 %v4028, %v4029
    %v4031 = vsel %vm3933, %v3024, 0.0
    %v4032 = vadd.f32 %v4030, %v4031
    %v4033 = vsel %vm3933, %v3025, 0.0
    %v4034 = vadd.f32 %v4032, %v4033
    %v4035 = vsel %vm3933, %v3026, 0.0
    %v4036 = vadd.f32 %v4034, %v4035
    %v4037 = vsel %vm3933, %v3027, 0.0
    %v4038 = vadd.f32 %v4036, %v4037
    %v4039 = vrot.slane %v4038, 4
    %v4040 = vadd.f32 %v4038, %v4039
    %v4041 = vrot.slane %v4040, 2
    %v4042 = vadd.f32 %v4040, %v4041
    %v4043 = vrot.slane %v4042, 1
    %v4044 = vadd.f32 %v4042, %v4043
    %v4045 = vsel %vm3933, %v3028, 0.0
    %v4046 = vsel %vm3933, %v3029, 0.0
    %v4047 = vadd.f32 %v4045, %v4046
    %v4048 = vsel %vm3933, %v3030, 0.0
    %v4049 = vadd.f32 %v4047, %v4048
    %v4050 = vsel %vm3933, %v3031, 0.0
    %v4051 = vadd.f32 %v4049, %v4050
    %v4052 = vsel %vm3933, %v3032, 0.0
    %v4053 = vadd.f32 %v4051, %v4052
    %v4054 = vsel %vm3933, %v3033, 0.0
    %v4055 = vadd.f32 %v4053, %v4054
    %v4056 = vsel %vm3933, %v3034, 0.0
    %v4057 = vadd.f32 %v4055, %v4056
    %v4058 = vsel %vm3933, %v3035, 0.0
    %v4059 = vadd.f32 %v4057, %v4058
    %v4060 = vsel %vm3933, %v3036, 0.0
    %v4061 = vadd.f32 %v4059, %v4060
    %v4062 = vsel %vm3933, %v3037, 0.0
    %v4063 = vadd.f32 %v4061, %v4062
    %v4064 = vsel %vm3933, %v3038, 0.0
    %v4065 = vadd.f32 %v4063, %v4064
    %v4066 = vsel %vm3933, %v3039, 0.0
    %v4067 = vadd.f32 %v4065, %v4066
    %v4068 = vsel %vm3933, %v3040, 0.0
    %v4069 = vadd.f32 %v4067, %v4068
    %v4070 = vsel %vm3933, %v3041, 0.0
    %v4071 = vadd.f32 %v4069, %v4070
    %v4072 = vsel %vm3933, %v3042, 0.0
    %v4073 = vadd.f32 %v4071, %v4072
    %v4074 = vsel %vm3933, %v3043, 0.0
    %v4075 = vadd.f32 %v4073, %v4074
    %v4076 = vrot.slane %v4075, 4
    %v4077 = vadd.f32 %v4075, %v4076
    %v4078 = vrot.slane %v4077, 2
    %v4079 = vadd.f32 %v4077, %v4078
    %v4080 = vrot.slane %v4079, 1
    %v4081 = vadd.f32 %v4079, %v4080
    %v4082 = vsel %vm3933, %v3044, 0.0
    %v4083 = vsel %vm3933, %v3045, 0.0
    %v4084 = vadd.f32 %v4082, %v4083
    %v4085 = vsel %vm3933, %v3046, 0.0
    %v4086 = vadd.f32 %v4084, %v4085
    %v4087 = vsel %vm3933, %v3047, 0.0
    %v4088 = vadd.f32 %v4086, %v4087
    %v4089 = vsel %vm3933, %v3048, 0.0
    %v4090 = vadd.f32 %v4088, %v4089
    %v4091 = vsel %vm3933, %v3049, 0.0
    %v4092 = vadd.f32 %v4090, %v4091
    %v4093 = vsel %vm3933, %v3050, 0.0
    %v4094 = vadd.f32 %v4092, %v4093
    %v4095 = vsel %vm3933, %v3051, 0.0
    %v4096 = vadd.f32 %v4094, %v4095
    %v4097 = vsel %vm3933, %v3052, 0.0
    %v4098 = vadd.f32 %v4096, %v4097
    %v4099 = vsel %vm3933, %v3053, 0.0
    %v4100 = vadd.f32 %v4098, %v4099
    %v4101 = vsel %vm3933, %v3054, 0.0
    %v4102 = vadd.f32 %v4100, %v4101
    %v4103 = vsel %vm3933, %v3055, 0.0
    %v4104 = vadd.f32 %v4102, %v4103
    %v4105 = vsel %vm3933, %v3056, 0.0
    %v4106 = vadd.f32 %v4104, %v4105
    %v4107 = vsel %vm3933, %v3057, 0.0
    %v4108 = vadd.f32 %v4106, %v4107
    %v4109 = vsel %vm3933, %v3058, 0.0
    %v4110 = vadd.f32 %v4108, %v4109
    %v4111 = vsel %vm3933, %v3059, 0.0
    %v4112 = vadd.f32 %v4110, %v4111
    %v4113 = vrot.slane %v4112, 4
    %v4114 = vadd.f32 %v4112, %v4113
    %v4115 = vrot.slane %v4114, 2
    %v4116 = vadd.f32 %v4114, %v4115
    %v4117 = vrot.slane %v4116, 1
    %v4118 = vadd.f32 %v4116, %v4117
    %v4119 = vsel %vm3933, %v3060, 0.0
    %v4120 = vsel %vm3933, %v3061, 0.0
    %v4121 = vadd.f32 %v4119, %v4120
    %v4122 = vsel %vm3933, %v3062, 0.0
    %v4123 = vadd.f32 %v4121, %v4122
    %v4124 = vsel %vm3933, %v3063, 0.0
    %v4125 = vadd.f32 %v4123, %v4124
    %v4126 = vsel %vm3933, %v3064, 0.0
    %v4127 = vadd.f32 %v4125, %v4126
    %v4128 = vsel %vm3933, %v3065, 0.0
    %v4129 = vadd.f32 %v4127, %v4128
    %v4130 = vsel %vm3933, %v3066, 0.0
    %v4131 = vadd.f32 %v4129, %v4130
    %v4132 = vsel %vm3933, %v3067, 0.0
    %v4133 = vadd.f32 %v4131, %v4132
    %v4134 = vsel %vm3933, %v3068, 0.0
    %v4135 = vadd.f32 %v4133, %v4134
    %v4136 = vsel %vm3933, %v3069, 0.0
    %v4137 = vadd.f32 %v4135, %v4136
    %v4138 = vsel %vm3933, %v3070, 0.0
    %v4139 = vadd.f32 %v4137, %v4138
    %v4140 = vsel %vm3933, %v3071, 0.0
    %v4141 = vadd.f32 %v4139, %v4140
    %v4142 = vsel %vm3933, %v3072, 0.0
    %v4143 = vadd.f32 %v4141, %v4142
    %v4144 = vsel %vm3933, %v3073, 0.0
    %v4145 = vadd.f32 %v4143, %v4144
    %v4146 = vsel %vm3933, %v3074, 0.0
    %v4147 = vadd.f32 %v4145, %v4146
    %v4148 = vsel %vm3933, %v3075, 0.0
    %v4149 = vadd.f32 %v4147, %v4148
    %v4150 = vrot.slane %v4149, 4
    %v4151 = vadd.f32 %v4149, %v4150
    %v4152 = vrot.slane %v4151, 2
    %v4153 = vadd.f32 %v4151, %v4152
    %v4154 = vrot.slane %v4153, 1
    %v4155 = vadd.f32 %v4153, %v4154
    %v4156 = vsel %vm3933, %v3076, 0.0
    %v4157 = vsel %vm3933, %v3077, 0.0
    %v4158 = vadd.f32 %v4156, %v4157
    %v4159 = vsel %vm3933, %v3078, 0.0
    %v4160 = vadd.f32 %v4158, %v4159
    %v4161 = vsel %vm3933, %v3079, 0.0
    %v4162 = vadd.f32 %v4160, %v4161
    %v4163 = vsel %vm3933, %v3080, 0.0
    %v4164 = vadd.f32 %v4162, %v4163
    %v4165 = vsel %vm3933, %v3081, 0.0
    %v4166 = vadd.f32 %v4164, %v4165
    %v4167 = vsel %vm3933, %v3082, 0.0
    %v4168 = vadd.f32 %v4166, %v4167
    %v4169 = vsel %vm3933, %v3083, 0.0
    %v4170 = vadd.f32 %v4168, %v4169
    %v4171 = vsel %vm3933, %v3084, 0.0
    %v4172 = vadd.f32 %v4170, %v4171
    %v4173 = vsel %vm3933, %v3085, 0.0
    %v4174 = vadd.f32 %v4172, %v4173
    %v4175 = vsel %vm3933, %v3086, 0.0
    %v4176 = vadd.f32 %v4174, %v4175
    %v4177 = vsel %vm3933, %v3087, 0.0
    %v4178 = vadd.f32 %v4176, %v4177
    %v4179 = vsel %vm3933, %v3088, 0.0
    %v4180 = vadd.f32 %v4178, %v4179
    %v4181 = vsel %vm3933, %v3089, 0.0
    %v4182 = vadd.f32 %v4180, %v4181
    %v4183 = vsel %vm3933, %v3090, 0.0
    %v4184 = vadd.f32 %v4182, %v4183
    %v4185 = vsel %vm3933, %v3091, 0.0
    %v4186 = vadd.f32 %v4184, %v4185
    %v4187 = vrot.slane %v4186, 4
    %v4188 = vadd.f32 %v4186, %v4187
    %v4189 = vrot.slane %v4188, 2
    %v4190 = vadd.f32 %v4188, %v4189
    %v4191 = vrot.slane %v4190, 1
    %v4192 = vadd.f32 %v4190, %v4191
    %v4193 = vsel %vm3933, %v3092, 0.0
    %v4194 = vsel %vm3933, %v3093, 0.0
    %v4195 = vadd.f32 %v4193, %v4194
    %v4196 = vsel %vm3933, %v3094, 0.0
    %v4197 = vadd.f32 %v4195, %v4196
    %v4198 = vsel %vm3933, %v3095, 0.0
    %v4199 = vadd.f32 %v4197, %v4198
    %v4200 = vsel %vm3933, %v3096, 0.0
    %v4201 = vadd.f32 %v4199, %v4200
    %v4202 = vsel %vm3933, %v3097, 0.0
    %v4203 = vadd.f32 %v4201, %v4202
    %v4204 = vsel %vm3933, %v3098, 0.0
    %v4205 = vadd.f32 %v4203, %v4204
    %v4206 = vsel %vm3933, %v3099, 0.0
    %v4207 = vadd.f32 %v4205, %v4206
    %v4208 = vsel %vm3933, %v3100, 0.0
    %v4209 = vadd.f32 %v4207, %v4208
    %v4210 = vsel %vm3933, %v3101, 0.0
    %v4211 = vadd.f32 %v4209, %v4210
    %v4212 = vsel %vm3933, %v3102, 0.0
    %v4213 = vadd.f32 %v4211, %v4212
    %v4214 = vsel %vm3933, %v3103, 0.0
    %v4215 = vadd.f32 %v4213, %v4214
    %v4216 = vsel %vm3933, %v3104, 0.0
    %v4217 = vadd.f32 %v4215, %v4216
    %v4218 = vsel %vm3933, %v3105, 0.0
    %v4219 = vadd.f32 %v4217, %v4218
    %v4220 = vsel %vm3933, %v3106, 0.0
    %v4221 = vadd.f32 %v4219, %v4220
    %v4222 = vsel %vm3933, %v3107, 0.0
    %v4223 = vadd.f32 %v4221, %v4222
    %v4224 = vrot.slane %v4223, 4
    %v4225 = vadd.f32 %v4223, %v4224
    %v4226 = vrot.slane %v4225, 2
    %v4227 = vadd.f32 %v4225, %v4226
    %v4228 = vrot.slane %v4227, 1
    %v4229 = vadd.f32 %v4227, %v4228
    %4230 = vadd.xlane.f32.xlu0 %v224
    %v4231 = vpop.xlane.xlu0 %4230
    %v4233 = vrot.slane %v4231, 1
    %v4234 = vrot.slane %v4231, 2
    %v4235 = vrot.slane %v4231, 3
    %v4236 = vrot.slane %v4231, 4
    %v4237 = vrot.slane %v4231, 5
    %v4238 = vrot.slane %v4231, 6
    %v4239 = vrot.slane %v4231, 7
    %v4248 = vrcp.pop %v4231
    %v4249 = vmul.f32 %v4231, %v4248
    %v4250 = vsub.f32 1.0, %v4249
    %v4251 = vmul.f32 %v4248, %v4250
    %v4252 = vadd.f32 %v4248, %v4251
    %vm4253 = vweird.f32 %v4231
    %vm4254 = vweird.f32 %v4248
    %vm4255 = vmor %vm4253, %vm4254
    %v4256 = vsel %vm4255, %v4248, %v4252
    %v4257 = vand.u32 2147483647, %v4231
    %vm4258 = vcmp.eq.f32.partialorder %v4257, 8.507059e+37
    %v4259 = vand.u32 %v4231, 2147483648
    %v4260 = vor.u32 1.1754944e-38, %v4259
    %v4261 = vsel %vm4258, %v4260, %v4256
    %v4262 = vmul.f32 %v3970, %v4261
    %v4263 = vrcp.pop %v4233
    %v4264 = vmul.f32 %v4233, %v4263
    %v4265 = vsub.f32 1.0, %v4264
    %v4266 = vmul.f32 %v4263, %v4265
    %v4267 = vadd.f32 %v4263, %v4266
    %vm4268 = vweird.f32 %v4233
    %vm4269 = vweird.f32 %v4263
    %vm4270 = vmor %vm4268, %vm4269
    %v4271 = vsel %vm4270, %v4263, %v4267
    %v4272 = vand.u32 2147483647, %v4233
    %vm4273 = vcmp.eq.f32.partialorder %v4272, 8.507059e+37
    %v4274 = vand.u32 %v4233, 2147483648
    %v4275 = vor.u32 1.1754944e-38, %v4274
    %v4276 = vsel %vm4273, %v4275, %v4271
    %v4277 = vmul.f32 %v4007, %v4276
    %v4278 = vrcp.pop %v4234
    %v4279 = vmul.f32 %v4234, %v4278
    %v4280 = vsub.f32 1.0, %v4279
    %v4281 = vmul.f32 %v4278, %v4280
    %v4282 = vadd.f32 %v4278, %v4281
    %vm4283 = vweird.f32 %v4234
    %vm4284 = vweird.f32 %v4278
    %vm4285 = vmor %vm4283, %vm4284
    %v4286 = vsel %vm4285, %v4278, %v4282
    %v4287 = vand.u32 2147483647, %v4234
    %vm4288 = vcmp.eq.f32.partialorder %v4287, 8.507059e+37
    %v4289 = vand.u32 %v4234, 2147483648
    %v4290 = vor.u32 1.1754944e-38, %v4289
    %v4291 = vsel %vm4288, %v4290, %v4286
    %v4292 = vmul.f32 %v4044, %v4291
    %v4293 = vrcp.pop %v4235
    %v4294 = vmul.f32 %v4235, %v4293
    %v4295 = vsub.f32 1.0, %v4294
    %v4296 = vmul.f32 %v4293, %v4295
    %v4297 = vadd.f32 %v4293, %v4296
    %vm4298 = vweird.f32 %v4235
    %vm4299 = vweird.f32 %v4293
    %vm4300 = vmor %vm4298, %vm4299
    %v4301 = vsel %vm4300, %v4293, %v4297
    %v4302 = vand.u32 2147483647, %v4235
    %vm4303 = vcmp.eq.f32.partialorder %v4302, 8.507059e+37
    %v4304 = vand.u32 %v4235, 2147483648
    %v4305 = vor.u32 1.1754944e-38, %v4304
    %v4306 = vsel %vm4303, %v4305, %v4301
    %v4307 = vmul.f32 %v4081, %v4306
    %v4308 = vrcp.pop %v4236
    %v4309 = vmul.f32 %v4236, %v4308
    %v4310 = vsub.f32 1.0, %v4309
    %v4311 = vmul.f32 %v4308, %v4310
    %v4312 = vadd.f32 %v4308, %v4311
    %vm4313 = vweird.f32 %v4236
    %vm4314 = vweird.f32 %v4308
    %vm4315 = vmor %vm4313, %vm4314
    %v4316 = vsel %vm4315, %v4308, %v4312
    %v4317 = vand.u32 2147483647, %v4236
    %vm4318 = vcmp.eq.f32.partialorder %v4317, 8.507059e+37
    %v4319 = vand.u32 %v4236, 2147483648
    %v4320 = vor.u32 1.1754944e-38, %v4319
    %v4321 = vsel %vm4318, %v4320, %v4316
    %v4322 = vmul.f32 %v4118, %v4321
    %v4323 = vrcp.pop %v4237
    %v4324 = vmul.f32 %v4237, %v4323
    %v4325 = vsub.f32 1.0, %v4324
    %v4326 = vmul.f32 %v4323, %v4325
    %v4327 = vadd.f32 %v4323, %v4326
    %vm4328 = vweird.f32 %v4237
    %vm4329 = vweird.f32 %v4323
    %vm4330 = vmor %vm4328, %vm4329
    %v4331 = vsel %vm4330, %v4323, %v4327
    %v4332 = vand.u32 2147483647, %v4237
    %vm4333 = vcmp.eq.f32.partialorder %v4332, 8.507059e+37
    %v4334 = vand.u32 %v4237, 2147483648
    %v4335 = vor.u32 1.1754944e-38, %v4334
    %v4336 = vsel %vm4333, %v4335, %v4331
    %v4337 = vmul.f32 %v4155, %v4336
    %v4338 = vrcp.pop %v4238
    %v4339 = vmul.f32 %v4238, %v4338
    %v4340 = vsub.f32 1.0, %v4339
    %v4341 = vmul.f32 %v4338, %v4340
    %v4342 = vadd.f32 %v4338, %v4341
    %vm4343 = vweird.f32 %v4238
    %vm4344 = vweird.f32 %v4338
    %vm4345 = vmor %vm4343, %vm4344
    %v4346 = vsel %vm4345, %v4338, %v4342
    %v4347 = vand.u32 2147483647, %v4238
    %vm4348 = vcmp.eq.f32.partialorder %v4347, 8.507059e+37
    %v4349 = vand.u32 %v4238, 2147483648
    %v4350 = vor.u32 1.1754944e-38, %v4349
    %v4351 = vsel %vm4348, %v4350, %v4346
    %v4352 = vmul.f32 %v4192, %v4351
    %v4353 = vrcp.pop %v4239
    %v4354 = vmul.f32 %v4239, %v4353
    %v4355 = vsub.f32 1.0, %v4354
    %v4356 = vmul.f32 %v4353, %v4355
    %v4357 = vadd.f32 %v4353, %v4356
    %vm4358 = vweird.f32 %v4239
    %vm4359 = vweird.f32 %v4353
    %vm4360 = vmor %vm4358, %vm4359
    %v4361 = vsel %vm4360, %v4353, %v4357
    %v4362 = vand.u32 2147483647, %v4239
    %vm4363 = vcmp.eq.f32.partialorder %v4362, 8.507059e+37
    %v4364 = vand.u32 %v4239, 2147483648
    %v4365 = vor.u32 1.1754944e-38, %v4364
    %v4366 = vsel %vm4363, %v4365, %v4361
    %v4367 = vmul.f32 %v4229, %v4366
    %v4368 = vlaneseq
    %v4369 = vand.u32 %v4368, 127
    %vm4370 = vcmp.gt.f32.partialorder %v224, 0.0
    %v4371 = vperm.slane %v85, 0
    %v4372 = vlaneseq
    %v4373 = vshrl.u32 %v4372, 7
    %4375 = vset.pattern.permute.xlu0 %v4373
    %4376 = vperm.xlu0 %4375, %v4371
    %v4377 = vpop.permute.xlu0 %4376
    %v4378 = vlaneseq
    %v4379 = vshrl.u32 %v4378, 7
    %v4380 = vadd.s32 %v4379, 8
    %4381 = vset.pattern.permute.xlu0 %v4380
    %4382 = vperm.xlu0 %4381, %v4371
    %v4383 = vpop.permute.xlu0 %4382
    %v4384 = vlaneseq
    %v4385 = vshrl.u32 %v4384, 7
    %v4386 = vadd.s32 %v4385, 16
    %4387 = vset.pattern.permute.xlu0 %v4386
    %4388 = vperm.xlu0 %4387, %v4371
    %v4389 = vpop.permute.xlu0 %4388
    %v4390 = vlaneseq
    %v4391 = vshrl.u32 %v4390, 7
    %v4392 = vadd.s32 %v4391, 24
    %4393 = vset.pattern.permute.xlu0 %v4392
    %4394 = vperm.xlu0 %4393, %v4371
    %v4395 = vpop.permute.xlu0 %4394
    %s4396 = vtos %v86
    %v4397 = vperm.slane %v82, 0
    %v4398 = vlaneseq
    %v4399 = vshrl.u32 %v4398, 7
    %4401 = vset.pattern.permute.xlu0 %v4399
    %4402 = vperm.xlu0 %4401, %v4397
    %v4403 = vpop.permute.xlu0 %4402
    %v4404 = vlaneseq
    %v4405 = vshrl.u32 %v4404, 7
    %v4406 = vadd.s32 %v4405, 8
    %4407 = vset.pattern.permute.xlu0 %v4406
    %4408 = vperm.xlu0 %4407, %v4397
    %v4409 = vpop.permute.xlu0 %4408
    %v4410 = vlaneseq
    %v4411 = vshrl.u32 %v4410, 7
    %v4412 = vadd.s32 %v4411, 16
    %4413 = vset.pattern.permute.xlu0 %v4412
    %4414 = vperm.xlu0 %4413, %v4397
    %v4415 = vpop.permute.xlu0 %4414
    %v4416 = vlaneseq
    %v4417 = vshrl.u32 %v4416, 7
    %v4418 = vadd.s32 %v4417, 24
    %4419 = vset.pattern.permute.xlu0 %v4418
    %4420 = vperm.xlu0 %4419, %v4397
    %v4421 = vpop.permute.xlu0 %4420
    %v4422 = vperm.slane %v82, 1
    %v4423 = vlaneseq
    %v4424 = vshrl.u32 %v4423, 7
    %4426 = vset.pattern.permute.xlu0 %v4424
    %4427 = vperm.xlu0 %4426, %v4422
    %v4428 = vpop.permute.xlu0 %4427
    %v4429 = vlaneseq
    %v4430 = vshrl.u32 %v4429, 7
    %v4431 = vadd.s32 %v4430, 8
    %4432 = vset.pattern.permute.xlu0 %v4431
    %4433 = vperm.xlu0 %4432, %v4422
    %v4434 = vpop.permute.xlu0 %4433
    %v4435 = vlaneseq
    %v4436 = vshrl.u32 %v4435, 7
    %v4437 = vadd.s32 %v4436, 16
    %4438 = vset.pattern.permute.xlu0 %v4437
    %4439 = vperm.xlu0 %4438, %v4422
    %v4440 = vpop.permute.xlu0 %4439
    %v4441 = vlaneseq
    %v4442 = vshrl.u32 %v4441, 7
    %v4443 = vadd.s32 %v4442, 24
    %4444 = vset.pattern.permute.xlu0 %v4443
    %4445 = vperm.xlu0 %4444, %v4422
    %v4446 = vpop.permute.xlu0 %4445
    %v4447 = vperm.slane %v82, 2
    %v4448 = vlaneseq
    %v4449 = vshrl.u32 %v4448, 7
    %4451 = vset.pattern.permute.xlu0 %v4449
    %4452 = vperm.xlu0 %4451, %v4447
    %v4453 = vpop.permute.xlu0 %4452
    %v4454 = vlaneseq
    %v4455 = vshrl.u32 %v4454, 7
    %v4456 = vadd.s32 %v4455, 8
    %4457 = vset.pattern.permute.xlu0 %v4456
    %4458 = vperm.xlu0 %4457, %v4447
    %v4459 = vpop.permute.xlu0 %4458
    %v4460 = vlaneseq
    %v4461 = vshrl.u32 %v4460, 7
    %v4462 = vadd.s32 %v4461, 16
    %4463 = vset.pattern.permute.xlu0 %v4462
    %4464 = vperm.xlu0 %4463, %v4447
    %v4465 = vpop.permute.xlu0 %4464
    %v4466 = vlaneseq
    %v4467 = vshrl.u32 %v4466, 7
    %v4468 = vadd.s32 %v4467, 24
    %4469 = vset.pattern.permute.xlu0 %v4468
    %4470 = vperm.xlu0 %4469, %v4447
    %v4471 = vpop.permute.xlu0 %4470
    %v4472 = vperm.slane %v83, 0
    %v4473 = vlaneseq
    %v4474 = vshrl.u32 %v4473, 7
    %4476 = vset.pattern.permute.xlu0 %v4474
    %4477 = vperm.xlu0 %4476, %v4472
    %v4478 = vpop.permute.xlu0 %4477
    %v4479 = vlaneseq
    %v4480 = vshrl.u32 %v4479, 7
    %v4481 = vadd.s32 %v4480, 8
    %4482 = vset.pattern.permute.xlu0 %v4481
    %4483 = vperm.xlu0 %4482, %v4472
    %v4484 = vpop.permute.xlu0 %4483
    %v4485 = vlaneseq
    %v4486 = vshrl.u32 %v4485, 7
    %v4487 = vadd.s32 %v4486, 16
    %4488 = vset.pattern.permute.xlu0 %v4487
    %4489 = vperm.xlu0 %4488, %v4472
    %v4490 = vpop.permute.xlu0 %4489
    %v4491 = vlaneseq
    %v4492 = vshrl.u32 %v4491, 7
    %v4493 = vadd.s32 %v4492, 24
    %4494 = vset.pattern.permute.xlu0 %v4493
    %4495 = vperm.xlu0 %4494, %v4472
    %v4496 = vpop.permute.xlu0 %4495
    %v4497 = vperm.slane %v83, 1
    %v4498 = vlaneseq
    %v4499 = vshrl.u32 %v4498, 7
    %4501 = vset.pattern.permute.xlu0 %v4499
    %4502 = vperm.xlu0 %4501, %v4497
    %v4503 = vpop.permute.xlu0 %4502
    %v4504 = vlaneseq
    %v4505 = vshrl.u32 %v4504, 7
    %v4506 = vadd.s32 %v4505, 8
    %4507 = vset.pattern.permute.xlu0 %v4506
    %4508 = vperm.xlu0 %4507, %v4497
    %v4509 = vpop.permute.xlu0 %4508
    %v4510 = vlaneseq
    %v4511 = vshrl.u32 %v4510, 7
    %v4512 = vadd.s32 %v4511, 16
    %4513 = vset.pattern.permute.xlu0 %v4512
    %4514 = vperm.xlu0 %4513, %v4497
    %v4515 = vpop.permute.xlu0 %4514
    %v4516 = vlaneseq
    %v4517 = vshrl.u32 %v4516, 7
    %v4518 = vadd.s32 %v4517, 24
    %4519 = vset.pattern.permute.xlu0 %v4518
    %4520 = vperm.xlu0 %4519, %v4497
    %v4521 = vpop.permute.xlu0 %4520
    %v4522 = vperm.slane %v83, 2
    %v4523 = vlaneseq
    %v4524 = vshrl.u32 %v4523, 7
    %4526 = vset.pattern.permute.xlu0 %v4524
    %4527 = vperm.xlu0 %4526, %v4522
    %v4528 = vpop.permute.xlu0 %4527
    %v4529 = vlaneseq
    %v4530 = vshrl.u32 %v4529, 7
    %v4531 = vadd.s32 %v4530, 8
    %4532 = vset.pattern.permute.xlu0 %v4531
    %4533 = vperm.xlu0 %4532, %v4522
    %v4534 = vpop.permute.xlu0 %4533
    %v4535 = vlaneseq
    %v4536 = vshrl.u32 %v4535, 7
    %v4537 = vadd.s32 %v4536, 16
    %4538 = vset.pattern.permute.xlu0 %v4537
    %4539 = vperm.xlu0 %4538, %v4522
    %v4540 = vpop.permute.xlu0 %4539
    %v4541 = vlaneseq
    %v4542 = vshrl.u32 %v4541, 7
    %v4543 = vadd.s32 %v4542, 24
    %4544 = vset.pattern.permute.xlu0 %v4543
    %4545 = vperm.xlu0 %4544, %v4522
    %v4546 = vpop.permute.xlu0 %4545
    %v4555 = vrot.slane %v4277, 7
    %vm4556 = vcmask 1041409
    %v4557 = vsel %vm4556, %v4555, %v4262
    %v4558 = vrot.slane %v4292, 6
    %vm4559 = vcmask 1042434
    %v4560 = vsel %vm4559, %v4558, %v4557
    %v4561 = vrot.slane %v4307, 5
    %vm4562 = vcmask 1043459
    %v4563 = vsel %vm4562, %v4561, %v4560
    %v4564 = vrot.slane %v4322, 4
    %vm4565 = vcmask 1044484
    %v4566 = vsel %vm4565, %v4564, %v4563
    %v4567 = vrot.slane %v4337, 3
    %vm4568 = vcmask 1045509
    %v4569 = vsel %vm4568, %v4567, %v4566
    %v4570 = vrot.slane %v4352, 2
    %vm4571 = vcmask 1046534
    %v4572 = vsel %vm4571, %v4570, %v4569
    %v4573 = vrot.slane %v4367, 1
    %vm4574 = vcmask 1047559
    %v4575 = vsel %vm4574, %v4573, %v4572
    %4576 = vrot.lane.b32.xlu0 %v4575, 64
    %v4577 = vpop.permute.xlu0 %4576
    loop: start=0, step=1, limit=8
    $region66: #{tpu_custom_call.1} parent=1 // loop_pre_header
      _
    $region67: #{tpu_custom_call.1} parent=1 // loop_header
      %s4580 = sphi 0, %s4584
      %p4581 = scmp.ge.s32.totalorder %s4580, 8
      %v4585 = vphi %v4577, %v7716
      %v4586 = vphi 0.0, %v6101
      %v4587 = vphi 0.0, %v6102
    $region68: #{tpu_custom_call.1} parent=1 // loop_header_branch
      %4583 = sbr.rel (%p4581) target = $region72
    $region69: #{tpu_custom_call.1} parent=1 // loop_body
      %s4588 = sadd.s32 %s4580, 1
      %s4589 = sshra.s32 %s4588, 3
      %s4590 = sand.u32 %s4588, 7
      %s4591 = sshra.s32 %s4588, 3
      %s4592 = sand.u32 %s4588, 7
      %s4593 = smul.u32 %s4589, 2
      %s4594 = smul.u32 %s4593, 8
      %s4595 = sadd.s32 %s4594, %s4592
      %s4596 = scalar_lea.vmem [#allocation2], %s4595
      %v4597 = vld [vmem:[%s4596] ss:$8 sm:$0x3]
      %s4598 = sadd.s32 256, %s4595
      %s4599 = scalar_lea.vmem [#allocation2], %s4598
      %v4600 = vld [vmem:[%s4599] ss:$8 sm:$0x3]
      %s4601 = sadd.s32 512, %s4595
      %s4602 = scalar_lea.vmem [#allocation2], %s4601
      %v4603 = vld [vmem:[%s4602] ss:$8 sm:$0x3]
      %s4604 = sadd.s32 768, %s4595
      %s4605 = scalar_lea.vmem [#allocation2], %s4604
      %v4606 = vld [vmem:[%s4605] ss:$8 sm:$0x3]
      %s4607 = sadd.s32 1024, %s4595
      %s4608 = scalar_lea.vmem [#allocation2], %s4607
      %v4609 = vld [vmem:[%s4608] ss:$8 sm:$0x3]
      %s4610 = sadd.s32 1280, %s4595
      %s4611 = scalar_lea.vmem [#allocation2], %s4610
      %v4612 = vld [vmem:[%s4611] ss:$8 sm:$0x3]
      %s4613 = sadd.s32 1536, %s4595
      %s4614 = scalar_lea.vmem [#allocation2], %s4613
      %v4615 = vld [vmem:[%s4614] ss:$8 sm:$0x3]
      %s4616 = sadd.s32 1792, %s4595
      %s4617 = scalar_lea.vmem [#allocation2], %s4616
      %v4618 = vld [vmem:[%s4617] ss:$8 sm:$0x3]
      %v4620 = vperm.slane %v76, 0
      %v4623 = vsel %vm232, %v4585, 0
      %4625 = vmatpush.msra.mxu0 0.0
      %4626 = vmatpush.msra.mxu0 0.0
      %4627 = vmatpush.msra.mxu0 0.0
      %4628 = vmatpush.msra.mxu0 0.0
      %4629 = vmatpush.msra.mxu0 0.0
      %4630 = vmatpush.msra.mxu0 0.0
      %4631 = vmatpush.msra.mxu0 0.0
      %4632 = vmatpush.msra.mxu0 0.0
      %4633 = vmatpush.msra.mxu0 0.0
      %4634 = vmatpush.msra.mxu0 0.0
      %4635 = vmatpush.msra.mxu0 0.0
      %4636 = vmatpush.msra.mxu0 0.0
      %4637 = vmatpush.msra.mxu0 %v75
      %4638 = vmatpush.msra.mxu0 %v74
      %4639 = vmatpush.msra.mxu0 %v73
      %4640 = vmatpush.msra.mxu0 %v72
      %4641 = vmatmul.f32.gmra.mxu0 %v4623
      %v4642 = vpop.f32.mrf.mxu0
      %v4643 = vadd.f32 %v4620, %v4642
      %4644 = vdwg.mxu0
      %v4646 = vrot.slane %v4643, 1
      %v4647 = vrot.slane %v4643, 2
      %v4648 = vrot.slane %v4643, 3
      %v4649 = vrot.slane %v4643, 4
      %v4650 = vrot.slane %v4643, 5
      %v4651 = vrot.slane %v4643, 6
      %v4652 = vrot.slane %v4643, 7
      %v4660 = vadd.f32 %v4597, %v4643
      %v4661 = vadd.f32 %v4600, %v4646
      %v4662 = vadd.f32 %v4603, %v4647
      %v4663 = vadd.f32 %v4606, %v4648
      %v4664 = vadd.f32 %v4609, %v4649
      %v4665 = vadd.f32 %v4612, %v4650
      %v4666 = vadd.f32 %v4615, %v4651
      %v4667 = vadd.f32 %v4618, %v4652
      %v4668 = vxor.u32 %v4660, 2147483648
      %v4669 = vxor.u32 %v4661, 2147483648
      %v4670 = vxor.u32 %v4662, 2147483648
      %v4671 = vxor.u32 %v4663, 2147483648
      %v4672 = vxor.u32 %v4664, 2147483648
      %v4673 = vxor.u32 %v4665, 2147483648
      %v4674 = vxor.u32 %v4666, 2147483648
      %v4675 = vxor.u32 %v4667, 2147483648
      %v4676 = vmul.f32 %v4668, 1.442695
      %v4677 = vpow.pop %v4676
      %v4678 = vmul.f32 %v4669, 1.442695
      %v4679 = vpow.pop %v4678
      %v4680 = vmul.f32 %v4670, 1.442695
      %v4681 = vpow.pop %v4680
      %v4682 = vmul.f32 %v4671, 1.442695
      %v4683 = vpow.pop %v4682
      %v4684 = vmul.f32 %v4672, 1.442695
      %v4685 = vpow.pop %v4684
      %v4686 = vmul.f32 %v4673, 1.442695
      %v4687 = vpow.pop %v4686
      %v4688 = vmul.f32 %v4674, 1.442695
      %v4689 = vpow.pop %v4688
      %v4690 = vmul.f32 %v4675, 1.442695
      %v4691 = vpow.pop %v4690
      %v4692 = vadd.f32 %v4677, 1.0
      %v4693 = vadd.f32 %v4679, 1.0
      %v4694 = vadd.f32 %v4681, 1.0
      %v4695 = vadd.f32 %v4683, 1.0
      %v4696 = vadd.f32 %v4685, 1.0
      %v4697 = vadd.f32 %v4687, 1.0
      %v4698 = vadd.f32 %v4689, 1.0
      %v4699 = vadd.f32 %v4691, 1.0
      %v4700 = vrcp.pop %v4692
      %v4701 = vmul.f32 %v4692, %v4700
      %v4702 = vsub.f32 1.0, %v4701
      %v4703 = vmul.f32 %v4700, %v4702
      %v4704 = vadd.f32 %v4700, %v4703
      %vm4705 = vweird.f32 %v4692
      %vm4706 = vweird.f32 %v4700
      %vm4707 = vmor %vm4705, %vm4706
      %v4708 = vsel %vm4707, %v4700, %v4704
      %v4709 = vand.u32 2147483647, %v4692
      %vm4710 = vcmp.eq.f32.partialorder %v4709, 8.507059e+37
      %v4711 = vand.u32 %v4692, 2147483648
      %v4712 = vor.u32 1.1754944e-38, %v4711
      %v4713 = vsel %vm4710, %v4712, %v4708
      %v4714 = vmul.f32 1.0, %v4713
      %v4715 = vrcp.pop %v4693
      %v4716 = vmul.f32 %v4693, %v4715
      %v4717 = vsub.f32 1.0, %v4716
      %v4718 = vmul.f32 %v4715, %v4717
      %v4719 = vadd.f32 %v4715, %v4718
      %vm4720 = vweird.f32 %v4693
      %vm4721 = vweird.f32 %v4715
      %vm4722 = vmor %vm4720, %vm4721
      %v4723 = vsel %vm4722, %v4715, %v4719
      %v4724 = vand.u32 2147483647, %v4693
      %vm4725 = vcmp.eq.f32.partialorder %v4724, 8.507059e+37
      %v4726 = vand.u32 %v4693, 2147483648
      %v4727 = vor.u32 1.1754944e-38, %v4726
      %v4728 = vsel %vm4725, %v4727, %v4723
      %v4729 = vmul.f32 1.0, %v4728
      %v4730 = vrcp.pop %v4694
      %v4731 = vmul.f32 %v4694, %v4730
      %v4732 = vsub.f32 1.0, %v4731
      %v4733 = vmul.f32 %v4730, %v4732
      %v4734 = vadd.f32 %v4730, %v4733
      %vm4735 = vweird.f32 %v4694
      %vm4736 = vweird.f32 %v4730
      %vm4737 = vmor %vm4735, %vm4736
      %v4738 = vsel %vm4737, %v4730, %v4734
      %v4739 = vand.u32 2147483647, %v4694
      %vm4740 = vcmp.eq.f32.partialorder %v4739, 8.507059e+37
      %v4741 = vand.u32 %v4694, 2147483648
      %v4742 = vor.u32 1.1754944e-38, %v4741
      %v4743 = vsel %vm4740, %v4742, %v4738
      %v4744 = vmul.f32 1.0, %v4743
      %v4745 = vrcp.pop %v4695
      %v4746 = vmul.f32 %v4695, %v4745
      %v4747 = vsub.f32 1.0, %v4746
      %v4748 = vmul.f32 %v4745, %v4747
      %v4749 = vadd.f32 %v4745, %v4748
      %vm4750 = vweird.f32 %v4695
      %vm4751 = vweird.f32 %v4745
      %vm4752 = vmor %vm4750, %vm4751
      %v4753 = vsel %vm4752, %v4745, %v4749
      %v4754 = vand.u32 2147483647, %v4695
      %vm4755 = vcmp.eq.f32.partialorder %v4754, 8.507059e+37
      %v4756 = vand.u32 %v4695, 2147483648
      %v4757 = vor.u32 1.1754944e-38, %v4756
      %v4758 = vsel %vm4755, %v4757, %v4753
      %v4759 = vmul.f32 1.0, %v4758
      %v4760 = vrcp.pop %v4696
      %v4761 = vmul.f32 %v4696, %v4760
      %v4762 = vsub.f32 1.0, %v4761
      %v4763 = vmul.f32 %v4760, %v4762
      %v4764 = vadd.f32 %v4760, %v4763
      %vm4765 = vweird.f32 %v4696
      %vm4766 = vweird.f32 %v4760
      %vm4767 = vmor %vm4765, %vm4766
      %v4768 = vsel %vm4767, %v4760, %v4764
      %v4769 = vand.u32 2147483647, %v4696
      %vm4770 = vcmp.eq.f32.partialorder %v4769, 8.507059e+37
      %v4771 = vand.u32 %v4696, 2147483648
      %v4772 = vor.u32 1.1754944e-38, %v4771
      %v4773 = vsel %vm4770, %v4772, %v4768
      %v4774 = vmul.f32 1.0, %v4773
      %v4775 = vrcp.pop %v4697
      %v4776 = vmul.f32 %v4697, %v4775
      %v4777 = vsub.f32 1.0, %v4776
      %v4778 = vmul.f32 %v4775, %v4777
      %v4779 = vadd.f32 %v4775, %v4778
      %vm4780 = vweird.f32 %v4697
      %vm4781 = vweird.f32 %v4775
      %vm4782 = vmor %vm4780, %vm4781
      %v4783 = vsel %vm4782, %v4775, %v4779
      %v4784 = vand.u32 2147483647, %v4697
      %vm4785 = vcmp.eq.f32.partialorder %v4784, 8.507059e+37
      %v4786 = vand.u32 %v4697, 2147483648
      %v4787 = vor.u32 1.1754944e-38, %v4786
      %v4788 = vsel %vm4785, %v4787, %v4783
      %v4789 = vmul.f32 1.0, %v4788
      %v4790 = vrcp.pop %v4698
      %v4791 = vmul.f32 %v4698, %v4790
      %v4792 = vsub.f32 1.0, %v4791
      %v4793 = vmul.f32 %v4790, %v4792
      %v4794 = vadd.f32 %v4790, %v4793
      %vm4795 = vweird.f32 %v4698
      %vm4796 = vweird.f32 %v4790
      %vm4797 = vmor %vm4795, %vm4796
      %v4798 = vsel %vm4797, %v4790, %v4794
      %v4799 = vand.u32 2147483647, %v4698
      %vm4800 = vcmp.eq.f32.partialorder %v4799, 8.507059e+37
      %v4801 = vand.u32 %v4698, 2147483648
      %v4802 = vor.u32 1.1754944e-38, %v4801
      %v4803 = vsel %vm4800, %v4802, %v4798
      %v4804 = vmul.f32 1.0, %v4803
      %v4805 = vrcp.pop %v4699
      %v4806 = vmul.f32 %v4699, %v4805
      %v4807 = vsub.f32 1.0, %v4806
      %v4808 = vmul.f32 %v4805, %v4807
      %v4809 = vadd.f32 %v4805, %v4808
      %vm4810 = vweird.f32 %v4699
      %vm4811 = vweird.f32 %v4805
      %vm4812 = vmor %vm4810, %vm4811
      %v4813 = vsel %vm4812, %v4805, %v4809
      %v4814 = vand.u32 2147483647, %v4699
      %vm4815 = vcmp.eq.f32.partialorder %v4814, 8.507059e+37
      %v4816 = vand.u32 %v4699, 2147483648
      %v4817 = vor.u32 1.1754944e-38, %v4816
      %v4818 = vsel %vm4815, %v4817, %v4813
      %v4819 = vmul.f32 1.0, %v4818
      %4820 = vrot.lane.b32.xlu0 %v4643, 64
      %v4821 = vpop.permute.xlu0 %4820
      %4822 = vrot.lane.b32.xlu0 %v4646, 64
      %v4823 = vpop.permute.xlu0 %4822
      %4824 = vrot.lane.b32.xlu0 %v4647, 64
      %v4825 = vpop.permute.xlu0 %4824
      %4826 = vrot.lane.b32.xlu0 %v4648, 64
      %v4827 = vpop.permute.xlu0 %4826
      %4828 = vrot.lane.b32.xlu0 %v4649, 64
      %v4829 = vpop.permute.xlu0 %4828
      %4830 = vrot.lane.b32.xlu0 %v4650, 64
      %v4831 = vpop.permute.xlu0 %4830
      %4832 = vrot.lane.b32.xlu0 %v4651, 64
      %v4833 = vpop.permute.xlu0 %4832
      %4834 = vrot.lane.b32.xlu0 %v4652, 64
      %v4835 = vpop.permute.xlu0 %4834
      %v4844 = vmul.f32 %v4714, %v4821
      %v4845 = vmul.f32 %v4729, %v4823
      %v4846 = vmul.f32 %v4744, %v4825
      %v4847 = vmul.f32 %v4759, %v4827
      %v4848 = vmul.f32 %v4774, %v4829
      %v4849 = vmul.f32 %v4789, %v4831
      %v4850 = vmul.f32 %v4804, %v4833
      %v4851 = vmul.f32 %v4819, %v4835
      %4860 = vrot.lane.b32.xlu0 %v4844, 64
      %v4861 = vpop.permute.xlu0 %4860
      %4862 = vrot.lane.b32.xlu0 %v4845, 64
      %v4863 = vpop.permute.xlu0 %4862
      %4864 = vrot.lane.b32.xlu0 %v4846, 64
      %v4865 = vpop.permute.xlu0 %4864
      %4866 = vrot.lane.b32.xlu0 %v4847, 64
      %v4867 = vpop.permute.xlu0 %4866
      %4868 = vrot.lane.b32.xlu0 %v4848, 64
      %v4869 = vpop.permute.xlu0 %4868
      %4870 = vrot.lane.b32.xlu0 %v4849, 64
      %v4871 = vpop.permute.xlu0 %4870
      %4872 = vrot.lane.b32.xlu0 %v4850, 64
      %v4873 = vpop.permute.xlu0 %4872
      %4874 = vrot.lane.b32.xlu0 %v4851, 64
      %v4875 = vpop.permute.xlu0 %4874
      %v4884 = vadd.f32 %v4597, %v4861
      %v4885 = vadd.f32 %v4600, %v4863
      %v4886 = vadd.f32 %v4603, %v4865
      %v4887 = vadd.f32 %v4606, %v4867
      %v4888 = vadd.f32 %v4609, %v4869
      %v4889 = vadd.f32 %v4612, %v4871
      %v4890 = vadd.f32 %v4615, %v4873
      %v4891 = vadd.f32 %v4618, %v4875
      %v4892 = vtanh.pop %v4884
      %v4893 = vtanh.pop %v4885
      %v4894 = vtanh.pop %v4886
      %v4895 = vtanh.pop %v4887
      %v4896 = vtanh.pop %v4888
      %v4897 = vtanh.pop %v4889
      %v4898 = vtanh.pop %v4890
      %v4899 = vtanh.pop %v4891
      %v4900 = vsub.f32 1.0, %v4714
      %v4901 = vsub.f32 1.0, %v4729
      %v4902 = vsub.f32 1.0, %v4744
      %v4903 = vsub.f32 1.0, %v4759
      %v4904 = vsub.f32 1.0, %v4774
      %v4905 = vsub.f32 1.0, %v4789
      %v4906 = vsub.f32 1.0, %v4804
      %v4907 = vsub.f32 1.0, %v4819
      %4916 = vrot.lane.b32.xlu0 %v4892, 96
      %v4917 = vpop.permute.xlu0 %4916
      %4918 = vrot.lane.b32.xlu0 %v4893, 96
      %v4919 = vpop.permute.xlu0 %4918
      %4920 = vrot.lane.b32.xlu0 %v4894, 96
      %v4921 = vpop.permute.xlu0 %4920
      %4922 = vrot.lane.b32.xlu0 %v4895, 96
      %v4923 = vpop.permute.xlu0 %4922
      %4924 = vrot.lane.b32.xlu0 %v4896, 96
      %v4925 = vpop.permute.xlu0 %4924
      %4926 = vrot.lane.b32.xlu0 %v4897, 96
      %v4927 = vpop.permute.xlu0 %4926
      %4928 = vrot.lane.b32.xlu0 %v4898, 96
      %v4929 = vpop.permute.xlu0 %4928
      %4930 = vrot.lane.b32.xlu0 %v4899, 96
      %v4931 = vpop.permute.xlu0 %4930
      %v4940 = vmul.f32 %v4900, %v4917
      %v4941 = vmul.f32 %v4901, %v4919
      %v4942 = vmul.f32 %v4902, %v4921
      %v4943 = vmul.f32 %v4903, %v4923
      %v4944 = vmul.f32 %v4904, %v4925
      %v4945 = vmul.f32 %v4905, %v4927
      %v4946 = vmul.f32 %v4906, %v4929
      %v4947 = vmul.f32 %v4907, %v4931
      %v4948 = vrot.slane %v4585, 1
      %v4949 = vrot.slane %v4585, 2
      %v4950 = vrot.slane %v4585, 3
      %v4951 = vrot.slane %v4585, 4
      %v4952 = vrot.slane %v4585, 5
      %v4953 = vrot.slane %v4585, 6
      %v4954 = vrot.slane %v4585, 7
      %4955 = vrot.lane.b32.xlu0 %v4585, 32
      %v4956 = vpop.permute.xlu0 %4955
      %4957 = vrot.lane.b32.xlu0 %v4948, 32
      %v4958 = vpop.permute.xlu0 %4957
      %4959 = vrot.lane.b32.xlu0 %v4949, 32
      %v4960 = vpop.permute.xlu0 %4959
      %4961 = vrot.lane.b32.xlu0 %v4950, 32
      %v4962 = vpop.permute.xlu0 %4961
      %4963 = vrot.lane.b32.xlu0 %v4951, 32
      %v4964 = vpop.permute.xlu0 %4963
      %4965 = vrot.lane.b32.xlu0 %v4952, 32
      %v4966 = vpop.permute.xlu0 %4965
      %4967 = vrot.lane.b32.xlu0 %v4953, 32
      %v4968 = vpop.permute.xlu0 %4967
      %4969 = vrot.lane.b32.xlu0 %v4954, 32
      %v4970 = vpop.permute.xlu0 %4969
      %v4979 = vmul.f32 %v4714, %v4956
      %v4980 = vmul.f32 %v4729, %v4958
      %v4981 = vmul.f32 %v4744, %v4960
      %v4982 = vmul.f32 %v4759, %v4962
      %v4983 = vmul.f32 %v4774, %v4964
      %v4984 = vmul.f32 %v4789, %v4966
      %v4985 = vmul.f32 %v4804, %v4968
      %v4986 = vmul.f32 %v4819, %v4970
      %v4987 = vadd.f32 %v4940, %v4979
      %v4988 = vadd.f32 %v4941, %v4980
      %v4989 = vadd.f32 %v4942, %v4981
      %v4990 = vadd.f32 %v4943, %v4982
      %v4991 = vadd.f32 %v4944, %v4983
      %v4992 = vadd.f32 %v4945, %v4984
      %v4993 = vadd.f32 %v4946, %v4985
      %v4994 = vadd.f32 %v4947, %v4986
      %v4996 = vperm.slane %v81, 0
      %5006 = vst [vmem:[#allocation1] ss:$9 sm:$0xff] %v4987
      %s5007 = scalar_lea.vmem [#allocation1], 1
      %5008 = vst [vmem:[%s5007] ss:$9 sm:$0xff] %v4988
      %s5009 = scalar_lea.vmem [#allocation1], 2
      %5010 = vst [vmem:[%s5009] ss:$9 sm:$0xff] %v4989
      %s5011 = scalar_lea.vmem [#allocation1], 3
      %5012 = vst [vmem:[%s5011] ss:$9 sm:$0xff] %v4990
      %s5013 = scalar_lea.vmem [#allocation1], 4
      %5014 = vst [vmem:[%s5013] ss:$9 sm:$0xff] %v4991
      %s5015 = scalar_lea.vmem [#allocation1], 5
      %5016 = vst [vmem:[%s5015] ss:$9 sm:$0xff] %v4992
      %s5017 = scalar_lea.vmem [#allocation1], 6
      %5018 = vst [vmem:[%s5017] ss:$9 sm:$0xff] %v4993
      %s5019 = scalar_lea.vmem [#allocation1], 7
      %5020 = vst [vmem:[%s5019] ss:$9 sm:$0xff] %v4994
      %v5021 = vld [vmem:[#allocation1] sm:$0xff]
      %5022 = vrot.lane.b32.xlu0 %v5021, 96
      %v5023 = vpop.permute.xlu0 %5022
      %v5024 = vsel %vm232, %v5023, 0
      %5026 = vmatpush.msra.mxu0 0.0
      %5027 = vmatpush.msra.mxu0 0.0
      %5028 = vmatpush.msra.mxu0 0.0
      %5029 = vmatpush.msra.mxu0 0.0
      %5030 = vmatpush.msra.mxu0 0.0
      %5031 = vmatpush.msra.mxu0 0.0
      %5032 = vmatpush.msra.mxu0 0.0
      %5033 = vmatpush.msra.mxu0 0.0
      %5034 = vmatpush.msra.mxu0 0.0
      %5035 = vmatpush.msra.mxu0 0.0
      %5036 = vmatpush.msra.mxu0 0.0
      %5037 = vmatpush.msra.mxu0 0.0
      %5038 = vmatpush.msra.mxu0 %v80
      %5039 = vmatpush.msra.mxu0 %v79
      %5040 = vmatpush.msra.mxu0 %v78
      %5041 = vmatpush.msra.mxu0 %v77
      %5042 = vmatmul.f32.gmra.mxu0 %v5024
      %v5043 = vpop.f32.mrf.mxu0
      %v5044 = vadd.f32 %v4996, %v5043
      %5045 = vdwg.mxu0
      %v5047 = vrot.slane %v5044, 1
      %v5048 = vrot.slane %v5044, 2
      %v5049 = vrot.slane %v5044, 3
      %v5050 = vrot.slane %v5044, 4
      %v5051 = vrot.slane %v5044, 5
      %v5052 = vrot.slane %v5044, 6
      %v5053 = vrot.slane %v5044, 7
      %5054 = vrot.lane.b32.xlu0 %v5044, 96
      %v5055 = vpop.permute.xlu0 %5054
      %5056 = vrot.lane.b32.xlu0 %v5047, 96
      %v5057 = vpop.permute.xlu0 %5056
      %5058 = vrot.lane.b32.xlu0 %v5048, 96
      %v5059 = vpop.permute.xlu0 %5058
      %5060 = vrot.lane.b32.xlu0 %v5049, 96
      %v5061 = vpop.permute.xlu0 %5060
      %5062 = vrot.lane.b32.xlu0 %v5050, 96
      %v5063 = vpop.permute.xlu0 %5062
      %5064 = vrot.lane.b32.xlu0 %v5051, 96
      %v5065 = vpop.permute.xlu0 %5064
      %5066 = vrot.lane.b32.xlu0 %v5052, 96
      %v5067 = vpop.permute.xlu0 %5066
      %5068 = vrot.lane.b32.xlu0 %v5053, 96
      %v5069 = vpop.permute.xlu0 %5068
      %v5078 = vadd.f32 %v4597, %v5055
      %v5079 = vadd.f32 %v4600, %v5057
      %v5080 = vadd.f32 %v4603, %v5059
      %v5081 = vadd.f32 %v4606, %v5061
      %v5082 = vadd.f32 %v4609, %v5063
      %v5083 = vadd.f32 %v4612, %v5065
      %v5084 = vadd.f32 %v4615, %v5067
      %v5085 = vadd.f32 %v4618, %v5069
      %v5086 = vperm.slane %v5078, 0
      %v5087 = vlaneseq
      %v5088 = vshrl.u32 %v5087, 7
      %v5089 = vadd.s32 %v5088, 96
      %5090 = vset.pattern.permute.xlu0 %v5089
      %5091 = vperm.xlu0 %5090, %v5086
      %v5092 = vpop.permute.xlu0 %5091
      %v5093 = vlaneseq
      %v5094 = vshrl.u32 %v5093, 7
      %v5095 = vadd.s32 %v5094, 104
      %5096 = vset.pattern.permute.xlu0 %v5095
      %5097 = vperm.xlu0 %5096, %v5086
      %v5098 = vpop.permute.xlu0 %5097
      %v5099 = vlaneseq
      %v5100 = vshrl.u32 %v5099, 7
      %v5101 = vadd.s32 %v5100, 112
      %5102 = vset.pattern.permute.xlu0 %v5101
      %5103 = vperm.xlu0 %5102, %v5086
      %v5104 = vpop.permute.xlu0 %5103
      %v5105 = vlaneseq
      %v5106 = vshrl.u32 %v5105, 7
      %v5107 = vadd.s32 %v5106, 120
      %5108 = vset.pattern.permute.xlu0 %v5107
      %5109 = vperm.xlu0 %5108, %v5086
      %v5110 = vpop.permute.xlu0 %5109
      %v5111 = vperm.slane %v5079, 0
      %v5112 = vlaneseq
      %v5113 = vshrl.u32 %v5112, 7
      %v5114 = vadd.s32 %v5113, 96
      %5115 = vset.pattern.permute.xlu0 %v5114
      %5116 = vperm.xlu0 %5115, %v5111
      %v5117 = vpop.permute.xlu0 %5116
      %v5118 = vlaneseq
      %v5119 = vshrl.u32 %v5118, 7
      %v5120 = vadd.s32 %v5119, 104
      %5121 = vset.pattern.permute.xlu0 %v5120
      %5122 = vperm.xlu0 %5121, %v5111
      %v5123 = vpop.permute.xlu0 %5122
      %v5124 = vlaneseq
      %v5125 = vshrl.u32 %v5124, 7
      %v5126 = vadd.s32 %v5125, 112
      %5127 = vset.pattern.permute.xlu0 %v5126
      %5128 = vperm.xlu0 %5127, %v5111
      %v5129 = vpop.permute.xlu0 %5128
      %v5130 = vlaneseq
      %v5131 = vshrl.u32 %v5130, 7
      %v5132 = vadd.s32 %v5131, 120
      %5133 = vset.pattern.permute.xlu0 %v5132
      %5134 = vperm.xlu0 %5133, %v5111
      %v5135 = vpop.permute.xlu0 %5134
      %v5136 = vperm.slane %v5080, 0
      %v5137 = vlaneseq
      %v5138 = vshrl.u32 %v5137, 7
      %v5139 = vadd.s32 %v5138, 96
      %5140 = vset.pattern.permute.xlu0 %v5139
      %5141 = vperm.xlu0 %5140, %v5136
      %v5142 = vpop.permute.xlu0 %5141
      %v5143 = vlaneseq
      %v5144 = vshrl.u32 %v5143, 7
      %v5145 = vadd.s32 %v5144, 104
      %5146 = vset.pattern.permute.xlu0 %v5145
      %5147 = vperm.xlu0 %5146, %v5136
      %v5148 = vpop.permute.xlu0 %5147
      %v5149 = vlaneseq
      %v5150 = vshrl.u32 %v5149, 7
      %v5151 = vadd.s32 %v5150, 112
      %5152 = vset.pattern.permute.xlu0 %v5151
      %5153 = vperm.xlu0 %5152, %v5136
      %v5154 = vpop.permute.xlu0 %5153
      %v5155 = vlaneseq
      %v5156 = vshrl.u32 %v5155, 7
      %v5157 = vadd.s32 %v5156, 120
      %5158 = vset.pattern.permute.xlu0 %v5157
      %5159 = vperm.xlu0 %5158, %v5136
      %v5160 = vpop.permute.xlu0 %5159
      %v5161 = vperm.slane %v5081, 0
      %v5162 = vlaneseq
      %v5163 = vshrl.u32 %v5162, 7
      %v5164 = vadd.s32 %v5163, 96
      %5165 = vset.pattern.permute.xlu0 %v5164
      %5166 = vperm.xlu0 %5165, %v5161
      %v5167 = vpop.permute.xlu0 %5166
      %v5168 = vlaneseq
      %v5169 = vshrl.u32 %v5168, 7
      %v5170 = vadd.s32 %v5169, 104
      %5171 = vset.pattern.permute.xlu0 %v5170
      %5172 = vperm.xlu0 %5171, %v5161
      %v5173 = vpop.permute.xlu0 %5172
      %v5174 = vlaneseq
      %v5175 = vshrl.u32 %v5174, 7
      %v5176 = vadd.s32 %v5175, 112
      %5177 = vset.pattern.permute.xlu0 %v5176
      %5178 = vperm.xlu0 %5177, %v5161
      %v5179 = vpop.permute.xlu0 %5178
      %v5180 = vlaneseq
      %v5181 = vshrl.u32 %v5180, 7
      %v5182 = vadd.s32 %v5181, 120
      %5183 = vset.pattern.permute.xlu0 %v5182
      %5184 = vperm.xlu0 %5183, %v5161
      %v5185 = vpop.permute.xlu0 %5184
      %v5186 = vperm.slane %v5082, 0
      %v5187 = vlaneseq
      %v5188 = vshrl.u32 %v5187, 7
      %v5189 = vadd.s32 %v5188, 96
      %5190 = vset.pattern.permute.xlu0 %v5189
      %5191 = vperm.xlu0 %5190, %v5186
      %v5192 = vpop.permute.xlu0 %5191
      %v5193 = vlaneseq
      %v5194 = vshrl.u32 %v5193, 7
      %v5195 = vadd.s32 %v5194, 104
      %5196 = vset.pattern.permute.xlu0 %v5195
      %5197 = vperm.xlu0 %5196, %v5186
      %v5198 = vpop.permute.xlu0 %5197
      %v5199 = vlaneseq
      %v5200 = vshrl.u32 %v5199, 7
      %v5201 = vadd.s32 %v5200, 112
      %5202 = vset.pattern.permute.xlu0 %v5201
      %5203 = vperm.xlu0 %5202, %v5186
      %v5204 = vpop.permute.xlu0 %5203
      %v5205 = vlaneseq
      %v5206 = vshrl.u32 %v5205, 7
      %v5207 = vadd.s32 %v5206, 120
      %5208 = vset.pattern.permute.xlu0 %v5207
      %5209 = vperm.xlu0 %5208, %v5186
      %v5210 = vpop.permute.xlu0 %5209
      %v5211 = vperm.slane %v5083, 0
      %v5212 = vlaneseq
      %v5213 = vshrl.u32 %v5212, 7
      %v5214 = vadd.s32 %v5213, 96
      %5215 = vset.pattern.permute.xlu0 %v5214
      %5216 = vperm.xlu0 %5215, %v5211
      %v5217 = vpop.permute.xlu0 %5216
      %v5218 = vlaneseq
      %v5219 = vshrl.u32 %v5218, 7
      %v5220 = vadd.s32 %v5219, 104
      %5221 = vset.pattern.permute.xlu0 %v5220
      %5222 = vperm.xlu0 %5221, %v5211
      %v5223 = vpop.permute.xlu0 %5222
      %v5224 = vlaneseq
      %v5225 = vshrl.u32 %v5224, 7
      %v5226 = vadd.s32 %v5225, 112
      %5227 = vset.pattern.permute.xlu0 %v5226
      %5228 = vperm.xlu0 %5227, %v5211
      %v5229 = vpop.permute.xlu0 %5228
      %v5230 = vlaneseq
      %v5231 = vshrl.u32 %v5230, 7
      %v5232 = vadd.s32 %v5231, 120
      %5233 = vset.pattern.permute.xlu0 %v5232
      %5234 = vperm.xlu0 %5233, %v5211
      %v5235 = vpop.permute.xlu0 %5234
      %v5236 = vperm.slane %v5084, 0
      %v5237 = vlaneseq
      %v5238 = vshrl.u32 %v5237, 7
      %v5239 = vadd.s32 %v5238, 96
      %5240 = vset.pattern.permute.xlu0 %v5239
      %5241 = vperm.xlu0 %5240, %v5236
      %v5242 = vpop.permute.xlu0 %5241
      %v5243 = vlaneseq
      %v5244 = vshrl.u32 %v5243, 7
      %v5245 = vadd.s32 %v5244, 104
      %5246 = vset.pattern.permute.xlu0 %v5245
      %5247 = vperm.xlu0 %5246, %v5236
      %v5248 = vpop.permute.xlu0 %5247
      %v5249 = vlaneseq
      %v5250 = vshrl.u32 %v5249, 7
      %v5251 = vadd.s32 %v5250, 112
      %5252 = vset.pattern.permute.xlu0 %v5251
      %5253 = vperm.xlu0 %5252, %v5236
      %v5254 = vpop.permute.xlu0 %5253
      %v5255 = vlaneseq
      %v5256 = vshrl.u32 %v5255, 7
      %v5257 = vadd.s32 %v5256, 120
      %5258 = vset.pattern.permute.xlu0 %v5257
      %5259 = vperm.xlu0 %5258, %v5236
      %v5260 = vpop.permute.xlu0 %5259
      %v5261 = vperm.slane %v5085, 0
      %v5262 = vlaneseq
      %v5263 = vshrl.u32 %v5262, 7
      %v5264 = vadd.s32 %v5263, 96
      %5265 = vset.pattern.permute.xlu0 %v5264
      %5266 = vperm.xlu0 %5265, %v5261
      %v5267 = vpop.permute.xlu0 %5266
      %v5268 = vlaneseq
      %v5269 = vshrl.u32 %v5268, 7
      %v5270 = vadd.s32 %v5269, 104
      %5271 = vset.pattern.permute.xlu0 %v5270
      %5272 = vperm.xlu0 %5271, %v5261
      %v5273 = vpop.permute.xlu0 %5272
      %v5274 = vlaneseq
      %v5275 = vshrl.u32 %v5274, 7
      %v5276 = vadd.s32 %v5275, 112
      %5277 = vset.pattern.permute.xlu0 %v5276
      %5278 = vperm.xlu0 %5277, %v5261
      %v5279 = vpop.permute.xlu0 %5278
      %v5280 = vlaneseq
      %v5281 = vshrl.u32 %v5280, 7
      %v5282 = vadd.s32 %v5281, 120
      %5283 = vset.pattern.permute.xlu0 %v5282
      %5284 = vperm.xlu0 %5283, %v5261
      %v5285 = vpop.permute.xlu0 %5284
      %v5286 = vadd.f32 %v3901, %v5092
      %v5287 = vadd.f32 %v3902, %v5098
      %v5288 = vadd.f32 %v3903, %v5104
      %v5289 = vadd.f32 %v3904, %v5110
      %v5290 = vadd.f32 %v3905, %v5117
      %v5291 = vadd.f32 %v3906, %v5123
      %v5292 = vadd.f32 %v3907, %v5129
      %v5293 = vadd.f32 %v3908, %v5135
      %v5294 = vadd.f32 %v3909, %v5142
      %v5295 = vadd.f32 %v3910, %v5148
      %v5296 = vadd.f32 %v3911, %v5154
      %v5297 = vadd.f32 %v3912, %v5160
      %v5298 = vadd.f32 %v3913, %v5167
      %v5299 = vadd.f32 %v3914, %v5173
      %v5300 = vadd.f32 %v3915, %v5179
      %v5301 = vadd.f32 %v3916, %v5185
      %v5302 = vadd.f32 %v3917, %v5192
      %v5303 = vadd.f32 %v3918, %v5198
      %v5304 = vadd.f32 %v3919, %v5204
      %v5305 = vadd.f32 %v3920, %v5210
      %v5306 = vadd.f32 %v3921, %v5217
      %v5307 = vadd.f32 %v3922, %v5223
      %v5308 = vadd.f32 %v3923, %v5229
      %v5309 = vadd.f32 %v3924, %v5235
      %v5310 = vadd.f32 %v3925, %v5242
      %v5311 = vadd.f32 %v3926, %v5248
      %v5312 = vadd.f32 %v3927, %v5254
      %v5313 = vadd.f32 %v3928, %v5260
      %v5314 = vadd.f32 %v3929, %v5267
      %v5315 = vadd.f32 %v3930, %v5273
      %v5316 = vadd.f32 %v3931, %v5279
      %v5317 = vadd.f32 %v3932, %v5285
      %5318 = vrot.lane.b32.xlu0 %v4586, 1
      %v5319 = vpop.permute.xlu0 %5318
      %v5321 = vrot.slane %v5319, 1
      %v5322 = vrot.slane %v5319, 2
      %v5323 = vrot.slane %v5319, 3
      %v5324 = vrot.slane %v5319, 4
      %v5325 = vrot.slane %v5319, 5
      %v5326 = vrot.slane %v5319, 6
      %v5327 = vrot.slane %v5319, 7
      %v5328 = vperm.slane %v5319, 0
      %v5329 = vperm.slane %v5321, 0
      %v5330 = vperm.slane %v5322, 0
      %v5331 = vperm.slane %v5323, 0
      %v5332 = vperm.slane %v5324, 0
      %v5333 = vperm.slane %v5325, 0
      %v5334 = vperm.slane %v5326, 0
      %v5335 = vperm.slane %v5327, 0
      %v5344 = vmul.f32 %v5328, %v4403
      %v5345 = vmul.f32 %v5328, %v4409
      %v5346 = vmul.f32 %v5328, %v4415
      %v5347 = vmul.f32 %v5328, %v4421
      %v5348 = vmul.f32 %v5329, %v4403
      %v5349 = vmul.f32 %v5329, %v4409
      %v5350 = vmul.f32 %v5329, %v4415
      %v5351 = vmul.f32 %v5329, %v4421
      %v5352 = vmul.f32 %v5330, %v4403
      %v5353 = vmul.f32 %v5330, %v4409
      %v5354 = vmul.f32 %v5330, %v4415
      %v5355 = vmul.f32 %v5330, %v4421
      %v5356 = vmul.f32 %v5331, %v4403
      %v5357 = vmul.f32 %v5331, %v4409
      %v5358 = vmul.f32 %v5331, %v4415
      %v5359 = vmul.f32 %v5331, %v4421
      %v5360 = vmul.f32 %v5332, %v4403
      %v5361 = vmul.f32 %v5332, %v4409
      %v5362 = vmul.f32 %v5332, %v4415
      %v5363 = vmul.f32 %v5332, %v4421
      %v5364 = vmul.f32 %v5333, %v4403
      %v5365 = vmul.f32 %v5333, %v4409
      %v5366 = vmul.f32 %v5333, %v4415
      %v5367 = vmul.f32 %v5333, %v4421
      %v5368 = vmul.f32 %v5334, %v4403
      %v5369 = vmul.f32 %v5334, %v4409
      %v5370 = vmul.f32 %v5334, %v4415
      %v5371 = vmul.f32 %v5334, %v4421
      %v5372 = vmul.f32 %v5335, %v4403
      %v5373 = vmul.f32 %v5335, %v4409
      %v5374 = vmul.f32 %v5335, %v4415
      %v5375 = vmul.f32 %v5335, %v4421
      %v5376 = vadd.f32 %v5286, %v5344
      %v5377 = vadd.f32 %v5287, %v5345
      %v5378 = vadd.f32 %v5288, %v5346
      %v5379 = vadd.f32 %v5289, %v5347
      %v5380 = vadd.f32 %v5290, %v5348
      %v5381 = vadd.f32 %v5291, %v5349
      %v5382 = vadd.f32 %v5292, %v5350
      %v5383 = vadd.f32 %v5293, %v5351
      %v5384 = vadd.f32 %v5294, %v5352
      %v5385 = vadd.f32 %v5295, %v5353
      %v5386 = vadd.f32 %v5296, %v5354
      %v5387 = vadd.f32 %v5297, %v5355
      %v5388 = vadd.f32 %v5298, %v5356
      %v5389 = vadd.f32 %v5299, %v5357
      %v5390 = vadd.f32 %v5300, %v5358
      %v5391 = vadd.f32 %v5301, %v5359
      %v5392 = vadd.f32 %v5302, %v5360
      %v5393 = vadd.f32 %v5303, %v5361
      %v5394 = vadd.f32 %v5304, %v5362
      %v5395 = vadd.f32 %v5305, %v5363
      %v5396 = vadd.f32 %v5306, %v5364
      %v5397 = vadd.f32 %v5307, %v5365
      %v5398 = vadd.f32 %v5308, %v5366
      %v5399 = vadd.f32 %v5309, %v5367
      %v5400 = vadd.f32 %v5310, %v5368
      %v5401 = vadd.f32 %v5311, %v5369
      %v5402 = vadd.f32 %v5312, %v5370
      %v5403 = vadd.f32 %v5313, %v5371
      %v5404 = vadd.f32 %v5314, %v5372
      %v5405 = vadd.f32 %v5315, %v5373
      %v5406 = vadd.f32 %v5316, %v5374
      %v5407 = vadd.f32 %v5317, %v5375
      %5408 = vrot.lane.b32.xlu0 %v4587, 1
      %v5409 = vpop.permute.xlu0 %5408
      %v5411 = vrot.slane %v5409, 1
      %v5412 = vrot.slane %v5409, 2
      %v5413 = vrot.slane %v5409, 3
      %v5414 = vrot.slane %v5409, 4
      %v5415 = vrot.slane %v5409, 5
      %v5416 = vrot.slane %v5409, 6
      %v5417 = vrot.slane %v5409, 7
      %v5418 = vperm.slane %v5409, 0
      %v5419 = vperm.slane %v5411, 0
      %v5420 = vperm.slane %v5412, 0
      %v5421 = vperm.slane %v5413, 0
      %v5422 = vperm.slane %v5414, 0
      %v5423 = vperm.slane %v5415, 0
      %v5424 = vperm.slane %v5416, 0
      %v5425 = vperm.slane %v5417, 0
      %v5434 = vmul.f32 %v5418, %v4478
      %v5435 = vmul.f32 %v5418, %v4484
      %v5436 = vmul.f32 %v5418, %v4490
      %v5437 = vmul.f32 %v5418, %v4496
      %v5438 = vmul.f32 %v5419, %v4478
      %v5439 = vmul.f32 %v5419, %v4484
      %v5440 = vmul.f32 %v5419, %v4490
      %v5441 = vmul.f32 %v5419, %v4496
      %v5442 = vmul.f32 %v5420, %v4478
      %v5443 = vmul.f32 %v5420, %v4484
      %v5444 = vmul.f32 %v5420, %v4490
      %v5445 = vmul.f32 %v5420, %v4496
      %v5446 = vmul.f32 %v5421, %v4478
      %v5447 = vmul.f32 %v5421, %v4484
      %v5448 = vmul.f32 %v5421, %v4490
      %v5449 = vmul.f32 %v5421, %v4496
      %v5450 = vmul.f32 %v5422, %v4478
      %v5451 = vmul.f32 %v5422, %v4484
      %v5452 = vmul.f32 %v5422, %v4490
      %v5453 = vmul.f32 %v5422, %v4496
      %v5454 = vmul.f32 %v5423, %v4478
      %v5455 = vmul.f32 %v5423, %v4484
      %v5456 = vmul.f32 %v5423, %v4490
      %v5457 = vmul.f32 %v5423, %v4496
      %v5458 = vmul.f32 %v5424, %v4478
      %v5459 = vmul.f32 %v5424, %v4484
      %v5460 = vmul.f32 %v5424, %v4490
      %v5461 = vmul.f32 %v5424, %v4496
      %v5462 = vmul.f32 %v5425, %v4478
      %v5463 = vmul.f32 %v5425, %v4484
      %v5464 = vmul.f32 %v5425, %v4490
      %v5465 = vmul.f32 %v5425, %v4496
      %v5466 = vadd.f32 %v5376, %v5434
      %v5467 = vadd.f32 %v5377, %v5435
      %v5468 = vadd.f32 %v5378, %v5436
      %v5469 = vadd.f32 %v5379, %v5437
      %v5470 = vadd.f32 %v5380, %v5438
      %v5471 = vadd.f32 %v5381, %v5439
      %v5472 = vadd.f32 %v5382, %v5440
      %v5473 = vadd.f32 %v5383, %v5441
      %v5474 = vadd.f32 %v5384, %v5442
      %v5475 = vadd.f32 %v5385, %v5443
      %v5476 = vadd.f32 %v5386, %v5444
      %v5477 = vadd.f32 %v5387, %v5445
      %v5478 = vadd.f32 %v5388, %v5446
      %v5479 = vadd.f32 %v5389, %v5447
      %v5480 = vadd.f32 %v5390, %v5448
      %v5481 = vadd.f32 %v5391, %v5449
      %v5482 = vadd.f32 %v5392, %v5450
      %v5483 = vadd.f32 %v5393, %v5451
      %v5484 = vadd.f32 %v5394, %v5452
      %v5485 = vadd.f32 %v5395, %v5453
      %v5486 = vadd.f32 %v5396, %v5454
      %v5487 = vadd.f32 %v5397, %v5455
      %v5488 = vadd.f32 %v5398, %v5456
      %v5489 = vadd.f32 %v5399, %v5457
      %v5490 = vadd.f32 %v5400, %v5458
      %v5491 = vadd.f32 %v5401, %v5459
      %v5492 = vadd.f32 %v5402, %v5460
      %v5493 = vadd.f32 %v5403, %v5461
      %v5494 = vadd.f32 %v5404, %v5462
      %v5495 = vadd.f32 %v5405, %v5463
      %v5496 = vadd.f32 %v5406, %v5464
      %v5497 = vadd.f32 %v5407, %v5465
      %v5499 = vrot.slane %v4586, 1
      %v5500 = vrot.slane %v4586, 2
      %v5501 = vrot.slane %v4586, 3
      %v5502 = vrot.slane %v4586, 4
      %v5503 = vrot.slane %v4586, 5
      %v5504 = vrot.slane %v4586, 6
      %v5505 = vrot.slane %v4586, 7
      %v5506 = vperm.slane %v4586, 0
      %v5507 = vperm.slane %v5499, 0
      %v5508 = vperm.slane %v5500, 0
      %v5509 = vperm.slane %v5501, 0
      %v5510 = vperm.slane %v5502, 0
      %v5511 = vperm.slane %v5503, 0
      %v5512 = vperm.slane %v5504, 0
      %v5513 = vperm.slane %v5505, 0
      %v5522 = vmul.f32 %v5506, %v4428
      %v5523 = vmul.f32 %v5506, %v4434
      %v5524 = vmul.f32 %v5506, %v4440
      %v5525 = vmul.f32 %v5506, %v4446
      %v5526 = vmul.f32 %v5507, %v4428
      %v5527 = vmul.f32 %v5507, %v4434
      %v5528 = vmul.f32 %v5507, %v4440
      %v5529 = vmul.f32 %v5507, %v4446
      %v5530 = vmul.f32 %v5508, %v4428
      %v5531 = vmul.f32 %v5508, %v4434
      %v5532 = vmul.f32 %v5508, %v4440
      %v5533 = vmul.f32 %v5508, %v4446
      %v5534 = vmul.f32 %v5509, %v4428
      %v5535 = vmul.f32 %v5509, %v4434
      %v5536 = vmul.f32 %v5509, %v4440
      %v5537 = vmul.f32 %v5509, %v4446
      %v5538 = vmul.f32 %v5510, %v4428
      %v5539 = vmul.f32 %v5510, %v4434
      %v5540 = vmul.f32 %v5510, %v4440
      %v5541 = vmul.f32 %v5510, %v4446
      %v5542 = vmul.f32 %v5511, %v4428
      %v5543 = vmul.f32 %v5511, %v4434
      %v5544 = vmul.f32 %v5511, %v4440
      %v5545 = vmul.f32 %v5511, %v4446
      %v5546 = vmul.f32 %v5512, %v4428
      %v5547 = vmul.f32 %v5512, %v4434
      %v5548 = vmul.f32 %v5512, %v4440
      %v5549 = vmul.f32 %v5512, %v4446
      %v5550 = vmul.f32 %v5513, %v4428
      %v5551 = vmul.f32 %v5513, %v4434
      %v5552 = vmul.f32 %v5513, %v4440
      %v5553 = vmul.f32 %v5513, %v4446
      %v5554 = vadd.f32 %v5466, %v5522
      %v5555 = vadd.f32 %v5467, %v5523
      %v5556 = vadd.f32 %v5468, %v5524
      %v5557 = vadd.f32 %v5469, %v5525
      %v5558 = vadd.f32 %v5470, %v5526
      %v5559 = vadd.f32 %v5471, %v5527
      %v5560 = vadd.f32 %v5472, %v5528
      %v5561 = vadd.f32 %v5473, %v5529
      %v5562 = vadd.f32 %v5474, %v5530
      %v5563 = vadd.f32 %v5475, %v5531
      %v5564 = vadd.f32 %v5476, %v5532
      %v5565 = vadd.f32 %v5477, %v5533
      %v5566 = vadd.f32 %v5478, %v5534
      %v5567 = vadd.f32 %v5479, %v5535
      %v5568 = vadd.f32 %v5480, %v5536
      %v5569 = vadd.f32 %v5481, %v5537
      %v5570 = vadd.f32 %v5482, %v5538
      %v5571 = vadd.f32 %v5483, %v5539
      %v5572 = vadd.f32 %v5484, %v5540
      %v5573 = vadd.f32 %v5485, %v5541
      %v5574 = vadd.f32 %v5486, %v5542
      %v5575 = vadd.f32 %v5487, %v5543
      %v5576 = vadd.f32 %v5488, %v5544
      %v5577 = vadd.f32 %v5489, %v5545
      %v5578 = vadd.f32 %v5490, %v5546
      %v5579 = vadd.f32 %v5491, %v5547
      %v5580 = vadd.f32 %v5492, %v5548
      %v5581 = vadd.f32 %v5493, %v5549
      %v5582 = vadd.f32 %v5494, %v5550
      %v5583 = vadd.f32 %v5495, %v5551
      %v5584 = vadd.f32 %v5496, %v5552
      %v5585 = vadd.f32 %v5497, %v5553
      %v5587 = vrot.slane %v4587, 1
      %v5588 = vrot.slane %v4587, 2
      %v5589 = vrot.slane %v4587, 3
      %v5590 = vrot.slane %v4587, 4
      %v5591 = vrot.slane %v4587, 5
      %v5592 = vrot.slane %v4587, 6
      %v5593 = vrot.slane %v4587, 7
      %v5594 = vperm.slane %v4587, 0
      %v5595 = vperm.slane %v5587, 0
      %v5596 = vperm.slane %v5588, 0
      %v5597 = vperm.slane %v5589, 0
      %v5598 = vperm.slane %v5590, 0
      %v5599 = vperm.slane %v5591, 0
      %v5600 = vperm.slane %v5592, 0
      %v5601 = vperm.slane %v5593, 0
      %v5610 = vmul.f32 %v5594, %v4503
      %v5611 = vmul.f32 %v5594, %v4509
      %v5612 = vmul.f32 %v5594, %v4515
      %v5613 = vmul.f32 %v5594, %v4521
      %v5614 = vmul.f32 %v5595, %v4503
      %v5615 = vmul.f32 %v5595, %v4509
      %v5616 = vmul.f32 %v5595, %v4515
      %v5617 = vmul.f32 %v5595, %v4521
      %v5618 = vmul.f32 %v5596, %v4503
      %v5619 = vmul.f32 %v5596, %v4509
      %v5620 = vmul.f32 %v5596, %v4515
      %v5621 = vmul.f32 %v5596, %v4521
      %v5622 = vmul.f32 %v5597, %v4503
      %v5623 = vmul.f32 %v5597, %v4509
      %v5624 = vmul.f32 %v5597, %v4515
      %v5625 = vmul.f32 %v5597, %v4521
      %v5626 = vmul.f32 %v5598, %v4503
      %v5627 = vmul.f32 %v5598, %v4509
      %v5628 = vmul.f32 %v5598, %v4515
      %v5629 = vmul.f32 %v5598, %v4521
      %v5630 = vmul.f32 %v5599, %v4503
      %v5631 = vmul.f32 %v5599, %v4509
      %v5632 = vmul.f32 %v5599, %v4515
      %v5633 = vmul.f32 %v5599, %v4521
      %v5634 = vmul.f32 %v5600, %v4503
      %v5635 = vmul.f32 %v5600, %v4509
      %v5636 = vmul.f32 %v5600, %v4515
      %v5637 = vmul.f32 %v5600, %v4521
      %v5638 = vmul.f32 %v5601, %v4503
      %v5639 = vmul.f32 %v5601, %v4509
      %v5640 = vmul.f32 %v5601, %v4515
      %v5641 = vmul.f32 %v5601, %v4521
      %v5642 = vadd.f32 %v5554, %v5610
      %v5643 = vadd.f32 %v5555, %v5611
      %v5644 = vadd.f32 %v5556, %v5612
      %v5645 = vadd.f32 %v5557, %v5613
      %v5646 = vadd.f32 %v5558, %v5614
      %v5647 = vadd.f32 %v5559, %v5615
      %v5648 = vadd.f32 %v5560, %v5616
      %v5649 = vadd.f32 %v5561, %v5617
      %v5650 = vadd.f32 %v5562, %v5618
      %v5651 = vadd.f32 %v5563, %v5619
      %v5652 = vadd.f32 %v5564, %v5620
      %v5653 = vadd.f32 %v5565, %v5621
      %v5654 = vadd.f32 %v5566, %v5622
      %v5655 = vadd.f32 %v5567, %v5623
      %v5656 = vadd.f32 %v5568, %v5624
      %v5657 = vadd.f32 %v5569, %v5625
      %v5658 = vadd.f32 %v5570, %v5626
      %v5659 = vadd.f32 %v5571, %v5627
      %v5660 = vadd.f32 %v5572, %v5628
      %v5661 = vadd.f32 %v5573, %v5629
      %v5662 = vadd.f32 %v5574, %v5630
      %v5663 = vadd.f32 %v5575, %v5631
      %v5664 = vadd.f32 %v5576, %v5632
      %v5665 = vadd.f32 %v5577, %v5633
      %v5666 = vadd.f32 %v5578, %v5634
      %v5667 = vadd.f32 %v5579, %v5635
      %v5668 = vadd.f32 %v5580, %v5636
      %v5669 = vadd.f32 %v5581, %v5637
      %v5670 = vadd.f32 %v5582, %v5638
      %v5671 = vadd.f32 %v5583, %v5639
      %v5672 = vadd.f32 %v5584, %v5640
      %v5673 = vadd.f32 %v5585, %v5641
      %5674 = vrot.lane.b32.xlu0 %v4586, 127
      %v5675 = vpop.permute.xlu0 %5674
      %v5677 = vrot.slane %v5675, 1
      %v5678 = vrot.slane %v5675, 2
      %v5679 = vrot.slane %v5675, 3
      %v5680 = vrot.slane %v5675, 4
      %v5681 = vrot.slane %v5675, 5
      %v5682 = vrot.slane %v5675, 6
      %v5683 = vrot.slane %v5675, 7
      %v5684 = vperm.slane %v5675, 0
      %v5685 = vperm.slane %v5677, 0
      %v5686 = vperm.slane %v5678, 0
      %v5687 = vperm.slane %v5679, 0
      %v5688 = vperm.slane %v5680, 0
      %v5689 = vperm.slane %v5681, 0
      %v5690 = vperm.slane %v5682, 0
      %v5691 = vperm.slane %v5683, 0
      %v5700 = vmul.f32 %v5684, %v4453
      %v5701 = vmul.f32 %v5684, %v4459
      %v5702 = vmul.f32 %v5684, %v4465
      %v5703 = vmul.f32 %v5684, %v4471
      %v5704 = vmul.f32 %v5685, %v4453
      %v5705 = vmul.f32 %v5685, %v4459
      %v5706 = vmul.f32 %v5685, %v4465
      %v5707 = vmul.f32 %v5685, %v4471
      %v5708 = vmul.f32 %v5686, %v4453
      %v5709 = vmul.f32 %v5686, %v4459
      %v5710 = vmul.f32 %v5686, %v4465
      %v5711 = vmul.f32 %v5686, %v4471
      %v5712 = vmul.f32 %v5687, %v4453
      %v5713 = vmul.f32 %v5687, %v4459
      %v5714 = vmul.f32 %v5687, %v4465
      %v5715 = vmul.f32 %v5687, %v4471
      %v5716 = vmul.f32 %v5688, %v4453
      %v5717 = vmul.f32 %v5688, %v4459
      %v5718 = vmul.f32 %v5688, %v4465
      %v5719 = vmul.f32 %v5688, %v4471
      %v5720 = vmul.f32 %v5689, %v4453
      %v5721 = vmul.f32 %v5689, %v4459
      %v5722 = vmul.f32 %v5689, %v4465
      %v5723 = vmul.f32 %v5689, %v4471
      %v5724 = vmul.f32 %v5690, %v4453
      %v5725 = vmul.f32 %v5690, %v4459
      %v5726 = vmul.f32 %v5690, %v4465
      %v5727 = vmul.f32 %v5690, %v4471
      %v5728 = vmul.f32 %v5691, %v4453
      %v5729 = vmul.f32 %v5691, %v4459
      %v5730 = vmul.f32 %v5691, %v4465
      %v5731 = vmul.f32 %v5691, %v4471
      %v5732 = vadd.f32 %v5642, %v5700
      %v5733 = vadd.f32 %v5643, %v5701
      %v5734 = vadd.f32 %v5644, %v5702
      %v5735 = vadd.f32 %v5645, %v5703
      %v5736 = vadd.f32 %v5646, %v5704
      %v5737 = vadd.f32 %v5647, %v5705
      %v5738 = vadd.f32 %v5648, %v5706
      %v5739 = vadd.f32 %v5649, %v5707
      %v5740 = vadd.f32 %v5650, %v5708
      %v5741 = vadd.f32 %v5651, %v5709
      %v5742 = vadd.f32 %v5652, %v5710
      %v5743 = vadd.f32 %v5653, %v5711
      %v5744 = vadd.f32 %v5654, %v5712
      %v5745 = vadd.f32 %v5655, %v5713
      %v5746 = vadd.f32 %v5656, %v5714
      %v5747 = vadd.f32 %v5657, %v5715
      %v5748 = vadd.f32 %v5658, %v5716
      %v5749 = vadd.f32 %v5659, %v5717
      %v5750 = vadd.f32 %v5660, %v5718
      %v5751 = vadd.f32 %v5661, %v5719
      %v5752 = vadd.f32 %v5662, %v5720
      %v5753 = vadd.f32 %v5663, %v5721
      %v5754 = vadd.f32 %v5664, %v5722
      %v5755 = vadd.f32 %v5665, %v5723
      %v5756 = vadd.f32 %v5666, %v5724
      %v5757 = vadd.f32 %v5667, %v5725
      %v5758 = vadd.f32 %v5668, %v5726
      %v5759 = vadd.f32 %v5669, %v5727
      %v5760 = vadd.f32 %v5670, %v5728
      %v5761 = vadd.f32 %v5671, %v5729
      %v5762 = vadd.f32 %v5672, %v5730
      %v5763 = vadd.f32 %v5673, %v5731
      %5764 = vrot.lane.b32.xlu0 %v4587, 127
      %v5765 = vpop.permute.xlu0 %5764
      %v5767 = vrot.slane %v5765, 1
      %v5768 = vrot.slane %v5765, 2
      %v5769 = vrot.slane %v5765, 3
      %v5770 = vrot.slane %v5765, 4
      %v5771 = vrot.slane %v5765, 5
      %v5772 = vrot.slane %v5765, 6
      %v5773 = vrot.slane %v5765, 7
      %v5774 = vperm.slane %v5765, 0
      %v5775 = vperm.slane %v5767, 0
      %v5776 = vperm.slane %v5768, 0
      %v5777 = vperm.slane %v5769, 0
      %v5778 = vperm.slane %v5770, 0
      %v5779 = vperm.slane %v5771, 0
      %v5780 = vperm.slane %v5772, 0
      %v5781 = vperm.slane %v5773, 0
      %v5790 = vmul.f32 %v5774, %v4528
      %v5791 = vmul.f32 %v5774, %v4534
      %v5792 = vmul.f32 %v5774, %v4540
      %v5793 = vmul.f32 %v5774, %v4546
      %v5794 = vmul.f32 %v5775, %v4528
      %v5795 = vmul.f32 %v5775, %v4534
      %v5796 = vmul.f32 %v5775, %v4540
      %v5797 = vmul.f32 %v5775, %v4546
      %v5798 = vmul.f32 %v5776, %v4528
      %v5799 = vmul.f32 %v5776, %v4534
      %v5800 = vmul.f32 %v5776, %v4540
      %v5801 = vmul.f32 %v5776, %v4546
      %v5802 = vmul.f32 %v5777, %v4528
      %v5803 = vmul.f32 %v5777, %v4534
      %v5804 = vmul.f32 %v5777, %v4540
      %v5805 = vmul.f32 %v5777, %v4546
      %v5806 = vmul.f32 %v5778, %v4528
      %v5807 = vmul.f32 %v5778, %v4534
      %v5808 = vmul.f32 %v5778, %v4540
      %v5809 = vmul.f32 %v5778, %v4546
      %v5810 = vmul.f32 %v5779, %v4528
      %v5811 = vmul.f32 %v5779, %v4534
      %v5812 = vmul.f32 %v5779, %v4540
      %v5813 = vmul.f32 %v5779, %v4546
      %v5814 = vmul.f32 %v5780, %v4528
      %v5815 = vmul.f32 %v5780, %v4534
      %v5816 = vmul.f32 %v5780, %v4540
      %v5817 = vmul.f32 %v5780, %v4546
      %v5818 = vmul.f32 %v5781, %v4528
      %v5819 = vmul.f32 %v5781, %v4534
      %v5820 = vmul.f32 %v5781, %v4540
      %v5821 = vmul.f32 %v5781, %v4546
      %v5822 = vadd.f32 %v5732, %v5790
      %v5823 = vadd.f32 %v5733, %v5791
      %v5824 = vadd.f32 %v5734, %v5792
      %v5825 = vadd.f32 %v5735, %v5793
      %v5826 = vadd.f32 %v5736, %v5794
      %v5827 = vadd.f32 %v5737, %v5795
      %v5828 = vadd.f32 %v5738, %v5796
      %v5829 = vadd.f32 %v5739, %v5797
      %v5830 = vadd.f32 %v5740, %v5798
      %v5831 = vadd.f32 %v5741, %v5799
      %v5832 = vadd.f32 %v5742, %v5800
      %v5833 = vadd.f32 %v5743, %v5801
      %v5834 = vadd.f32 %v5744, %v5802
      %v5835 = vadd.f32 %v5745, %v5803
      %v5836 = vadd.f32 %v5746, %v5804
      %v5837 = vadd.f32 %v5747, %v5805
      %v5838 = vadd.f32 %v5748, %v5806
      %v5839 = vadd.f32 %v5749, %v5807
      %v5840 = vadd.f32 %v5750, %v5808
      %v5841 = vadd.f32 %v5751, %v5809
      %v5842 = vadd.f32 %v5752, %v5810
      %v5843 = vadd.f32 %v5753, %v5811
      %v5844 = vadd.f32 %v5754, %v5812
      %v5845 = vadd.f32 %v5755, %v5813
      %v5846 = vadd.f32 %v5756, %v5814
      %v5847 = vadd.f32 %v5757, %v5815
      %v5848 = vadd.f32 %v5758, %v5816
      %v5849 = vadd.f32 %v5759, %v5817
      %v5850 = vadd.f32 %v5760, %v5818
      %v5851 = vadd.f32 %v5761, %v5819
      %v5852 = vadd.f32 %v5762, %v5820
      %v5853 = vadd.f32 %v5763, %v5821
      %v5854 = vtanh.pop %v5822
      %v5855 = vtanh.pop %v5823
      %v5856 = vtanh.pop %v5824
      %v5857 = vtanh.pop %v5825
      %v5858 = vtanh.pop %v5826
      %v5859 = vtanh.pop %v5827
      %v5860 = vtanh.pop %v5828
      %v5861 = vtanh.pop %v5829
      %v5862 = vtanh.pop %v5830
      %v5863 = vtanh.pop %v5831
      %v5864 = vtanh.pop %v5832
      %v5865 = vtanh.pop %v5833
      %v5866 = vtanh.pop %v5834
      %v5867 = vtanh.pop %v5835
      %v5868 = vtanh.pop %v5836
      %v5869 = vtanh.pop %v5837
      %v5870 = vtanh.pop %v5838
      %v5871 = vtanh.pop %v5839
      %v5872 = vtanh.pop %v5840
      %v5873 = vtanh.pop %v5841
      %v5874 = vtanh.pop %v5842
      %v5875 = vtanh.pop %v5843
      %v5876 = vtanh.pop %v5844
      %v5877 = vtanh.pop %v5845
      %v5878 = vtanh.pop %v5846
      %v5879 = vtanh.pop %v5847
      %v5880 = vtanh.pop %v5848
      %v5881 = vtanh.pop %v5849
      %v5882 = vtanh.pop %v5850
      %v5883 = vtanh.pop %v5851
      %v5884 = vtanh.pop %v5852
      %v5885 = vtanh.pop %v5853
      %v5886 = vmul.f32 %v5854, %v4377
      %v5887 = vmul.f32 %v5855, %v4383
      %v5888 = vmul.f32 %v5856, %v4389
      %v5889 = vmul.f32 %v5857, %v4395
      %v5890 = vmul.f32 %v5858, %v4377
      %v5891 = vmul.f32 %v5859, %v4383
      %v5892 = vmul.f32 %v5860, %v4389
      %v5893 = vmul.f32 %v5861, %v4395
      %v5894 = vmul.f32 %v5862, %v4377
      %v5895 = vmul.f32 %v5863, %v4383
      %v5896 = vmul.f32 %v5864, %v4389
      %v5897 = vmul.f32 %v5865, %v4395
      %v5898 = vmul.f32 %v5866, %v4377
      %v5899 = vmul.f32 %v5867, %v4383
      %v5900 = vmul.f32 %v5868, %v4389
      %v5901 = vmul.f32 %v5869, %v4395
      %v5902 = vmul.f32 %v5870, %v4377
      %v5903 = vmul.f32 %v5871, %v4383
      %v5904 = vmul.f32 %v5872, %v4389
      %v5905 = vmul.f32 %v5873, %v4395
      %v5906 = vmul.f32 %v5874, %v4377
      %v5907 = vmul.f32 %v5875, %v4383
      %v5908 = vmul.f32 %v5876, %v4389
      %v5909 = vmul.f32 %v5877, %v4395
      %v5910 = vmul.f32 %v5878, %v4377
      %v5911 = vmul.f32 %v5879, %v4383
      %v5912 = vmul.f32 %v5880, %v4389
      %v5913 = vmul.f32 %v5881, %v4395
      %v5914 = vmul.f32 %v5882, %v4377
      %v5915 = vmul.f32 %v5883, %v4383
      %v5916 = vmul.f32 %v5884, %v4389
      %v5917 = vmul.f32 %v5885, %v4395
      %v5918 = vadd.f32 %v5886, %v5887
      %v5919 = vadd.f32 %v5918, %v5888
      %v5920 = vadd.f32 %v5919, %v5889
      %v5921 = vrot.slane %v5920, 4
      %v5922 = vadd.f32 %v5920, %v5921
      %v5923 = vrot.slane %v5922, 2
      %v5924 = vadd.f32 %v5922, %v5923
      %v5925 = vrot.slane %v5924, 1
      %v5926 = vadd.f32 %v5924, %v5925
      %v5927 = vadd.f32 %v5890, %v5891
      %v5928 = vadd.f32 %v5927, %v5892
      %v5929 = vadd.f32 %v5928, %v5893
      %v5930 = vrot.slane %v5929, 4
      %v5931 = vadd.f32 %v5929, %v5930
      %v5932 = vrot.slane %v5931, 2
      %v5933 = vadd.f32 %v5931, %v5932
      %v5934 = vrot.slane %v5933, 1
      %v5935 = vadd.f32 %v5933, %v5934
      %v5936 = vadd.f32 %v5894, %v5895
      %v5937 = vadd.f32 %v5936, %v5896
      %v5938 = vadd.f32 %v5937, %v5897
      %v5939 = vrot.slane %v5938, 4
      %v5940 = vadd.f32 %v5938, %v5939
      %v5941 = vrot.slane %v5940, 2
      %v5942 = vadd.f32 %v5940, %v5941
      %v5943 = vrot.slane %v5942, 1
      %v5944 = vadd.f32 %v5942, %v5943
      %v5945 = vadd.f32 %v5898, %v5899
      %v5946 = vadd.f32 %v5945, %v5900
      %v5947 = vadd.f32 %v5946, %v5901
      %v5948 = vrot.slane %v5947, 4
      %v5949 = vadd.f32 %v5947, %v5948
      %v5950 = vrot.slane %v5949, 2
      %v5951 = vadd.f32 %v5949, %v5950
      %v5952 = vrot.slane %v5951, 1
      %v5953 = vadd.f32 %v5951, %v5952
      %v5954 = vadd.f32 %v5902, %v5903
      %v5955 = vadd.f32 %v5954, %v5904
      %v5956 = vadd.f32 %v5955, %v5905
      %v5957 = vrot.slane %v5956, 4
      %v5958 = vadd.f32 %v5956, %v5957
      %v5959 = vrot.slane %v5958, 2
      %v5960 = vadd.f32 %v5958, %v5959
      %v5961 = vrot.slane %v5960, 1
      %v5962 = vadd.f32 %v5960, %v5961
      %v5963 = vadd.f32 %v5906, %v5907
      %v5964 = vadd.f32 %v5963, %v5908
      %v5965 = vadd.f32 %v5964, %v5909
      %v5966 = vrot.slane %v5965, 4
      %v5967 = vadd.f32 %v5965, %v5966
      %v5968 = vrot.slane %v5967, 2
      %v5969 = vadd.f32 %v5967, %v5968
      %v5970 = vrot.slane %v5969, 1
      %v5971 = vadd.f32 %v5969, %v5970
      %v5972 = vadd.f32 %v5910, %v5911
      %v5973 = vadd.f32 %v5972, %v5912
      %v5974 = vadd.f32 %v5973, %v5913
      %v5975 = vrot.slane %v5974, 4
      %v5976 = vadd.f32 %v5974, %v5975
      %v5977 = vrot.slane %v5976, 2
      %v5978 = vadd.f32 %v5976, %v5977
      %v5979 = vrot.slane %v5978, 1
      %v5980 = vadd.f32 %v5978, %v5979
      %v5981 = vadd.f32 %v5914, %v5915
      %v5982 = vadd.f32 %v5981, %v5916
      %v5983 = vadd.f32 %v5982, %v5917
      %v5984 = vrot.slane %v5983, 4
      %v5985 = vadd.f32 %v5983, %v5984
      %v5986 = vrot.slane %v5985, 2
      %v5987 = vadd.f32 %v5985, %v5986
      %v5988 = vrot.slane %v5987, 1
      %v5989 = vadd.f32 %v5987, %v5988
      %v5990 = vstv %s4396
      %v5991 = vadd.f32 %v5926, %v5990
      %v5992 = vadd.f32 %v5935, %v5990
      %v5993 = vadd.f32 %v5944, %v5990
      %v5994 = vadd.f32 %v5953, %v5990
      %v5995 = vadd.f32 %v5962, %v5990
      %v5996 = vadd.f32 %v5971, %v5990
      %v5997 = vadd.f32 %v5980, %v5990
      %v5998 = vadd.f32 %v5989, %v5990
      %v5999 = vstv %s4580
      %vm6000 = vcmp.le.s32.totalorder %v4369, %v5999
      %vm6001 = vmand %vm4370, %vm6000
      %v6010 = vsel %vm4556, %v5992, %v5991
      %v6011 = vsel %vm4559, %v5993, %v6010
      %v6012 = vsel %vm4562, %v5994, %v6011
      %v6013 = vsel %vm4565, %v5995, %v6012
      %v6014 = vsel %vm4568, %v5996, %v6013
      %v6015 = vsel %vm4571, %v5997, %v6014
      %v6016 = vsel %vm4574, %v5998, %v6015
      %v6018 = vsel %vm6001, %v6016, -1e+30
      %6019 = vmax.xlane.f32.xlu0 %v6018
      %v6020 = vpop.xlane.xlu0 %6019
      %v6022 = vrot.slane %v6020, 1
      %v6023 = vrot.slane %v6020, 2
      %v6024 = vrot.slane %v6020, 3
      %v6025 = vrot.slane %v6020, 4
      %v6026 = vrot.slane %v6020, 5
      %v6027 = vrot.slane %v6020, 6
      %v6028 = vrot.slane %v6020, 7
      %v6037 = vsub.f32 %v5991, %v6020
      %v6038 = vsub.f32 %v5992, %v6022
      %v6039 = vsub.f32 %v5993, %v6023
      %v6040 = vsub.f32 %v5994, %v6024
      %v6041 = vsub.f32 %v5995, %v6025
      %v6042 = vsub.f32 %v5996, %v6026
      %v6043 = vsub.f32 %v5997, %v6027
      %v6044 = vsub.f32 %v5998, %v6028
      %v6045 = vmul.f32 %v6037, 1.442695
      %v6046 = vpow.pop %v6045
      %v6047 = vmul.f32 %v6038, 1.442695
      %v6048 = vpow.pop %v6047
      %v6049 = vmul.f32 %v6039, 1.442695
      %v6050 = vpow.pop %v6049
      %v6051 = vmul.f32 %v6040, 1.442695
      %v6052 = vpow.pop %v6051
      %v6053 = vmul.f32 %v6041, 1.442695
      %v6054 = vpow.pop %v6053
      %v6055 = vmul.f32 %v6042, 1.442695
      %v6056 = vpow.pop %v6055
      %v6057 = vmul.f32 %v6043, 1.442695
      %v6058 = vpow.pop %v6057
      %v6059 = vmul.f32 %v6044, 1.442695
      %v6060 = vpow.pop %v6059
      %v6069 = vrot.slane %v6048, 7
      %v6070 = vsel %vm4556, %v6069, %v6046
      %v6071 = vrot.slane %v6050, 6
      %v6072 = vsel %vm4559, %v6071, %v6070
      %v6073 = vrot.slane %v6052, 5
      %v6074 = vsel %vm4562, %v6073, %v6072
      %v6075 = vrot.slane %v6054, 4
      %v6076 = vsel %vm4565, %v6075, %v6074
      %v6077 = vrot.slane %v6056, 3
      %v6078 = vsel %vm4568, %v6077, %v6076
      %v6079 = vrot.slane %v6058, 2
      %v6080 = vsel %vm4571, %v6079, %v6078
      %v6081 = vrot.slane %v6060, 1
      %v6082 = vsel %vm4574, %v6081, %v6080
      %v6084 = vsel %vm6001, %v6082, 0.0
      %6085 = vadd.xlane.f32.xlu0 %v6084
      %v6086 = vpop.xlane.xlu0 %6085
      %v6087 = vrcp.pop %v6086
      %v6088 = vmul.f32 %v6086, %v6087
      %v6089 = vsub.f32 1.0, %v6088
      %v6090 = vmul.f32 %v6087, %v6089
      %v6091 = vadd.f32 %v6087, %v6090
      %vm6092 = vweird.f32 %v6086
      %vm6093 = vweird.f32 %v6087
      %vm6094 = vmor %vm6092, %vm6093
      %v6095 = vsel %vm6094, %v6087, %v6091
      %v6096 = vand.u32 2147483647, %v6086
      %vm6097 = vcmp.eq.f32.partialorder %v6096, 8.507059e+37
      %v6098 = vand.u32 %v6086, 2147483648
      %v6099 = vor.u32 1.1754944e-38, %v6098
      %v6100 = vsel %vm6097, %v6099, %v6095
      %v6101 = vmul.f32 %v6084, %v6100
      %v6102 = vadd.f32 %v4587, %v6101
      %v6103 = vsel %vm6000, %v6016, -1e+30
      %6104 = vmax.xlane.f32.xlu0 %v6103
      %v6105 = vpop.xlane.xlu0 %6104
      %vm6106 = vcmp.ge.f32.partialorder %v6103, %v6105
      %v6107 = vsel %vm6106, %v4369, 128
      %v6108 = vand.u32 %v6107, 65535
      %v6109 = vshra.s32 %v6107, 16
      %v6110 = vcvt.s32.f32 %v6108
      %v6111 = vcvt.s32.f32 %v6109
      %6112 = vmin.xlane.f32.xlu0 %v6111
      %v6113 = vpop.xlane.xlu0 %6112
      %vm6114 = vcmp.eq.f32.partialorder %v6111, %v6113
      %v6115 = vsel %vm6114, %v6110, inf
      %6116 = vmin.xlane.f32.xlu0 %v6115
      %v6117 = vpop.xlane.xlu0 %6116
      %v6118 = vcvt.f32.s32 %v6117
      %v6119 = vcvt.f32.s32 %v6113
      %v6120 = vshll.u32 %v6119, 16
      %v6121 = vadd.s32 %v6120, %v6118
      %vm6122 = vcmp.eq.s32.totalorder %v4369, %v6121
      %v6123 = vsel %vm6122, 1, 0
      %v6124 = vcvt.s32.f32 %v6123
      %v6125 = vperm.slane %v6124, 0
      %v6126 = vlaneseq
      %v6127 = vshrl.u32 %v6126, 7
      %6129 = vset.pattern.permute.xlu0 %v6127
      %6130 = vperm.xlu0 %6129, %v6125
      %v6131 = vpop.permute.xlu0 %6130
      %v6132 = vlaneseq
      %v6133 = vshrl.u32 %v6132, 7
      %v6134 = vadd.s32 %v6133, 8
      %6135 = vset.pattern.permute.xlu0 %v6134
      %6136 = vperm.xlu0 %6135, %v6125
      %v6137 = vpop.permute.xlu0 %6136
      %v6138 = vlaneseq
      %v6139 = vshrl.u32 %v6138, 7
      %v6140 = vadd.s32 %v6139, 16
      %6141 = vset.pattern.permute.xlu0 %v6140
      %6142 = vperm.xlu0 %6141, %v6125
      %v6143 = vpop.permute.xlu0 %6142
      %v6144 = vlaneseq
      %v6145 = vshrl.u32 %v6144, 7
      %v6146 = vadd.s32 %v6145, 24
      %6147 = vset.pattern.permute.xlu0 %v6146
      %6148 = vperm.xlu0 %6147, %v6125
      %v6149 = vpop.permute.xlu0 %6148
      %v6150 = vlaneseq
      %v6151 = vshrl.u32 %v6150, 7
      %v6152 = vadd.s32 %v6151, 32
      %6153 = vset.pattern.permute.xlu0 %v6152
      %6154 = vperm.xlu0 %6153, %v6125
      %v6155 = vpop.permute.xlu0 %6154
      %v6156 = vlaneseq
      %v6157 = vshrl.u32 %v6156, 7
      %v6158 = vadd.s32 %v6157, 40
      %6159 = vset.pattern.permute.xlu0 %v6158
      %6160 = vperm.xlu0 %6159, %v6125
      %v6161 = vpop.permute.xlu0 %6160
      %v6162 = vlaneseq
      %v6163 = vshrl.u32 %v6162, 7
      %v6164 = vadd.s32 %v6163, 48
      %6165 = vset.pattern.permute.xlu0 %v6164
      %6166 = vperm.xlu0 %6165, %v6125
      %v6167 = vpop.permute.xlu0 %6166
      %v6168 = vlaneseq
      %v6169 = vshrl.u32 %v6168, 7
      %v6170 = vadd.s32 %v6169, 56
      %6171 = vset.pattern.permute.xlu0 %v6170
      %6172 = vperm.xlu0 %6171, %v6125
      %v6173 = vpop.permute.xlu0 %6172
      %v6174 = vlaneseq
      %v6175 = vshrl.u32 %v6174, 7
      %v6176 = vadd.s32 %v6175, 64
      %6177 = vset.pattern.permute.xlu0 %v6176
      %6178 = vperm.xlu0 %6177, %v6125
      %v6179 = vpop.permute.xlu0 %6178
      %v6180 = vlaneseq
      %v6181 = vshrl.u32 %v6180, 7
      %v6182 = vadd.s32 %v6181, 72
      %6183 = vset.pattern.permute.xlu0 %v6182
      %6184 = vperm.xlu0 %6183, %v6125
      %v6185 = vpop.permute.xlu0 %6184
      %v6186 = vlaneseq
      %v6187 = vshrl.u32 %v6186, 7
      %v6188 = vadd.s32 %v6187, 80
      %6189 = vset.pattern.permute.xlu0 %v6188
      %6190 = vperm.xlu0 %6189, %v6125
      %v6191 = vpop.permute.xlu0 %6190
      %v6192 = vlaneseq
      %v6193 = vshrl.u32 %v6192, 7
      %v6194 = vadd.s32 %v6193, 88
      %6195 = vset.pattern.permute.xlu0 %v6194
      %6196 = vperm.xlu0 %6195, %v6125
      %v6197 = vpop.permute.xlu0 %6196
      %v6198 = vlaneseq
      %v6199 = vshrl.u32 %v6198, 7
      %v6200 = vadd.s32 %v6199, 96
      %6201 = vset.pattern.permute.xlu0 %v6200
      %6202 = vperm.xlu0 %6201, %v6125
      %v6203 = vpop.permute.xlu0 %6202
      %v6204 = vlaneseq
      %v6205 = vshrl.u32 %v6204, 7
      %v6206 = vadd.s32 %v6205, 104
      %6207 = vset.pattern.permute.xlu0 %v6206
      %6208 = vperm.xlu0 %6207, %v6125
      %v6209 = vpop.permute.xlu0 %6208
      %v6210 = vlaneseq
      %v6211 = vshrl.u32 %v6210, 7
      %v6212 = vadd.s32 %v6211, 112
      %6213 = vset.pattern.permute.xlu0 %v6212
      %6214 = vperm.xlu0 %6213, %v6125
      %v6215 = vpop.permute.xlu0 %6214
      %v6216 = vlaneseq
      %v6217 = vshrl.u32 %v6216, 7
      %v6218 = vadd.s32 %v6217, 120
      %6219 = vset.pattern.permute.xlu0 %v6218
      %6220 = vperm.xlu0 %6219, %v6125
      %v6221 = vpop.permute.xlu0 %6220
      %v6222 = vperm.slane %v6124, 1
      %v6223 = vlaneseq
      %v6224 = vshrl.u32 %v6223, 7
      %6226 = vset.pattern.permute.xlu0 %v6224
      %6227 = vperm.xlu0 %6226, %v6222
      %v6228 = vpop.permute.xlu0 %6227
      %v6229 = vlaneseq
      %v6230 = vshrl.u32 %v6229, 7
      %v6231 = vadd.s32 %v6230, 8
      %6232 = vset.pattern.permute.xlu0 %v6231
      %6233 = vperm.xlu0 %6232, %v6222
      %v6234 = vpop.permute.xlu0 %6233
      %v6235 = vlaneseq
      %v6236 = vshrl.u32 %v6235, 7
      %v6237 = vadd.s32 %v6236, 16
      %6238 = vset.pattern.permute.xlu0 %v6237
      %6239 = vperm.xlu0 %6238, %v6222
      %v6240 = vpop.permute.xlu0 %6239
      %v6241 = vlaneseq
      %v6242 = vshrl.u32 %v6241, 7
      %v6243 = vadd.s32 %v6242, 24
      %6244 = vset.pattern.permute.xlu0 %v6243
      %6245 = vperm.xlu0 %6244, %v6222
      %v6246 = vpop.permute.xlu0 %6245
      %v6247 = vlaneseq
      %v6248 = vshrl.u32 %v6247, 7
      %v6249 = vadd.s32 %v6248, 32
      %6250 = vset.pattern.permute.xlu0 %v6249
      %6251 = vperm.xlu0 %6250, %v6222
      %v6252 = vpop.permute.xlu0 %6251
      %v6253 = vlaneseq
      %v6254 = vshrl.u32 %v6253, 7
      %v6255 = vadd.s32 %v6254, 40
      %6256 = vset.pattern.permute.xlu0 %v6255
      %6257 = vperm.xlu0 %6256, %v6222
      %v6258 = vpop.permute.xlu0 %6257
      %v6259 = vlaneseq
      %v6260 = vshrl.u32 %v6259, 7
      %v6261 = vadd.s32 %v6260, 48
      %6262 = vset.pattern.permute.xlu0 %v6261
      %6263 = vperm.xlu0 %6262, %v6222
      %v6264 = vpop.permute.xlu0 %6263
      %v6265 = vlaneseq
      %v6266 = vshrl.u32 %v6265, 7
      %v6267 = vadd.s32 %v6266, 56
      %6268 = vset.pattern.permute.xlu0 %v6267
      %6269 = vperm.xlu0 %6268, %v6222
      %v6270 = vpop.permute.xlu0 %6269
      %v6271 = vlaneseq
      %v6272 = vshrl.u32 %v6271, 7
      %v6273 = vadd.s32 %v6272, 64
      %6274 = vset.pattern.permute.xlu0 %v6273
      %6275 = vperm.xlu0 %6274, %v6222
      %v6276 = vpop.permute.xlu0 %6275
      %v6277 = vlaneseq
      %v6278 = vshrl.u32 %v6277, 7
      %v6279 = vadd.s32 %v6278, 72
      %6280 = vset.pattern.permute.xlu0 %v6279
      %6281 = vperm.xlu0 %6280, %v6222
      %v6282 = vpop.permute.xlu0 %6281
      %v6283 = vlaneseq
      %v6284 = vshrl.u32 %v6283, 7
      %v6285 = vadd.s32 %v6284, 80
      %6286 = vset.pattern.permute.xlu0 %v6285
      %6287 = vperm.xlu0 %6286, %v6222
      %v6288 = vpop.permute.xlu0 %6287
      %v6289 = vlaneseq
      %v6290 = vshrl.u32 %v6289, 7
      %v6291 = vadd.s32 %v6290, 88
      %6292 = vset.pattern.permute.xlu0 %v6291
      %6293 = vperm.xlu0 %6292, %v6222
      %v6294 = vpop.permute.xlu0 %6293
      %v6295 = vlaneseq
      %v6296 = vshrl.u32 %v6295, 7
      %v6297 = vadd.s32 %v6296, 96
      %6298 = vset.pattern.permute.xlu0 %v6297
      %6299 = vperm.xlu0 %6298, %v6222
      %v6300 = vpop.permute.xlu0 %6299
      %v6301 = vlaneseq
      %v6302 = vshrl.u32 %v6301, 7
      %v6303 = vadd.s32 %v6302, 104
      %6304 = vset.pattern.permute.xlu0 %v6303
      %6305 = vperm.xlu0 %6304, %v6222
      %v6306 = vpop.permute.xlu0 %6305
      %v6307 = vlaneseq
      %v6308 = vshrl.u32 %v6307, 7
      %v6309 = vadd.s32 %v6308, 112
      %6310 = vset.pattern.permute.xlu0 %v6309
      %6311 = vperm.xlu0 %6310, %v6222
      %v6312 = vpop.permute.xlu0 %6311
      %v6313 = vlaneseq
      %v6314 = vshrl.u32 %v6313, 7
      %v6315 = vadd.s32 %v6314, 120
      %6316 = vset.pattern.permute.xlu0 %v6315
      %6317 = vperm.xlu0 %6316, %v6222
      %v6318 = vpop.permute.xlu0 %6317
      %v6319 = vperm.slane %v6124, 2
      %v6320 = vlaneseq
      %v6321 = vshrl.u32 %v6320, 7
      %6323 = vset.pattern.permute.xlu0 %v6321
      %6324 = vperm.xlu0 %6323, %v6319
      %v6325 = vpop.permute.xlu0 %6324
      %v6326 = vlaneseq
      %v6327 = vshrl.u32 %v6326, 7
      %v6328 = vadd.s32 %v6327, 8
      %6329 = vset.pattern.permute.xlu0 %v6328
      %6330 = vperm.xlu0 %6329, %v6319
      %v6331 = vpop.permute.xlu0 %6330
      %v6332 = vlaneseq
      %v6333 = vshrl.u32 %v6332, 7
      %v6334 = vadd.s32 %v6333, 16
      %6335 = vset.pattern.permute.xlu0 %v6334
      %6336 = vperm.xlu0 %6335, %v6319
      %v6337 = vpop.permute.xlu0 %6336
      %v6338 = vlaneseq
      %v6339 = vshrl.u32 %v6338, 7
      %v6340 = vadd.s32 %v6339, 24
      %6341 = vset.pattern.permute.xlu0 %v6340
      %6342 = vperm.xlu0 %6341, %v6319
      %v6343 = vpop.permute.xlu0 %6342
      %v6344 = vlaneseq
      %v6345 = vshrl.u32 %v6344, 7
      %v6346 = vadd.s32 %v6345, 32
      %6347 = vset.pattern.permute.xlu0 %v6346
      %6348 = vperm.xlu0 %6347, %v6319
      %v6349 = vpop.permute.xlu0 %6348
      %v6350 = vlaneseq
      %v6351 = vshrl.u32 %v6350, 7
      %v6352 = vadd.s32 %v6351, 40
      %6353 = vset.pattern.permute.xlu0 %v6352
      %6354 = vperm.xlu0 %6353, %v6319
      %v6355 = vpop.permute.xlu0 %6354
      %v6356 = vlaneseq
      %v6357 = vshrl.u32 %v6356, 7
      %v6358 = vadd.s32 %v6357, 48
      %6359 = vset.pattern.permute.xlu0 %v6358
      %6360 = vperm.xlu0 %6359, %v6319
      %v6361 = vpop.permute.xlu0 %6360
      %v6362 = vlaneseq
      %v6363 = vshrl.u32 %v6362, 7
      %v6364 = vadd.s32 %v6363, 56
      %6365 = vset.pattern.permute.xlu0 %v6364
      %6366 = vperm.xlu0 %6365, %v6319
      %v6367 = vpop.permute.xlu0 %6366
      %v6368 = vlaneseq
      %v6369 = vshrl.u32 %v6368, 7
      %v6370 = vadd.s32 %v6369, 64
      %6371 = vset.pattern.permute.xlu0 %v6370
      %6372 = vperm.xlu0 %6371, %v6319
      %v6373 = vpop.permute.xlu0 %6372
      %v6374 = vlaneseq
      %v6375 = vshrl.u32 %v6374, 7
      %v6376 = vadd.s32 %v6375, 72
      %6377 = vset.pattern.permute.xlu0 %v6376
      %6378 = vperm.xlu0 %6377, %v6319
      %v6379 = vpop.permute.xlu0 %6378
      %v6380 = vlaneseq
      %v6381 = vshrl.u32 %v6380, 7
      %v6382 = vadd.s32 %v6381, 80
      %6383 = vset.pattern.permute.xlu0 %v6382
      %6384 = vperm.xlu0 %6383, %v6319
      %v6385 = vpop.permute.xlu0 %6384
      %v6386 = vlaneseq
      %v6387 = vshrl.u32 %v6386, 7
      %v6388 = vadd.s32 %v6387, 88
      %6389 = vset.pattern.permute.xlu0 %v6388
      %6390 = vperm.xlu0 %6389, %v6319
      %v6391 = vpop.permute.xlu0 %6390
      %v6392 = vlaneseq
      %v6393 = vshrl.u32 %v6392, 7
      %v6394 = vadd.s32 %v6393, 96
      %6395 = vset.pattern.permute.xlu0 %v6394
      %6396 = vperm.xlu0 %6395, %v6319
      %v6397 = vpop.permute.xlu0 %6396
      %v6398 = vlaneseq
      %v6399 = vshrl.u32 %v6398, 7
      %v6400 = vadd.s32 %v6399, 104
      %6401 = vset.pattern.permute.xlu0 %v6400
      %6402 = vperm.xlu0 %6401, %v6319
      %v6403 = vpop.permute.xlu0 %6402
      %v6404 = vlaneseq
      %v6405 = vshrl.u32 %v6404, 7
      %v6406 = vadd.s32 %v6405, 112
      %6407 = vset.pattern.permute.xlu0 %v6406
      %6408 = vperm.xlu0 %6407, %v6319
      %v6409 = vpop.permute.xlu0 %6408
      %v6410 = vlaneseq
      %v6411 = vshrl.u32 %v6410, 7
      %v6412 = vadd.s32 %v6411, 120
      %6413 = vset.pattern.permute.xlu0 %v6412
      %6414 = vperm.xlu0 %6413, %v6319
      %v6415 = vpop.permute.xlu0 %6414
      %v6416 = vperm.slane %v6124, 3
      %v6417 = vlaneseq
      %v6418 = vshrl.u32 %v6417, 7
      %6420 = vset.pattern.permute.xlu0 %v6418
      %6421 = vperm.xlu0 %6420, %v6416
      %v6422 = vpop.permute.xlu0 %6421
      %v6423 = vlaneseq
      %v6424 = vshrl.u32 %v6423, 7
      %v6425 = vadd.s32 %v6424, 8
      %6426 = vset.pattern.permute.xlu0 %v6425
      %6427 = vperm.xlu0 %6426, %v6416
      %v6428 = vpop.permute.xlu0 %6427
      %v6429 = vlaneseq
      %v6430 = vshrl.u32 %v6429, 7
      %v6431 = vadd.s32 %v6430, 16
      %6432 = vset.pattern.permute.xlu0 %v6431
      %6433 = vperm.xlu0 %6432, %v6416
      %v6434 = vpop.permute.xlu0 %6433
      %v6435 = vlaneseq
      %v6436 = vshrl.u32 %v6435, 7
      %v6437 = vadd.s32 %v6436, 24
      %6438 = vset.pattern.permute.xlu0 %v6437
      %6439 = vperm.xlu0 %6438, %v6416
      %v6440 = vpop.permute.xlu0 %6439
      %v6441 = vlaneseq
      %v6442 = vshrl.u32 %v6441, 7
      %v6443 = vadd.s32 %v6442, 32
      %6444 = vset.pattern.permute.xlu0 %v6443
      %6445 = vperm.xlu0 %6444, %v6416
      %v6446 = vpop.permute.xlu0 %6445
      %v6447 = vlaneseq
      %v6448 = vshrl.u32 %v6447, 7
      %v6449 = vadd.s32 %v6448, 40
      %6450 = vset.pattern.permute.xlu0 %v6449
      %6451 = vperm.xlu0 %6450, %v6416
      %v6452 = vpop.permute.xlu0 %6451
      %v6453 = vlaneseq
      %v6454 = vshrl.u32 %v6453, 7
      %v6455 = vadd.s32 %v6454, 48
      %6456 = vset.pattern.permute.xlu0 %v6455
      %6457 = vperm.xlu0 %6456, %v6416
      %v6458 = vpop.permute.xlu0 %6457
      %v6459 = vlaneseq
      %v6460 = vshrl.u32 %v6459, 7
      %v6461 = vadd.s32 %v6460, 56
      %6462 = vset.pattern.permute.xlu0 %v6461
      %6463 = vperm.xlu0 %6462, %v6416
      %v6464 = vpop.permute.xlu0 %6463
      %v6465 = vlaneseq
      %v6466 = vshrl.u32 %v6465, 7
      %v6467 = vadd.s32 %v6466, 64
      %6468 = vset.pattern.permute.xlu0 %v6467
      %6469 = vperm.xlu0 %6468, %v6416
      %v6470 = vpop.permute.xlu0 %6469
      %v6471 = vlaneseq
      %v6472 = vshrl.u32 %v6471, 7
      %v6473 = vadd.s32 %v6472, 72
      %6474 = vset.pattern.permute.xlu0 %v6473
      %6475 = vperm.xlu0 %6474, %v6416
      %v6476 = vpop.permute.xlu0 %6475
      %v6477 = vlaneseq
      %v6478 = vshrl.u32 %v6477, 7
      %v6479 = vadd.s32 %v6478, 80
      %6480 = vset.pattern.permute.xlu0 %v6479
      %6481 = vperm.xlu0 %6480, %v6416
      %v6482 = vpop.permute.xlu0 %6481
      %v6483 = vlaneseq
      %v6484 = vshrl.u32 %v6483, 7
      %v6485 = vadd.s32 %v6484, 88
      %6486 = vset.pattern.permute.xlu0 %v6485
      %6487 = vperm.xlu0 %6486, %v6416
      %v6488 = vpop.permute.xlu0 %6487
      %v6489 = vlaneseq
      %v6490 = vshrl.u32 %v6489, 7
      %v6491 = vadd.s32 %v6490, 96
      %6492 = vset.pattern.permute.xlu0 %v6491
      %6493 = vperm.xlu0 %6492, %v6416
      %v6494 = vpop.permute.xlu0 %6493
      %v6495 = vlaneseq
      %v6496 = vshrl.u32 %v6495, 7
      %v6497 = vadd.s32 %v6496, 104
      %6498 = vset.pattern.permute.xlu0 %v6497
      %6499 = vperm.xlu0 %6498, %v6416
      %v6500 = vpop.permute.xlu0 %6499
      %v6501 = vlaneseq
      %v6502 = vshrl.u32 %v6501, 7
      %v6503 = vadd.s32 %v6502, 112
      %6504 = vset.pattern.permute.xlu0 %v6503
      %6505 = vperm.xlu0 %6504, %v6416
      %v6506 = vpop.permute.xlu0 %6505
      %v6507 = vlaneseq
      %v6508 = vshrl.u32 %v6507, 7
      %v6509 = vadd.s32 %v6508, 120
      %6510 = vset.pattern.permute.xlu0 %v6509
      %6511 = vperm.xlu0 %6510, %v6416
      %v6512 = vpop.permute.xlu0 %6511
      %v6513 = vperm.slane %v6124, 4
      %v6514 = vlaneseq
      %v6515 = vshrl.u32 %v6514, 7
      %6517 = vset.pattern.permute.xlu0 %v6515
      %6518 = vperm.xlu0 %6517, %v6513
      %v6519 = vpop.permute.xlu0 %6518
      %v6520 = vlaneseq
      %v6521 = vshrl.u32 %v6520, 7
      %v6522 = vadd.s32 %v6521, 8
      %6523 = vset.pattern.permute.xlu0 %v6522
      %6524 = vperm.xlu0 %6523, %v6513
      %v6525 = vpop.permute.xlu0 %6524
      %v6526 = vlaneseq
      %v6527 = vshrl.u32 %v6526, 7
      %v6528 = vadd.s32 %v6527, 16
      %6529 = vset.pattern.permute.xlu0 %v6528
      %6530 = vperm.xlu0 %6529, %v6513
      %v6531 = vpop.permute.xlu0 %6530
      %v6532 = vlaneseq
      %v6533 = vshrl.u32 %v6532, 7
      %v6534 = vadd.s32 %v6533, 24
      %6535 = vset.pattern.permute.xlu0 %v6534
      %6536 = vperm.xlu0 %6535, %v6513
      %v6537 = vpop.permute.xlu0 %6536
      %v6538 = vlaneseq
      %v6539 = vshrl.u32 %v6538, 7
      %v6540 = vadd.s32 %v6539, 32
      %6541 = vset.pattern.permute.xlu0 %v6540
      %6542 = vperm.xlu0 %6541, %v6513
      %v6543 = vpop.permute.xlu0 %6542
      %v6544 = vlaneseq
      %v6545 = vshrl.u32 %v6544, 7
      %v6546 = vadd.s32 %v6545, 40
      %6547 = vset.pattern.permute.xlu0 %v6546
      %6548 = vperm.xlu0 %6547, %v6513
      %v6549 = vpop.permute.xlu0 %6548
      %v6550 = vlaneseq
      %v6551 = vshrl.u32 %v6550, 7
      %v6552 = vadd.s32 %v6551, 48
      %6553 = vset.pattern.permute.xlu0 %v6552
      %6554 = vperm.xlu0 %6553, %v6513
      %v6555 = vpop.permute.xlu0 %6554
      %v6556 = vlaneseq
      %v6557 = vshrl.u32 %v6556, 7
      %v6558 = vadd.s32 %v6557, 56
      %6559 = vset.pattern.permute.xlu0 %v6558
      %6560 = vperm.xlu0 %6559, %v6513
      %v6561 = vpop.permute.xlu0 %6560
      %v6562 = vlaneseq
      %v6563 = vshrl.u32 %v6562, 7
      %v6564 = vadd.s32 %v6563, 64
      %6565 = vset.pattern.permute.xlu0 %v6564
      %6566 = vperm.xlu0 %6565, %v6513
      %v6567 = vpop.permute.xlu0 %6566
      %v6568 = vlaneseq
      %v6569 = vshrl.u32 %v6568, 7
      %v6570 = vadd.s32 %v6569, 72
      %6571 = vset.pattern.permute.xlu0 %v6570
      %6572 = vperm.xlu0 %6571, %v6513
      %v6573 = vpop.permute.xlu0 %6572
      %v6574 = vlaneseq
      %v6575 = vshrl.u32 %v6574, 7
      %v6576 = vadd.s32 %v6575, 80
      %6577 = vset.pattern.permute.xlu0 %v6576
      %6578 = vperm.xlu0 %6577, %v6513
      %v6579 = vpop.permute.xlu0 %6578
      %v6580 = vlaneseq
      %v6581 = vshrl.u32 %v6580, 7
      %v6582 = vadd.s32 %v6581, 88
      %6583 = vset.pattern.permute.xlu0 %v6582
      %6584 = vperm.xlu0 %6583, %v6513
      %v6585 = vpop.permute.xlu0 %6584
      %v6586 = vlaneseq
      %v6587 = vshrl.u32 %v6586, 7
      %v6588 = vadd.s32 %v6587, 96
      %6589 = vset.pattern.permute.xlu0 %v6588
      %6590 = vperm.xlu0 %6589, %v6513
      %v6591 = vpop.permute.xlu0 %6590
      %v6592 = vlaneseq
      %v6593 = vshrl.u32 %v6592, 7
      %v6594 = vadd.s32 %v6593, 104
      %6595 = vset.pattern.permute.xlu0 %v6594
      %6596 = vperm.xlu0 %6595, %v6513
      %v6597 = vpop.permute.xlu0 %6596
      %v6598 = vlaneseq
      %v6599 = vshrl.u32 %v6598, 7
      %v6600 = vadd.s32 %v6599, 112
      %6601 = vset.pattern.permute.xlu0 %v6600
      %6602 = vperm.xlu0 %6601, %v6513
      %v6603 = vpop.permute.xlu0 %6602
      %v6604 = vlaneseq
      %v6605 = vshrl.u32 %v6604, 7
      %v6606 = vadd.s32 %v6605, 120
      %6607 = vset.pattern.permute.xlu0 %v6606
      %6608 = vperm.xlu0 %6607, %v6513
      %v6609 = vpop.permute.xlu0 %6608
      %v6610 = vperm.slane %v6124, 5
      %v6611 = vlaneseq
      %v6612 = vshrl.u32 %v6611, 7
      %6614 = vset.pattern.permute.xlu0 %v6612
      %6615 = vperm.xlu0 %6614, %v6610
      %v6616 = vpop.permute.xlu0 %6615
      %v6617 = vlaneseq
      %v6618 = vshrl.u32 %v6617, 7
      %v6619 = vadd.s32 %v6618, 8
      %6620 = vset.pattern.permute.xlu0 %v6619
      %6621 = vperm.xlu0 %6620, %v6610
      %v6622 = vpop.permute.xlu0 %6621
      %v6623 = vlaneseq
      %v6624 = vshrl.u32 %v6623, 7
      %v6625 = vadd.s32 %v6624, 16
      %6626 = vset.pattern.permute.xlu0 %v6625
      %6627 = vperm.xlu0 %6626, %v6610
      %v6628 = vpop.permute.xlu0 %6627
      %v6629 = vlaneseq
      %v6630 = vshrl.u32 %v6629, 7
      %v6631 = vadd.s32 %v6630, 24
      %6632 = vset.pattern.permute.xlu0 %v6631
      %6633 = vperm.xlu0 %6632, %v6610
      %v6634 = vpop.permute.xlu0 %6633
      %v6635 = vlaneseq
      %v6636 = vshrl.u32 %v6635, 7
      %v6637 = vadd.s32 %v6636, 32
      %6638 = vset.pattern.permute.xlu0 %v6637
      %6639 = vperm.xlu0 %6638, %v6610
      %v6640 = vpop.permute.xlu0 %6639
      %v6641 = vlaneseq
      %v6642 = vshrl.u32 %v6641, 7
      %v6643 = vadd.s32 %v6642, 40
      %6644 = vset.pattern.permute.xlu0 %v6643
      %6645 = vperm.xlu0 %6644, %v6610
      %v6646 = vpop.permute.xlu0 %6645
      %v6647 = vlaneseq
      %v6648 = vshrl.u32 %v6647, 7
      %v6649 = vadd.s32 %v6648, 48
      %6650 = vset.pattern.permute.xlu0 %v6649
      %6651 = vperm.xlu0 %6650, %v6610
      %v6652 = vpop.permute.xlu0 %6651
      %v6653 = vlaneseq
      %v6654 = vshrl.u32 %v6653, 7
      %v6655 = vadd.s32 %v6654, 56
      %6656 = vset.pattern.permute.xlu0 %v6655
      %6657 = vperm.xlu0 %6656, %v6610
      %v6658 = vpop.permute.xlu0 %6657
      %v6659 = vlaneseq
      %v6660 = vshrl.u32 %v6659, 7
      %v6661 = vadd.s32 %v6660, 64
      %6662 = vset.pattern.permute.xlu0 %v6661
      %6663 = vperm.xlu0 %6662, %v6610
      %v6664 = vpop.permute.xlu0 %6663
      %v6665 = vlaneseq
      %v6666 = vshrl.u32 %v6665, 7
      %v6667 = vadd.s32 %v6666, 72
      %6668 = vset.pattern.permute.xlu0 %v6667
      %6669 = vperm.xlu0 %6668, %v6610
      %v6670 = vpop.permute.xlu0 %6669
      %v6671 = vlaneseq
      %v6672 = vshrl.u32 %v6671, 7
      %v6673 = vadd.s32 %v6672, 80
      %6674 = vset.pattern.permute.xlu0 %v6673
      %6675 = vperm.xlu0 %6674, %v6610
      %v6676 = vpop.permute.xlu0 %6675
      %v6677 = vlaneseq
      %v6678 = vshrl.u32 %v6677, 7
      %v6679 = vadd.s32 %v6678, 88
      %6680 = vset.pattern.permute.xlu0 %v6679
      %6681 = vperm.xlu0 %6680, %v6610
      %v6682 = vpop.permute.xlu0 %6681
      %v6683 = vlaneseq
      %v6684 = vshrl.u32 %v6683, 7
      %v6685 = vadd.s32 %v6684, 96
      %6686 = vset.pattern.permute.xlu0 %v6685
      %6687 = vperm.xlu0 %6686, %v6610
      %v6688 = vpop.permute.xlu0 %6687
      %v6689 = vlaneseq
      %v6690 = vshrl.u32 %v6689, 7
      %v6691 = vadd.s32 %v6690, 104
      %6692 = vset.pattern.permute.xlu0 %v6691
      %6693 = vperm.xlu0 %6692, %v6610
      %v6694 = vpop.permute.xlu0 %6693
      %v6695 = vlaneseq
      %v6696 = vshrl.u32 %v6695, 7
      %v6697 = vadd.s32 %v6696, 112
      %6698 = vset.pattern.permute.xlu0 %v6697
      %6699 = vperm.xlu0 %6698, %v6610
      %v6700 = vpop.permute.xlu0 %6699
      %v6701 = vlaneseq
      %v6702 = vshrl.u32 %v6701, 7
      %v6703 = vadd.s32 %v6702, 120
      %6704 = vset.pattern.permute.xlu0 %v6703
      %6705 = vperm.xlu0 %6704, %v6610
      %v6706 = vpop.permute.xlu0 %6705
      %v6707 = vperm.slane %v6124, 6
      %v6708 = vlaneseq
      %v6709 = vshrl.u32 %v6708, 7
      %6711 = vset.pattern.permute.xlu0 %v6709
      %6712 = vperm.xlu0 %6711, %v6707
      %v6713 = vpop.permute.xlu0 %6712
      %v6714 = vlaneseq
      %v6715 = vshrl.u32 %v6714, 7
      %v6716 = vadd.s32 %v6715, 8
      %6717 = vset.pattern.permute.xlu0 %v6716
      %6718 = vperm.xlu0 %6717, %v6707
      %v6719 = vpop.permute.xlu0 %6718
      %v6720 = vlaneseq
      %v6721 = vshrl.u32 %v6720, 7
      %v6722 = vadd.s32 %v6721, 16
      %6723 = vset.pattern.permute.xlu0 %v6722
      %6724 = vperm.xlu0 %6723, %v6707
      %v6725 = vpop.permute.xlu0 %6724
      %v6726 = vlaneseq
      %v6727 = vshrl.u32 %v6726, 7
      %v6728 = vadd.s32 %v6727, 24
      %6729 = vset.pattern.permute.xlu0 %v6728
      %6730 = vperm.xlu0 %6729, %v6707
      %v6731 = vpop.permute.xlu0 %6730
      %v6732 = vlaneseq
      %v6733 = vshrl.u32 %v6732, 7
      %v6734 = vadd.s32 %v6733, 32
      %6735 = vset.pattern.permute.xlu0 %v6734
      %6736 = vperm.xlu0 %6735, %v6707
      %v6737 = vpop.permute.xlu0 %6736
      %v6738 = vlaneseq
      %v6739 = vshrl.u32 %v6738, 7
      %v6740 = vadd.s32 %v6739, 40
      %6741 = vset.pattern.permute.xlu0 %v6740
      %6742 = vperm.xlu0 %6741, %v6707
      %v6743 = vpop.permute.xlu0 %6742
      %v6744 = vlaneseq
      %v6745 = vshrl.u32 %v6744, 7
      %v6746 = vadd.s32 %v6745, 48
      %6747 = vset.pattern.permute.xlu0 %v6746
      %6748 = vperm.xlu0 %6747, %v6707
      %v6749 = vpop.permute.xlu0 %6748
      %v6750 = vlaneseq
      %v6751 = vshrl.u32 %v6750, 7
      %v6752 = vadd.s32 %v6751, 56
      %6753 = vset.pattern.permute.xlu0 %v6752
      %6754 = vperm.xlu0 %6753, %v6707
      %v6755 = vpop.permute.xlu0 %6754
      %v6756 = vlaneseq
      %v6757 = vshrl.u32 %v6756, 7
      %v6758 = vadd.s32 %v6757, 64
      %6759 = vset.pattern.permute.xlu0 %v6758
      %6760 = vperm.xlu0 %6759, %v6707
      %v6761 = vpop.permute.xlu0 %6760
      %v6762 = vlaneseq
      %v6763 = vshrl.u32 %v6762, 7
      %v6764 = vadd.s32 %v6763, 72
      %6765 = vset.pattern.permute.xlu0 %v6764
      %6766 = vperm.xlu0 %6765, %v6707
      %v6767 = vpop.permute.xlu0 %6766
      %v6768 = vlaneseq
      %v6769 = vshrl.u32 %v6768, 7
      %v6770 = vadd.s32 %v6769, 80
      %6771 = vset.pattern.permute.xlu0 %v6770
      %6772 = vperm.xlu0 %6771, %v6707
      %v6773 = vpop.permute.xlu0 %6772
      %v6774 = vlaneseq
      %v6775 = vshrl.u32 %v6774, 7
      %v6776 = vadd.s32 %v6775, 88
      %6777 = vset.pattern.permute.xlu0 %v6776
      %6778 = vperm.xlu0 %6777, %v6707
      %v6779 = vpop.permute.xlu0 %6778
      %v6780 = vlaneseq
      %v6781 = vshrl.u32 %v6780, 7
      %v6782 = vadd.s32 %v6781, 96
      %6783 = vset.pattern.permute.xlu0 %v6782
      %6784 = vperm.xlu0 %6783, %v6707
      %v6785 = vpop.permute.xlu0 %6784
      %v6786 = vlaneseq
      %v6787 = vshrl.u32 %v6786, 7
      %v6788 = vadd.s32 %v6787, 104
      %6789 = vset.pattern.permute.xlu0 %v6788
      %6790 = vperm.xlu0 %6789, %v6707
      %v6791 = vpop.permute.xlu0 %6790
      %v6792 = vlaneseq
      %v6793 = vshrl.u32 %v6792, 7
      %v6794 = vadd.s32 %v6793, 112
      %6795 = vset.pattern.permute.xlu0 %v6794
      %6796 = vperm.xlu0 %6795, %v6707
      %v6797 = vpop.permute.xlu0 %6796
      %v6798 = vlaneseq
      %v6799 = vshrl.u32 %v6798, 7
      %v6800 = vadd.s32 %v6799, 120
      %6801 = vset.pattern.permute.xlu0 %v6800
      %6802 = vperm.xlu0 %6801, %v6707
      %v6803 = vpop.permute.xlu0 %6802
      %v6804 = vperm.slane %v6124, 7
      %v6805 = vlaneseq
      %v6806 = vshrl.u32 %v6805, 7
      %6808 = vset.pattern.permute.xlu0 %v6806
      %6809 = vperm.xlu0 %6808, %v6804
      %v6810 = vpop.permute.xlu0 %6809
      %v6811 = vlaneseq
      %v6812 = vshrl.u32 %v6811, 7
      %v6813 = vadd.s32 %v6812, 8
      %6814 = vset.pattern.permute.xlu0 %v6813
      %6815 = vperm.xlu0 %6814, %v6804
      %v6816 = vpop.permute.xlu0 %6815
      %v6817 = vlaneseq
      %v6818 = vshrl.u32 %v6817, 7
      %v6819 = vadd.s32 %v6818, 16
      %6820 = vset.pattern.permute.xlu0 %v6819
      %6821 = vperm.xlu0 %6820, %v6804
      %v6822 = vpop.permute.xlu0 %6821
      %v6823 = vlaneseq
      %v6824 = vshrl.u32 %v6823, 7
      %v6825 = vadd.s32 %v6824, 24
      %6826 = vset.pattern.permute.xlu0 %v6825
      %6827 = vperm.xlu0 %6826, %v6804
      %v6828 = vpop.permute.xlu0 %6827
      %v6829 = vlaneseq
      %v6830 = vshrl.u32 %v6829, 7
      %v6831 = vadd.s32 %v6830, 32
      %6832 = vset.pattern.permute.xlu0 %v6831
      %6833 = vperm.xlu0 %6832, %v6804
      %v6834 = vpop.permute.xlu0 %6833
      %v6835 = vlaneseq
      %v6836 = vshrl.u32 %v6835, 7
      %v6837 = vadd.s32 %v6836, 40
      %6838 = vset.pattern.permute.xlu0 %v6837
      %6839 = vperm.xlu0 %6838, %v6804
      %v6840 = vpop.permute.xlu0 %6839
      %v6841 = vlaneseq
      %v6842 = vshrl.u32 %v6841, 7
      %v6843 = vadd.s32 %v6842, 48
      %6844 = vset.pattern.permute.xlu0 %v6843
      %6845 = vperm.xlu0 %6844, %v6804
      %v6846 = vpop.permute.xlu0 %6845
      %v6847 = vlaneseq
      %v6848 = vshrl.u32 %v6847, 7
      %v6849 = vadd.s32 %v6848, 56
      %6850 = vset.pattern.permute.xlu0 %v6849
      %6851 = vperm.xlu0 %6850, %v6804
      %v6852 = vpop.permute.xlu0 %6851
      %v6853 = vlaneseq
      %v6854 = vshrl.u32 %v6853, 7
      %v6855 = vadd.s32 %v6854, 64
      %6856 = vset.pattern.permute.xlu0 %v6855
      %6857 = vperm.xlu0 %6856, %v6804
      %v6858 = vpop.permute.xlu0 %6857
      %v6859 = vlaneseq
      %v6860 = vshrl.u32 %v6859, 7
      %v6861 = vadd.s32 %v6860, 72
      %6862 = vset.pattern.permute.xlu0 %v6861
      %6863 = vperm.xlu0 %6862, %v6804
      %v6864 = vpop.permute.xlu0 %6863
      %v6865 = vlaneseq
      %v6866 = vshrl.u32 %v6865, 7
      %v6867 = vadd.s32 %v6866, 80
      %6868 = vset.pattern.permute.xlu0 %v6867
      %6869 = vperm.xlu0 %6868, %v6804
      %v6870 = vpop.permute.xlu0 %6869
      %v6871 = vlaneseq
      %v6872 = vshrl.u32 %v6871, 7
      %v6873 = vadd.s32 %v6872, 88
      %6874 = vset.pattern.permute.xlu0 %v6873
      %6875 = vperm.xlu0 %6874, %v6804
      %v6876 = vpop.permute.xlu0 %6875
      %v6877 = vlaneseq
      %v6878 = vshrl.u32 %v6877, 7
      %v6879 = vadd.s32 %v6878, 96
      %6880 = vset.pattern.permute.xlu0 %v6879
      %6881 = vperm.xlu0 %6880, %v6804
      %v6882 = vpop.permute.xlu0 %6881
      %v6883 = vlaneseq
      %v6884 = vshrl.u32 %v6883, 7
      %v6885 = vadd.s32 %v6884, 104
      %6886 = vset.pattern.permute.xlu0 %v6885
      %6887 = vperm.xlu0 %6886, %v6804
      %v6888 = vpop.permute.xlu0 %6887
      %v6889 = vlaneseq
      %v6890 = vshrl.u32 %v6889, 7
      %v6891 = vadd.s32 %v6890, 112
      %6892 = vset.pattern.permute.xlu0 %v6891
      %6893 = vperm.xlu0 %6892, %v6804
      %v6894 = vpop.permute.xlu0 %6893
      %v6895 = vlaneseq
      %v6896 = vshrl.u32 %v6895, 7
      %v6897 = vadd.s32 %v6896, 120
      %6898 = vset.pattern.permute.xlu0 %v6897
      %6899 = vperm.xlu0 %6898, %v6804
      %v6900 = vpop.permute.xlu0 %6899
      %v6901 = vld [vmem:[#allocation3] sm:$0xff]
      %v6902 = vld [vmem:[#allocation3 + $0x8] sm:$0xff]
      %v6903 = vld [vmem:[#allocation3 + $0x10] sm:$0xff]
      %v6904 = vld [vmem:[#allocation3 + $0x18] sm:$0xff]
      %v6905 = vld [vmem:[#allocation3 + $0x20] sm:$0xff]
      %v6906 = vld [vmem:[#allocation3 + $0x28] sm:$0xff]
      %v6907 = vld [vmem:[#allocation3 + $0x30] sm:$0xff]
      %v6908 = vld [vmem:[#allocation3 + $0x38] sm:$0xff]
      %v6909 = vld [vmem:[#allocation3 + $0x40] sm:$0xff]
      %v6910 = vld [vmem:[#allocation3 + $0x48] sm:$0xff]
      %v6911 = vld [vmem:[#allocation3 + $0x50] sm:$0xff]
      %v6912 = vld [vmem:[#allocation3 + $0x58] sm:$0xff]
      %v6913 = vld [vmem:[#allocation3 + $0x60] sm:$0xff]
      %v6914 = vld [vmem:[#allocation3 + $0x68] sm:$0xff]
      %v6915 = vld [vmem:[#allocation3 + $0x70] sm:$0xff]
      %v6916 = vld [vmem:[#allocation3 + $0x78] sm:$0xff]
      %v6917 = vld [vmem:[#allocation3 + $0x80] sm:$0xff]
      %v6918 = vld [vmem:[#allocation3 + $0x88] sm:$0xff]
      %v6919 = vld [vmem:[#allocation3 + $0x90] sm:$0xff]
      %v6920 = vld [vmem:[#allocation3 + $0x98] sm:$0xff]
      %v6921 = vld [vmem:[#allocation3 + $0xa0] sm:$0xff]
      %v6922 = vld [vmem:[#allocation3 + $0xa8] sm:$0xff]
      %v6923 = vld [vmem:[#allocation3 + $0xb0] sm:$0xff]
      %v6924 = vld [vmem:[#allocation3 + $0xb8] sm:$0xff]
      %v6925 = vld [vmem:[#allocation3 + $0xc0] sm:$0xff]
      %v6926 = vld [vmem:[#allocation3 + $0xc8] sm:$0xff]
      %v6927 = vld [vmem:[#allocation3 + $0xd0] sm:$0xff]
      %v6928 = vld [vmem:[#allocation3 + $0xd8] sm:$0xff]
      %v6929 = vld [vmem:[#allocation3 + $0xe0] sm:$0xff]
      %v6930 = vld [vmem:[#allocation3 + $0xe8] sm:$0xff]
      %v6931 = vld [vmem:[#allocation3 + $0xf0] sm:$0xff]
      %v6932 = vld [vmem:[#allocation3 + $0xf8] sm:$0xff]
      %v6933 = vld [vmem:[#allocation3 + $0x100] sm:$0xff]
      %v6934 = vld [vmem:[#allocation3 + $0x108] sm:$0xff]
      %v6935 = vld [vmem:[#allocation3 + $0x110] sm:$0xff]
      %v6936 = vld [vmem:[#allocation3 + $0x118] sm:$0xff]
      %v6937 = vld [vmem:[#allocation3 + $0x120] sm:$0xff]
      %v6938 = vld [vmem:[#allocation3 + $0x128] sm:$0xff]
      %v6939 = vld [vmem:[#allocation3 + $0x130] sm:$0xff]
      %v6940 = vld [vmem:[#allocation3 + $0x138] sm:$0xff]
      %v6941 = vld [vmem:[#allocation3 + $0x140] sm:$0xff]
      %v6942 = vld [vmem:[#allocation3 + $0x148] sm:$0xff]
      %v6943 = vld [vmem:[#allocation3 + $0x150] sm:$0xff]
      %v6944 = vld [vmem:[#allocation3 + $0x158] sm:$0xff]
      %v6945 = vld [vmem:[#allocation3 + $0x160] sm:$0xff]
      %v6946 = vld [vmem:[#allocation3 + $0x168] sm:$0xff]
      %v6947 = vld [vmem:[#allocation3 + $0x170] sm:$0xff]
      %v6948 = vld [vmem:[#allocation3 + $0x178] sm:$0xff]
      %v6949 = vld [vmem:[#allocation3 + $0x180] sm:$0xff]
      %v6950 = vld [vmem:[#allocation3 + $0x188] sm:$0xff]
      %v6951 = vld [vmem:[#allocation3 + $0x190] sm:$0xff]
      %v6952 = vld [vmem:[#allocation3 + $0x198] sm:$0xff]
      %v6953 = vld [vmem:[#allocation3 + $0x1a0] sm:$0xff]
      %v6954 = vld [vmem:[#allocation3 + $0x1a8] sm:$0xff]
      %v6955 = vld [vmem:[#allocation3 + $0x1b0] sm:$0xff]
      %v6956 = vld [vmem:[#allocation3 + $0x1b8] sm:$0xff]
      %v6957 = vld [vmem:[#allocation3 + $0x1c0] sm:$0xff]
      %v6958 = vld [vmem:[#allocation3 + $0x1c8] sm:$0xff]
      %v6959 = vld [vmem:[#allocation3 + $0x1d0] sm:$0xff]
      %v6960 = vld [vmem:[#allocation3 + $0x1d8] sm:$0xff]
      %v6961 = vld [vmem:[#allocation3 + $0x1e0] sm:$0xff]
      %v6962 = vld [vmem:[#allocation3 + $0x1e8] sm:$0xff]
      %v6963 = vld [vmem:[#allocation3 + $0x1f0] sm:$0xff]
      %v6964 = vld [vmem:[#allocation3 + $0x1f8] sm:$0xff]
      %v6965 = vld [vmem:[#allocation3 + $0x200] sm:$0xff]
      %v6966 = vld [vmem:[#allocation3 + $0x208] sm:$0xff]
      %v6967 = vld [vmem:[#allocation3 + $0x210] sm:$0xff]
      %v6968 = vld [vmem:[#allocation3 + $0x218] sm:$0xff]
      %v6969 = vld [vmem:[#allocation3 + $0x220] sm:$0xff]
      %v6970 = vld [vmem:[#allocation3 + $0x228] sm:$0xff]
      %v6971 = vld [vmem:[#allocation3 + $0x230] sm:$0xff]
      %v6972 = vld [vmem:[#allocation3 + $0x238] sm:$0xff]
      %v6973 = vld [vmem:[#allocation3 + $0x240] sm:$0xff]
      %v6974 = vld [vmem:[#allocation3 + $0x248] sm:$0xff]
      %v6975 = vld [vmem:[#allocation3 + $0x250] sm:$0xff]
      %v6976 = vld [vmem:[#allocation3 + $0x258] sm:$0xff]
      %v6977 = vld [vmem:[#allocation3 + $0x260] sm:$0xff]
      %v6978 = vld [vmem:[#allocation3 + $0x268] sm:$0xff]
      %v6979 = vld [vmem:[#allocation3 + $0x270] sm:$0xff]
      %v6980 = vld [vmem:[#allocation3 + $0x278] sm:$0xff]
      %v6981 = vld [vmem:[#allocation3 + $0x280] sm:$0xff]
      %v6982 = vld [vmem:[#allocation3 + $0x288] sm:$0xff]
      %v6983 = vld [vmem:[#allocation3 + $0x290] sm:$0xff]
      %v6984 = vld [vmem:[#allocation3 + $0x298] sm:$0xff]
      %v6985 = vld [vmem:[#allocation3 + $0x2a0] sm:$0xff]
      %v6986 = vld [vmem:[#allocation3 + $0x2a8] sm:$0xff]
      %v6987 = vld [vmem:[#allocation3 + $0x2b0] sm:$0xff]
      %v6988 = vld [vmem:[#allocation3 + $0x2b8] sm:$0xff]
      %v6989 = vld [vmem:[#allocation3 + $0x2c0] sm:$0xff]
      %v6990 = vld [vmem:[#allocation3 + $0x2c8] sm:$0xff]
      %v6991 = vld [vmem:[#allocation3 + $0x2d0] sm:$0xff]
      %v6992 = vld [vmem:[#allocation3 + $0x2d8] sm:$0xff]
      %v6993 = vld [vmem:[#allocation3 + $0x2e0] sm:$0xff]
      %v6994 = vld [vmem:[#allocation3 + $0x2e8] sm:$0xff]
      %v6995 = vld [vmem:[#allocation3 + $0x2f0] sm:$0xff]
      %v6996 = vld [vmem:[#allocation3 + $0x2f8] sm:$0xff]
      %v6997 = vld [vmem:[#allocation3 + $0x300] sm:$0xff]
      %v6998 = vld [vmem:[#allocation3 + $0x308] sm:$0xff]
      %v6999 = vld [vmem:[#allocation3 + $0x310] sm:$0xff]
      %v7000 = vld [vmem:[#allocation3 + $0x318] sm:$0xff]
      %v7001 = vld [vmem:[#allocation3 + $0x320] sm:$0xff]
      %v7002 = vld [vmem:[#allocation3 + $0x328] sm:$0xff]
      %v7003 = vld [vmem:[#allocation3 + $0x330] sm:$0xff]
      %v7004 = vld [vmem:[#allocation3 + $0x338] sm:$0xff]
      %v7005 = vld [vmem:[#allocation3 + $0x340] sm:$0xff]
      %v7006 = vld [vmem:[#allocation3 + $0x348] sm:$0xff]
      %v7007 = vld [vmem:[#allocation3 + $0x350] sm:$0xff]
      %v7008 = vld [vmem:[#allocation3 + $0x358] sm:$0xff]
      %v7009 = vld [vmem:[#allocation3 + $0x360] sm:$0xff]
      %v7010 = vld [vmem:[#allocation3 + $0x368] sm:$0xff]
      %v7011 = vld [vmem:[#allocation3 + $0x370] sm:$0xff]
      %v7012 = vld [vmem:[#allocation3 + $0x378] sm:$0xff]
      %v7013 = vld [vmem:[#allocation3 + $0x380] sm:$0xff]
      %v7014 = vld [vmem:[#allocation3 + $0x388] sm:$0xff]
      %v7015 = vld [vmem:[#allocation3 + $0x390] sm:$0xff]
      %v7016 = vld [vmem:[#allocation3 + $0x398] sm:$0xff]
      %v7017 = vld [vmem:[#allocation3 + $0x3a0] sm:$0xff]
      %v7018 = vld [vmem:[#allocation3 + $0x3a8] sm:$0xff]
      %v7019 = vld [vmem:[#allocation3 + $0x3b0] sm:$0xff]
      %v7020 = vld [vmem:[#allocation3 + $0x3b8] sm:$0xff]
      %v7021 = vld [vmem:[#allocation3 + $0x3c0] sm:$0xff]
      %v7022 = vld [vmem:[#allocation3 + $0x3c8] sm:$0xff]
      %v7023 = vld [vmem:[#allocation3 + $0x3d0] sm:$0xff]
      %v7024 = vld [vmem:[#allocation3 + $0x3d8] sm:$0xff]
      %v7025 = vld [vmem:[#allocation3 + $0x3e0] sm:$0xff]
      %v7026 = vld [vmem:[#allocation3 + $0x3e8] sm:$0xff]
      %v7027 = vld [vmem:[#allocation3 + $0x3f0] sm:$0xff]
      %v7028 = vld [vmem:[#allocation3 + $0x3f8] sm:$0xff]
      %v7029 = vmul.f32 %v6131, %v6901
      %v7030 = vmul.f32 %v6137, %v6902
      %v7031 = vmul.f32 %v6143, %v6903
      %v7032 = vmul.f32 %v6149, %v6904
      %v7033 = vmul.f32 %v6155, %v6905
      %v7034 = vmul.f32 %v6161, %v6906
      %v7035 = vmul.f32 %v6167, %v6907
      %v7036 = vmul.f32 %v6173, %v6908
      %v7037 = vmul.f32 %v6179, %v6909
      %v7038 = vmul.f32 %v6185, %v6910
      %v7039 = vmul.f32 %v6191, %v6911
      %v7040 = vmul.f32 %v6197, %v6912
      %v7041 = vmul.f32 %v6203, %v6913
      %v7042 = vmul.f32 %v6209, %v6914
      %v7043 = vmul.f32 %v6215, %v6915
      %v7044 = vmul.f32 %v6221, %v6916
      %v7045 = vmul.f32 %v6228, %v6917
      %v7046 = vmul.f32 %v6234, %v6918
      %v7047 = vmul.f32 %v6240, %v6919
      %v7048 = vmul.f32 %v6246, %v6920
      %v7049 = vmul.f32 %v6252, %v6921
      %v7050 = vmul.f32 %v6258, %v6922
      %v7051 = vmul.f32 %v6264, %v6923
      %v7052 = vmul.f32 %v6270, %v6924
      %v7053 = vmul.f32 %v6276, %v6925
      %v7054 = vmul.f32 %v6282, %v6926
      %v7055 = vmul.f32 %v6288, %v6927
      %v7056 = vmul.f32 %v6294, %v6928
      %v7057 = vmul.f32 %v6300, %v6929
      %v7058 = vmul.f32 %v6306, %v6930
      %v7059 = vmul.f32 %v6312, %v6931
      %v7060 = vmul.f32 %v6318, %v6932
      %v7061 = vmul.f32 %v6325, %v6933
      %v7062 = vmul.f32 %v6331, %v6934
      %v7063 = vmul.f32 %v6337, %v6935
      %v7064 = vmul.f32 %v6343, %v6936
      %v7065 = vmul.f32 %v6349, %v6937
      %v7066 = vmul.f32 %v6355, %v6938
      %v7067 = vmul.f32 %v6361, %v6939
      %v7068 = vmul.f32 %v6367, %v6940
      %v7069 = vmul.f32 %v6373, %v6941
      %v7070 = vmul.f32 %v6379, %v6942
      %v7071 = vmul.f32 %v6385, %v6943
      %v7072 = vmul.f32 %v6391, %v6944
      %v7073 = vmul.f32 %v6397, %v6945
      %v7074 = vmul.f32 %v6403, %v6946
      %v7075 = vmul.f32 %v6409, %v6947
      %v7076 = vmul.f32 %v6415, %v6948
      %v7077 = vmul.f32 %v6422, %v6949
      %v7078 = vmul.f32 %v6428, %v6950
      %v7079 = vmul.f32 %v6434, %v6951
      %v7080 = vmul.f32 %v6440, %v6952
      %v7081 = vmul.f32 %v6446, %v6953
      %v7082 = vmul.f32 %v6452, %v6954
      %v7083 = vmul.f32 %v6458, %v6955
      %v7084 = vmul.f32 %v6464, %v6956
      %v7085 = vmul.f32 %v6470, %v6957
      %v7086 = vmul.f32 %v6476, %v6958
      %v7087 = vmul.f32 %v6482, %v6959
      %v7088 = vmul.f32 %v6488, %v6960
      %v7089 = vmul.f32 %v6494, %v6961
      %v7090 = vmul.f32 %v6500, %v6962
      %v7091 = vmul.f32 %v6506, %v6963
      %v7092 = vmul.f32 %v6512, %v6964
      %v7093 = vmul.f32 %v6519, %v6965
      %v7094 = vmul.f32 %v6525, %v6966
      %v7095 = vmul.f32 %v6531, %v6967
      %v7096 = vmul.f32 %v6537, %v6968
      %v7097 = vmul.f32 %v6543, %v6969
      %v7098 = vmul.f32 %v6549, %v6970
      %v7099 = vmul.f32 %v6555, %v6971
      %v7100 = vmul.f32 %v6561, %v6972
      %v7101 = vmul.f32 %v6567, %v6973
      %v7102 = vmul.f32 %v6573, %v6974
      %v7103 = vmul.f32 %v6579, %v6975
      %v7104 = vmul.f32 %v6585, %v6976
      %v7105 = vmul.f32 %v6591, %v6977
      %v7106 = vmul.f32 %v6597, %v6978
      %v7107 = vmul.f32 %v6603, %v6979
      %v7108 = vmul.f32 %v6609, %v6980
      %v7109 = vmul.f32 %v6616, %v6981
      %v7110 = vmul.f32 %v6622, %v6982
      %v7111 = vmul.f32 %v6628, %v6983
      %v7112 = vmul.f32 %v6634, %v6984
      %v7113 = vmul.f32 %v6640, %v6985
      %v7114 = vmul.f32 %v6646, %v6986
      %v7115 = vmul.f32 %v6652, %v6987
      %v7116 = vmul.f32 %v6658, %v6988
      %v7117 = vmul.f32 %v6664, %v6989
      %v7118 = vmul.f32 %v6670, %v6990
      %v7119 = vmul.f32 %v6676, %v6991
      %v7120 = vmul.f32 %v6682, %v6992
      %v7121 = vmul.f32 %v6688, %v6993
      %v7122 = vmul.f32 %v6694, %v6994
      %v7123 = vmul.f32 %v6700, %v6995
      %v7124 = vmul.f32 %v6706, %v6996
      %v7125 = vmul.f32 %v6713, %v6997
      %v7126 = vmul.f32 %v6719, %v6998
      %v7127 = vmul.f32 %v6725, %v6999
      %v7128 = vmul.f32 %v6731, %v7000
      %v7129 = vmul.f32 %v6737, %v7001
      %v7130 = vmul.f32 %v6743, %v7002
      %v7131 = vmul.f32 %v6749, %v7003
      %v7132 = vmul.f32 %v6755, %v7004
      %v7133 = vmul.f32 %v6761, %v7005
      %v7134 = vmul.f32 %v6767, %v7006
      %v7135 = vmul.f32 %v6773, %v7007
      %v7136 = vmul.f32 %v6779, %v7008
      %v7137 = vmul.f32 %v6785, %v7009
      %v7138 = vmul.f32 %v6791, %v7010
      %v7139 = vmul.f32 %v6797, %v7011
      %v7140 = vmul.f32 %v6803, %v7012
      %v7141 = vmul.f32 %v6810, %v7013
      %v7142 = vmul.f32 %v6816, %v7014
      %v7143 = vmul.f32 %v6822, %v7015
      %v7144 = vmul.f32 %v6828, %v7016
      %v7145 = vmul.f32 %v6834, %v7017
      %v7146 = vmul.f32 %v6840, %v7018
      %v7147 = vmul.f32 %v6846, %v7019
      %v7148 = vmul.f32 %v6852, %v7020
      %v7149 = vmul.f32 %v6858, %v7021
      %v7150 = vmul.f32 %v6864, %v7022
      %v7151 = vmul.f32 %v6870, %v7023
      %v7152 = vmul.f32 %v6876, %v7024
      %v7153 = vmul.f32 %v6882, %v7025
      %v7154 = vmul.f32 %v6888, %v7026
      %v7155 = vmul.f32 %v6894, %v7027
      %v7156 = vmul.f32 %v6900, %v7028
      %v7157 = vadd.f32 %v7029, %v7030
      %v7158 = vadd.f32 %v7157, %v7031
      %v7159 = vadd.f32 %v7158, %v7032
      %v7160 = vadd.f32 %v7159, %v7033
      %v7161 = vadd.f32 %v7160, %v7034
      %v7162 = vadd.f32 %v7161, %v7035
      %v7163 = vadd.f32 %v7162, %v7036
      %v7164 = vadd.f32 %v7163, %v7037
      %v7165 = vadd.f32 %v7164, %v7038
      %v7166 = vadd.f32 %v7165, %v7039
      %v7167 = vadd.f32 %v7166, %v7040
      %v7168 = vadd.f32 %v7167, %v7041
      %v7169 = vadd.f32 %v7168, %v7042
      %v7170 = vadd.f32 %v7169, %v7043
      %v7171 = vadd.f32 %v7170, %v7044
      %v7172 = vrot.slane %v7171, 4
      %v7173 = vadd.f32 %v7171, %v7172
      %v7174 = vrot.slane %v7173, 2
      %v7175 = vadd.f32 %v7173, %v7174
      %v7176 = vrot.slane %v7175, 1
      %v7177 = vadd.f32 %v7175, %v7176
      %v7178 = vadd.f32 %v7045, %v7046
      %v7179 = vadd.f32 %v7178, %v7047
      %v7180 = vadd.f32 %v7179, %v7048
      %v7181 = vadd.f32 %v7180, %v7049
      %v7182 = vadd.f32 %v7181, %v7050
      %v7183 = vadd.f32 %v7182, %v7051
      %v7184 = vadd.f32 %v7183, %v7052
      %v7185 = vadd.f32 %v7184, %v7053
      %v7186 = vadd.f32 %v7185, %v7054
      %v7187 = vadd.f32 %v7186, %v7055
      %v7188 = vadd.f32 %v7187, %v7056
      %v7189 = vadd.f32 %v7188, %v7057
      %v7190 = vadd.f32 %v7189, %v7058
      %v7191 = vadd.f32 %v7190, %v7059
      %v7192 = vadd.f32 %v7191, %v7060
      %v7193 = vrot.slane %v7192, 4
      %v7194 = vadd.f32 %v7192, %v7193
      %v7195 = vrot.slane %v7194, 2
      %v7196 = vadd.f32 %v7194, %v7195
      %v7197 = vrot.slane %v7196, 1
      %v7198 = vadd.f32 %v7196, %v7197
      %v7199 = vadd.f32 %v7061, %v7062
      %v7200 = vadd.f32 %v7199, %v7063
      %v7201 = vadd.f32 %v7200, %v7064
      %v7202 = vadd.f32 %v7201, %v7065
      %v7203 = vadd.f32 %v7202, %v7066
      %v7204 = vadd.f32 %v7203, %v7067
      %v7205 = vadd.f32 %v7204, %v7068
      %v7206 = vadd.f32 %v7205, %v7069
      %v7207 = vadd.f32 %v7206, %v7070
      %v7208 = vadd.f32 %v7207, %v7071
      %v7209 = vadd.f32 %v7208, %v7072
      %v7210 = vadd.f32 %v7209, %v7073
      %v7211 = vadd.f32 %v7210, %v7074
      %v7212 = vadd.f32 %v7211, %v7075
      %v7213 = vadd.f32 %v7212, %v7076
      %v7214 = vrot.slane %v7213, 4
      %v7215 = vadd.f32 %v7213, %v7214
      %v7216 = vrot.slane %v7215, 2
      %v7217 = vadd.f32 %v7215, %v7216
      %v7218 = vrot.slane %v7217, 1
      %v7219 = vadd.f32 %v7217, %v7218
      %v7220 = vadd.f32 %v7077, %v7078
      %v7221 = vadd.f32 %v7220, %v7079
      %v7222 = vadd.f32 %v7221, %v7080
      %v7223 = vadd.f32 %v7222, %v7081
      %v7224 = vadd.f32 %v7223, %v7082
      %v7225 = vadd.f32 %v7224, %v7083
      %v7226 = vadd.f32 %v7225, %v7084
      %v7227 = vadd.f32 %v7226, %v7085
      %v7228 = vadd.f32 %v7227, %v7086
      %v7229 = vadd.f32 %v7228, %v7087
      %v7230 = vadd.f32 %v7229, %v7088
      %v7231 = vadd.f32 %v7230, %v7089
      %v7232 = vadd.f32 %v7231, %v7090
      %v7233 = vadd.f32 %v7232, %v7091
      %v7234 = vadd.f32 %v7233, %v7092
      %v7235 = vrot.slane %v7234, 4
      %v7236 = vadd.f32 %v7234, %v7235
      %v7237 = vrot.slane %v7236, 2
      %v7238 = vadd.f32 %v7236, %v7237
      %v7239 = vrot.slane %v7238, 1
      %v7240 = vadd.f32 %v7238, %v7239
      %v7241 = vadd.f32 %v7093, %v7094
      %v7242 = vadd.f32 %v7241, %v7095
      %v7243 = vadd.f32 %v7242, %v7096
      %v7244 = vadd.f32 %v7243, %v7097
      %v7245 = vadd.f32 %v7244, %v7098
      %v7246 = vadd.f32 %v7245, %v7099
      %v7247 = vadd.f32 %v7246, %v7100
      %v7248 = vadd.f32 %v7247, %v7101
      %v7249 = vadd.f32 %v7248, %v7102
      %v7250 = vadd.f32 %v7249, %v7103
      %v7251 = vadd.f32 %v7250, %v7104
      %v7252 = vadd.f32 %v7251, %v7105
      %v7253 = vadd.f32 %v7252, %v7106
      %v7254 = vadd.f32 %v7253, %v7107
      %v7255 = vadd.f32 %v7254, %v7108
      %v7256 = vrot.slane %v7255, 4
      %v7257 = vadd.f32 %v7255, %v7256
      %v7258 = vrot.slane %v7257, 2
      %v7259 = vadd.f32 %v7257, %v7258
      %v7260 = vrot.slane %v7259, 1
      %v7261 = vadd.f32 %v7259, %v7260
      %v7262 = vadd.f32 %v7109, %v7110
      %v7263 = vadd.f32 %v7262, %v7111
      %v7264 = vadd.f32 %v7263, %v7112
      %v7265 = vadd.f32 %v7264, %v7113
      %v7266 = vadd.f32 %v7265, %v7114
      %v7267 = vadd.f32 %v7266, %v7115
      %v7268 = vadd.f32 %v7267, %v7116
      %v7269 = vadd.f32 %v7268, %v7117
      %v7270 = vadd.f32 %v7269, %v7118
      %v7271 = vadd.f32 %v7270, %v7119
      %v7272 = vadd.f32 %v7271, %v7120
      %v7273 = vadd.f32 %v7272, %v7121
      %v7274 = vadd.f32 %v7273, %v7122
      %v7275 = vadd.f32 %v7274, %v7123
      %v7276 = vadd.f32 %v7275, %v7124
      %v7277 = vrot.slane %v7276, 4
      %v7278 = vadd.f32 %v7276, %v7277
      %v7279 = vrot.slane %v7278, 2
      %v7280 = vadd.f32 %v7278, %v7279
      %v7281 = vrot.slane %v7280, 1
      %v7282 = vadd.f32 %v7280, %v7281
      %v7283 = vadd.f32 %v7125, %v7126
      %v7284 = vadd.f32 %v7283, %v7127
      %v7285 = vadd.f32 %v7284, %v7128
      %v7286 = vadd.f32 %v7285, %v7129
      %v7287 = vadd.f32 %v7286, %v7130
      %v7288 = vadd.f32 %v7287, %v7131
      %v7289 = vadd.f32 %v7288, %v7132
      %v7290 = vadd.f32 %v7289, %v7133
      %v7291 = vadd.f32 %v7290, %v7134
      %v7292 = vadd.f32 %v7291, %v7135
      %v7293 = vadd.f32 %v7292, %v7136
      %v7294 = vadd.f32 %v7293, %v7137
      %v7295 = vadd.f32 %v7294, %v7138
      %v7296 = vadd.f32 %v7295, %v7139
      %v7297 = vadd.f32 %v7296, %v7140
      %v7298 = vrot.slane %v7297, 4
      %v7299 = vadd.f32 %v7297, %v7298
      %v7300 = vrot.slane %v7299, 2
      %v7301 = vadd.f32 %v7299, %v7300
      %v7302 = vrot.slane %v7301, 1
      %v7303 = vadd.f32 %v7301, %v7302
      %v7304 = vadd.f32 %v7141, %v7142
      %v7305 = vadd.f32 %v7304, %v7143
      %v7306 = vadd.f32 %v7305, %v7144
      %v7307 = vadd.f32 %v7306, %v7145
      %v7308 = vadd.f32 %v7307, %v7146
      %v7309 = vadd.f32 %v7308, %v7147
      %v7310 = vadd.f32 %v7309, %v7148
      %v7311 = vadd.f32 %v7310, %v7149
      %v7312 = vadd.f32 %v7311, %v7150
      %v7313 = vadd.f32 %v7312, %v7151
      %v7314 = vadd.f32 %v7313, %v7152
      %v7315 = vadd.f32 %v7314, %v7153
      %v7316 = vadd.f32 %v7315, %v7154
      %v7317 = vadd.f32 %v7316, %v7155
      %v7318 = vadd.f32 %v7317, %v7156
      %v7319 = vrot.slane %v7318, 4
      %v7320 = vadd.f32 %v7318, %v7319
      %v7321 = vrot.slane %v7320, 2
      %v7322 = vadd.f32 %v7320, %v7321
      %v7323 = vrot.slane %v7322, 1
      %v7324 = vadd.f32 %v7322, %v7323
      %v7325 = vadd.f32 %v7177, %v5055
      %v7326 = vadd.f32 %v7198, %v5057
      %v7327 = vadd.f32 %v7219, %v5059
      %v7328 = vadd.f32 %v7240, %v5061
      %v7329 = vadd.f32 %v7261, %v5063
      %v7330 = vadd.f32 %v7282, %v5065
      %v7331 = vadd.f32 %v7303, %v5067
      %v7332 = vadd.f32 %v7324, %v5069
      %v7333 = vxor.u32 %v7325, 2147483648
      %v7334 = vxor.u32 %v7326, 2147483648
      %v7335 = vxor.u32 %v7327, 2147483648
      %v7336 = vxor.u32 %v7328, 2147483648
      %v7337 = vxor.u32 %v7329, 2147483648
      %v7338 = vxor.u32 %v7330, 2147483648
      %v7339 = vxor.u32 %v7331, 2147483648
      %v7340 = vxor.u32 %v7332, 2147483648
      %v7341 = vmul.f32 %v7333, 1.442695
      %v7342 = vpow.pop %v7341
      %v7343 = vmul.f32 %v7334, 1.442695
      %v7344 = vpow.pop %v7343
      %v7345 = vmul.f32 %v7335, 1.442695
      %v7346 = vpow.pop %v7345
      %v7347 = vmul.f32 %v7336, 1.442695
      %v7348 = vpow.pop %v7347
      %v7349 = vmul.f32 %v7337, 1.442695
      %v7350 = vpow.pop %v7349
      %v7351 = vmul.f32 %v7338, 1.442695
      %v7352 = vpow.pop %v7351
      %v7353 = vmul.f32 %v7339, 1.442695
      %v7354 = vpow.pop %v7353
      %v7355 = vmul.f32 %v7340, 1.442695
      %v7356 = vpow.pop %v7355
      %v7357 = vadd.f32 %v7342, 1.0
      %v7358 = vadd.f32 %v7344, 1.0
      %v7359 = vadd.f32 %v7346, 1.0
      %v7360 = vadd.f32 %v7348, 1.0
      %v7361 = vadd.f32 %v7350, 1.0
      %v7362 = vadd.f32 %v7352, 1.0
      %v7363 = vadd.f32 %v7354, 1.0
      %v7364 = vadd.f32 %v7356, 1.0
      %v7365 = vrcp.pop %v7357
      %v7366 = vmul.f32 %v7357, %v7365
      %v7367 = vsub.f32 1.0, %v7366
      %v7368 = vmul.f32 %v7365, %v7367
      %v7369 = vadd.f32 %v7365, %v7368
      %vm7370 = vweird.f32 %v7357
      %vm7371 = vweird.f32 %v7365
      %vm7372 = vmor %vm7370, %vm7371
      %v7373 = vsel %vm7372, %v7365, %v7369
      %v7374 = vand.u32 2147483647, %v7357
      %vm7375 = vcmp.eq.f32.partialorder %v7374, 8.507059e+37
      %v7376 = vand.u32 %v7357, 2147483648
      %v7377 = vor.u32 1.1754944e-38, %v7376
      %v7378 = vsel %vm7375, %v7377, %v7373
      %v7379 = vmul.f32 1.0, %v7378
      %v7380 = vrcp.pop %v7358
      %v7381 = vmul.f32 %v7358, %v7380
      %v7382 = vsub.f32 1.0, %v7381
      %v7383 = vmul.f32 %v7380, %v7382
      %v7384 = vadd.f32 %v7380, %v7383
      %vm7385 = vweird.f32 %v7358
      %vm7386 = vweird.f32 %v7380
      %vm7387 = vmor %vm7385, %vm7386
      %v7388 = vsel %vm7387, %v7380, %v7384
      %v7389 = vand.u32 2147483647, %v7358
      %vm7390 = vcmp.eq.f32.partialorder %v7389, 8.507059e+37
      %v7391 = vand.u32 %v7358, 2147483648
      %v7392 = vor.u32 1.1754944e-38, %v7391
      %v7393 = vsel %vm7390, %v7392, %v7388
      %v7394 = vmul.f32 1.0, %v7393
      %v7395 = vrcp.pop %v7359
      %v7396 = vmul.f32 %v7359, %v7395
      %v7397 = vsub.f32 1.0, %v7396
      %v7398 = vmul.f32 %v7395, %v7397
      %v7399 = vadd.f32 %v7395, %v7398
      %vm7400 = vweird.f32 %v7359
      %vm7401 = vweird.f32 %v7395
      %vm7402 = vmor %vm7400, %vm7401
      %v7403 = vsel %vm7402, %v7395, %v7399
      %v7404 = vand.u32 2147483647, %v7359
      %vm7405 = vcmp.eq.f32.partialorder %v7404, 8.507059e+37
      %v7406 = vand.u32 %v7359, 2147483648
      %v7407 = vor.u32 1.1754944e-38, %v7406
      %v7408 = vsel %vm7405, %v7407, %v7403
      %v7409 = vmul.f32 1.0, %v7408
      %v7410 = vrcp.pop %v7360
      %v7411 = vmul.f32 %v7360, %v7410
      %v7412 = vsub.f32 1.0, %v7411
      %v7413 = vmul.f32 %v7410, %v7412
      %v7414 = vadd.f32 %v7410, %v7413
      %vm7415 = vweird.f32 %v7360
      %vm7416 = vweird.f32 %v7410
      %vm7417 = vmor %vm7415, %vm7416
      %v7418 = vsel %vm7417, %v7410, %v7414
      %v7419 = vand.u32 2147483647, %v7360
      %vm7420 = vcmp.eq.f32.partialorder %v7419, 8.507059e+37
      %v7421 = vand.u32 %v7360, 2147483648
      %v7422 = vor.u32 1.1754944e-38, %v7421
      %v7423 = vsel %vm7420, %v7422, %v7418
      %v7424 = vmul.f32 1.0, %v7423
      %v7425 = vrcp.pop %v7361
      %v7426 = vmul.f32 %v7361, %v7425
      %v7427 = vsub.f32 1.0, %v7426
      %v7428 = vmul.f32 %v7425, %v7427
      %v7429 = vadd.f32 %v7425, %v7428
      %vm7430 = vweird.f32 %v7361
      %vm7431 = vweird.f32 %v7425
      %vm7432 = vmor %vm7430, %vm7431
      %v7433 = vsel %vm7432, %v7425, %v7429
      %v7434 = vand.u32 2147483647, %v7361
      %vm7435 = vcmp.eq.f32.partialorder %v7434, 8.507059e+37
      %v7436 = vand.u32 %v7361, 2147483648
      %v7437 = vor.u32 1.1754944e-38, %v7436
      %v7438 = vsel %vm7435, %v7437, %v7433
      %v7439 = vmul.f32 1.0, %v7438
      %v7440 = vrcp.pop %v7362
      %v7441 = vmul.f32 %v7362, %v7440
      %v7442 = vsub.f32 1.0, %v7441
      %v7443 = vmul.f32 %v7440, %v7442
      %v7444 = vadd.f32 %v7440, %v7443
      %vm7445 = vweird.f32 %v7362
      %vm7446 = vweird.f32 %v7440
      %vm7447 = vmor %vm7445, %vm7446
      %v7448 = vsel %vm7447, %v7440, %v7444
      %v7449 = vand.u32 2147483647, %v7362
      %vm7450 = vcmp.eq.f32.partialorder %v7449, 8.507059e+37
      %v7451 = vand.u32 %v7362, 2147483648
      %v7452 = vor.u32 1.1754944e-38, %v7451
      %v7453 = vsel %vm7450, %v7452, %v7448
      %v7454 = vmul.f32 1.0, %v7453
      %v7455 = vrcp.pop %v7363
      %v7456 = vmul.f32 %v7363, %v7455
      %v7457 = vsub.f32 1.0, %v7456
      %v7458 = vmul.f32 %v7455, %v7457
      %v7459 = vadd.f32 %v7455, %v7458
      %vm7460 = vweird.f32 %v7363
      %vm7461 = vweird.f32 %v7455
      %vm7462 = vmor %vm7460, %vm7461
      %v7463 = vsel %vm7462, %v7455, %v7459
      %v7464 = vand.u32 2147483647, %v7363
      %vm7465 = vcmp.eq.f32.partialorder %v7464, 8.507059e+37
      %v7466 = vand.u32 %v7363, 2147483648
      %v7467 = vor.u32 1.1754944e-38, %v7466
      %v7468 = vsel %vm7465, %v7467, %v7463
      %v7469 = vmul.f32 1.0, %v7468
      %v7470 = vrcp.pop %v7364
      %v7471 = vmul.f32 %v7364, %v7470
      %v7472 = vsub.f32 1.0, %v7471
      %v7473 = vmul.f32 %v7470, %v7472
      %v7474 = vadd.f32 %v7470, %v7473
      %vm7475 = vweird.f32 %v7364
      %vm7476 = vweird.f32 %v7470
      %vm7477 = vmor %vm7475, %vm7476
      %v7478 = vsel %vm7477, %v7470, %v7474
      %v7479 = vand.u32 2147483647, %v7364
      %vm7480 = vcmp.eq.f32.partialorder %v7479, 8.507059e+37
      %v7481 = vand.u32 %v7364, 2147483648
      %v7482 = vor.u32 1.1754944e-38, %v7481
      %v7483 = vsel %vm7480, %v7482, %v7478
      %v7484 = vmul.f32 1.0, %v7483
      %7485 = vrot.lane.b32.xlu0 %v5044, 32
      %v7486 = vpop.permute.xlu0 %7485
      %7487 = vrot.lane.b32.xlu0 %v5047, 32
      %v7488 = vpop.permute.xlu0 %7487
      %7489 = vrot.lane.b32.xlu0 %v5048, 32
      %v7490 = vpop.permute.xlu0 %7489
      %7491 = vrot.lane.b32.xlu0 %v5049, 32
      %v7492 = vpop.permute.xlu0 %7491
      %7493 = vrot.lane.b32.xlu0 %v5050, 32
      %v7494 = vpop.permute.xlu0 %7493
      %7495 = vrot.lane.b32.xlu0 %v5051, 32
      %v7496 = vpop.permute.xlu0 %7495
      %7497 = vrot.lane.b32.xlu0 %v5052, 32
      %v7498 = vpop.permute.xlu0 %7497
      %7499 = vrot.lane.b32.xlu0 %v5053, 32
      %v7500 = vpop.permute.xlu0 %7499
      %v7509 = vmul.f32 %v7379, %v7486
      %v7510 = vmul.f32 %v7394, %v7488
      %v7511 = vmul.f32 %v7409, %v7490
      %v7512 = vmul.f32 %v7424, %v7492
      %v7513 = vmul.f32 %v7439, %v7494
      %v7514 = vmul.f32 %v7454, %v7496
      %v7515 = vmul.f32 %v7469, %v7498
      %v7516 = vmul.f32 %v7484, %v7500
      %7525 = vrot.lane.b32.xlu0 %v7509, 64
      %v7526 = vpop.permute.xlu0 %7525
      %7527 = vrot.lane.b32.xlu0 %v7510, 64
      %v7528 = vpop.permute.xlu0 %7527
      %7529 = vrot.lane.b32.xlu0 %v7511, 64
      %v7530 = vpop.permute.xlu0 %7529
      %7531 = vrot.lane.b32.xlu0 %v7512, 64
      %v7532 = vpop.permute.xlu0 %7531
      %7533 = vrot.lane.b32.xlu0 %v7513, 64
      %v7534 = vpop.permute.xlu0 %7533
      %7535 = vrot.lane.b32.xlu0 %v7514, 64
      %v7536 = vpop.permute.xlu0 %7535
      %7537 = vrot.lane.b32.xlu0 %v7515, 64
      %v7538 = vpop.permute.xlu0 %7537
      %7539 = vrot.lane.b32.xlu0 %v7516, 64
      %v7540 = vpop.permute.xlu0 %7539
      %v7549 = vadd.f32 %v7177, %v7526
      %v7550 = vadd.f32 %v7198, %v7528
      %v7551 = vadd.f32 %v7219, %v7530
      %v7552 = vadd.f32 %v7240, %v7532
      %v7553 = vadd.f32 %v7261, %v7534
      %v7554 = vadd.f32 %v7282, %v7536
      %v7555 = vadd.f32 %v7303, %v7538
      %v7556 = vadd.f32 %v7324, %v7540
      %v7557 = vtanh.pop %v7549
      %v7558 = vtanh.pop %v7550
      %v7559 = vtanh.pop %v7551
      %v7560 = vtanh.pop %v7552
      %v7561 = vtanh.pop %v7553
      %v7562 = vtanh.pop %v7554
      %v7563 = vtanh.pop %v7555
      %v7564 = vtanh.pop %v7556
      %v7565 = vsub.f32 1.0, %v7379
      %v7566 = vsub.f32 1.0, %v7394
      %v7567 = vsub.f32 1.0, %v7409
      %v7568 = vsub.f32 1.0, %v7424
      %v7569 = vsub.f32 1.0, %v7439
      %v7570 = vsub.f32 1.0, %v7454
      %v7571 = vsub.f32 1.0, %v7469
      %v7572 = vsub.f32 1.0, %v7484
      %7581 = vrot.lane.b32.xlu0 %v7557, 96
      %v7582 = vpop.permute.xlu0 %7581
      %7583 = vrot.lane.b32.xlu0 %v7558, 96
      %v7584 = vpop.permute.xlu0 %7583
      %7585 = vrot.lane.b32.xlu0 %v7559, 96
      %v7586 = vpop.permute.xlu0 %7585
      %7587 = vrot.lane.b32.xlu0 %v7560, 96
      %v7588 = vpop.permute.xlu0 %7587
      %7589 = vrot.lane.b32.xlu0 %v7561, 96
      %v7590 = vpop.permute.xlu0 %7589
      %7591 = vrot.lane.b32.xlu0 %v7562, 96
      %v7592 = vpop.permute.xlu0 %7591
      %7593 = vrot.lane.b32.xlu0 %v7563, 96
      %v7594 = vpop.permute.xlu0 %7593
      %7595 = vrot.lane.b32.xlu0 %v7564, 96
      %v7596 = vpop.permute.xlu0 %7595
      %v7605 = vmul.f32 %v7565, %v7582
      %v7606 = vmul.f32 %v7566, %v7584
      %v7607 = vmul.f32 %v7567, %v7586
      %v7608 = vmul.f32 %v7568, %v7588
      %v7609 = vmul.f32 %v7569, %v7590
      %v7610 = vmul.f32 %v7570, %v7592
      %v7611 = vmul.f32 %v7571, %v7594
      %v7612 = vmul.f32 %v7572, %v7596
      %v7613 = vmul.f32 %v7379, %v4987
      %v7614 = vmul.f32 %v7394, %v4988
      %v7615 = vmul.f32 %v7409, %v4989
      %v7616 = vmul.f32 %v7424, %v4990
      %v7617 = vmul.f32 %v7439, %v4991
      %v7618 = vmul.f32 %v7454, %v4992
      %v7619 = vmul.f32 %v7469, %v4993
      %v7620 = vmul.f32 %v7484, %v4994
      %v7621 = vadd.f32 %v7605, %v7613
      %v7622 = vadd.f32 %v7606, %v7614
      %v7623 = vadd.f32 %v7607, %v7615
      %v7624 = vadd.f32 %v7608, %v7616
      %v7625 = vadd.f32 %v7609, %v7617
      %v7626 = vadd.f32 %v7610, %v7618
      %v7627 = vadd.f32 %v7611, %v7619
      %v7628 = vadd.f32 %v7612, %v7620
      %v7637 = vrot.slane %v4597, 1
      %v7638 = vrot.slane %v4600, 1
      %v7639 = vrot.slane %v4603, 1
      %v7640 = vrot.slane %v4606, 1
      %v7641 = vrot.slane %v4609, 1
      %v7642 = vrot.slane %v4612, 1
      %v7643 = vrot.slane %v4615, 1
      %v7644 = vrot.slane %v4618, 1
      %7661 = vrot.lane.b32.xlu0 %v7177, 32
      %v7662 = vpop.permute.xlu0 %7661
      %7663 = vrot.lane.b32.xlu0 %v7198, 32
      %v7664 = vpop.permute.xlu0 %7663
      %7665 = vrot.lane.b32.xlu0 %v7219, 32
      %v7666 = vpop.permute.xlu0 %7665
      %7667 = vrot.lane.b32.xlu0 %v7240, 32
      %v7668 = vpop.permute.xlu0 %7667
      %7669 = vrot.lane.b32.xlu0 %v7261, 32
      %v7670 = vpop.permute.xlu0 %7669
      %7671 = vrot.lane.b32.xlu0 %v7282, 32
      %v7672 = vpop.permute.xlu0 %7671
      %7673 = vrot.lane.b32.xlu0 %v7303, 32
      %v7674 = vpop.permute.xlu0 %7673
      %7675 = vrot.lane.b32.xlu0 %v7324, 32
      %v7676 = vpop.permute.xlu0 %7675
      %v7685 = vadd.f32 %v7637, %v7662
      %v7686 = vadd.f32 %v7638, %v7664
      %v7687 = vadd.f32 %v7639, %v7666
      %v7688 = vadd.f32 %v7640, %v7668
      %v7689 = vadd.f32 %v7641, %v7670
      %v7690 = vadd.f32 %v7642, %v7672
      %v7691 = vadd.f32 %v7643, %v7674
      %v7692 = vadd.f32 %v7644, %v7676
      %v7701 = vrot.slane %v7622, 7
      %v7702 = vsel %vm4556, %v7701, %v7621
      %v7703 = vrot.slane %v7623, 6
      %v7704 = vsel %vm4559, %v7703, %v7702
      %v7705 = vrot.slane %v7624, 5
      %v7706 = vsel %vm4562, %v7705, %v7704
      %v7707 = vrot.slane %v7625, 4
      %v7708 = vsel %vm4565, %v7707, %v7706
      %v7709 = vrot.slane %v7626, 3
      %v7710 = vsel %vm4568, %v7709, %v7708
      %v7711 = vrot.slane %v7627, 2
      %v7712 = vsel %vm4571, %v7711, %v7710
      %v7713 = vrot.slane %v7628, 1
      %v7714 = vsel %vm4574, %v7713, %v7712
      %7715 = vrot.lane.b32.xlu0 %v7714, 96
      %v7716 = vpop.permute.xlu0 %7715
      %v7717 = vsel %vm232, %v7716, 0
      %7719 = vmatpush.msra.mxu0 0.0
      %7720 = vmatpush.msra.mxu0 0.0
      %7721 = vmatpush.msra.mxu0 0.0
      %7722 = vmatpush.msra.mxu0 0.0
      %7723 = vmatpush.msra.mxu0 0.0
      %7724 = vmatpush.msra.mxu0 0.0
      %7725 = vmatpush.msra.mxu0 0.0
      %7726 = vmatpush.msra.mxu0 0.0
      %7727 = vmatpush.msra.mxu0 0.0
      %7728 = vmatpush.msra.mxu0 0.0
      %7729 = vmatpush.msra.mxu0 0.0
      %7730 = vmatpush.msra.mxu0 0.0
      %7731 = vmatpush.msra.mxu0 %v90
      %7732 = vmatpush.msra.mxu0 %v89
      %7733 = vmatpush.msra.mxu0 %v88
      %7734 = vmatpush.msra.mxu0 %v87
      %7735 = vmatmul.f32.gmra.mxu0 %v7717
      %v7736 = vpop.f32.mrf.mxu0
      %v7737 = vadd.f32 0.0, %v7736
      %7738 = vdwg.mxu0
      %v7740 = vrot.slane %v7737, 1
      %v7741 = vrot.slane %v7737, 2
      %v7742 = vrot.slane %v7737, 3
      %v7743 = vrot.slane %v7737, 4
      %v7744 = vrot.slane %v7737, 5
      %v7745 = vrot.slane %v7737, 6
      %v7746 = vrot.slane %v7737, 7
      %v7754 = vadd.f32 %v7685, %v7737
      %v7755 = vadd.f32 %v7686, %v7740
      %v7756 = vadd.f32 %v7687, %v7741
      %v7757 = vadd.f32 %v7688, %v7742
      %v7758 = vadd.f32 %v7689, %v7743
      %v7759 = vadd.f32 %v7690, %v7744
      %v7760 = vadd.f32 %v7691, %v7745
      %v7761 = vadd.f32 %v7692, %v7746
      %v7762 = vtanh.pop %v7754
      %v7763 = vtanh.pop %v7755
      %v7764 = vtanh.pop %v7756
      %v7765 = vtanh.pop %v7757
      %v7766 = vtanh.pop %v7758
      %v7767 = vtanh.pop %v7759
      %v7768 = vtanh.pop %v7760
      %v7769 = vtanh.pop %v7761
      %v7771 = vperm.slane %v95, 0
      %7781 = vst [vmem:[#allocation1] ss:$9 sm:$0xff] %v7762
      %s7782 = scalar_lea.vmem [#allocation1], 1
      %7783 = vst [vmem:[%s7782] ss:$9 sm:$0xff] %v7763
      %s7784 = scalar_lea.vmem [#allocation1], 2
      %7785 = vst [vmem:[%s7784] ss:$9 sm:$0xff] %v7764
      %s7786 = scalar_lea.vmem [#allocation1], 3
      %7787 = vst [vmem:[%s7786] ss:$9 sm:$0xff] %v7765
      %s7788 = scalar_lea.vmem [#allocation1], 4
      %7789 = vst [vmem:[%s7788] ss:$9 sm:$0xff] %v7766
      %s7790 = scalar_lea.vmem [#allocation1], 5
      %7791 = vst [vmem:[%s7790] ss:$9 sm:$0xff] %v7767
      %s7792 = scalar_lea.vmem [#allocation1], 6
      %7793 = vst [vmem:[%s7792] ss:$9 sm:$0xff] %v7768
      %s7794 = scalar_lea.vmem [#allocation1], 7
      %7795 = vst [vmem:[%s7794] ss:$9 sm:$0xff] %v7769
      %v7796 = vld [vmem:[#allocation1] sm:$0xff]
      %v7797 = vsel %vm232, %v7796, 0
      %7799 = vmatpush.msra.mxu0 0.0
      %7800 = vmatpush.msra.mxu0 0.0
      %7801 = vmatpush.msra.mxu0 0.0
      %7802 = vmatpush.msra.mxu0 0.0
      %7803 = vmatpush.msra.mxu0 0.0
      %7804 = vmatpush.msra.mxu0 0.0
      %7805 = vmatpush.msra.mxu0 0.0
      %7806 = vmatpush.msra.mxu0 0.0
      %7807 = vmatpush.msra.mxu0 0.0
      %7808 = vmatpush.msra.mxu0 0.0
      %7809 = vmatpush.msra.mxu0 0.0
      %7810 = vmatpush.msra.mxu0 0.0
      %7811 = vmatpush.msra.mxu0 %v94
      %7812 = vmatpush.msra.mxu0 %v93
      %7813 = vmatpush.msra.mxu0 %v92
      %7814 = vmatpush.msra.mxu0 %v91
      %7815 = vmatmul.f32.gmra.mxu0 %v7797
      %v7816 = vpop.f32.mrf.mxu0
      %v7817 = vadd.f32 %v7771, %v7816
      %7818 = vdwg.mxu0
      %s7819 = smul.u32 %s4580, 8
      %s7820 = scalar_lea.vmem [#allocation5], %s7819
      %7821 = vst [vmem:[%s7820] sm:$0xff] %v7817
      %s7822 = scalar_lea.vmem [#allocation7], %s7819
      %7823 = vst [vmem:[%s7822] sm:$0xff] %v6016
    $region70: #{tpu_custom_call.1} parent=1 // loop_footer
      %s4584 = sadd.s32 1, %s4580
    $region71: #{tpu_custom_call.1} parent=1 // loop_footer_branch
      %4579 = sbr.rel target = $region67
    $region72: #{tpu_custom_call.1} parent=1 // loop_exit
      _
    // Predicated region
    $region73: #{tpu_custom_call.1} parent=1 // pred_check
      _
    $region74: #{tpu_custom_call.1} parent=1 // pred_check_branch
      %7826 = sbr.rel (0) target = $region76
    $region75: #{tpu_custom_call.1} parent=1 // pred_region
      %7828 = vsyncadd [#allocation6], 0
      %s7829 = sshll.u32 [#allocation5], 4
      %s7830 = int_to_ptr.vmem [resolvable:$true] %s7829
      %s7831 = sshll.u32 %s16, 4
      %s7832 = int_to_ptr.hbm [resolvable:$true] %s7831
      %7837 = dma.vmem_to_hbm [thread:$0]  %s7830, 1024, %s7832, [#allocation6], 128, 128, 8
    $region76: #{tpu_custom_call.1} parent=1 // pred_fallthru
      _
    // Predicated region
    $region77: #{tpu_custom_call.1} parent=1 // pred_check
      _
    $region78: #{tpu_custom_call.1} parent=1 // pred_check_branch
      %7839 = sbr.rel (0) target = $region80
    $region79: #{tpu_custom_call.1} parent=1 // pred_region
      %7841 = vsyncadd [#allocation8], 0
      %s7842 = sshll.u32 [#allocation7], 4
      %s7843 = int_to_ptr.vmem [resolvable:$true] %s7842
      %s7844 = sshll.u32 %s17, 4
      %s7845 = int_to_ptr.hbm [resolvable:$true] %s7844
      %7850 = dma.vmem_to_hbm [thread:$0]  %s7843, 1024, %s7845, [#allocation8], 128, 128, 8
    $region80: #{tpu_custom_call.1} parent=1 // pred_fallthru
      _
    // Predicated region
    $region81: #{tpu_custom_call.1} parent=1 // pred_check
      _
    $region82: #{tpu_custom_call.1} parent=1 // pred_check_branch
      %7852 = sbr.rel (0) target = $region84
    $region83: #{tpu_custom_call.1} parent=1 // pred_region
      %7854 = dma.done [#allocation6], 1024
    $region84: #{tpu_custom_call.1} parent=1 // pred_fallthru
      _
    // Predicated region
    $region85: #{tpu_custom_call.1} parent=1 // pred_check
      _
    $region86: #{tpu_custom_call.1} parent=1 // pred_check_branch
      %7856 = sbr.rel (0) target = $region88
    $region87: #{tpu_custom_call.1} parent=1 // pred_region
      %7858 = dma.done [#allocation8], 1024
    $region88: #{tpu_custom_call.1} parent=1 // pred_fallthru
      _
    %7859 = vsyncpa [#allocation6], 1
    %7860 = vsyncpa [#allocation8], 1

</llo_original>
